<compile_context>
chip_gen: v7x
topology: tpu7x:2x2x1
jax: 0.10.0
libtpu: 0.0.40
codegen_flags: <defaults>
</compile_context>

<pallas_src>
import jax
import jax.numpy as jnp
from jax.experimental import pallas as pl
from jax.experimental.pallas import tpu as pltpu

TM_MAX = 512
F32 = jnp.float32
BF16 = jnp.bfloat16

# message small-pack row offsets (width 128)
M_BS0, M_BS1, M_BS2 = 0, 1, 2
M_WH0, M_WV0, M_WH1, M_WV1, M_WH2, M_WV2 = 8, 16, 24, 28, 32, 36
# node small-pack row offsets (width 512)
N_FF0B, N_G0, N_B0, N_G1, N_B1, N_FF1B = 0, 1, 2, 3, 4, 5
N_F0WH, N_F0WV, N_F1WH, N_F1WV = 8, 12, 16, 20


def _ceil_to(n, m):
    return ((n + m - 1) // m) * m


def _pick_tm(n):
    """Largest row tile <= TM_MAX that still yields >= 2 grid steps (v7x megacore)."""
    rows8 = _ceil_to(max(n, 1), 8)
    if rows8 <= 8:
        return 8
    return min(TM_MAX, _ceil_to((rows8 + 1) // 2, 8))


# --------------------------------------------------------------------------- in-kernel helpers
def _vec_sumsq(vp, nv):
    # vp: (R, 3*nv) coordinate-major packed -> per-channel sum over coords (R, nv)
    sq = vp * vp
    return sq[:, 0:nv] + sq[:, nv:2 * nv] + sq[:, 2 * nv:3 * nv]


def _vec_norm(vp, nv):
    return jnp.sqrt(jnp.maximum(_vec_sumsq(vp, nv), 1e-8))


def _tile3(x):
    return jnp.concatenate([x, x, x], axis=-1)


def _vec_mm(vp, sp_ref, row, nv_in, nv_out):
    """Per-coordinate (R, nv_in) @ (nv_in, nv_out) on the VPU (unrolled broadcast MACs).
    Weight row k of the tiny matrix lives at sp_ref[row + k, 0:nv_out]."""
    w_rows = [sp_ref[row + k:row + k + 1, 0:nv_out] for k in range(nv_in)]
    outs = []
    for c in range(3):
        b = c * nv_in
        acc = vp[:, b:b + 1] * w_rows[0]
        for k in range(1, nv_in):
            acc = acc + vp[:, b + k:b + k + 1] * w_rows[k]
        outs.append(acc)
    return jnp.concatenate(outs, axis=-1)                                # (R, 3*nv_out)


def _gvp(s, vp, sp_ref, wh_row, wv_row, nv_in, h, nv_out,
         ws_s_ref, ws_vn_ref, bs_row, so, relu, gate):
    """GVP with split scalar weights; vector-channel projections on the VPU."""
    vh = _vec_mm(vp, sp_ref, wh_row, nv_in, h)                           # (R, 3h)
    vn = _vec_norm(vh, h)                                                # (R, h)
    s_new = (jnp.dot(s.astype(BF16), ws_s_ref[...], preferred_element_type=F32)
             + jnp.dot(vn.astype(BF16), ws_vn_ref[...], preferred_element_type=F32)
             + sp_ref[bs_row:bs_row + 1, 0:so])
    v_new = _vec_mm(vh, sp_ref, wv_row, h, nv_out)                       # (R, 3*nv_out)
    if gate:
        v_new = v_new * _tile3(jax.nn.sigmoid(_vec_norm(v_new, nv_out)))
    if relu:
        s_new = jnp.maximum(s_new, 0.0)
    return s_new, v_new


def _ln_pair(s, vp, sp_ref, g_row, b_row, nv):
    # scalar LayerNorm (affine) + GVP vector norm  (v / sqrt(mean_k ||v_k||^2))
    so = s.shape[1]
    mu = jnp.mean(s, axis=-1, keepdims=True)
    d = s - mu
    var = jnp.mean(d * d, axis=-1, keepdims=True)
    s_n = (d * jax.lax.rsqrt(var + 1e-5) * sp_ref[g_row:g_row + 1, 0:so]
           + sp_ref[b_row:b_row + 1, 0:so])
    ch = jnp.maximum(_vec_sumsq(vp, nv), 1e-8)                           # (R, nv)
    inv = jax.lax.rsqrt(jnp.mean(ch, axis=-1, keepdims=True))            # (R, 1)
    return s_n, vp * inv


# --------------------------------------------------------------------------- kernel 1: first linear
def _linear_kernel(x_ref, w_ref, b_ref, o_ref):
    o_ref[...] = (jnp.dot(x_ref[...].astype(BF16), w_ref[...],
                          preferred_element_type=F32) + b_ref[...])


def linear_pallas(x, w, b, tm):
    rows, k = x.shape                           # K stays at full 1433 (no padding copy)
    m = w.shape[1]
    cost = pl.CostEstimate(flops=2 * rows * k * m, transcendentals=0,
                           bytes_accessed=rows * k * 4 + k * m * 2 + rows * m * 4)
    return pl.pallas_call(
        _linear_kernel,
        out_shape=jax.ShapeDtypeStruct((rows, m), F32),
        grid_spec=pltpu.PrefetchScalarGridSpec(
            num_scalar_prefetch=0,
            grid=(rows // tm,),
            in_specs=[pl.BlockSpec((tm, k), lambda i: (i, 0)),
                      pl.BlockSpec((k, m), lambda i: (0, 0)),
                      pl.BlockSpec((1, m), lambda i: (0, 0))],
            out_specs=pl.BlockSpec((tm, m), lambda i: (i, 0))),
        compiler_params=pltpu.CompilerParams(dimension_semantics=("parallel",)),
        cost_estimate=cost,
    )(x, w, b)


# --------------------------------------------------------------------------- kernel 2: fused 3-GVP message
def _make_message_kernel(n_edges, need_mask):
    def kernel(sd_ref, es_ref, vin_ref,
               w0sd_ref, w0e_ref, w0vn_ref,
               w1s_ref, w1vn_ref, w2s_ref, w2vn_ref,
               sp_ref, os_ref, ov_ref):
        vin = vin_ref[...]                                               # (TM, 15)
        # GVP0: (264 scalar, 5 vector) -> (128, 2), relu + sigmoid vector gate.
        # [s_src|s_dst] is a single 256-K bf16 dot (fills 256-wide MXU on v6e/v7x).
        vh = _vec_mm(vin, sp_ref, M_WH0, 5, 5)                           # (TM, 15)
        vn = _vec_norm(vh, 5)                                            # (TM, 5)
        s = (jnp.dot(sd_ref[...].astype(BF16), w0sd_ref[...], preferred_element_type=F32)
             + jnp.dot(es_ref[...].astype(BF16), w0e_ref[...], preferred_element_type=F32)
             + jnp.dot(vn.astype(BF16), w0vn_ref[...], preferred_element_type=F32)
             + sp_ref[M_BS0:M_BS0 + 1, 0:128])
        v = _vec_mm(vh, sp_ref, M_WV0, 5, 2)                             # (TM, 6)
        v = v * _tile3(jax.nn.sigmoid(_vec_norm(v, 2)))
        s = jnp.maximum(s, 0.0)

        # GVP 1 (relu / gate) and GVP 2 (no activations), all in-VMEM
        s, v = _gvp(s, v, sp_ref, M_WH1, M_WV1, 2, 2, 2,
                    w1s_ref, w1vn_ref, M_BS1, 128, True, True)
        s, v = _gvp(s, v, sp_ref, M_WH2, M_WV2, 2, 2, 2,
                    w2s_ref, w2vn_ref, M_BS2, 128, False, False)

        if need_mask:   # zero padded-edge rows so the scatter-mean stays exact
            tm = sd_ref.shape[0]
            row = (pl.program_id(0) * tm
                   + jax.lax.broadcasted_iota(jnp.int32, (tm, 1), 0))
            valid = row < n_edges
            s = jnp.where(valid, s, 0.0)
            v = jnp.where(valid, v, 0.0)
        os_ref[...] = s
        ov_ref[...] = v
    return kernel


_MSG_WKEYS = ("w0_sd", "w0_e", "w0_vn", "w1_s", "w1_vn", "w2_s", "w2_vn", "msp")


def message_pallas(sd, es, vin, cp, tm, n_edges):
    rows = sd.shape[0]
    weights = tuple(cp[k] for k in _MSG_WKEYS)

    def rspec(d):
        return pl.BlockSpec((tm, d), lambda i: (i, 0))

    def wspec(a):
        return pl.BlockSpec(a.shape, lambda i: (0, 0))

    flops = 2 * rows * 128 * (256 + 8 + 5 + 130 + 130) + 200 * rows
    bytes_acc = (rows * (256 + 8 + 15 + 128 + 6) * 4
                 + sum(int(w.size) * w.dtype.itemsize for w in weights))
    cost = pl.CostEstimate(flops=flops, transcendentals=6 * rows, bytes_accessed=bytes_acc)

    return pl.pallas_call(
        _make_message_kernel(n_edges, rows != n_edges),
        out_shape=(jax.ShapeDtypeStruct((rows, 128), F32),
                   jax.ShapeDtypeStruct((rows, 6), F32)),
        grid_spec=pltpu.PrefetchScalarGridSpec(
            num_scalar_prefetch=0,
            grid=(rows // tm,),
            in_specs=[rspec(256), rspec(8), rspec(15)] + [wspec(w) for w in weights],
            out_specs=(rspec(128), rspec(6))),
        compiler_params=pltpu.CompilerParams(dimension_semantics=("parallel",)),
        cost_estimate=cost,
    )(sd, es, vin, *weights)


# --------------------------------------------------------------------------- kernel 3: fused node update
def _node_kernel(s_ref, dhs_ref, v_ref, dhv_ref,
                 f0s_ref, f0vn_ref, f1s_ref, f1vn_ref, sp_ref,
                 os_ref, ov_ref):
    s_in = s_ref[...]
    v_in = v_ref[...]                                                    # (TM, 6)
    # TODO(synk): dropout layers are identity here (eval-mode semantics).
    s, v = _ln_pair(s_in + dhs_ref[...], v_in + dhv_ref[...], sp_ref, N_G0, N_B0, 2)
    hs, hv = _gvp(s, v, sp_ref, N_F0WH, N_F0WV, 2, 4, 4,
                  f0s_ref, f0vn_ref, N_FF0B, 512, True, True)            # (128,2)->(512,4)
    hs, hv = _gvp(hs, hv, sp_ref, N_F1WH, N_F1WV, 4, 4, 2,
                  f1s_ref, f1vn_ref, N_FF1B, 128, False, False)          # (512,4)->(128,2)
    s, v = _ln_pair(s + hs, v + hv, sp_ref, N_G1, N_B1, 2)
    # block-level (out + in) / 2 residual averaging fused in
    os_ref[...] = (s + s_in) * 0.5
    ov_ref[...] = (v + v_in) * 0.5


_NODE_WKEYS = ("f0_s", "f0_vn", "f1_s", "f1_vn", "nsp")


def node_pallas(s_in, dh_s, v_in, dh_v, bp, tm):
    rows = s_in.shape[0]
    weights = tuple(bp[k] for k in _NODE_WKEYS)

    def rspec(d):
        return pl.BlockSpec((tm, d), lambda i: (i, 0))

    def wspec(a):
        return pl.BlockSpec(a.shape, lambda i: (0, 0))

    flops = 2 * rows * (132 * 512 + 516 * 128) + 400 * rows
    bytes_acc = (rows * (2 * 128 + 2 * 6 + 128 + 6) * 4
                 + sum(int(w.size) * w.dtype.itemsize for w in weights))
    cost = pl.CostEstimate(flops=flops, transcendentals=8 * rows, bytes_accessed=bytes_acc)

    return pl.pallas_call(
        _node_kernel,
        out_shape=(jax.ShapeDtypeStruct((rows, 128), F32),
                   jax.ShapeDtypeStruct((rows, 6), F32)),
        grid_spec=pltpu.PrefetchScalarGridSpec(
            num_scalar_prefetch=0,
            grid=(rows // tm,),
            in_specs=[rspec(128), rspec(128), rspec(6), rspec(6)]
                     + [wspec(w) for w in weights],
            out_specs=(rspec(128), rspec(6))),
        compiler_params=pltpu.CompilerParams(dimension_semantics=("parallel",)),
        cost_estimate=cost,
    )(s_in, dh_s, v_in, dh_v, *weights)


# --------------------------------------------------------------------------- GVP conv layer glue
def gvp_conv_layer(bp, s, v, src, dst, es, evp, inv_deg, rows_n, tm_n, tm_e, n_edges):
    # TODO(synk): the data-dependent edge gather + segment-mean scatter stay in plain JAX;
    # fusing them into the kernels needs dst-sorted edges + scalar-prefetched segment
    # offsets (or per-row DMA) and is left for a later revision.
    sd = jnp.concatenate([jnp.take(s, src, axis=0),
                          jnp.take(s, dst, axis=0)], axis=-1)            # (rows_e, 256)
    v_src = jnp.take(v, src, axis=0)                                     # (rows_e, 6)
    v_dst = jnp.take(v, dst, axis=0)
    parts = []
    for c in range(3):   # per-coordinate channel order [src0, src1, e, dst0, dst1]
        parts += [v_src[:, 2 * c:2 * c + 2], evp[:, c:c + 1], v_dst[:, 2 * c:2 * c + 2]]
    vin = jnp.concatenate(parts, axis=-1)                                # (rows_e, 15)

    ms, mv = message_pallas(sd, es, vin, bp["conv"], tm_e, n_edges)
    agg_s = jnp.zeros((rows_n, 128), F32).at[dst].add(ms) * inv_deg
    agg_v = jnp.zeros((rows_n, 6), F32).at[dst].add(mv) * inv_deg
    return node_pallas(s, agg_s, v, agg_v, bp, tm_n)


# --------------------------------------------------------------------------- full scoring_model forward
def scoring_forward(prep, node_scalar, node_vec, edge_index, edge_scalar, edge_vec, b_factor):
    # TODO(synk): PyG Batch construction / attribute concatenation is replaced by
    # directly-provided pre-concatenated node features (1433 scalar dims).
    n = node_scalar.shape[0]
    e = edge_index.shape[1]
    tm_n = _pick_tm(n)
    rows_n = _ceil_to(n, tm_n)
    tm_e = _pick_tm(e)
    rows_e = _ceil_to(e, tm_e)

    if rows_n != n:   # one-time row pad; stays padded through the whole 8-layer stack
        node_scalar = jnp.pad(node_scalar, ((0, rows_n - n), (0, 0)))
    s = linear_pallas(node_scalar, prep["lin_w"], prep["lin_b"], tm_n)   # (rows_n, 128)

    v = jnp.transpose(node_vec, (0, 2, 1)).reshape(n, 6)                 # lane-packed (N, 6)
    evp = edge_vec.reshape(e, 3)                                         # lane-packed (E, 3)
    es = edge_scalar
    src, dst = edge_index[0], edge_index[1]
    if rows_n != n:
        v = jnp.pad(v, ((0, rows_n - n), (0, 0)))
    if rows_e != e:
        pe = rows_e - e
        evp = jnp.pad(evp, ((0, pe), (0, 0)))
        es = jnp.pad(es, ((0, pe), (0, 0)))
        src = jnp.pad(src, (0, pe))        # padded edges gather row 0 (harmless: masked)
        dst = jnp.pad(dst, (0, pe))        # padded messages are zeroed inside the kernel

    # mean-aggregation normalization (1/deg), computed once for all 8 layers
    edge_valid = (jnp.arange(rows_e) < e).astype(F32)
    deg = jnp.zeros((rows_n,), F32).at[dst].add(edge_valid)
    inv_deg = (1.0 / jnp.maximum(deg, 1.0))[:, None]

    for bp in prep["blocks"]:
        s, v = gvp_conv_layer(bp, s, v, src, dst, es, evp, inv_deg,
                              rows_n, tm_n, tm_e, e)

    # read-out Linear(128->1)+sigmoid: 1-lane output, negligible FLOPs -> plain JAX
    out = jax.nn.sigmoid(jnp.dot(s[:n], prep["ro_w"]) + prep["ro_b"])[:, 0]
    labels = b_factor.squeeze()
    return out, labels


# --------------------------------------------------------------------------- deterministic parameter init
def _linear_init(key, fan_in, fan_out, bias=True):
    k1, k2 = jax.random.split(key)
    bound = float(fan_in) ** -0.5
    w = jax.random.uniform(k1, (fan_in, fan_out), F32, -bound, bound)
    b = jax.random.uniform(k2, (fan_out,), F32, -bound, bound) if bias else None
    return w, b


def _gvp_init(key, si, vi, so, vo):
    h = max(vi, vo)
    k1, k2, k3 = jax.random.split(key, 3)
    wh, _ = _linear_init(k1, vi, h, bias=False)
    ws, bs = _linear_init(k2, si + h, so)
    wv, _ = _linear_init(k3, h, vo, bias=False)
    return {"wh": wh, "ws": ws, "bs": bs, "wv": wv}


def _block_init(key):
    ks = jax.random.split(key, 5)
    conv = [_gvp_init(ks[0], 2 * 128 + 8, 2 * 2 + 1, 128, 2),
            _gvp_init(ks[1], 128, 2, 128, 2),
            _gvp_init(ks[2], 128, 2, 128, 2)]
    return {"conv": conv,
            "ff0": _gvp_init(ks[3], 128, 2, 512, 4),
            "ff1": _gvp_init(ks[4], 512, 4, 128, 2),
            "norm0_g": jnp.ones((128,), F32), "norm0_b": jnp.zeros((128,), F32),
            "norm1_g": jnp.ones((128,), F32), "norm1_b": jnp.zeros((128,), F32)}


def init_params(key):
    ks = jax.random.split(key, 10)
    lin_w, lin_b = _linear_init(ks[0], 1433, 128)
    ro_w, ro_b = _linear_init(ks[1], 128, 1)
    blocks = [_block_init(ks[2 + i]) for i in range(8)]
    return {"lin_w": lin_w, "lin_b": lin_b, "ro_w": ro_w, "ro_b": ro_b, "blocks": blocks}


def prepare_params(params):
    """One-time (outside jit) layout/precision prep: split concat-facing ws weights into
    lane-aligned pieces, fuse the src/dst halves into one 256-K weight, cast MXU weights
    to bf16, and pack all tiny per-layer operands into one f32 array per kernel."""
    prep = {"lin_w": params["lin_w"].astype(BF16),
            "lin_b": params["lin_b"].reshape(1, -1),
            "ro_w": params["ro_w"], "ro_b": params["ro_b"],
            "blocks": []}
    for bp in params["blocks"]:
        c0, c1, c2 = bp["conv"]
        ws0 = c0["ws"]   # (269,128): rows [s_src 0:128 | e_s 128:136 | s_dst 136:264 | vn 264:269]
        msp = jnp.zeros((40, 128), F32)
        msp = msp.at[M_BS0, :].set(c0["bs"])
        msp = msp.at[M_BS1, :].set(c1["bs"])
        msp = msp.at[M_BS2, :].set(c2["bs"])
        msp = msp.at[M_WH0:M_WH0 + 5, 0:5].set(c0["wh"])
        msp = msp.at[M_WV0:M_WV0 + 5, 0:2].set(c0["wv"])
        msp = msp.at[M_WH1:M_WH1 + 2, 0:2].set(c1["wh"])
        msp = msp.at[M_WV1:M_WV1 + 2, 0:2].set(c1["wv"])
        msp = msp.at[M_WH2:M_WH2 + 2, 0:2].set(c2["wh"])
        msp = msp.at[M_WV2:M_WV2 + 2, 0:2].set(c2["wv"])
        conv = {"w0_sd": jnp.concatenate([ws0[0:128], ws0[136:264]], axis=0).astype(BF16),
                "w0_e": ws0[128:136].astype(BF16),
                "w0_vn": ws0[264:269].astype(BF16),
                "w1_s": c1["ws"][:128].astype(BF16), "w1_vn": c1["ws"][128:].astype(BF16),
                "w2_s": c2["ws"][:128].astype(BF16), "w2_vn": c2["ws"][128:].astype(BF16),
                "msp": msp}

        nsp = jnp.zeros((24, 512), F32)
        nsp = nsp.at[N_FF0B, :].set(bp["ff0"]["bs"])
        nsp = nsp.at[N_G0, 0:128].set(bp["norm0_g"])
        nsp = nsp.at[N_B0, 0:128].set(bp["norm0_b"])
        nsp = nsp.at[N_G1, 0:128].set(bp["norm1_g"])
        nsp = nsp.at[N_B1, 0:128].set(bp["norm1_b"])
        nsp = nsp.at[N_FF1B, 0:128].set(bp["ff1"]["bs"])
        nsp = nsp.at[N_F0WH:N_F0WH + 2, 0:4].set(bp["ff0"]["wh"])
        nsp = nsp.at[N_F0WV:N_F0WV + 4, 0:4].set(bp["ff0"]["wv"])
        nsp = nsp.at[N_F1WH:N_F1WH + 4, 0:4].set(bp["ff1"]["wh"])
        nsp = nsp.at[N_F1WV:N_F1WV + 4, 0:2].set(bp["ff1"]["wv"])
        prep["blocks"].append({
            "conv": conv,
            "f0_s": bp["ff0"]["ws"][:128].astype(BF16),
            "f0_vn": bp["ff0"]["ws"][128:].astype(BF16),
            "f1_s": bp["ff1"]["ws"][:512].astype(BF16),
            "f1_vn": bp["ff1"]["ws"][512:].astype(BF16),
            "nsp": nsp})
    return prep


# --------------------------------------------------------------------------- main
if __name__ == "__main__":
    key = jax.random.PRNGKey(0)
    kp, kd = jax.random.split(key)
    params = init_params(kp)
    prep = prepare_params(params)   # one-time weight split / pack / bf16 cast (outside jit)

    N, E = 16, 48  # small synthetic graph
    kk = jax.random.split(kd, 7)
    node_scalar = jax.random.normal(kk[0], (N, 1433), F32)
    to_next_ca = jax.random.normal(kk[1], (N, 1, 3), F32)
    to_last_ca = jax.random.normal(kk[2], (N, 1, 3), F32)
    node_vec = jnp.concatenate([to_next_ca, to_last_ca], axis=-2)      # (N, 2, 3)
    edge_index = jax.random.randint(kk[3], (2, E), 0, N)               # (2, E)
    edge_scalar = jax.random.normal(kk[4], (E, 8), F32)                # distance_fourier
    edge_vec = jax.random.normal(kk[5], (E, 1, 3), F32)                # direction_vector
    b_factor = jax.random.uniform(kk[6], (N, 1), F32)                  # labels

    fwd = jax.jit(scoring_forward)
    output, labels = fwd(prep, node_scalar, node_vec, edge_index,
                         edge_scalar, edge_vec, b_factor)
    jax.block_until_ready((output, labels))
    assert output.shape == (N,) and labels.shape == (N,)
    assert bool(jnp.all(jnp.isfinite(output)))
    print("KERNEL_OK")
</pallas_src>

<mosaic_0001>
module attributes {stable_mosaic.version = 11 : i64} {
  func.func private @main(%arg0: i32) attributes {dimension_semantics = [#tpu.dimension_semantics<core_parallel>], iteration_bounds = array<i64: 2>, tpu.core_type = #tpu.core_type<sc_scalar_subcore>, window_params = []} {
    return
  }
}

module attributes {stable_mosaic.version = 11 : i64} {
  func.func private @main(%arg0: i32) attributes {dimension_semantics = [#tpu.dimension_semantics<core_parallel>], iteration_bounds = array<i64: 2>, tpu.core_type = #tpu.core_type<sc_scalar_subcore>, window_params = []} {
    return
  }
}

module attributes {stable_mosaic.version = 11 : i64} {
  func.func @_linear_kernel(%arg0: i32, %arg1: memref<8x1433xf32, #tpu.memory_space<vmem>>, %arg2: memref<1433x128xbf16, #tpu.memory_space<vmem>>, %arg3: memref<1x128xf32, #tpu.memory_space<vmem>>, %arg4: memref<8x128xf32, #tpu.memory_space<vmem>>) attributes {dimension_semantics = [#tpu.dimension_semantics<parallel>], iteration_bounds = array<i64: 2>, scalar_prefetch = 0 : i64, scratch_operands = 0 : i64, tpu.core_type = #tpu.core_type<tc>, window_params = [{transform_indices = @transform_0, window_bounds = array<i64: 8, 1433>}, {pipeline_mode = #tpu.pipeline_mode<synchronous>, transform_indices = @transform_1, window_bounds = array<i64: 1433, 128>}, {pipeline_mode = #tpu.pipeline_mode<synchronous>, transform_indices = @transform_2, window_bounds = array<i64: 1, 128>}, {transform_indices = @transform_3, window_bounds = array<i64: 8, 128>}]} {
    %c0 = arith.constant 0 : index
    %c0_0 = arith.constant 0 : index
    %0 = vector.load %arg1[%c0, %c0_0] : memref<8x1433xf32, #tpu.memory_space<vmem>>, vector<8x1433xf32>
    %1 = arith.truncf %0 : vector<8x1433xf32> to vector<8x1433xbf16>
    %c0_1 = arith.constant 0 : index
    %c0_2 = arith.constant 0 : index
    %2 = vector.load %arg2[%c0_1, %c0_2] : memref<1433x128xbf16, #tpu.memory_space<vmem>>, vector<1433x128xbf16>
    %cst = arith.constant dense<0.000000e+00> : vector<8x128xf32>
    %3 = tpu.matmul %1, %2, %cst {dimension_numbers = #tpu.dot_dimension_numbers<[1], [0], [0], [1], [0, 0, 1, 1], [], []>} : vector<8x1433xbf16>, vector<1433x128xbf16>, vector<8x128xf32> -> vector<8x128xf32>
    %c0_3 = arith.constant 0 : index
    %c0_4 = arith.constant 0 : index
    %4 = vector.load %arg3[%c0_3, %c0_4] : memref<1x128xf32, #tpu.memory_space<vmem>>, vector<1x128xf32>
    %5 = vector.broadcast %4 : vector<1x128xf32> to vector<8x128xf32>
    %6 = arith.addf %3, %5 : vector<8x128xf32>
    %c0_5 = arith.constant 0 : index
    %c0_6 = arith.constant 0 : index
    %7 = vector.load %arg4[%c0_5, %c0_6] : memref<8x128xf32, #tpu.memory_space<vmem>>, vector<8x128xf32>
    tpu.vector_store %arg4[%c0_5, %c0_6], %6 {strides = array<i32>} : memref<8x128xf32, #tpu.memory_space<vmem>>, vector<8x128xf32>,
    return
  }
  func.func @transform_0(%arg0: i32) -> (i32, i32) {
    %c0_i32 = arith.constant 0 : i32
    %c0_i32_0 = arith.constant 0 : i32
    return %arg0, %c0_i32 : i32, i32
  }
  func.func @transform_1(%arg0: i32) -> (i32, i32) {
    %c0_i32 = arith.constant 0 : i32
    %c0_i32_0 = arith.constant 0 : i32
    %c0_i32_1 = arith.constant 0 : i32
    return %c0_i32, %c0_i32_0 : i32, i32
  }
  func.func @transform_2(%arg0: i32) -> (i32, i32) {
    %c0_i32 = arith.constant 0 : i32
    %c0_i32_0 = arith.constant 0 : i32
    %c0_i32_1 = arith.constant 0 : i32
    return %c0_i32, %c0_i32_0 : i32, i32
  }
  func.func @transform_3(%arg0: i32) -> (i32, i32) {
    %c0_i32 = arith.constant 0 : i32
    %c0_i32_0 = arith.constant 0 : i32
    return %arg0, %c0_i32 : i32, i32
  }
}

module attributes {stable_mosaic.version = 11 : i64} {
  func.func @kernel(%arg0: i32, %arg1: memref<24x256xf32, #tpu.memory_space<vmem>>, %arg2: memref<24x8xf32, #tpu.memory_space<vmem>>, %arg3: memref<24x15xf32, #tpu.memory_space<vmem>>, %arg4: memref<256x128xbf16, #tpu.memory_space<vmem>>, %arg5: memref<8x128xbf16, #tpu.memory_space<vmem>>, %arg6: memref<5x128xbf16, #tpu.memory_space<vmem>>, %arg7: memref<128x128xbf16, #tpu.memory_space<vmem>>, %arg8: memref<2x128xbf16, #tpu.memory_space<vmem>>, %arg9: memref<128x128xbf16, #tpu.memory_space<vmem>>, %arg10: memref<2x128xbf16, #tpu.memory_space<vmem>>, %arg11: memref<40x128xf32, #tpu.memory_space<vmem>>, %arg12: memref<24x128xf32, #tpu.memory_space<vmem>>, %arg13: memref<24x6xf32, #tpu.memory_space<vmem>>) attributes {dimension_semantics = [#tpu.dimension_semantics<parallel>], iteration_bounds = array<i64: 2>, scalar_prefetch = 0 : i64, scratch_operands = 0 : i64, tpu.core_type = #tpu.core_type<tc>, window_params = [{transform_indices = @transform_0, window_bounds = array<i64: 24, 256>}, {transform_indices = @transform_1, window_bounds = array<i64: 24, 8>}, {transform_indices = @transform_2, window_bounds = array<i64: 24, 15>}, {pipeline_mode = #tpu.pipeline_mode<synchronous>, transform_indices = @transform_3, window_bounds = array<i64: 256, 128>}, {pipeline_mode = #tpu.pipeline_mode<synchronous>, transform_indices = @transform_4, window_bounds = array<i64: 8, 128>}, {pipeline_mode = #tpu.pipeline_mode<synchronous>, transform_indices = @transform_5, window_bounds = array<i64: 5, 128>}, {pipeline_mode = #tpu.pipeline_mode<synchronous>, transform_indices = @transform_6, window_bounds = array<i64: 128, 128>}, {pipeline_mode = #tpu.pipeline_mode<synchronous>, transform_indices = @transform_7, window_bounds = array<i64: 2, 128>}, {pipeline_mode = #tpu.pipeline_mode<synchronous>, transform_indices = @transform_8, window_bounds = array<i64: 128, 128>}, {pipeline_mode = #tpu.pipeline_mode<synchronous>, transform_indices = @transform_9, window_bounds = array<i64: 2, 128>}, {pipeline_mode = #tpu.pipeline_mode<synchronous>, transform_indices = @transform_10, window_bounds = array<i64: 40, 128>}, {transform_indices = @transform_11, window_bounds = array<i64: 24, 128>}, {transform_indices = @transform_12, window_bounds = array<i64: 24, 6>}]} {
    %c0 = arith.constant 0 : index
    %c0_0 = arith.constant 0 : index
    %0 = vector.load %arg3[%c0, %c0_0] : memref<24x15xf32, #tpu.memory_space<vmem>>, vector<24x15xf32>
    %c8 = arith.constant 8 : index
    %c0_1 = arith.constant 0 : index
    %1 = vector.load %arg11[%c8, %c0_1] : memref<40x128xf32, #tpu.memory_space<vmem>>, vector<1x5xf32>
    %c9 = arith.constant 9 : index
    %c0_2 = arith.constant 0 : index
    %2 = vector.load %arg11[%c9, %c0_2] : memref<40x128xf32, #tpu.memory_space<vmem>>, vector<1x5xf32>
    %c10 = arith.constant 10 : index
    %c0_3 = arith.constant 0 : index
    %3 = vector.load %arg11[%c10, %c0_3] : memref<40x128xf32, #tpu.memory_space<vmem>>, vector<1x5xf32>
    %c11 = arith.constant 11 : index
    %c0_4 = arith.constant 0 : index
    %4 = vector.load %arg11[%c11, %c0_4] : memref<40x128xf32, #tpu.memory_space<vmem>>, vector<1x5xf32>
    %c12 = arith.constant 12 : index
    %c0_5 = arith.constant 0 : index
    %5 = vector.load %arg11[%c12, %c0_5] : memref<40x128xf32, #tpu.memory_space<vmem>>, vector<1x5xf32>
    %6 = vector.extract_strided_slice %0 {offsets = [0, 0], sizes = [24, 1], strides = [1, 1]} : vector<24x15xf32> to vector<24x1xf32>
    %7 = vector.broadcast %6 : vector<24x1xf32> to vector<24x5xf32>
    %8 = vector.broadcast %1 : vector<1x5xf32> to vector<24x5xf32>
    %9 = arith.mulf %7, %8 : vector<24x5xf32>
    %10 = vector.extract_strided_slice %0 {offsets = [0, 1], sizes = [24, 1], strides = [1, 1]} : vector<24x15xf32> to vector<24x1xf32>
    %11 = vector.broadcast %10 : vector<24x1xf32> to vector<24x5xf32>
    %12 = vector.broadcast %2 : vector<1x5xf32> to vector<24x5xf32>
    %13 = arith.mulf %11, %12 : vector<24x5xf32>
    %14 = arith.addf %9, %13 : vector<24x5xf32>
    %15 = vector.extract_strided_slice %0 {offsets = [0, 2], sizes = [24, 1], strides = [1, 1]} : vector<24x15xf32> to vector<24x1xf32>
    %16 = vector.broadcast %15 : vector<24x1xf32> to vector<24x5xf32>
    %17 = vector.broadcast %3 : vector<1x5xf32> to vector<24x5xf32>
    %18 = arith.mulf %16, %17 : vector<24x5xf32>
    %19 = arith.addf %14, %18 : vector<24x5xf32>
    %20 = vector.extract_strided_slice %0 {offsets = [0, 3], sizes = [24, 1], strides = [1, 1]} : vector<24x15xf32> to vector<24x1xf32>
    %21 = vector.broadcast %20 : vector<24x1xf32> to vector<24x5xf32>
    %22 = vector.broadcast %4 : vector<1x5xf32> to vector<24x5xf32>
    %23 = arith.mulf %21, %22 : vector<24x5xf32>
    %24 = arith.addf %19, %23 : vector<24x5xf32>
    %25 = vector.extract_strided_slice %0 {offsets = [0, 4], sizes = [24, 1], strides = [1, 1]} : vector<24x15xf32> to vector<24x1xf32>
    %26 = vector.broadcast %25 : vector<24x1xf32> to vector<24x5xf32>
    %27 = vector.broadcast %5 : vector<1x5xf32> to vector<24x5xf32>
    %28 = arith.mulf %26, %27 : vector<24x5xf32>
    %29 = arith.addf %24, %28 : vector<24x5xf32>
    %30 = vector.extract_strided_slice %0 {offsets = [0, 5], sizes = [24, 1], strides = [1, 1]} : vector<24x15xf32> to vector<24x1xf32>
    %31 = vector.broadcast %30 : vector<24x1xf32> to vector<24x5xf32>
    %32 = vector.broadcast %1 : vector<1x5xf32> to vector<24x5xf32>
    %33 = arith.mulf %31, %32 : vector<24x5xf32>
    %34 = vector.extract_strided_slice %0 {offsets = [0, 6], sizes = [24, 1], strides = [1, 1]} : vector<24x15xf32> to vector<24x1xf32>
    %35 = vector.broadcast %34 : vector<24x1xf32> to vector<24x5xf32>
    %36 = vector.broadcast %2 : vector<1x5xf32> to vector<24x5xf32>
    %37 = arith.mulf %35, %36 : vector<24x5xf32>
    %38 = arith.addf %33, %37 : vector<24x5xf32>
    %39 = vector.extract_strided_slice %0 {offsets = [0, 7], sizes = [24, 1], strides = [1, 1]} : vector<24x15xf32> to vector<24x1xf32>
    %40 = vector.broadcast %39 : vector<24x1xf32> to vector<24x5xf32>
    %41 = vector.broadcast %3 : vector<1x5xf32> to vector<24x5xf32>
    %42 = arith.mulf %40, %41 : vector<24x5xf32>
    %43 = arith.addf %38, %42 : vector<24x5xf32>
    %44 = vector.extract_strided_slice %0 {offsets = [0, 8], sizes = [24, 1], strides = [1, 1]} : vector<24x15xf32> to vector<24x1xf32>
    %45 = vector.broadcast %44 : vector<24x1xf32> to vector<24x5xf32>
    %46 = vector.broadcast %4 : vector<1x5xf32> to vector<24x5xf32>
    %47 = arith.mulf %45, %46 : vector<24x5xf32>
    %48 = arith.addf %43, %47 : vector<24x5xf32>
    %49 = vector.extract_strided_slice %0 {offsets = [0, 9], sizes = [24, 1], strides = [1, 1]} : vector<24x15xf32> to vector<24x1xf32>
    %50 = vector.broadcast %49 : vector<24x1xf32> to vector<24x5xf32>
    %51 = vector.broadcast %5 : vector<1x5xf32> to vector<24x5xf32>
    %52 = arith.mulf %50, %51 : vector<24x5xf32>
    %53 = arith.addf %48, %52 : vector<24x5xf32>
    %54 = vector.extract_strided_slice %0 {offsets = [0, 10], sizes = [24, 1], strides = [1, 1]} : vector<24x15xf32> to vector<24x1xf32>
    %55 = vector.broadcast %54 : vector<24x1xf32> to vector<24x5xf32>
    %56 = vector.broadcast %1 : vector<1x5xf32> to vector<24x5xf32>
    %57 = arith.mulf %55, %56 : vector<24x5xf32>
    %58 = vector.extract_strided_slice %0 {offsets = [0, 11], sizes = [24, 1], strides = [1, 1]} : vector<24x15xf32> to vector<24x1xf32>
    %59 = vector.broadcast %58 : vector<24x1xf32> to vector<24x5xf32>
    %60 = vector.broadcast %2 : vector<1x5xf32> to vector<24x5xf32>
    %61 = arith.mulf %59, %60 : vector<24x5xf32>
    %62 = arith.addf %57, %61 : vector<24x5xf32>
    %63 = vector.extract_strided_slice %0 {offsets = [0, 12], sizes = [24, 1], strides = [1, 1]} : vector<24x15xf32> to vector<24x1xf32>
    %64 = vector.broadcast %63 : vector<24x1xf32> to vector<24x5xf32>
    %65 = vector.broadcast %3 : vector<1x5xf32> to vector<24x5xf32>
    %66 = arith.mulf %64, %65 : vector<24x5xf32>
    %67 = arith.addf %62, %66 : vector<24x5xf32>
    %68 = vector.extract_strided_slice %0 {offsets = [0, 13], sizes = [24, 1], strides = [1, 1]} : vector<24x15xf32> to vector<24x1xf32>
    %69 = vector.broadcast %68 : vector<24x1xf32> to vector<24x5xf32>
    %70 = vector.broadcast %4 : vector<1x5xf32> to vector<24x5xf32>
    %71 = arith.mulf %69, %70 : vector<24x5xf32>
    %72 = arith.addf %67, %71 : vector<24x5xf32>
    %73 = vector.extract_strided_slice %0 {offsets = [0, 14], sizes = [24, 1], strides = [1, 1]} : vector<24x15xf32> to vector<24x1xf32>
    %74 = vector.broadcast %73 : vector<24x1xf32> to vector<24x5xf32>
    %75 = vector.broadcast %5 : vector<1x5xf32> to vector<24x5xf32>
    %76 = arith.mulf %74, %75 : vector<24x5xf32>
    %77 = arith.addf %72, %76 : vector<24x5xf32>
    %78 = tpu.concatenate %29, %53, %77 in 1 : vector<24x5xf32>, vector<24x5xf32>, vector<24x5xf32> -> vector<24x15xf32>
    %79 = arith.mulf %78, %78 : vector<24x15xf32>
    %80 = vector.extract_strided_slice %79 {offsets = [0, 0], sizes = [24, 5], strides = [1, 1]} : vector<24x15xf32> to vector<24x5xf32>
    %81 = vector.extract_strided_slice %79 {offsets = [0, 5], sizes = [24, 5], strides = [1, 1]} : vector<24x15xf32> to vector<24x5xf32>
    %82 = arith.addf %80, %81 : vector<24x5xf32>
    %83 = vector.extract_strided_slice %79 {offsets = [0, 10], sizes = [24, 5], strides = [1, 1]} : vector<24x15xf32> to vector<24x5xf32>
    %84 = arith.addf %82, %83 : vector<24x5xf32>
    %cst = arith.constant 9.99999993E-9 : f32
    %85 = vector.broadcast %cst : f32 to vector<24x5xf32>
    %86 = arith.maximumf %84, %85 : vector<24x5xf32>
    %87 = math.sqrt %86 : vector<24x5xf32>
    %c0_6 = arith.constant 0 : index
    %c0_7 = arith.constant 0 : index
    %88 = vector.load %arg1[%c0_6, %c0_7] : memref<24x256xf32, #tpu.memory_space<vmem>>, vector<24x256xf32>
    %89 = arith.truncf %88 : vector<24x256xf32> to vector<24x256xbf16>
    %c0_8 = arith.constant 0 : index
    %c0_9 = arith.constant 0 : index
    %90 = vector.load %arg4[%c0_8, %c0_9] : memref<256x128xbf16, #tpu.memory_space<vmem>>, vector<256x128xbf16>
    %cst_10 = arith.constant dense<0.000000e+00> : vector<24x128xf32>
    %91 = tpu.matmul %89, %90, %cst_10 {dimension_numbers = #tpu.dot_dimension_numbers<[1], [0], [0], [1], [0, 0, 1, 1], [], []>} : vector<24x256xbf16>, vector<256x128xbf16>, vector<24x128xf32> -> vector<24x128xf32>
    %c0_11 = arith.constant 0 : index
    %c0_12 = arith.constant 0 : index
    %92 = vector.load %arg2[%c0_11, %c0_12] : memref<24x8xf32, #tpu.memory_space<vmem>>, vector<24x8xf32>
    %93 = arith.truncf %92 : vector<24x8xf32> to vector<24x8xbf16>
    %c0_13 = arith.constant 0 : index
    %c0_14 = arith.constant 0 : index
    %94 = vector.load %arg5[%c0_13, %c0_14] : memref<8x128xbf16, #tpu.memory_space<vmem>>, vector<8x128xbf16>
    %cst_15 = arith.constant dense<0.000000e+00> : vector<24x128xf32>
    %95 = tpu.matmul %93, %94, %cst_15 {dimension_numbers = #tpu.dot_dimension_numbers<[1], [0], [0], [1], [0, 0, 1, 1], [], []>} : vector<24x8xbf16>, vector<8x128xbf16>, vector<24x128xf32> -> vector<24x128xf32>
    %96 = arith.addf %91, %95 : vector<24x128xf32>
    %97 = arith.truncf %87 : vector<24x5xf32> to vector<24x5xbf16>
    %c0_16 = arith.constant 0 : index
    %c0_17 = arith.constant 0 : index
    %98 = vector.load %arg6[%c0_16, %c0_17] : memref<5x128xbf16, #tpu.memory_space<vmem>>, vector<5x128xbf16>
    %cst_18 = arith.constant dense<0.000000e+00> : vector<24x128xf32>
    %99 = tpu.matmul %97, %98, %cst_18 {dimension_numbers = #tpu.dot_dimension_numbers<[1], [0], [0], [1], [0, 0, 1, 1], [], []>} : vector<24x5xbf16>, vector<5x128xbf16>, vector<24x128xf32> -> vector<24x128xf32>
    %100 = arith.addf %96, %99 : vector<24x128xf32>
    %c0_19 = arith.constant 0 : index
    %c0_20 = arith.constant 0 : index
    %101 = vector.load %arg11[%c0_19, %c0_20] : memref<40x128xf32, #tpu.memory_space<vmem>>, vector<1x128xf32>
    %102 = vector.broadcast %101 : vector<1x128xf32> to vector<24x128xf32>
    %103 = arith.addf %100, %102 : vector<24x128xf32>
    %c16 = arith.constant 16 : index
    %c0_21 = arith.constant 0 : index
    %104 = vector.load %arg11[%c16, %c0_21] : memref<40x128xf32, #tpu.memory_space<vmem>>, vector<1x2xf32>
    %c17 = arith.constant 17 : index
    %c0_22 = arith.constant 0 : index
    %105 = vector.load %arg11[%c17, %c0_22] : memref<40x128xf32, #tpu.memory_space<vmem>>, vector<1x2xf32>
    %c18 = arith.constant 18 : index
    %c0_23 = arith.constant 0 : index
    %106 = vector.load %arg11[%c18, %c0_23] : memref<40x128xf32, #tpu.memory_space<vmem>>, vector<1x2xf32>
    %c19 = arith.constant 19 : index
    %c0_24 = arith.constant 0 : index
    %107 = vector.load %arg11[%c19, %c0_24] : memref<40x128xf32, #tpu.memory_space<vmem>>, vector<1x2xf32>
    %c20 = arith.constant 20 : index
    %c0_25 = arith.constant 0 : index
    %108 = vector.load %arg11[%c20, %c0_25] : memref<40x128xf32, #tpu.memory_space<vmem>>, vector<1x2xf32>
    %109 = vector.extract_strided_slice %78 {offsets = [0, 0], sizes = [24, 1], strides = [1, 1]} : vector<24x15xf32> to vector<24x1xf32>
    %110 = vector.broadcast %109 : vector<24x1xf32> to vector<24x2xf32>
    %111 = vector.broadcast %104 : vector<1x2xf32> to vector<24x2xf32>
    %112 = arith.mulf %110, %111 : vector<24x2xf32>
    %113 = vector.extract_strided_slice %78 {offsets = [0, 1], sizes = [24, 1], strides = [1, 1]} : vector<24x15xf32> to vector<24x1xf32>
    %114 = vector.broadcast %113 : vector<24x1xf32> to vector<24x2xf32>
    %115 = vector.broadcast %105 : vector<1x2xf32> to vector<24x2xf32>
    %116 = arith.mulf %114, %115 : vector<24x2xf32>
    %117 = arith.addf %112, %116 : vector<24x2xf32>
    %118 = vector.extract_strided_slice %78 {offsets = [0, 2], sizes = [24, 1], strides = [1, 1]} : vector<24x15xf32> to vector<24x1xf32>
    %119 = vector.broadcast %118 : vector<24x1xf32> to vector<24x2xf32>
    %120 = vector.broadcast %106 : vector<1x2xf32> to vector<24x2xf32>
    %121 = arith.mulf %119, %120 : vector<24x2xf32>
    %122 = arith.addf %117, %121 : vector<24x2xf32>
    %123 = vector.extract_strided_slice %78 {offsets = [0, 3], sizes = [24, 1], strides = [1, 1]} : vector<24x15xf32> to vector<24x1xf32>
    %124 = vector.broadcast %123 : vector<24x1xf32> to vector<24x2xf32>
    %125 = vector.broadcast %107 : vector<1x2xf32> to vector<24x2xf32>
    %126 = arith.mulf %124, %125 : vector<24x2xf32>
    %127 = arith.addf %122, %126 : vector<24x2xf32>
    %128 = vector.extract_strided_slice %78 {offsets = [0, 4], sizes = [24, 1], strides = [1, 1]} : vector<24x15xf32> to vector<24x1xf32>
    %129 = vector.broadcast %128 : vector<24x1xf32> to vector<24x2xf32>
    %130 = vector.broadcast %108 : vector<1x2xf32> to vector<24x2xf32>
    %131 = arith.mulf %129, %130 : vector<24x2xf32>
    %132 = arith.addf %127, %131 : vector<24x2xf32>
    %133 = vector.extract_strided_slice %78 {offsets = [0, 5], sizes = [24, 1], strides = [1, 1]} : vector<24x15xf32> to vector<24x1xf32>
    %134 = vector.broadcast %133 : vector<24x1xf32> to vector<24x2xf32>
    %135 = vector.broadcast %104 : vector<1x2xf32> to vector<24x2xf32>
    %136 = arith.mulf %134, %135 : vector<24x2xf32>
    %137 = vector.extract_strided_slice %78 {offsets = [0, 6], sizes = [24, 1], strides = [1, 1]} : vector<24x15xf32> to vector<24x1xf32>
    %138 = vector.broadcast %137 : vector<24x1xf32> to vector<24x2xf32>
    %139 = vector.broadcast %105 : vector<1x2xf32> to vector<24x2xf32>
    %140 = arith.mulf %138, %139 : vector<24x2xf32>
    %141 = arith.addf %136, %140 : vector<24x2xf32>
    %142 = vector.extract_strided_slice %78 {offsets = [0, 7], sizes = [24, 1], strides = [1, 1]} : vector<24x15xf32> to vector<24x1xf32>
    %143 = vector.broadcast %142 : vector<24x1xf32> to vector<24x2xf32>
    %144 = vector.broadcast %106 : vector<1x2xf32> to vector<24x2xf32>
    %145 = arith.mulf %143, %144 : vector<24x2xf32>
    %146 = arith.addf %141, %145 : vector<24x2xf32>
    %147 = vector.extract_strided_slice %78 {offsets = [0, 8], sizes = [24, 1], strides = [1, 1]} : vector<24x15xf32> to vector<24x1xf32>
    %148 = vector.broadcast %147 : vector<24x1xf32> to vector<24x2xf32>
    %149 = vector.broadcast %107 : vector<1x2xf32> to vector<24x2xf32>
    %150 = arith.mulf %148, %149 : vector<24x2xf32>
    %151 = arith.addf %146, %150 : vector<24x2xf32>
    %152 = vector.extract_strided_slice %78 {offsets = [0, 9], sizes = [24, 1], strides = [1, 1]} : vector<24x15xf32> to vector<24x1xf32>
    %153 = vector.broadcast %152 : vector<24x1xf32> to vector<24x2xf32>
    %154 = vector.broadcast %108 : vector<1x2xf32> to vector<24x2xf32>
    %155 = arith.mulf %153, %154 : vector<24x2xf32>
    %156 = arith.addf %151, %155 : vector<24x2xf32>
    %157 = vector.extract_strided_slice %78 {offsets = [0, 10], sizes = [24, 1], strides = [1, 1]} : vector<24x15xf32> to vector<24x1xf32>
    %158 = vector.broadcast %157 : vector<24x1xf32> to vector<24x2xf32>
    %159 = vector.broadcast %104 : vector<1x2xf32> to vector<24x2xf32>
    %160 = arith.mulf %158, %159 : vector<24x2xf32>
    %161 = vector.extract_strided_slice %78 {offsets = [0, 11], sizes = [24, 1], strides = [1, 1]} : vector<24x15xf32> to vector<24x1xf32>
    %162 = vector.broadcast %161 : vector<24x1xf32> to vector<24x2xf32>
    %163 = vector.broadcast %105 : vector<1x2xf32> to vector<24x2xf32>
    %164 = arith.mulf %162, %163 : vector<24x2xf32>
    %165 = arith.addf %160, %164 : vector<24x2xf32>
    %166 = vector.extract_strided_slice %78 {offsets = [0, 12], sizes = [24, 1], strides = [1, 1]} : vector<24x15xf32> to vector<24x1xf32>
    %167 = vector.broadcast %166 : vector<24x1xf32> to vector<24x2xf32>
    %168 = vector.broadcast %106 : vector<1x2xf32> to vector<24x2xf32>
    %169 = arith.mulf %167, %168 : vector<24x2xf32>
    %170 = arith.addf %165, %169 : vector<24x2xf32>
    %171 = vector.extract_strided_slice %78 {offsets = [0, 13], sizes = [24, 1], strides = [1, 1]} : vector<24x15xf32> to vector<24x1xf32>
    %172 = vector.broadcast %171 : vector<24x1xf32> to vector<24x2xf32>
    %173 = vector.broadcast %107 : vector<1x2xf32> to vector<24x2xf32>
    %174 = arith.mulf %172, %173 : vector<24x2xf32>
    %175 = arith.addf %170, %174 : vector<24x2xf32>
    %176 = vector.extract_strided_slice %78 {offsets = [0, 14], sizes = [24, 1], strides = [1, 1]} : vector<24x15xf32> to vector<24x1xf32>
    %177 = vector.broadcast %176 : vector<24x1xf32> to vector<24x2xf32>
    %178 = vector.broadcast %108 : vector<1x2xf32> to vector<24x2xf32>
    %179 = arith.mulf %177, %178 : vector<24x2xf32>
    %180 = arith.addf %175, %179 : vector<24x2xf32>
    %181 = tpu.concatenate %132, %156, %180 in 1 : vector<24x2xf32>, vector<24x2xf32>, vector<24x2xf32> -> vector<24x6xf32>
    %182 = arith.mulf %181, %181 : vector<24x6xf32>
    %183 = vector.extract_strided_slice %182 {offsets = [0, 0], sizes = [24, 2], strides = [1, 1]} : vector<24x6xf32> to vector<24x2xf32>
    %184 = vector.extract_strided_slice %182 {offsets = [0, 2], sizes = [24, 2], strides = [1, 1]} : vector<24x6xf32> to vector<24x2xf32>
    %185 = arith.addf %183, %184 : vector<24x2xf32>
    %186 = vector.extract_strided_slice %182 {offsets = [0, 4], sizes = [24, 2], strides = [1, 1]} : vector<24x6xf32> to vector<24x2xf32>
    %187 = arith.addf %185, %186 : vector<24x2xf32>
    %cst_26 = arith.constant 9.99999993E-9 : f32
    %188 = vector.broadcast %cst_26 : f32 to vector<24x2xf32>
    %189 = arith.maximumf %187, %188 : vector<24x2xf32>
    %190 = math.sqrt %189 : vector<24x2xf32>
    %191 = arith.negf %190 : vector<24x2xf32>
    %192 = math.exp %191 : vector<24x2xf32>
    %cst_27 = arith.constant 1.000000e+00 : f32
    %193 = vector.broadcast %cst_27 : f32 to vector<24x2xf32>
    %194 = arith.addf %193, %192 : vector<24x2xf32>
    %195 = arith.divf %193, %194 : vector<24x2xf32>
    %196 = tpu.concatenate %195, %195, %195 in 1 : vector<24x2xf32>, vector<24x2xf32>, vector<24x2xf32> -> vector<24x6xf32>
    %197 = arith.mulf %181, %196 : vector<24x6xf32>
    %cst_28 = arith.constant 0.000000e+00 : f32
    %198 = vector.broadcast %cst_28 : f32 to vector<24x128xf32>
    %199 = arith.maximumf %103, %198 : vector<24x128xf32>
    %c24 = arith.constant 24 : index
    %c0_29 = arith.constant 0 : index
    %200 = vector.load %arg11[%c24, %c0_29] : memref<40x128xf32, #tpu.memory_space<vmem>>, vector<1x2xf32>
    %c25 = arith.constant 25 : index
    %c0_30 = arith.constant 0 : index
    %201 = vector.load %arg11[%c25, %c0_30] : memref<40x128xf32, #tpu.memory_space<vmem>>, vector<1x2xf32>
    %202 = vector.extract_strided_slice %197 {offsets = [0, 0], sizes = [24, 1], strides = [1, 1]} : vector<24x6xf32> to vector<24x1xf32>
    %203 = vector.broadcast %202 : vector<24x1xf32> to vector<24x2xf32>
    %204 = vector.broadcast %200 : vector<1x2xf32> to vector<24x2xf32>
    %205 = arith.mulf %203, %204 : vector<24x2xf32>
    %206 = vector.extract_strided_slice %197 {offsets = [0, 1], sizes = [24, 1], strides = [1, 1]} : vector<24x6xf32> to vector<24x1xf32>
    %207 = vector.broadcast %206 : vector<24x1xf32> to vector<24x2xf32>
    %208 = vector.broadcast %201 : vector<1x2xf32> to vector<24x2xf32>
    %209 = arith.mulf %207, %208 : vector<24x2xf32>
    %210 = arith.addf %205, %209 : vector<24x2xf32>
    %211 = vector.extract_strided_slice %197 {offsets = [0, 2], sizes = [24, 1], strides = [1, 1]} : vector<24x6xf32> to vector<24x1xf32>
    %212 = vector.broadcast %211 : vector<24x1xf32> to vector<24x2xf32>
    %213 = vector.broadcast %200 : vector<1x2xf32> to vector<24x2xf32>
    %214 = arith.mulf %212, %213 : vector<24x2xf32>
    %215 = vector.extract_strided_slice %197 {offsets = [0, 3], sizes = [24, 1], strides = [1, 1]} : vector<24x6xf32> to vector<24x1xf32>
    %216 = vector.broadcast %215 : vector<24x1xf32> to vector<24x2xf32>
    %217 = vector.broadcast %201 : vector<1x2xf32> to vector<24x2xf32>
    %218 = arith.mulf %216, %217 : vector<24x2xf32>
    %219 = arith.addf %214, %218 : vector<24x2xf32>
    %220 = vector.extract_strided_slice %197 {offsets = [0, 4], sizes = [24, 1], strides = [1, 1]} : vector<24x6xf32> to vector<24x1xf32>
    %221 = vector.broadcast %220 : vector<24x1xf32> to vector<24x2xf32>
    %222 = vector.broadcast %200 : vector<1x2xf32> to vector<24x2xf32>
    %223 = arith.mulf %221, %222 : vector<24x2xf32>
    %224 = vector.extract_strided_slice %197 {offsets = [0, 5], sizes = [24, 1], strides = [1, 1]} : vector<24x6xf32> to vector<24x1xf32>
    %225 = vector.broadcast %224 : vector<24x1xf32> to vector<24x2xf32>
    %226 = vector.broadcast %201 : vector<1x2xf32> to vector<24x2xf32>
    %227 = arith.mulf %225, %226 : vector<24x2xf32>
    %228 = arith.addf %223, %227 : vector<24x2xf32>
    %229 = tpu.concatenate %210, %219, %228 in 1 : vector<24x2xf32>, vector<24x2xf32>, vector<24x2xf32> -> vector<24x6xf32>
    %230 = arith.mulf %229, %229 : vector<24x6xf32>
    %231 = vector.extract_strided_slice %230 {offsets = [0, 0], sizes = [24, 2], strides = [1, 1]} : vector<24x6xf32> to vector<24x2xf32>
    %232 = vector.extract_strided_slice %230 {offsets = [0, 2], sizes = [24, 2], strides = [1, 1]} : vector<24x6xf32> to vector<24x2xf32>
    %233 = arith.addf %231, %232 : vector<24x2xf32>
    %234 = vector.extract_strided_slice %230 {offsets = [0, 4], sizes = [24, 2], strides = [1, 1]} : vector<24x6xf32> to vector<24x2xf32>
    %235 = arith.addf %233, %234 : vector<24x2xf32>
    %cst_31 = arith.constant 9.99999993E-9 : f32
    %236 = vector.broadcast %cst_31 : f32 to vector<24x2xf32>
    %237 = arith.maximumf %235, %236 : vector<24x2xf32>
    %238 = math.sqrt %237 : vector<24x2xf32>
    %239 = arith.truncf %199 : vector<24x128xf32> to vector<24x128xbf16>
    %c0_32 = arith.constant 0 : index
    %c0_33 = arith.constant 0 : index
    %240 = vector.load %arg7[%c0_32, %c0_33] : memref<128x128xbf16, #tpu.memory_space<vmem>>, vector<128x128xbf16>
    %cst_34 = arith.constant dense<0.000000e+00> : vector<24x128xf32>
    %241 = tpu.matmul %239, %240, %cst_34 {dimension_numbers = #tpu.dot_dimension_numbers<[1], [0], [0], [1], [0, 0, 1, 1], [], []>} : vector<24x128xbf16>, vector<128x128xbf16>, vector<24x128xf32> -> vector<24x128xf32>
    %242 = arith.truncf %238 : vector<24x2xf32> to vector<24x2xbf16>
    %c0_35 = arith.constant 0 : index
    %c0_36 = arith.constant 0 : index
    %243 = vector.load %arg8[%c0_35, %c0_36] : memref<2x128xbf16, #tpu.memory_space<vmem>>, vector<2x128xbf16>
    %cst_37 = arith.constant dense<0.000000e+00> : vector<24x128xf32>
    %244 = tpu.matmul %242, %243, %cst_37 {dimension_numbers = #tpu.dot_dimension_numbers<[1], [0], [0], [1], [0, 0, 1, 1], [], []>} : vector<24x2xbf16>, vector<2x128xbf16>, vector<24x128xf32> -> vector<24x128xf32>
    %245 = arith.addf %241, %244 : vector<24x128xf32>
    %c1 = arith.constant 1 : index
    %c0_38 = arith.constant 0 : index
    %246 = vector.load %arg11[%c1, %c0_38] : memref<40x128xf32, #tpu.memory_space<vmem>>, vector<1x128xf32>
    %247 = vector.broadcast %246 : vector<1x128xf32> to vector<24x128xf32>
    %248 = arith.addf %245, %247 : vector<24x128xf32>
    %c28 = arith.constant 28 : index
    %c0_39 = arith.constant 0 : index
    %249 = vector.load %arg11[%c28, %c0_39] : memref<40x128xf32, #tpu.memory_space<vmem>>, vector<1x2xf32>
    %c29 = arith.constant 29 : index
    %c0_40 = arith.constant 0 : index
    %250 = vector.load %arg11[%c29, %c0_40] : memref<40x128xf32, #tpu.memory_space<vmem>>, vector<1x2xf32>
    %251 = vector.extract_strided_slice %229 {offsets = [0, 0], sizes = [24, 1], strides = [1, 1]} : vector<24x6xf32> to vector<24x1xf32>
    %252 = vector.broadcast %251 : vector<24x1xf32> to vector<24x2xf32>
    %253 = vector.broadcast %249 : vector<1x2xf32> to vector<24x2xf32>
    %254 = arith.mulf %252, %253 : vector<24x2xf32>
    %255 = vector.extract_strided_slice %229 {offsets = [0, 1], sizes = [24, 1], strides = [1, 1]} : vector<24x6xf32> to vector<24x1xf32>
    %256 = vector.broadcast %255 : vector<24x1xf32> to vector<24x2xf32>
    %257 = vector.broadcast %250 : vector<1x2xf32> to vector<24x2xf32>
    %258 = arith.mulf %256, %257 : vector<24x2xf32>
    %259 = arith.addf %254, %258 : vector<24x2xf32>
    %260 = vector.extract_strided_slice %229 {offsets = [0, 2], sizes = [24, 1], strides = [1, 1]} : vector<24x6xf32> to vector<24x1xf32>
    %261 = vector.broadcast %260 : vector<24x1xf32> to vector<24x2xf32>
    %262 = vector.broadcast %249 : vector<1x2xf32> to vector<24x2xf32>
    %263 = arith.mulf %261, %262 : vector<24x2xf32>
    %264 = vector.extract_strided_slice %229 {offsets = [0, 3], sizes = [24, 1], strides = [1, 1]} : vector<24x6xf32> to vector<24x1xf32>
    %265 = vector.broadcast %264 : vector<24x1xf32> to vector<24x2xf32>
    %266 = vector.broadcast %250 : vector<1x2xf32> to vector<24x2xf32>
    %267 = arith.mulf %265, %266 : vector<24x2xf32>
    %268 = arith.addf %263, %267 : vector<24x2xf32>
    %269 = vector.extract_strided_slice %229 {offsets = [0, 4], sizes = [24, 1], strides = [1, 1]} : vector<24x6xf32> to vector<24x1xf32>
    %270 = vector.broadcast %269 : vector<24x1xf32> to vector<24x2xf32>
    %271 = vector.broadcast %249 : vector<1x2xf32> to vector<24x2xf32>
    %272 = arith.mulf %270, %271 : vector<24x2xf32>
    %273 = vector.extract_strided_slice %229 {offsets = [0, 5], sizes = [24, 1], strides = [1, 1]} : vector<24x6xf32> to vector<24x1xf32>
    %274 = vector.broadcast %273 : vector<24x1xf32> to vector<24x2xf32>
    %275 = vector.broadcast %250 : vector<1x2xf32> to vector<24x2xf32>
    %276 = arith.mulf %274, %275 : vector<24x2xf32>
    %277 = arith.addf %272, %276 : vector<24x2xf32>
    %278 = tpu.concatenate %259, %268, %277 in 1 : vector<24x2xf32>, vector<24x2xf32>, vector<24x2xf32> -> vector<24x6xf32>
    %279 = arith.mulf %278, %278 : vector<24x6xf32>
    %280 = vector.extract_strided_slice %279 {offsets = [0, 0], sizes = [24, 2], strides = [1, 1]} : vector<24x6xf32> to vector<24x2xf32>
    %281 = vector.extract_strided_slice %279 {offsets = [0, 2], sizes = [24, 2], strides = [1, 1]} : vector<24x6xf32> to vector<24x2xf32>
    %282 = arith.addf %280, %281 : vector<24x2xf32>
    %283 = vector.extract_strided_slice %279 {offsets = [0, 4], sizes = [24, 2], strides = [1, 1]} : vector<24x6xf32> to vector<24x2xf32>
    %284 = arith.addf %282, %283 : vector<24x2xf32>
    %cst_41 = arith.constant 9.99999993E-9 : f32
    %285 = vector.broadcast %cst_41 : f32 to vector<24x2xf32>
    %286 = arith.maximumf %284, %285 : vector<24x2xf32>
    %287 = math.sqrt %286 : vector<24x2xf32>
    %288 = arith.negf %287 : vector<24x2xf32>
    %289 = math.exp %288 : vector<24x2xf32>
    %cst_42 = arith.constant 1.000000e+00 : f32
    %290 = vector.broadcast %cst_42 : f32 to vector<24x2xf32>
    %291 = arith.addf %290, %289 : vector<24x2xf32>
    %292 = arith.divf %290, %291 : vector<24x2xf32>
    %293 = tpu.concatenate %292, %292, %292 in 1 : vector<24x2xf32>, vector<24x2xf32>, vector<24x2xf32> -> vector<24x6xf32>
    %294 = arith.mulf %278, %293 : vector<24x6xf32>
    %cst_43 = arith.constant 0.000000e+00 : f32
    %295 = vector.broadcast %cst_43 : f32 to vector<24x128xf32>
    %296 = arith.maximumf %248, %295 : vector<24x128xf32>
    %c32 = arith.constant 32 : index
    %c0_44 = arith.constant 0 : index
    %297 = vector.load %arg11[%c32, %c0_44] : memref<40x128xf32, #tpu.memory_space<vmem>>, vector<1x2xf32>
    %c33 = arith.constant 33 : index
    %c0_45 = arith.constant 0 : index
    %298 = vector.load %arg11[%c33, %c0_45] : memref<40x128xf32, #tpu.memory_space<vmem>>, vector<1x2xf32>
    %299 = vector.extract_strided_slice %294 {offsets = [0, 0], sizes = [24, 1], strides = [1, 1]} : vector<24x6xf32> to vector<24x1xf32>
    %300 = vector.broadcast %299 : vector<24x1xf32> to vector<24x2xf32>
    %301 = vector.broadcast %297 : vector<1x2xf32> to vector<24x2xf32>
    %302 = arith.mulf %300, %301 : vector<24x2xf32>
    %303 = vector.extract_strided_slice %294 {offsets = [0, 1], sizes = [24, 1], strides = [1, 1]} : vector<24x6xf32> to vector<24x1xf32>
    %304 = vector.broadcast %303 : vector<24x1xf32> to vector<24x2xf32>
    %305 = vector.broadcast %298 : vector<1x2xf32> to vector<24x2xf32>
    %306 = arith.mulf %304, %305 : vector<24x2xf32>
    %307 = arith.addf %302, %306 : vector<24x2xf32>
    %308 = vector.extract_strided_slice %294 {offsets = [0, 2], sizes = [24, 1], strides = [1, 1]} : vector<24x6xf32> to vector<24x1xf32>
    %309 = vector.broadcast %308 : vector<24x1xf32> to vector<24x2xf32>
    %310 = vector.broadcast %297 : vector<1x2xf32> to vector<24x2xf32>
    %311 = arith.mulf %309, %310 : vector<24x2xf32>
    %312 = vector.extract_strided_slice %294 {offsets = [0, 3], sizes = [24, 1], strides = [1, 1]} : vector<24x6xf32> to vector<24x1xf32>
    %313 = vector.broadcast %312 : vector<24x1xf32> to vector<24x2xf32>
    %314 = vector.broadcast %298 : vector<1x2xf32> to vector<24x2xf32>
    %315 = arith.mulf %313, %314 : vector<24x2xf32>
    %316 = arith.addf %311, %315 : vector<24x2xf32>
    %317 = vector.extract_strided_slice %294 {offsets = [0, 4], sizes = [24, 1], strides = [1, 1]} : vector<24x6xf32> to vector<24x1xf32>
    %318 = vector.broadcast %317 : vector<24x1xf32> to vector<24x2xf32>
    %319 = vector.broadcast %297 : vector<1x2xf32> to vector<24x2xf32>
    %320 = arith.mulf %318, %319 : vector<24x2xf32>
    %321 = vector.extract_strided_slice %294 {offsets = [0, 5], sizes = [24, 1], strides = [1, 1]} : vector<24x6xf32> to vector<24x1xf32>
    %322 = vector.broadcast %321 : vector<24x1xf32> to vector<24x2xf32>
    %323 = vector.broadcast %298 : vector<1x2xf32> to vector<24x2xf32>
    %324 = arith.mulf %322, %323 : vector<24x2xf32>
    %325 = arith.addf %320, %324 : vector<24x2xf32>
    %326 = tpu.concatenate %307, %316, %325 in 1 : vector<24x2xf32>, vector<24x2xf32>, vector<24x2xf32> -> vector<24x6xf32>
    %327 = arith.mulf %326, %326 : vector<24x6xf32>
    %328 = vector.extract_strided_slice %327 {offsets = [0, 0], sizes = [24, 2], strides = [1, 1]} : vector<24x6xf32> to vector<24x2xf32>
    %329 = vector.extract_strided_slice %327 {offsets = [0, 2], sizes = [24, 2], strides = [1, 1]} : vector<24x6xf32> to vector<24x2xf32>
    %330 = arith.addf %328, %329 : vector<24x2xf32>
    %331 = vector.extract_strided_slice %327 {offsets = [0, 4], sizes = [24, 2], strides = [1, 1]} : vector<24x6xf32> to vector<24x2xf32>
    %332 = arith.addf %330, %331 : vector<24x2xf32>
    %cst_46 = arith.constant 9.99999993E-9 : f32
    %333 = vector.broadcast %cst_46 : f32 to vector<24x2xf32>
    %334 = arith.maximumf %332, %333 : vector<24x2xf32>
    %335 = math.sqrt %334 : vector<24x2xf32>
    %336 = arith.truncf %296 : vector<24x128xf32> to vector<24x128xbf16>
    %c0_47 = arith.constant 0 : index
    %c0_48 = arith.constant 0 : index
    %337 = vector.load %arg9[%c0_47, %c0_48] : memref<128x128xbf16, #tpu.memory_space<vmem>>, vector<128x128xbf16>
    %cst_49 = arith.constant dense<0.000000e+00> : vector<24x128xf32>
    %338 = tpu.matmul %336, %337, %cst_49 {dimension_numbers = #tpu.dot_dimension_numbers<[1], [0], [0], [1], [0, 0, 1, 1], [], []>} : vector<24x128xbf16>, vector<128x128xbf16>, vector<24x128xf32> -> vector<24x128xf32>
    %339 = arith.truncf %335 : vector<24x2xf32> to vector<24x2xbf16>
    %c0_50 = arith.constant 0 : index
    %c0_51 = arith.constant 0 : index
    %340 = vector.load %arg10[%c0_50, %c0_51] : memref<2x128xbf16, #tpu.memory_space<vmem>>, vector<2x128xbf16>
    %cst_52 = arith.constant dense<0.000000e+00> : vector<24x128xf32>
    %341 = tpu.matmul %339, %340, %cst_52 {dimension_numbers = #tpu.dot_dimension_numbers<[1], [0], [0], [1], [0, 0, 1, 1], [], []>} : vector<24x2xbf16>, vector<2x128xbf16>, vector<24x128xf32> -> vector<24x128xf32>
    %342 = arith.addf %338, %341 : vector<24x128xf32>
    %c2 = arith.constant 2 : index
    %c0_53 = arith.constant 0 : index
    %343 = vector.load %arg11[%c2, %c0_53] : memref<40x128xf32, #tpu.memory_space<vmem>>, vector<1x128xf32>
    %344 = vector.broadcast %343 : vector<1x128xf32> to vector<24x128xf32>
    %345 = arith.addf %342, %344 : vector<24x128xf32>
    %c36 = arith.constant 36 : index
    %c0_54 = arith.constant 0 : index
    %346 = vector.load %arg11[%c36, %c0_54] : memref<40x128xf32, #tpu.memory_space<vmem>>, vector<1x2xf32>
    %c37 = arith.constant 37 : index
    %c0_55 = arith.constant 0 : index
    %347 = vector.load %arg11[%c37, %c0_55] : memref<40x128xf32, #tpu.memory_space<vmem>>, vector<1x2xf32>
    %348 = vector.extract_strided_slice %326 {offsets = [0, 0], sizes = [24, 1], strides = [1, 1]} : vector<24x6xf32> to vector<24x1xf32>
    %349 = vector.broadcast %348 : vector<24x1xf32> to vector<24x2xf32>
    %350 = vector.broadcast %346 : vector<1x2xf32> to vector<24x2xf32>
    %351 = arith.mulf %349, %350 : vector<24x2xf32>
    %352 = vector.extract_strided_slice %326 {offsets = [0, 1], sizes = [24, 1], strides = [1, 1]} : vector<24x6xf32> to vector<24x1xf32>
    %353 = vector.broadcast %352 : vector<24x1xf32> to vector<24x2xf32>
    %354 = vector.broadcast %347 : vector<1x2xf32> to vector<24x2xf32>
    %355 = arith.mulf %353, %354 : vector<24x2xf32>
    %356 = arith.addf %351, %355 : vector<24x2xf32>
    %357 = vector.extract_strided_slice %326 {offsets = [0, 2], sizes = [24, 1], strides = [1, 1]} : vector<24x6xf32> to vector<24x1xf32>
    %358 = vector.broadcast %357 : vector<24x1xf32> to vector<24x2xf32>
    %359 = vector.broadcast %346 : vector<1x2xf32> to vector<24x2xf32>
    %360 = arith.mulf %358, %359 : vector<24x2xf32>
    %361 = vector.extract_strided_slice %326 {offsets = [0, 3], sizes = [24, 1], strides = [1, 1]} : vector<24x6xf32> to vector<24x1xf32>
    %362 = vector.broadcast %361 : vector<24x1xf32> to vector<24x2xf32>
    %363 = vector.broadcast %347 : vector<1x2xf32> to vector<24x2xf32>
    %364 = arith.mulf %362, %363 : vector<24x2xf32>
    %365 = arith.addf %360, %364 : vector<24x2xf32>
    %366 = vector.extract_strided_slice %326 {offsets = [0, 4], sizes = [24, 1], strides = [1, 1]} : vector<24x6xf32> to vector<24x1xf32>
    %367 = vector.broadcast %366 : vector<24x1xf32> to vector<24x2xf32>
    %368 = vector.broadcast %346 : vector<1x2xf32> to vector<24x2xf32>
    %369 = arith.mulf %367, %368 : vector<24x2xf32>
    %370 = vector.extract_strided_slice %326 {offsets = [0, 5], sizes = [24, 1], strides = [1, 1]} : vector<24x6xf32> to vector<24x1xf32>
    %371 = vector.broadcast %370 : vector<24x1xf32> to vector<24x2xf32>
    %372 = vector.broadcast %347 : vector<1x2xf32> to vector<24x2xf32>
    %373 = arith.mulf %371, %372 : vector<24x2xf32>
    %374 = arith.addf %369, %373 : vector<24x2xf32>
    %375 = tpu.concatenate %356, %365, %374 in 1 : vector<24x2xf32>, vector<24x2xf32>, vector<24x2xf32> -> vector<24x6xf32>
    %c0_56 = arith.constant 0 : index
    %c0_57 = arith.constant 0 : index
    %376 = vector.load %arg12[%c0_56, %c0_57] : memref<24x128xf32, #tpu.memory_space<vmem>>, vector<24x128xf32>
    tpu.vector_store %arg12[%c0_56, %c0_57], %345 {strides = array<i32>} : memref<24x128xf32, #tpu.memory_space<vmem>>, vector<24x128xf32>,
    %c0_58 = arith.constant 0 : index
    %c0_59 = arith.constant 0 : index
    %377 = vector.load %arg13[%c0_58, %c0_59] : memref<24x6xf32, #tpu.memory_space<vmem>>, vector<24x6xf32>
    tpu.vector_store %arg13[%c0_58, %c0_59], %375 {strides = array<i32>} : memref<24x6xf32, #tpu.memory_space<vmem>>, vector<24x6xf32>,
    return
  }
  func.func @transform_0(%arg0: i32) -> (i32, i32) {
    %c0_i32 = arith.constant 0 : i32
    %c0_i32_0 = arith.constant 0 : i32
    return %arg0, %c0_i32 : i32, i32
  }
  func.func @transform_1(%arg0: i32) -> (i32, i32) {
    %c0_i32 = arith.constant 0 : i32
    %c0_i32_0 = arith.constant 0 : i32
    return %arg0, %c0_i32 : i32, i32
  }
  func.func @transform_2(%arg0: i32) -> (i32, i32) {
    %c0_i32 = arith.constant 0 : i32
    %c0_i32_0 = arith.constant 0 : i32
    return %arg0, %c0_i32 : i32, i32
  }
  func.func @transform_3(%arg0: i32) -> (i32, i32) {
    %c0_i32 = arith.constant 0 : i32
    %c0_i32_0 = arith.constant 0 : i32
    %c0_i32_1 = arith.constant 0 : i32
    return %c0_i32, %c0_i32_0 : i32, i32
  }
  func.func @transform_4(%arg0: i32) -> (i32, i32) {
    %c0_i32 = arith.constant 0 : i32
    %c0_i32_0 = arith.constant 0 : i32
    %c0_i32_1 = arith.constant 0 : i32
    return %c0_i32, %c0_i32_0 : i32, i32
  }
  func.func @transform_5(%arg0: i32) -> (i32, i32) {
    %c0_i32 = arith.constant 0 : i32
    %c0_i32_0 = arith.constant 0 : i32
    %c0_i32_1 = arith.constant 0 : i32
    return %c0_i32, %c0_i32_0 : i32, i32
  }
  func.func @transform_6(%arg0: i32) -> (i32, i32) {
    %c0_i32 = arith.constant 0 : i32
    %c0_i32_0 = arith.constant 0 : i32
    %c0_i32_1 = arith.constant 0 : i32
    return %c0_i32, %c0_i32_0 : i32, i32
  }
  func.func @transform_7(%arg0: i32) -> (i32, i32) {
    %c0_i32 = arith.constant 0 : i32
    %c0_i32_0 = arith.constant 0 : i32
    %c0_i32_1 = arith.constant 0 : i32
    return %c0_i32, %c0_i32_0 : i32, i32
  }
  func.func @transform_8(%arg0: i32) -> (i32, i32) {
    %c0_i32 = arith.constant 0 : i32
    %c0_i32_0 = arith.constant 0 : i32
    %c0_i32_1 = arith.constant 0 : i32
    return %c0_i32, %c0_i32_0 : i32, i32
  }
  func.func @transform_9(%arg0: i32) -> (i32, i32) {
    %c0_i32 = arith.constant 0 : i32
    %c0_i32_0 = arith.constant 0 : i32
    %c0_i32_1 = arith.constant 0 : i32
    return %c0_i32, %c0_i32_0 : i32, i32
  }
  func.func @transform_10(%arg0: i32) -> (i32, i32) {
    %c0_i32 = arith.constant 0 : i32
    %c0_i32_0 = arith.constant 0 : i32
    %c0_i32_1 = arith.constant 0 : i32
    return %c0_i32, %c0_i32_0 : i32, i32
  }
  func.func @transform_11(%arg0: i32) -> (i32, i32) {
    %c0_i32 = arith.constant 0 : i32
    %c0_i32_0 = arith.constant 0 : i32
    return %arg0, %c0_i32 : i32, i32
  }
  func.func @transform_12(%arg0: i32) -> (i32, i32) {
    %c0_i32 = arith.constant 0 : i32
    %c0_i32_0 = arith.constant 0 : i32
    return %arg0, %c0_i32 : i32, i32
  }
}

module attributes {stable_mosaic.version = 11 : i64} {
  func.func @_node_kernel(%arg0: i32, %arg1: memref<8x128xf32, #tpu.memory_space<vmem>>, %arg2: memref<8x128xf32, #tpu.memory_space<vmem>>, %arg3: memref<8x6xf32, #tpu.memory_space<vmem>>, %arg4: memref<8x6xf32, #tpu.memory_space<vmem>>, %arg5: memref<128x512xbf16, #tpu.memory_space<vmem>>, %arg6: memref<4x512xbf16, #tpu.memory_space<vmem>>, %arg7: memref<512x128xbf16, #tpu.memory_space<vmem>>, %arg8: memref<4x128xbf16, #tpu.memory_space<vmem>>, %arg9: memref<24x512xf32, #tpu.memory_space<vmem>>, %arg10: memref<8x128xf32, #tpu.memory_space<vmem>>, %arg11: memref<8x6xf32, #tpu.memory_space<vmem>>) attributes {dimension_semantics = [#tpu.dimension_semantics<parallel>], iteration_bounds = array<i64: 2>, scalar_prefetch = 0 : i64, scratch_operands = 0 : i64, tpu.core_type = #tpu.core_type<tc>, window_params = [{transform_indices = @transform_0, window_bounds = array<i64: 8, 128>}, {transform_indices = @transform_1, window_bounds = array<i64: 8, 128>}, {transform_indices = @transform_2, window_bounds = array<i64: 8, 6>}, {transform_indices = @transform_3, window_bounds = array<i64: 8, 6>}, {pipeline_mode = #tpu.pipeline_mode<synchronous>, transform_indices = @transform_4, window_bounds = array<i64: 128, 512>}, {pipeline_mode = #tpu.pipeline_mode<synchronous>, transform_indices = @transform_5, window_bounds = array<i64: 4, 512>}, {pipeline_mode = #tpu.pipeline_mode<synchronous>, transform_indices = @transform_6, window_bounds = array<i64: 512, 128>}, {pipeline_mode = #tpu.pipeline_mode<synchronous>, transform_indices = @transform_7, window_bounds = array<i64: 4, 128>}, {pipeline_mode = #tpu.pipeline_mode<synchronous>, transform_indices = @transform_8, window_bounds = array<i64: 24, 512>}, {transform_indices = @transform_9, window_bounds = array<i64: 8, 128>}, {transform_indices = @transform_10, window_bounds = array<i64: 8, 6>}]} {
    %c0 = arith.constant 0 : index
    %c0_0 = arith.constant 0 : index
    %0 = vector.load %arg1[%c0, %c0_0] : memref<8x128xf32, #tpu.memory_space<vmem>>, vector<8x128xf32>
    %c0_1 = arith.constant 0 : index
    %c0_2 = arith.constant 0 : index
    %1 = vector.load %arg3[%c0_1, %c0_2] : memref<8x6xf32, #tpu.memory_space<vmem>>, vector<8x6xf32>
    %c0_3 = arith.constant 0 : index
    %c0_4 = arith.constant 0 : index
    %2 = vector.load %arg2[%c0_3, %c0_4] : memref<8x128xf32, #tpu.memory_space<vmem>>, vector<8x128xf32>
    %3 = arith.addf %0, %2 : vector<8x128xf32>
    %c0_5 = arith.constant 0 : index
    %c0_6 = arith.constant 0 : index
    %4 = vector.load %arg4[%c0_5, %c0_6] : memref<8x6xf32, #tpu.memory_space<vmem>>, vector<8x6xf32>
    %5 = arith.addf %1, %4 : vector<8x6xf32>
    %cst = arith.constant dense<0.000000e+00> : vector<8xf32>
    %6 = vector.multi_reduction <add>, %3, %cst [1] : vector<8x128xf32> to vector<8xf32>
    %7 = vector.shape_cast %6 : vector<8xf32> to vector<8x1xf32>
    %cst_7 = arith.constant 1.280000e+02 : f32
    %8 = vector.broadcast %cst_7 : f32 to vector<8x1xf32>
    %9 = arith.divf %7, %8 : vector<8x1xf32>
    %10 = vector.broadcast %9 : vector<8x1xf32> to vector<8x128xf32>
    %11 = arith.subf %3, %10 : vector<8x128xf32>
    %12 = arith.mulf %11, %11 : vector<8x128xf32>
    %cst_8 = arith.constant dense<0.000000e+00> : vector<8xf32>
    %13 = vector.multi_reduction <add>, %12, %cst_8 [1] : vector<8x128xf32> to vector<8xf32>
    %14 = vector.shape_cast %13 : vector<8xf32> to vector<8x1xf32>
    %cst_9 = arith.constant 1.280000e+02 : f32
    %15 = vector.broadcast %cst_9 : f32 to vector<8x1xf32>
    %16 = arith.divf %14, %15 : vector<8x1xf32>
    %cst_10 = arith.constant 9.99999974E-6 : f32
    %17 = vector.broadcast %cst_10 : f32 to vector<8x1xf32>
    %18 = arith.addf %16, %17 : vector<8x1xf32>
    %19 = math.rsqrt %18 : vector<8x1xf32>
    %20 = vector.broadcast %19 : vector<8x1xf32> to vector<8x128xf32>
    %21 = arith.mulf %11, %20 : vector<8x128xf32>
    %c1 = arith.constant 1 : index
    %c0_11 = arith.constant 0 : index
    %22 = vector.load %arg9[%c1, %c0_11] : memref<24x512xf32, #tpu.memory_space<vmem>>, vector<1x128xf32>
    %23 = vector.broadcast %22 : vector<1x128xf32> to vector<8x128xf32>
    %24 = arith.mulf %21, %23 : vector<8x128xf32>
    %c2 = arith.constant 2 : index
    %c0_12 = arith.constant 0 : index
    %25 = vector.load %arg9[%c2, %c0_12] : memref<24x512xf32, #tpu.memory_space<vmem>>, vector<1x128xf32>
    %26 = vector.broadcast %25 : vector<1x128xf32> to vector<8x128xf32>
    %27 = arith.addf %24, %26 : vector<8x128xf32>
    %28 = arith.mulf %5, %5 : vector<8x6xf32>
    %29 = vector.extract_strided_slice %28 {offsets = [0, 0], sizes = [8, 2], strides = [1, 1]} : vector<8x6xf32> to vector<8x2xf32>
    %30 = vector.extract_strided_slice %28 {offsets = [0, 2], sizes = [8, 2], strides = [1, 1]} : vector<8x6xf32> to vector<8x2xf32>
    %31 = arith.addf %29, %30 : vector<8x2xf32>
    %32 = vector.extract_strided_slice %28 {offsets = [0, 4], sizes = [8, 2], strides = [1, 1]} : vector<8x6xf32> to vector<8x2xf32>
    %33 = arith.addf %31, %32 : vector<8x2xf32>
    %cst_13 = arith.constant 9.99999993E-9 : f32
    %34 = vector.broadcast %cst_13 : f32 to vector<8x2xf32>
    %35 = arith.maximumf %33, %34 : vector<8x2xf32>
    %cst_14 = arith.constant dense<0.000000e+00> : vector<8xf32>
    %36 = vector.multi_reduction <add>, %35, %cst_14 [1] : vector<8x2xf32> to vector<8xf32>
    %37 = vector.shape_cast %36 : vector<8xf32> to vector<8x1xf32>
    %cst_15 = arith.constant 2.000000e+00 : f32
    %38 = vector.broadcast %cst_15 : f32 to vector<8x1xf32>
    %39 = arith.divf %37, %38 : vector<8x1xf32>
    %40 = math.rsqrt %39 : vector<8x1xf32>
    %41 = vector.broadcast %40 : vector<8x1xf32> to vector<8x6xf32>
    %42 = arith.mulf %5, %41 : vector<8x6xf32>
    %c8 = arith.constant 8 : index
    %c0_16 = arith.constant 0 : index
    %43 = vector.load %arg9[%c8, %c0_16] : memref<24x512xf32, #tpu.memory_space<vmem>>, vector<1x4xf32>
    %c9 = arith.constant 9 : index
    %c0_17 = arith.constant 0 : index
    %44 = vector.load %arg9[%c9, %c0_17] : memref<24x512xf32, #tpu.memory_space<vmem>>, vector<1x4xf32>
    %45 = vector.extract_strided_slice %42 {offsets = [0, 0], sizes = [8, 1], strides = [1, 1]} : vector<8x6xf32> to vector<8x1xf32>
    %46 = vector.broadcast %45 : vector<8x1xf32> to vector<8x4xf32>
    %47 = vector.broadcast %43 : vector<1x4xf32> to vector<8x4xf32>
    %48 = arith.mulf %46, %47 : vector<8x4xf32>
    %49 = vector.extract_strided_slice %42 {offsets = [0, 1], sizes = [8, 1], strides = [1, 1]} : vector<8x6xf32> to vector<8x1xf32>
    %50 = vector.broadcast %49 : vector<8x1xf32> to vector<8x4xf32>
    %51 = vector.broadcast %44 : vector<1x4xf32> to vector<8x4xf32>
    %52 = arith.mulf %50, %51 : vector<8x4xf32>
    %53 = arith.addf %48, %52 : vector<8x4xf32>
    %54 = vector.extract_strided_slice %42 {offsets = [0, 2], sizes = [8, 1], strides = [1, 1]} : vector<8x6xf32> to vector<8x1xf32>
    %55 = vector.broadcast %54 : vector<8x1xf32> to vector<8x4xf32>
    %56 = vector.broadcast %43 : vector<1x4xf32> to vector<8x4xf32>
    %57 = arith.mulf %55, %56 : vector<8x4xf32>
    %58 = vector.extract_strided_slice %42 {offsets = [0, 3], sizes = [8, 1], strides = [1, 1]} : vector<8x6xf32> to vector<8x1xf32>
    %59 = vector.broadcast %58 : vector<8x1xf32> to vector<8x4xf32>
    %60 = vector.broadcast %44 : vector<1x4xf32> to vector<8x4xf32>
    %61 = arith.mulf %59, %60 : vector<8x4xf32>
    %62 = arith.addf %57, %61 : vector<8x4xf32>
    %63 = vector.extract_strided_slice %42 {offsets = [0, 4], sizes = [8, 1], strides = [1, 1]} : vector<8x6xf32> to vector<8x1xf32>
    %64 = vector.broadcast %63 : vector<8x1xf32> to vector<8x4xf32>
    %65 = vector.broadcast %43 : vector<1x4xf32> to vector<8x4xf32>
    %66 = arith.mulf %64, %65 : vector<8x4xf32>
    %67 = vector.extract_strided_slice %42 {offsets = [0, 5], sizes = [8, 1], strides = [1, 1]} : vector<8x6xf32> to vector<8x1xf32>
    %68 = vector.broadcast %67 : vector<8x1xf32> to vector<8x4xf32>
    %69 = vector.broadcast %44 : vector<1x4xf32> to vector<8x4xf32>
    %70 = arith.mulf %68, %69 : vector<8x4xf32>
    %71 = arith.addf %66, %70 : vector<8x4xf32>
    %72 = tpu.concatenate %53, %62, %71 in 1 : vector<8x4xf32>, vector<8x4xf32>, vector<8x4xf32> -> vector<8x12xf32>
    %73 = arith.mulf %72, %72 : vector<8x12xf32>
    %74 = vector.extract_strided_slice %73 {offsets = [0, 0], sizes = [8, 4], strides = [1, 1]} : vector<8x12xf32> to vector<8x4xf32>
    %75 = vector.extract_strided_slice %73 {offsets = [0, 4], sizes = [8, 4], strides = [1, 1]} : vector<8x12xf32> to vector<8x4xf32>
    %76 = arith.addf %74, %75 : vector<8x4xf32>
    %77 = vector.extract_strided_slice %73 {offsets = [0, 8], sizes = [8, 4], strides = [1, 1]} : vector<8x12xf32> to vector<8x4xf32>
    %78 = arith.addf %76, %77 : vector<8x4xf32>
    %cst_18 = arith.constant 9.99999993E-9 : f32
    %79 = vector.broadcast %cst_18 : f32 to vector<8x4xf32>
    %80 = arith.maximumf %78, %79 : vector<8x4xf32>
    %81 = math.sqrt %80 : vector<8x4xf32>
    %82 = arith.truncf %27 : vector<8x128xf32> to vector<8x128xbf16>
    %c0_19 = arith.constant 0 : index
    %c0_20 = arith.constant 0 : index
    %83 = vector.load %arg5[%c0_19, %c0_20] : memref<128x512xbf16, #tpu.memory_space<vmem>>, vector<128x512xbf16>
    %cst_21 = arith.constant dense<0.000000e+00> : vector<8x512xf32>
    %84 = tpu.matmul %82, %83, %cst_21 {dimension_numbers = #tpu.dot_dimension_numbers<[1], [0], [0], [1], [0, 0, 1, 1], [], []>} : vector<8x128xbf16>, vector<128x512xbf16>, vector<8x512xf32> -> vector<8x512xf32>
    %85 = arith.truncf %81 : vector<8x4xf32> to vector<8x4xbf16>
    %c0_22 = arith.constant 0 : index
    %c0_23 = arith.constant 0 : index
    %86 = vector.load %arg6[%c0_22, %c0_23] : memref<4x512xbf16, #tpu.memory_space<vmem>>, vector<4x512xbf16>
    %cst_24 = arith.constant dense<0.000000e+00> : vector<8x512xf32>
    %87 = tpu.matmul %85, %86, %cst_24 {dimension_numbers = #tpu.dot_dimension_numbers<[1], [0], [0], [1], [0, 0, 1, 1], [], []>} : vector<8x4xbf16>, vector<4x512xbf16>, vector<8x512xf32> -> vector<8x512xf32>
    %88 = arith.addf %84, %87 : vector<8x512xf32>
    %c0_25 = arith.constant 0 : index
    %c0_26 = arith.constant 0 : index
    %89 = vector.load %arg9[%c0_25, %c0_26] : memref<24x512xf32, #tpu.memory_space<vmem>>, vector<1x512xf32>
    %90 = vector.broadcast %89 : vector<1x512xf32> to vector<8x512xf32>
    %91 = arith.addf %88, %90 : vector<8x512xf32>
    %c12 = arith.constant 12 : index
    %c0_27 = arith.constant 0 : index
    %92 = vector.load %arg9[%c12, %c0_27] : memref<24x512xf32, #tpu.memory_space<vmem>>, vector<1x4xf32>
    %c13 = arith.constant 13 : index
    %c0_28 = arith.constant 0 : index
    %93 = vector.load %arg9[%c13, %c0_28] : memref<24x512xf32, #tpu.memory_space<vmem>>, vector<1x4xf32>
    %c14 = arith.constant 14 : index
    %c0_29 = arith.constant 0 : index
    %94 = vector.load %arg9[%c14, %c0_29] : memref<24x512xf32, #tpu.memory_space<vmem>>, vector<1x4xf32>
    %c15 = arith.constant 15 : index
    %c0_30 = arith.constant 0 : index
    %95 = vector.load %arg9[%c15, %c0_30] : memref<24x512xf32, #tpu.memory_space<vmem>>, vector<1x4xf32>
    %96 = vector.extract_strided_slice %72 {offsets = [0, 0], sizes = [8, 1], strides = [1, 1]} : vector<8x12xf32> to vector<8x1xf32>
    %97 = vector.broadcast %96 : vector<8x1xf32> to vector<8x4xf32>
    %98 = vector.broadcast %92 : vector<1x4xf32> to vector<8x4xf32>
    %99 = arith.mulf %97, %98 : vector<8x4xf32>
    %100 = vector.extract_strided_slice %72 {offsets = [0, 1], sizes = [8, 1], strides = [1, 1]} : vector<8x12xf32> to vector<8x1xf32>
    %101 = vector.broadcast %100 : vector<8x1xf32> to vector<8x4xf32>
    %102 = vector.broadcast %93 : vector<1x4xf32> to vector<8x4xf32>
    %103 = arith.mulf %101, %102 : vector<8x4xf32>
    %104 = arith.addf %99, %103 : vector<8x4xf32>
    %105 = vector.extract_strided_slice %72 {offsets = [0, 2], sizes = [8, 1], strides = [1, 1]} : vector<8x12xf32> to vector<8x1xf32>
    %106 = vector.broadcast %105 : vector<8x1xf32> to vector<8x4xf32>
    %107 = vector.broadcast %94 : vector<1x4xf32> to vector<8x4xf32>
    %108 = arith.mulf %106, %107 : vector<8x4xf32>
    %109 = arith.addf %104, %108 : vector<8x4xf32>
    %110 = vector.extract_strided_slice %72 {offsets = [0, 3], sizes = [8, 1], strides = [1, 1]} : vector<8x12xf32> to vector<8x1xf32>
    %111 = vector.broadcast %110 : vector<8x1xf32> to vector<8x4xf32>
    %112 = vector.broadcast %95 : vector<1x4xf32> to vector<8x4xf32>
    %113 = arith.mulf %111, %112 : vector<8x4xf32>
    %114 = arith.addf %109, %113 : vector<8x4xf32>
    %115 = vector.extract_strided_slice %72 {offsets = [0, 4], sizes = [8, 1], strides = [1, 1]} : vector<8x12xf32> to vector<8x1xf32>
    %116 = vector.broadcast %115 : vector<8x1xf32> to vector<8x4xf32>
    %117 = vector.broadcast %92 : vector<1x4xf32> to vector<8x4xf32>
    %118 = arith.mulf %116, %117 : vector<8x4xf32>
    %119 = vector.extract_strided_slice %72 {offsets = [0, 5], sizes = [8, 1], strides = [1, 1]} : vector<8x12xf32> to vector<8x1xf32>
    %120 = vector.broadcast %119 : vector<8x1xf32> to vector<8x4xf32>
    %121 = vector.broadcast %93 : vector<1x4xf32> to vector<8x4xf32>
    %122 = arith.mulf %120, %121 : vector<8x4xf32>
    %123 = arith.addf %118, %122 : vector<8x4xf32>
    %124 = vector.extract_strided_slice %72 {offsets = [0, 6], sizes = [8, 1], strides = [1, 1]} : vector<8x12xf32> to vector<8x1xf32>
    %125 = vector.broadcast %124 : vector<8x1xf32> to vector<8x4xf32>
    %126 = vector.broadcast %94 : vector<1x4xf32> to vector<8x4xf32>
    %127 = arith.mulf %125, %126 : vector<8x4xf32>
    %128 = arith.addf %123, %127 : vector<8x4xf32>
    %129 = vector.extract_strided_slice %72 {offsets = [0, 7], sizes = [8, 1], strides = [1, 1]} : vector<8x12xf32> to vector<8x1xf32>
    %130 = vector.broadcast %129 : vector<8x1xf32> to vector<8x4xf32>
    %131 = vector.broadcast %95 : vector<1x4xf32> to vector<8x4xf32>
    %132 = arith.mulf %130, %131 : vector<8x4xf32>
    %133 = arith.addf %128, %132 : vector<8x4xf32>
    %134 = vector.extract_strided_slice %72 {offsets = [0, 8], sizes = [8, 1], strides = [1, 1]} : vector<8x12xf32> to vector<8x1xf32>
    %135 = vector.broadcast %134 : vector<8x1xf32> to vector<8x4xf32>
    %136 = vector.broadcast %92 : vector<1x4xf32> to vector<8x4xf32>
    %137 = arith.mulf %135, %136 : vector<8x4xf32>
    %138 = vector.extract_strided_slice %72 {offsets = [0, 9], sizes = [8, 1], strides = [1, 1]} : vector<8x12xf32> to vector<8x1xf32>
    %139 = vector.broadcast %138 : vector<8x1xf32> to vector<8x4xf32>
    %140 = vector.broadcast %93 : vector<1x4xf32> to vector<8x4xf32>
    %141 = arith.mulf %139, %140 : vector<8x4xf32>
    %142 = arith.addf %137, %141 : vector<8x4xf32>
    %143 = vector.extract_strided_slice %72 {offsets = [0, 10], sizes = [8, 1], strides = [1, 1]} : vector<8x12xf32> to vector<8x1xf32>
    %144 = vector.broadcast %143 : vector<8x1xf32> to vector<8x4xf32>
    %145 = vector.broadcast %94 : vector<1x4xf32> to vector<8x4xf32>
    %146 = arith.mulf %144, %145 : vector<8x4xf32>
    %147 = arith.addf %142, %146 : vector<8x4xf32>
    %148 = vector.extract_strided_slice %72 {offsets = [0, 11], sizes = [8, 1], strides = [1, 1]} : vector<8x12xf32> to vector<8x1xf32>
    %149 = vector.broadcast %148 : vector<8x1xf32> to vector<8x4xf32>
    %150 = vector.broadcast %95 : vector<1x4xf32> to vector<8x4xf32>
    %151 = arith.mulf %149, %150 : vector<8x4xf32>
    %152 = arith.addf %147, %151 : vector<8x4xf32>
    %153 = tpu.concatenate %114, %133, %152 in 1 : vector<8x4xf32>, vector<8x4xf32>, vector<8x4xf32> -> vector<8x12xf32>
    %154 = arith.mulf %153, %153 : vector<8x12xf32>
    %155 = vector.extract_strided_slice %154 {offsets = [0, 0], sizes = [8, 4], strides = [1, 1]} : vector<8x12xf32> to vector<8x4xf32>
    %156 = vector.extract_strided_slice %154 {offsets = [0, 4], sizes = [8, 4], strides = [1, 1]} : vector<8x12xf32> to vector<8x4xf32>
    %157 = arith.addf %155, %156 : vector<8x4xf32>
    %158 = vector.extract_strided_slice %154 {offsets = [0, 8], sizes = [8, 4], strides = [1, 1]} : vector<8x12xf32> to vector<8x4xf32>
    %159 = arith.addf %157, %158 : vector<8x4xf32>
    %cst_31 = arith.constant 9.99999993E-9 : f32
    %160 = vector.broadcast %cst_31 : f32 to vector<8x4xf32>
    %161 = arith.maximumf %159, %160 : vector<8x4xf32>
    %162 = math.sqrt %161 : vector<8x4xf32>
    %163 = arith.negf %162 : vector<8x4xf32>
    %164 = math.exp %163 : vector<8x4xf32>
    %cst_32 = arith.constant 1.000000e+00 : f32
    %165 = vector.broadcast %cst_32 : f32 to vector<8x4xf32>
    %166 = arith.addf %165, %164 : vector<8x4xf32>
    %167 = arith.divf %165, %166 : vector<8x4xf32>
    %168 = tpu.concatenate %167, %167, %167 in 1 : vector<8x4xf32>, vector<8x4xf32>, vector<8x4xf32> -> vector<8x12xf32>
    %169 = arith.mulf %153, %168 : vector<8x12xf32>
    %cst_33 = arith.constant 0.000000e+00 : f32
    %170 = vector.broadcast %cst_33 : f32 to vector<8x512xf32>
    %171 = arith.maximumf %91, %170 : vector<8x512xf32>
    %c16 = arith.constant 16 : index
    %c0_34 = arith.constant 0 : index
    %172 = vector.load %arg9[%c16, %c0_34] : memref<24x512xf32, #tpu.memory_space<vmem>>, vector<1x4xf32>
    %c17 = arith.constant 17 : index
    %c0_35 = arith.constant 0 : index
    %173 = vector.load %arg9[%c17, %c0_35] : memref<24x512xf32, #tpu.memory_space<vmem>>, vector<1x4xf32>
    %c18 = arith.constant 18 : index
    %c0_36 = arith.constant 0 : index
    %174 = vector.load %arg9[%c18, %c0_36] : memref<24x512xf32, #tpu.memory_space<vmem>>, vector<1x4xf32>
    %c19 = arith.constant 19 : index
    %c0_37 = arith.constant 0 : index
    %175 = vector.load %arg9[%c19, %c0_37] : memref<24x512xf32, #tpu.memory_space<vmem>>, vector<1x4xf32>
    %176 = vector.extract_strided_slice %169 {offsets = [0, 0], sizes = [8, 1], strides = [1, 1]} : vector<8x12xf32> to vector<8x1xf32>
    %177 = vector.broadcast %176 : vector<8x1xf32> to vector<8x4xf32>
    %178 = vector.broadcast %172 : vector<1x4xf32> to vector<8x4xf32>
    %179 = arith.mulf %177, %178 : vector<8x4xf32>
    %180 = vector.extract_strided_slice %169 {offsets = [0, 1], sizes = [8, 1], strides = [1, 1]} : vector<8x12xf32> to vector<8x1xf32>
    %181 = vector.broadcast %180 : vector<8x1xf32> to vector<8x4xf32>
    %182 = vector.broadcast %173 : vector<1x4xf32> to vector<8x4xf32>
    %183 = arith.mulf %181, %182 : vector<8x4xf32>
    %184 = arith.addf %179, %183 : vector<8x4xf32>
    %185 = vector.extract_strided_slice %169 {offsets = [0, 2], sizes = [8, 1], strides = [1, 1]} : vector<8x12xf32> to vector<8x1xf32>
    %186 = vector.broadcast %185 : vector<8x1xf32> to vector<8x4xf32>
    %187 = vector.broadcast %174 : vector<1x4xf32> to vector<8x4xf32>
    %188 = arith.mulf %186, %187 : vector<8x4xf32>
    %189 = arith.addf %184, %188 : vector<8x4xf32>
    %190 = vector.extract_strided_slice %169 {offsets = [0, 3], sizes = [8, 1], strides = [1, 1]} : vector<8x12xf32> to vector<8x1xf32>
    %191 = vector.broadcast %190 : vector<8x1xf32> to vector<8x4xf32>
    %192 = vector.broadcast %175 : vector<1x4xf32> to vector<8x4xf32>
    %193 = arith.mulf %191, %192 : vector<8x4xf32>
    %194 = arith.addf %189, %193 : vector<8x4xf32>
    %195 = vector.extract_strided_slice %169 {offsets = [0, 4], sizes = [8, 1], strides = [1, 1]} : vector<8x12xf32> to vector<8x1xf32>
    %196 = vector.broadcast %195 : vector<8x1xf32> to vector<8x4xf32>
    %197 = vector.broadcast %172 : vector<1x4xf32> to vector<8x4xf32>
    %198 = arith.mulf %196, %197 : vector<8x4xf32>
    %199 = vector.extract_strided_slice %169 {offsets = [0, 5], sizes = [8, 1], strides = [1, 1]} : vector<8x12xf32> to vector<8x1xf32>
    %200 = vector.broadcast %199 : vector<8x1xf32> to vector<8x4xf32>
    %201 = vector.broadcast %173 : vector<1x4xf32> to vector<8x4xf32>
    %202 = arith.mulf %200, %201 : vector<8x4xf32>
    %203 = arith.addf %198, %202 : vector<8x4xf32>
    %204 = vector.extract_strided_slice %169 {offsets = [0, 6], sizes = [8, 1], strides = [1, 1]} : vector<8x12xf32> to vector<8x1xf32>
    %205 = vector.broadcast %204 : vector<8x1xf32> to vector<8x4xf32>
    %206 = vector.broadcast %174 : vector<1x4xf32> to vector<8x4xf32>
    %207 = arith.mulf %205, %206 : vector<8x4xf32>
    %208 = arith.addf %203, %207 : vector<8x4xf32>
    %209 = vector.extract_strided_slice %169 {offsets = [0, 7], sizes = [8, 1], strides = [1, 1]} : vector<8x12xf32> to vector<8x1xf32>
    %210 = vector.broadcast %209 : vector<8x1xf32> to vector<8x4xf32>
    %211 = vector.broadcast %175 : vector<1x4xf32> to vector<8x4xf32>
    %212 = arith.mulf %210, %211 : vector<8x4xf32>
    %213 = arith.addf %208, %212 : vector<8x4xf32>
    %214 = vector.extract_strided_slice %169 {offsets = [0, 8], sizes = [8, 1], strides = [1, 1]} : vector<8x12xf32> to vector<8x1xf32>
    %215 = vector.broadcast %214 : vector<8x1xf32> to vector<8x4xf32>
    %216 = vector.broadcast %172 : vector<1x4xf32> to vector<8x4xf32>
    %217 = arith.mulf %215, %216 : vector<8x4xf32>
    %218 = vector.extract_strided_slice %169 {offsets = [0, 9], sizes = [8, 1], strides = [1, 1]} : vector<8x12xf32> to vector<8x1xf32>
    %219 = vector.broadcast %218 : vector<8x1xf32> to vector<8x4xf32>
    %220 = vector.broadcast %173 : vector<1x4xf32> to vector<8x4xf32>
    %221 = arith.mulf %219, %220 : vector<8x4xf32>
    %222 = arith.addf %217, %221 : vector<8x4xf32>
    %223 = vector.extract_strided_slice %169 {offsets = [0, 10], sizes = [8, 1], strides = [1, 1]} : vector<8x12xf32> to vector<8x1xf32>
    %224 = vector.broadcast %223 : vector<8x1xf32> to vector<8x4xf32>
    %225 = vector.broadcast %174 : vector<1x4xf32> to vector<8x4xf32>
    %226 = arith.mulf %224, %225 : vector<8x4xf32>
    %227 = arith.addf %222, %226 : vector<8x4xf32>
    %228 = vector.extract_strided_slice %169 {offsets = [0, 11], sizes = [8, 1], strides = [1, 1]} : vector<8x12xf32> to vector<8x1xf32>
    %229 = vector.broadcast %228 : vector<8x1xf32> to vector<8x4xf32>
    %230 = vector.broadcast %175 : vector<1x4xf32> to vector<8x4xf32>
    %231 = arith.mulf %229, %230 : vector<8x4xf32>
    %232 = arith.addf %227, %231 : vector<8x4xf32>
    %233 = tpu.concatenate %194, %213, %232 in 1 : vector<8x4xf32>, vector<8x4xf32>, vector<8x4xf32> -> vector<8x12xf32>
    %234 = arith.mulf %233, %233 : vector<8x12xf32>
    %235 = vector.extract_strided_slice %234 {offsets = [0, 0], sizes = [8, 4], strides = [1, 1]} : vector<8x12xf32> to vector<8x4xf32>
    %236 = vector.extract_strided_slice %234 {offsets = [0, 4], sizes = [8, 4], strides = [1, 1]} : vector<8x12xf32> to vector<8x4xf32>
    %237 = arith.addf %235, %236 : vector<8x4xf32>
    %238 = vector.extract_strided_slice %234 {offsets = [0, 8], sizes = [8, 4], strides = [1, 1]} : vector<8x12xf32> to vector<8x4xf32>
    %239 = arith.addf %237, %238 : vector<8x4xf32>
    %cst_38 = arith.constant 9.99999993E-9 : f32
    %240 = vector.broadcast %cst_38 : f32 to vector<8x4xf32>
    %241 = arith.maximumf %239, %240 : vector<8x4xf32>
    %242 = math.sqrt %241 : vector<8x4xf32>
    %243 = arith.truncf %171 : vector<8x512xf32> to vector<8x512xbf16>
    %c0_39 = arith.constant 0 : index
    %c0_40 = arith.constant 0 : index
    %244 = vector.load %arg7[%c0_39, %c0_40] : memref<512x128xbf16, #tpu.memory_space<vmem>>, vector<512x128xbf16>
    %cst_41 = arith.constant dense<0.000000e+00> : vector<8x128xf32>
    %245 = tpu.matmul %243, %244, %cst_41 {dimension_numbers = #tpu.dot_dimension_numbers<[1], [0], [0], [1], [0, 0, 1, 1], [], []>} : vector<8x512xbf16>, vector<512x128xbf16>, vector<8x128xf32> -> vector<8x128xf32>
    %246 = arith.truncf %242 : vector<8x4xf32> to vector<8x4xbf16>
    %c0_42 = arith.constant 0 : index
    %c0_43 = arith.constant 0 : index
    %247 = vector.load %arg8[%c0_42, %c0_43] : memref<4x128xbf16, #tpu.memory_space<vmem>>, vector<4x128xbf16>
    %cst_44 = arith.constant dense<0.000000e+00> : vector<8x128xf32>
    %248 = tpu.matmul %246, %247, %cst_44 {dimension_numbers = #tpu.dot_dimension_numbers<[1], [0], [0], [1], [0, 0, 1, 1], [], []>} : vector<8x4xbf16>, vector<4x128xbf16>, vector<8x128xf32> -> vector<8x128xf32>
    %249 = arith.addf %245, %248 : vector<8x128xf32>
    %c5 = arith.constant 5 : index
    %c0_45 = arith.constant 0 : index
    %250 = vector.load %arg9[%c5, %c0_45] : memref<24x512xf32, #tpu.memory_space<vmem>>, vector<1x128xf32>
    %251 = vector.broadcast %250 : vector<1x128xf32> to vector<8x128xf32>
    %252 = arith.addf %249, %251 : vector<8x128xf32>
    %c20 = arith.constant 20 : index
    %c0_46 = arith.constant 0 : index
    %253 = vector.load %arg9[%c20, %c0_46] : memref<24x512xf32, #tpu.memory_space<vmem>>, vector<1x2xf32>
    %c21 = arith.constant 21 : index
    %c0_47 = arith.constant 0 : index
    %254 = vector.load %arg9[%c21, %c0_47] : memref<24x512xf32, #tpu.memory_space<vmem>>, vector<1x2xf32>
    %c22 = arith.constant 22 : index
    %c0_48 = arith.constant 0 : index
    %255 = vector.load %arg9[%c22, %c0_48] : memref<24x512xf32, #tpu.memory_space<vmem>>, vector<1x2xf32>
    %c23 = arith.constant 23 : index
    %c0_49 = arith.constant 0 : index
    %256 = vector.load %arg9[%c23, %c0_49] : memref<24x512xf32, #tpu.memory_space<vmem>>, vector<1x2xf32>
    %257 = vector.extract_strided_slice %233 {offsets = [0, 0], sizes = [8, 1], strides = [1, 1]} : vector<8x12xf32> to vector<8x1xf32>
    %258 = vector.broadcast %257 : vector<8x1xf32> to vector<8x2xf32>
    %259 = vector.broadcast %253 : vector<1x2xf32> to vector<8x2xf32>
    %260 = arith.mulf %258, %259 : vector<8x2xf32>
    %261 = vector.extract_strided_slice %233 {offsets = [0, 1], sizes = [8, 1], strides = [1, 1]} : vector<8x12xf32> to vector<8x1xf32>
    %262 = vector.broadcast %261 : vector<8x1xf32> to vector<8x2xf32>
    %263 = vector.broadcast %254 : vector<1x2xf32> to vector<8x2xf32>
    %264 = arith.mulf %262, %263 : vector<8x2xf32>
    %265 = arith.addf %260, %264 : vector<8x2xf32>
    %266 = vector.extract_strided_slice %233 {offsets = [0, 2], sizes = [8, 1], strides = [1, 1]} : vector<8x12xf32> to vector<8x1xf32>
    %267 = vector.broadcast %266 : vector<8x1xf32> to vector<8x2xf32>
    %268 = vector.broadcast %255 : vector<1x2xf32> to vector<8x2xf32>
    %269 = arith.mulf %267, %268 : vector<8x2xf32>
    %270 = arith.addf %265, %269 : vector<8x2xf32>
    %271 = vector.extract_strided_slice %233 {offsets = [0, 3], sizes = [8, 1], strides = [1, 1]} : vector<8x12xf32> to vector<8x1xf32>
    %272 = vector.broadcast %271 : vector<8x1xf32> to vector<8x2xf32>
    %273 = vector.broadcast %256 : vector<1x2xf32> to vector<8x2xf32>
    %274 = arith.mulf %272, %273 : vector<8x2xf32>
    %275 = arith.addf %270, %274 : vector<8x2xf32>
    %276 = vector.extract_strided_slice %233 {offsets = [0, 4], sizes = [8, 1], strides = [1, 1]} : vector<8x12xf32> to vector<8x1xf32>
    %277 = vector.broadcast %276 : vector<8x1xf32> to vector<8x2xf32>
    %278 = vector.broadcast %253 : vector<1x2xf32> to vector<8x2xf32>
    %279 = arith.mulf %277, %278 : vector<8x2xf32>
    %280 = vector.extract_strided_slice %233 {offsets = [0, 5], sizes = [8, 1], strides = [1, 1]} : vector<8x12xf32> to vector<8x1xf32>
    %281 = vector.broadcast %280 : vector<8x1xf32> to vector<8x2xf32>
    %282 = vector.broadcast %254 : vector<1x2xf32> to vector<8x2xf32>
    %283 = arith.mulf %281, %282 : vector<8x2xf32>
    %284 = arith.addf %279, %283 : vector<8x2xf32>
    %285 = vector.extract_strided_slice %233 {offsets = [0, 6], sizes = [8, 1], strides = [1, 1]} : vector<8x12xf32> to vector<8x1xf32>
    %286 = vector.broadcast %285 : vector<8x1xf32> to vector<8x2xf32>
    %287 = vector.broadcast %255 : vector<1x2xf32> to vector<8x2xf32>
    %288 = arith.mulf %286, %287 : vector<8x2xf32>
    %289 = arith.addf %284, %288 : vector<8x2xf32>
    %290 = vector.extract_strided_slice %233 {offsets = [0, 7], sizes = [8, 1], strides = [1, 1]} : vector<8x12xf32> to vector<8x1xf32>
    %291 = vector.broadcast %290 : vector<8x1xf32> to vector<8x2xf32>
    %292 = vector.broadcast %256 : vector<1x2xf32> to vector<8x2xf32>
    %293 = arith.mulf %291, %292 : vector<8x2xf32>
    %294 = arith.addf %289, %293 : vector<8x2xf32>
    %295 = vector.extract_strided_slice %233 {offsets = [0, 8], sizes = [8, 1], strides = [1, 1]} : vector<8x12xf32> to vector<8x1xf32>
    %296 = vector.broadcast %295 : vector<8x1xf32> to vector<8x2xf32>
    %297 = vector.broadcast %253 : vector<1x2xf32> to vector<8x2xf32>
    %298 = arith.mulf %296, %297 : vector<8x2xf32>
    %299 = vector.extract_strided_slice %233 {offsets = [0, 9], sizes = [8, 1], strides = [1, 1]} : vector<8x12xf32> to vector<8x1xf32>
    %300 = vector.broadcast %299 : vector<8x1xf32> to vector<8x2xf32>
    %301 = vector.broadcast %254 : vector<1x2xf32> to vector<8x2xf32>
    %302 = arith.mulf %300, %301 : vector<8x2xf32>
    %303 = arith.addf %298, %302 : vector<8x2xf32>
    %304 = vector.extract_strided_slice %233 {offsets = [0, 10], sizes = [8, 1], strides = [1, 1]} : vector<8x12xf32> to vector<8x1xf32>
    %305 = vector.broadcast %304 : vector<8x1xf32> to vector<8x2xf32>
    %306 = vector.broadcast %255 : vector<1x2xf32> to vector<8x2xf32>
    %307 = arith.mulf %305, %306 : vector<8x2xf32>
    %308 = arith.addf %303, %307 : vector<8x2xf32>
    %309 = vector.extract_strided_slice %233 {offsets = [0, 11], sizes = [8, 1], strides = [1, 1]} : vector<8x12xf32> to vector<8x1xf32>
    %310 = vector.broadcast %309 : vector<8x1xf32> to vector<8x2xf32>
    %311 = vector.broadcast %256 : vector<1x2xf32> to vector<8x2xf32>
    %312 = arith.mulf %310, %311 : vector<8x2xf32>
    %313 = arith.addf %308, %312 : vector<8x2xf32>
    %314 = tpu.concatenate %275, %294, %313 in 1 : vector<8x2xf32>, vector<8x2xf32>, vector<8x2xf32> -> vector<8x6xf32>
    %315 = arith.addf %27, %252 : vector<8x128xf32>
    %316 = arith.addf %42, %314 : vector<8x6xf32>
    %cst_50 = arith.constant dense<0.000000e+00> : vector<8xf32>
    %317 = vector.multi_reduction <add>, %315, %cst_50 [1] : vector<8x128xf32> to vector<8xf32>
    %318 = vector.shape_cast %317 : vector<8xf32> to vector<8x1xf32>
    %cst_51 = arith.constant 1.280000e+02 : f32
    %319 = vector.broadcast %cst_51 : f32 to vector<8x1xf32>
    %320 = arith.divf %318, %319 : vector<8x1xf32>
    %321 = vector.broadcast %320 : vector<8x1xf32> to vector<8x128xf32>
    %322 = arith.subf %315, %321 : vector<8x128xf32>
    %323 = arith.mulf %322, %322 : vector<8x128xf32>
    %cst_52 = arith.constant dense<0.000000e+00> : vector<8xf32>
    %324 = vector.multi_reduction <add>, %323, %cst_52 [1] : vector<8x128xf32> to vector<8xf32>
    %325 = vector.shape_cast %324 : vector<8xf32> to vector<8x1xf32>
    %cst_53 = arith.constant 1.280000e+02 : f32
    %326 = vector.broadcast %cst_53 : f32 to vector<8x1xf32>
    %327 = arith.divf %325, %326 : vector<8x1xf32>
    %cst_54 = arith.constant 9.99999974E-6 : f32
    %328 = vector.broadcast %cst_54 : f32 to vector<8x1xf32>
    %329 = arith.addf %327, %328 : vector<8x1xf32>
    %330 = math.rsqrt %329 : vector<8x1xf32>
    %331 = vector.broadcast %330 : vector<8x1xf32> to vector<8x128xf32>
    %332 = arith.mulf %322, %331 : vector<8x128xf32>
    %c3 = arith.constant 3 : index
    %c0_55 = arith.constant 0 : index
    %333 = vector.load %arg9[%c3, %c0_55] : memref<24x512xf32, #tpu.memory_space<vmem>>, vector<1x128xf32>
    %334 = vector.broadcast %333 : vector<1x128xf32> to vector<8x128xf32>
    %335 = arith.mulf %332, %334 : vector<8x128xf32>
    %c4 = arith.constant 4 : index
    %c0_56 = arith.constant 0 : index
    %336 = vector.load %arg9[%c4, %c0_56] : memref<24x512xf32, #tpu.memory_space<vmem>>, vector<1x128xf32>
    %337 = vector.broadcast %336 : vector<1x128xf32> to vector<8x128xf32>
    %338 = arith.addf %335, %337 : vector<8x128xf32>
    %339 = arith.mulf %316, %316 : vector<8x6xf32>
    %340 = vector.extract_strided_slice %339 {offsets = [0, 0], sizes = [8, 2], strides = [1, 1]} : vector<8x6xf32> to vector<8x2xf32>
    %341 = vector.extract_strided_slice %339 {offsets = [0, 2], sizes = [8, 2], strides = [1, 1]} : vector<8x6xf32> to vector<8x2xf32>
    %342 = arith.addf %340, %341 : vector<8x2xf32>
    %343 = vector.extract_strided_slice %339 {offsets = [0, 4], sizes = [8, 2], strides = [1, 1]} : vector<8x6xf32> to vector<8x2xf32>
    %344 = arith.addf %342, %343 : vector<8x2xf32>
    %cst_57 = arith.constant 9.99999993E-9 : f32
    %345 = vector.broadcast %cst_57 : f32 to vector<8x2xf32>
    %346 = arith.maximumf %344, %345 : vector<8x2xf32>
    %cst_58 = arith.constant dense<0.000000e+00> : vector<8xf32>
    %347 = vector.multi_reduction <add>, %346, %cst_58 [1] : vector<8x2xf32> to vector<8xf32>
    %348 = vector.shape_cast %347 : vector<8xf32> to vector<8x1xf32>
    %cst_59 = arith.constant 2.000000e+00 : f32
    %349 = vector.broadcast %cst_59 : f32 to vector<8x1xf32>
    %350 = arith.divf %348, %349 : vector<8x1xf32>
    %351 = math.rsqrt %350 : vector<8x1xf32>
    %352 = vector.broadcast %351 : vector<8x1xf32> to vector<8x6xf32>
    %353 = arith.mulf %316, %352 : vector<8x6xf32>
    %354 = arith.addf %338, %0 : vector<8x128xf32>
    %cst_60 = arith.constant 5.000000e-01 : f32
    %355 = vector.broadcast %cst_60 : f32 to vector<8x128xf32>
    %356 = arith.mulf %354, %355 : vector<8x128xf32>
    %c0_61 = arith.constant 0 : index
    %c0_62 = arith.constant 0 : index
    %357 = vector.load %arg10[%c0_61, %c0_62] : memref<8x128xf32, #tpu.memory_space<vmem>>, vector<8x128xf32>
    tpu.vector_store %arg10[%c0_61, %c0_62], %356 {strides = array<i32>} : memref<8x128xf32, #tpu.memory_space<vmem>>, vector<8x128xf32>,
    %358 = arith.addf %353, %1 : vector<8x6xf32>
    %cst_63 = arith.constant 5.000000e-01 : f32
    %359 = vector.broadcast %cst_63 : f32 to vector<8x6xf32>
    %360 = arith.mulf %358, %359 : vector<8x6xf32>
    %c0_64 = arith.constant 0 : index
    %c0_65 = arith.constant 0 : index
    %361 = vector.load %arg11[%c0_64, %c0_65] : memref<8x6xf32, #tpu.memory_space<vmem>>, vector<8x6xf32>
    tpu.vector_store %arg11[%c0_64, %c0_65], %360 {strides = array<i32>} : memref<8x6xf32, #tpu.memory_space<vmem>>, vector<8x6xf32>,
    return
  }
  func.func @transform_0(%arg0: i32) -> (i32, i32) {
    %c0_i32 = arith.constant 0 : i32
    %c0_i32_0 = arith.constant 0 : i32
    return %arg0, %c0_i32 : i32, i32
  }
  func.func @transform_1(%arg0: i32) -> (i32, i32) {
    %c0_i32 = arith.constant 0 : i32
    %c0_i32_0 = arith.constant 0 : i32
    return %arg0, %c0_i32 : i32, i32
  }
  func.func @transform_2(%arg0: i32) -> (i32, i32) {
    %c0_i32 = arith.constant 0 : i32
    %c0_i32_0 = arith.constant 0 : i32
    return %arg0, %c0_i32 : i32, i32
  }
  func.func @transform_3(%arg0: i32) -> (i32, i32) {
    %c0_i32 = arith.constant 0 : i32
    %c0_i32_0 = arith.constant 0 : i32
    return %arg0, %c0_i32 : i32, i32
  }
  func.func @transform_4(%arg0: i32) -> (i32, i32) {
    %c0_i32 = arith.constant 0 : i32
    %c0_i32_0 = arith.constant 0 : i32
    %c0_i32_1 = arith.constant 0 : i32
    return %c0_i32, %c0_i32_0 : i32, i32
  }
  func.func @transform_5(%arg0: i32) -> (i32, i32) {
    %c0_i32 = arith.constant 0 : i32
    %c0_i32_0 = arith.constant 0 : i32
    %c0_i32_1 = arith.constant 0 : i32
    return %c0_i32, %c0_i32_0 : i32, i32
  }
  func.func @transform_6(%arg0: i32) -> (i32, i32) {
    %c0_i32 = arith.constant 0 : i32
    %c0_i32_0 = arith.constant 0 : i32
    %c0_i32_1 = arith.constant 0 : i32
    return %c0_i32, %c0_i32_0 : i32, i32
  }
  func.func @transform_7(%arg0: i32) -> (i32, i32) {
    %c0_i32 = arith.constant 0 : i32
    %c0_i32_0 = arith.constant 0 : i32
    %c0_i32_1 = arith.constant 0 : i32
    return %c0_i32, %c0_i32_0 : i32, i32
  }
  func.func @transform_8(%arg0: i32) -> (i32, i32) {
    %c0_i32 = arith.constant 0 : i32
    %c0_i32_0 = arith.constant 0 : i32
    %c0_i32_1 = arith.constant 0 : i32
    return %c0_i32, %c0_i32_0 : i32, i32
  }
  func.func @transform_9(%arg0: i32) -> (i32, i32) {
    %c0_i32 = arith.constant 0 : i32
    %c0_i32_0 = arith.constant 0 : i32
    return %arg0, %c0_i32 : i32, i32
  }
  func.func @transform_10(%arg0: i32) -> (i32, i32) {
    %c0_i32 = arith.constant 0 : i32
    %c0_i32_0 = arith.constant 0 : i32
    return %arg0, %c0_i32 : i32, i32
  }
}

module attributes {stable_mosaic.version = 11 : i64} {
  func.func @_node_kernel(%arg0: i32, %arg1: memref<8x128xf32, #tpu.memory_space<vmem>>, %arg2: memref<8x128xf32, #tpu.memory_space<vmem>>, %arg3: memref<8x6xf32, #tpu.memory_space<vmem>>, %arg4: memref<8x6xf32, #tpu.memory_space<vmem>>, %arg5: memref<128x512xbf16, #tpu.memory_space<vmem>>, %arg6: memref<4x512xbf16, #tpu.memory_space<vmem>>, %arg7: memref<512x128xbf16, #tpu.memory_space<vmem>>, %arg8: memref<4x128xbf16, #tpu.memory_space<vmem>>, %arg9: memref<24x512xf32, #tpu.memory_space<vmem>>, %arg10: memref<8x128xf32, #tpu.memory_space<vmem>>, %arg11: memref<8x6xf32, #tpu.memory_space<vmem>>) attributes {dimension_semantics = [#tpu.dimension_semantics<parallel>], iteration_bounds = array<i64: 2>, scalar_prefetch = 0 : i64, scratch_operands = 0 : i64, tpu.core_type = #tpu.core_type<tc>, window_params = [{transform_indices = @transform_0, window_bounds = array<i64: 8, 128>}, {transform_indices = @transform_1, window_bounds = array<i64: 8, 128>}, {transform_indices = @transform_2, window_bounds = array<i64: 8, 6>}, {transform_indices = @transform_3, window_bounds = array<i64: 8, 6>}, {pipeline_mode = #tpu.pipeline_mode<synchronous>, transform_indices = @transform_4, window_bounds = array<i64: 128, 512>}, {pipeline_mode = #tpu.pipeline_mode<synchronous>, transform_indices = @transform_5, window_bounds = array<i64: 4, 512>}, {pipeline_mode = #tpu.pipeline_mode<synchronous>, transform_indices = @transform_6, window_bounds = array<i64: 512, 128>}, {pipeline_mode = #tpu.pipeline_mode<synchronous>, transform_indices = @transform_7, window_bounds = array<i64: 4, 128>}, {pipeline_mode = #tpu.pipeline_mode<synchronous>, transform_indices = @transform_8, window_bounds = array<i64: 24, 512>}, {transform_indices = @transform_9, window_bounds = array<i64: 8, 128>}, {transform_indices = @transform_10, window_bounds = array<i64: 8, 6>}]} {
    %c0 = arith.constant 0 : index
    %c0_0 = arith.constant 0 : index
    %0 = vector.load %arg1[%c0, %c0_0] : memref<8x128xf32, #tpu.memory_space<vmem>>, vector<8x128xf32>
    %c0_1 = arith.constant 0 : index
    %c0_2 = arith.constant 0 : index
    %1 = vector.load %arg3[%c0_1, %c0_2] : memref<8x6xf32, #tpu.memory_space<vmem>>, vector<8x6xf32>
    %c0_3 = arith.constant 0 : index
    %c0_4 = arith.constant 0 : index
    %2 = vector.load %arg2[%c0_3, %c0_4] : memref<8x128xf32, #tpu.memory_space<vmem>>, vector<8x128xf32>
    %3 = arith.addf %0, %2 : vector<8x128xf32>
    %c0_5 = arith.constant 0 : index
    %c0_6 = arith.constant 0 : index
    %4 = vector.load %arg4[%c0_5, %c0_6] : memref<8x6xf32, #tpu.memory_space<vmem>>, vector<8x6xf32>
    %5 = arith.addf %1, %4 : vector<8x6xf32>
    %cst = arith.constant dense<0.000000e+00> : vector<8xf32>
    %6 = vector.multi_reduction <add>, %3, %cst [1] : vector<8x128xf32> to vector<8xf32>
    %7 = vector.shape_cast %6 : vector<8xf32> to vector<8x1xf32>
    %cst_7 = arith.constant 1.280000e+02 : f32
    %8 = vector.broadcast %cst_7 : f32 to vector<8x1xf32>
    %9 = arith.divf %7, %8 : vector<8x1xf32>
    %10 = vector.broadcast %9 : vector<8x1xf32> to vector<8x128xf32>
    %11 = arith.subf %3, %10 : vector<8x128xf32>
    %12 = arith.mulf %11, %11 : vector<8x128xf32>
    %cst_8 = arith.constant dense<0.000000e+00> : vector<8xf32>
    %13 = vector.multi_reduction <add>, %12, %cst_8 [1] : vector<8x128xf32> to vector<8xf32>
    %14 = vector.shape_cast %13 : vector<8xf32> to vector<8x1xf32>
    %cst_9 = arith.constant 1.280000e+02 : f32
    %15 = vector.broadcast %cst_9 : f32 to vector<8x1xf32>
    %16 = arith.divf %14, %15 : vector<8x1xf32>
    %cst_10 = arith.constant 9.99999974E-6 : f32
    %17 = vector.broadcast %cst_10 : f32 to vector<8x1xf32>
    %18 = arith.addf %16, %17 : vector<8x1xf32>
    %19 = math.rsqrt %18 : vector<8x1xf32>
    %20 = vector.broadcast %19 : vector<8x1xf32> to vector<8x128xf32>
    %21 = arith.mulf %11, %20 : vector<8x128xf32>
    %c1 = arith.constant 1 : index
    %c0_11 = arith.constant 0 : index
    %22 = vector.load %arg9[%c1, %c0_11] : memref<24x512xf32, #tpu.memory_space<vmem>>, vector<1x128xf32>
    %23 = vector.broadcast %22 : vector<1x128xf32> to vector<8x128xf32>
    %24 = arith.mulf %21, %23 : vector<8x128xf32>
    %c2 = arith.constant 2 : index
    %c0_12 = arith.constant 0 : index
    %25 = vector.load %arg9[%c2, %c0_12] : memref<24x512xf32, #tpu.memory_space<vmem>>, vector<1x128xf32>
    %26 = vector.broadcast %25 : vector<1x128xf32> to vector<8x128xf32>
    %27 = arith.addf %24, %26 : vector<8x128xf32>
    %28 = arith.mulf %5, %5 : vector<8x6xf32>
    %29 = vector.extract_strided_slice %28 {offsets = [0, 0], sizes = [8, 2], strides = [1, 1]} : vector<8x6xf32> to vector<8x2xf32>
    %30 = vector.extract_strided_slice %28 {offsets = [0, 2], sizes = [8, 2], strides = [1, 1]} : vector<8x6xf32> to vector<8x2xf32>
    %31 = arith.addf %29, %30 : vector<8x2xf32>
    %32 = vector.extract_strided_slice %28 {offsets = [0, 4], sizes = [8, 2], strides = [1, 1]} : vector<8x6xf32> to vector<8x2xf32>
    %33 = arith.addf %31, %32 : vector<8x2xf32>
    %cst_13 = arith.constant 9.99999993E-9 : f32
    %34 = vector.broadcast %cst_13 : f32 to vector<8x2xf32>
    %35 = arith.maximumf %33, %34 : vector<8x2xf32>
    %cst_14 = arith.constant dense<0.000000e+00> : vector<8xf32>
    %36 = vector.multi_reduction <add>, %35, %cst_14 [1] : vector<8x2xf32> to vector<8xf32>
    %37 = vector.shape_cast %36 : vector<8xf32> to vector<8x1xf32>
    %cst_15 = arith.constant 2.000000e+00 : f32
    %38 = vector.broadcast %cst_15 : f32 to vector<8x1xf32>
    %39 = arith.divf %37, %38 : vector<8x1xf32>
    %40 = math.rsqrt %39 : vector<8x1xf32>
    %41 = vector.broadcast %40 : vector<8x1xf32> to vector<8x6xf32>
    %42 = arith.mulf %5, %41 : vector<8x6xf32>
    %c8 = arith.constant 8 : index
    %c0_16 = arith.constant 0 : index
    %43 = vector.load %arg9[%c8, %c0_16] : memref<24x512xf32, #tpu.memory_space<vmem>>, vector<1x4xf32>
    %c9 = arith.constant 9 : index
    %c0_17 = arith.constant 0 : index
    %44 = vector.load %arg9[%c9, %c0_17] : memref<24x512xf32, #tpu.memory_space<vmem>>, vector<1x4xf32>
    %45 = vector.extract_strided_slice %42 {offsets = [0, 0], sizes = [8, 1], strides = [1, 1]} : vector<8x6xf32> to vector<8x1xf32>
    %46 = vector.broadcast %45 : vector<8x1xf32> to vector<8x4xf32>
    %47 = vector.broadcast %43 : vector<1x4xf32> to vector<8x4xf32>
    %48 = arith.mulf %46, %47 : vector<8x4xf32>
    %49 = vector.extract_strided_slice %42 {offsets = [0, 1], sizes = [8, 1], strides = [1, 1]} : vector<8x6xf32> to vector<8x1xf32>
    %50 = vector.broadcast %49 : vector<8x1xf32> to vector<8x4xf32>
    %51 = vector.broadcast %44 : vector<1x4xf32> to vector<8x4xf32>
    %52 = arith.mulf %50, %51 : vector<8x4xf32>
    %53 = arith.addf %48, %52 : vector<8x4xf32>
    %54 = vector.extract_strided_slice %42 {offsets = [0, 2], sizes = [8, 1], strides = [1, 1]} : vector<8x6xf32> to vector<8x1xf32>
    %55 = vector.broadcast %54 : vector<8x1xf32> to vector<8x4xf32>
    %56 = vector.broadcast %43 : vector<1x4xf32> to vector<8x4xf32>
    %57 = arith.mulf %55, %56 : vector<8x4xf32>
    %58 = vector.extract_strided_slice %42 {offsets = [0, 3], sizes = [8, 1], strides = [1, 1]} : vector<8x6xf32> to vector<8x1xf32>
    %59 = vector.broadcast %58 : vector<8x1xf32> to vector<8x4xf32>
    %60 = vector.broadcast %44 : vector<1x4xf32> to vector<8x4xf32>
    %61 = arith.mulf %59, %60 : vector<8x4xf32>
    %62 = arith.addf %57, %61 : vector<8x4xf32>
    %63 = vector.extract_strided_slice %42 {offsets = [0, 4], sizes = [8, 1], strides = [1, 1]} : vector<8x6xf32> to vector<8x1xf32>
    %64 = vector.broadcast %63 : vector<8x1xf32> to vector<8x4xf32>
    %65 = vector.broadcast %43 : vector<1x4xf32> to vector<8x4xf32>
    %66 = arith.mulf %64, %65 : vector<8x4xf32>
    %67 = vector.extract_strided_slice %42 {offsets = [0, 5], sizes = [8, 1], strides = [1, 1]} : vector<8x6xf32> to vector<8x1xf32>
    %68 = vector.broadcast %67 : vector<8x1xf32> to vector<8x4xf32>
    %69 = vector.broadcast %44 : vector<1x4xf32> to vector<8x4xf32>
    %70 = arith.mulf %68, %69 : vector<8x4xf32>
    %71 = arith.addf %66, %70 : vector<8x4xf32>
    %72 = tpu.concatenate %53, %62, %71 in 1 : vector<8x4xf32>, vector<8x4xf32>, vector<8x4xf32> -> vector<8x12xf32>
    %73 = arith.mulf %72, %72 : vector<8x12xf32>
    %74 = vector.extract_strided_slice %73 {offsets = [0, 0], sizes = [8, 4], strides = [1, 1]} : vector<8x12xf32> to vector<8x4xf32>
    %75 = vector.extract_strided_slice %73 {offsets = [0, 4], sizes = [8, 4], strides = [1, 1]} : vector<8x12xf32> to vector<8x4xf32>
    %76 = arith.addf %74, %75 : vector<8x4xf32>
    %77 = vector.extract_strided_slice %73 {offsets = [0, 8], sizes = [8, 4], strides = [1, 1]} : vector<8x12xf32> to vector<8x4xf32>
    %78 = arith.addf %76, %77 : vector<8x4xf32>
    %cst_18 = arith.constant 9.99999993E-9 : f32
    %79 = vector.broadcast %cst_18 : f32 to vector<8x4xf32>
    %80 = arith.maximumf %78, %79 : vector<8x4xf32>
    %81 = math.sqrt %80 : vector<8x4xf32>
    %82 = arith.truncf %27 : vector<8x128xf32> to vector<8x128xbf16>
    %c0_19 = arith.constant 0 : index
    %c0_20 = arith.constant 0 : index
    %83 = vector.load %arg5[%c0_19, %c0_20] : memref<128x512xbf16, #tpu.memory_space<vmem>>, vector<128x512xbf16>
    %cst_21 = arith.constant dense<0.000000e+00> : vector<8x512xf32>
    %84 = tpu.matmul %82, %83, %cst_21 {dimension_numbers = #tpu.dot_dimension_numbers<[1], [0], [0], [1], [0, 0, 1, 1], [], []>} : vector<8x128xbf16>, vector<128x512xbf16>, vector<8x512xf32> -> vector<8x512xf32>
    %85 = arith.truncf %81 : vector<8x4xf32> to vector<8x4xbf16>
    %c0_22 = arith.constant 0 : index
    %c0_23 = arith.constant 0 : index
    %86 = vector.load %arg6[%c0_22, %c0_23] : memref<4x512xbf16, #tpu.memory_space<vmem>>, vector<4x512xbf16>
    %cst_24 = arith.constant dense<0.000000e+00> : vector<8x512xf32>
    %87 = tpu.matmul %85, %86, %cst_24 {dimension_numbers = #tpu.dot_dimension_numbers<[1], [0], [0], [1], [0, 0, 1, 1], [], []>} : vector<8x4xbf16>, vector<4x512xbf16>, vector<8x512xf32> -> vector<8x512xf32>
    %88 = arith.addf %84, %87 : vector<8x512xf32>
    %c0_25 = arith.constant 0 : index
    %c0_26 = arith.constant 0 : index
    %89 = vector.load %arg9[%c0_25, %c0_26] : memref<24x512xf32, #tpu.memory_space<vmem>>, vector<1x512xf32>
    %90 = vector.broadcast %89 : vector<1x512xf32> to vector<8x512xf32>
    %91 = arith.addf %88, %90 : vector<8x512xf32>
    %c12 = arith.constant 12 : index
    %c0_27 = arith.constant 0 : index
    %92 = vector.load %arg9[%c12, %c0_27] : memref<24x512xf32, #tpu.memory_space<vmem>>, vector<1x4xf32>
    %c13 = arith.constant 13 : index
    %c0_28 = arith.constant 0 : index
    %93 = vector.load %arg9[%c13, %c0_28] : memref<24x512xf32, #tpu.memory_space<vmem>>, vector<1x4xf32>
    %c14 = arith.constant 14 : index
    %c0_29 = arith.constant 0 : index
    %94 = vector.load %arg9[%c14, %c0_29] : memref<24x512xf32, #tpu.memory_space<vmem>>, vector<1x4xf32>
    %c15 = arith.constant 15 : index
    %c0_30 = arith.constant 0 : index
    %95 = vector.load %arg9[%c15, %c0_30] : memref<24x512xf32, #tpu.memory_space<vmem>>, vector<1x4xf32>
    %96 = vector.extract_strided_slice %72 {offsets = [0, 0], sizes = [8, 1], strides = [1, 1]} : vector<8x12xf32> to vector<8x1xf32>
    %97 = vector.broadcast %96 : vector<8x1xf32> to vector<8x4xf32>
    %98 = vector.broadcast %92 : vector<1x4xf32> to vector<8x4xf32>
    %99 = arith.mulf %97, %98 : vector<8x4xf32>
    %100 = vector.extract_strided_slice %72 {offsets = [0, 1], sizes = [8, 1], strides = [1, 1]} : vector<8x12xf32> to vector<8x1xf32>
    %101 = vector.broadcast %100 : vector<8x1xf32> to vector<8x4xf32>
    %102 = vector.broadcast %93 : vector<1x4xf32> to vector<8x4xf32>
    %103 = arith.mulf %101, %102 : vector<8x4xf32>
    %104 = arith.addf %99, %103 : vector<8x4xf32>
    %105 = vector.extract_strided_slice %72 {offsets = [0, 2], sizes = [8, 1], strides = [1, 1]} : vector<8x12xf32> to vector<8x1xf32>
    %106 = vector.broadcast %105 : vector<8x1xf32> to vector<8x4xf32>
    %107 = vector.broadcast %94 : vector<1x4xf32> to vector<8x4xf32>
    %108 = arith.mulf %106, %107 : vector<8x4xf32>
    %109 = arith.addf %104, %108 : vector<8x4xf32>
    %110 = vector.extract_strided_slice %72 {offsets = [0, 3], sizes = [8, 1], strides = [1, 1]} : vector<8x12xf32> to vector<8x1xf32>
    %111 = vector.broadcast %110 : vector<8x1xf32> to vector<8x4xf32>
    %112 = vector.broadcast %95 : vector<1x4xf32> to vector<8x4xf32>
    %113 = arith.mulf %111, %112 : vector<8x4xf32>
    %114 = arith.addf %109, %113 : vector<8x4xf32>
    %115 = vector.extract_strided_slice %72 {offsets = [0, 4], sizes = [8, 1], strides = [1, 1]} : vector<8x12xf32> to vector<8x1xf32>
    %116 = vector.broadcast %115 : vector<8x1xf32> to vector<8x4xf32>
    %117 = vector.broadcast %92 : vector<1x4xf32> to vector<8x4xf32>
    %118 = arith.mulf %116, %117 : vector<8x4xf32>
    %119 = vector.extract_strided_slice %72 {offsets = [0, 5], sizes = [8, 1], strides = [1, 1]} : vector<8x12xf32> to vector<8x1xf32>
    %120 = vector.broadcast %119 : vector<8x1xf32> to vector<8x4xf32>
    %121 = vector.broadcast %93 : vector<1x4xf32> to vector<8x4xf32>
    %122 = arith.mulf %120, %121 : vector<8x4xf32>
    %123 = arith.addf %118, %122 : vector<8x4xf32>
    %124 = vector.extract_strided_slice %72 {offsets = [0, 6], sizes = [8, 1], strides = [1, 1]} : vector<8x12xf32> to vector<8x1xf32>
    %125 = vector.broadcast %124 : vector<8x1xf32> to vector<8x4xf32>
    %126 = vector.broadcast %94 : vector<1x4xf32> to vector<8x4xf32>
    %127 = arith.mulf %125, %126 : vector<8x4xf32>
    %128 = arith.addf %123, %127 : vector<8x4xf32>
    %129 = vector.extract_strided_slice %72 {offsets = [0, 7], sizes = [8, 1], strides = [1, 1]} : vector<8x12xf32> to vector<8x1xf32>
    %130 = vector.broadcast %129 : vector<8x1xf32> to vector<8x4xf32>
    %131 = vector.broadcast %95 : vector<1x4xf32> to vector<8x4xf32>
    %132 = arith.mulf %130, %131 : vector<8x4xf32>
    %133 = arith.addf %128, %132 : vector<8x4xf32>
    %134 = vector.extract_strided_slice %72 {offsets = [0, 8], sizes = [8, 1], strides = [1, 1]} : vector<8x12xf32> to vector<8x1xf32>
    %135 = vector.broadcast %134 : vector<8x1xf32> to vector<8x4xf32>
    %136 = vector.broadcast %92 : vector<1x4xf32> to vector<8x4xf32>
    %137 = arith.mulf %135, %136 : vector<8x4xf32>
    %138 = vector.extract_strided_slice %72 {offsets = [0, 9], sizes = [8, 1], strides = [1, 1]} : vector<8x12xf32> to vector<8x1xf32>
    %139 = vector.broadcast %138 : vector<8x1xf32> to vector<8x4xf32>
    %140 = vector.broadcast %93 : vector<1x4xf32> to vector<8x4xf32>
    %141 = arith.mulf %139, %140 : vector<8x4xf32>
    %142 = arith.addf %137, %141 : vector<8x4xf32>
    %143 = vector.extract_strided_slice %72 {offsets = [0, 10], sizes = [8, 1], strides = [1, 1]} : vector<8x12xf32> to vector<8x1xf32>
    %144 = vector.broadcast %143 : vector<8x1xf32> to vector<8x4xf32>
    %145 = vector.broadcast %94 : vector<1x4xf32> to vector<8x4xf32>
    %146 = arith.mulf %144, %145 : vector<8x4xf32>
    %147 = arith.addf %142, %146 : vector<8x4xf32>
    %148 = vector.extract_strided_slice %72 {offsets = [0, 11], sizes = [8, 1], strides = [1, 1]} : vector<8x12xf32> to vector<8x1xf32>
    %149 = vector.broadcast %148 : vector<8x1xf32> to vector<8x4xf32>
    %150 = vector.broadcast %95 : vector<1x4xf32> to vector<8x4xf32>
    %151 = arith.mulf %149, %150 : vector<8x4xf32>
    %152 = arith.addf %147, %151 : vector<8x4xf32>
    %153 = tpu.concatenate %114, %133, %152 in 1 : vector<8x4xf32>, vector<8x4xf32>, vector<8x4xf32> -> vector<8x12xf32>
    %154 = arith.mulf %153, %153 : vector<8x12xf32>
    %155 = vector.extract_strided_slice %154 {offsets = [0, 0], sizes = [8, 4], strides = [1, 1]} : vector<8x12xf32> to vector<8x4xf32>
    %156 = vector.extract_strided_slice %154 {offsets = [0, 4], sizes = [8, 4], strides = [1, 1]} : vector<8x12xf32> to vector<8x4xf32>
    %157 = arith.addf %155, %156 : vector<8x4xf32>
    %158 = vector.extract_strided_slice %154 {offsets = [0, 8], sizes = [8, 4], strides = [1, 1]} : vector<8x12xf32> to vector<8x4xf32>
    %159 = arith.addf %157, %158 : vector<8x4xf32>
    %cst_31 = arith.constant 9.99999993E-9 : f32
    %160 = vector.broadcast %cst_31 : f32 to vector<8x4xf32>
    %161 = arith.maximumf %159, %160 : vector<8x4xf32>
    %162 = math.sqrt %161 : vector<8x4xf32>
    %163 = arith.negf %162 : vector<8x4xf32>
    %164 = math.exp %163 : vector<8x4xf32>
    %cst_32 = arith.constant 1.000000e+00 : f32
    %165 = vector.broadcast %cst_32 : f32 to vector<8x4xf32>
    %166 = arith.addf %165, %164 : vector<8x4xf32>
    %167 = arith.divf %165, %166 : vector<8x4xf32>
    %168 = tpu.concatenate %167, %167, %167 in 1 : vector<8x4xf32>, vector<8x4xf32>, vector<8x4xf32> -> vector<8x12xf32>
    %169 = arith.mulf %153, %168 : vector<8x12xf32>
    %cst_33 = arith.constant 0.000000e+00 : f32
    %170 = vector.broadcast %cst_33 : f32 to vector<8x512xf32>
    %171 = arith.maximumf %91, %170 : vector<8x512xf32>
    %c16 = arith.constant 16 : index
    %c0_34 = arith.constant 0 : index
    %172 = vector.load %arg9[%c16, %c0_34] : memref<24x512xf32, #tpu.memory_space<vmem>>, vector<1x4xf32>
    %c17 = arith.constant 17 : index
    %c0_35 = arith.constant 0 : index
    %173 = vector.load %arg9[%c17, %c0_35] : memref<24x512xf32, #tpu.memory_space<vmem>>, vector<1x4xf32>
    %c18 = arith.constant 18 : index
    %c0_36 = arith.constant 0 : index
    %174 = vector.load %arg9[%c18, %c0_36] : memref<24x512xf32, #tpu.memory_space<vmem>>, vector<1x4xf32>
    %c19 = arith.constant 19 : index
    %c0_37 = arith.constant 0 : index
    %175 = vector.load %arg9[%c19, %c0_37] : memref<24x512xf32, #tpu.memory_space<vmem>>, vector<1x4xf32>
    %176 = vector.extract_strided_slice %169 {offsets = [0, 0], sizes = [8, 1], strides = [1, 1]} : vector<8x12xf32> to vector<8x1xf32>
    %177 = vector.broadcast %176 : vector<8x1xf32> to vector<8x4xf32>
    %178 = vector.broadcast %172 : vector<1x4xf32> to vector<8x4xf32>
    %179 = arith.mulf %177, %178 : vector<8x4xf32>
    %180 = vector.extract_strided_slice %169 {offsets = [0, 1], sizes = [8, 1], strides = [1, 1]} : vector<8x12xf32> to vector<8x1xf32>
    %181 = vector.broadcast %180 : vector<8x1xf32> to vector<8x4xf32>
    %182 = vector.broadcast %173 : vector<1x4xf32> to vector<8x4xf32>
    %183 = arith.mulf %181, %182 : vector<8x4xf32>
    %184 = arith.addf %179, %183 : vector<8x4xf32>
    %185 = vector.extract_strided_slice %169 {offsets = [0, 2], sizes = [8, 1], strides = [1, 1]} : vector<8x12xf32> to vector<8x1xf32>
    %186 = vector.broadcast %185 : vector<8x1xf32> to vector<8x4xf32>
    %187 = vector.broadcast %174 : vector<1x4xf32> to vector<8x4xf32>
    %188 = arith.mulf %186, %187 : vector<8x4xf32>
    %189 = arith.addf %184, %188 : vector<8x4xf32>
    %190 = vector.extract_strided_slice %169 {offsets = [0, 3], sizes = [8, 1], strides = [1, 1]} : vector<8x12xf32> to vector<8x1xf32>
    %191 = vector.broadcast %190 : vector<8x1xf32> to vector<8x4xf32>
    %192 = vector.broadcast %175 : vector<1x4xf32> to vector<8x4xf32>
    %193 = arith.mulf %191, %192 : vector<8x4xf32>
    %194 = arith.addf %189, %193 : vector<8x4xf32>
    %195 = vector.extract_strided_slice %169 {offsets = [0, 4], sizes = [8, 1], strides = [1, 1]} : vector<8x12xf32> to vector<8x1xf32>
    %196 = vector.broadcast %195 : vector<8x1xf32> to vector<8x4xf32>
    %197 = vector.broadcast %172 : vector<1x4xf32> to vector<8x4xf32>
    %198 = arith.mulf %196, %197 : vector<8x4xf32>
    %199 = vector.extract_strided_slice %169 {offsets = [0, 5], sizes = [8, 1], strides = [1, 1]} : vector<8x12xf32> to vector<8x1xf32>
    %200 = vector.broadcast %199 : vector<8x1xf32> to vector<8x4xf32>
    %201 = vector.broadcast %173 : vector<1x4xf32> to vector<8x4xf32>
    %202 = arith.mulf %200, %201 : vector<8x4xf32>
    %203 = arith.addf %198, %202 : vector<8x4xf32>
    %204 = vector.extract_strided_slice %169 {offsets = [0, 6], sizes = [8, 1], strides = [1, 1]} : vector<8x12xf32> to vector<8x1xf32>
    %205 = vector.broadcast %204 : vector<8x1xf32> to vector<8x4xf32>
    %206 = vector.broadcast %174 : vector<1x4xf32> to vector<8x4xf32>
    %207 = arith.mulf %205, %206 : vector<8x4xf32>
    %208 = arith.addf %203, %207 : vector<8x4xf32>
    %209 = vector.extract_strided_slice %169 {offsets = [0, 7], sizes = [8, 1], strides = [1, 1]} : vector<8x12xf32> to vector<8x1xf32>
    %210 = vector.broadcast %209 : vector<8x1xf32> to vector<8x4xf32>
    %211 = vector.broadcast %175 : vector<1x4xf32> to vector<8x4xf32>
    %212 = arith.mulf %210, %211 : vector<8x4xf32>
    %213 = arith.addf %208, %212 : vector<8x4xf32>
    %214 = vector.extract_strided_slice %169 {offsets = [0, 8], sizes = [8, 1], strides = [1, 1]} : vector<8x12xf32> to vector<8x1xf32>
    %215 = vector.broadcast %214 : vector<8x1xf32> to vector<8x4xf32>
    %216 = vector.broadcast %172 : vector<1x4xf32> to vector<8x4xf32>
    %217 = arith.mulf %215, %216 : vector<8x4xf32>
    %218 = vector.extract_strided_slice %169 {offsets = [0, 9], sizes = [8, 1], strides = [1, 1]} : vector<8x12xf32> to vector<8x1xf32>
    %219 = vector.broadcast %218 : vector<8x1xf32> to vector<8x4xf32>
    %220 = vector.broadcast %173 : vector<1x4xf32> to vector<8x4xf32>
    %221 = arith.mulf %219, %220 : vector<8x4xf32>
    %222 = arith.addf %217, %221 : vector<8x4xf32>
    %223 = vector.extract_strided_slice %169 {offsets = [0, 10], sizes = [8, 1], strides = [1, 1]} : vector<8x12xf32> to vector<8x1xf32>
    %224 = vector.broadcast %223 : vector<8x1xf32> to vector<8x4xf32>
    %225 = vector.broadcast %174 : vector<1x4xf32> to vector<8x4xf32>
    %226 = arith.mulf %224, %225 : vector<8x4xf32>
    %227 = arith.addf %222, %226 : vector<8x4xf32>
    %228 = vector.extract_strided_slice %169 {offsets = [0, 11], sizes = [8, 1], strides = [1, 1]} : vector<8x12xf32> to vector<8x1xf32>
    %229 = vector.broadcast %228 : vector<8x1xf32> to vector<8x4xf32>
    %230 = vector.broadcast %175 : vector<1x4xf32> to vector<8x4xf32>
    %231 = arith.mulf %229, %230 : vector<8x4xf32>
    %232 = arith.addf %227, %231 : vector<8x4xf32>
    %233 = tpu.concatenate %194, %213, %232 in 1 : vector<8x4xf32>, vector<8x4xf32>, vector<8x4xf32> -> vector<8x12xf32>
    %234 = arith.mulf %233, %233 : vector<8x12xf32>
    %235 = vector.extract_strided_slice %234 {offsets = [0, 0], sizes = [8, 4], strides = [1, 1]} : vector<8x12xf32> to vector<8x4xf32>
    %236 = vector.extract_strided_slice %234 {offsets = [0, 4], sizes = [8, 4], strides = [1, 1]} : vector<8x12xf32> to vector<8x4xf32>
    %237 = arith.addf %235, %236 : vector<8x4xf32>
    %238 = vector.extract_strided_slice %234 {offsets = [0, 8], sizes = [8, 4], strides = [1, 1]} : vector<8x12xf32> to vector<8x4xf32>
    %239 = arith.addf %237, %238 : vector<8x4xf32>
    %cst_38 = arith.constant 9.99999993E-9 : f32
    %240 = vector.broadcast %cst_38 : f32 to vector<8x4xf32>
    %241 = arith.maximumf %239, %240 : vector<8x4xf32>
    %242 = math.sqrt %241 : vector<8x4xf32>
    %243 = arith.truncf %171 : vector<8x512xf32> to vector<8x512xbf16>
    %c0_39 = arith.constant 0 : index
    %c0_40 = arith.constant 0 : index
    %244 = vector.load %arg7[%c0_39, %c0_40] : memref<512x128xbf16, #tpu.memory_space<vmem>>, vector<512x128xbf16>
    %cst_41 = arith.constant dense<0.000000e+00> : vector<8x128xf32>
    %245 = tpu.matmul %243, %244, %cst_41 {dimension_numbers = #tpu.dot_dimension_numbers<[1], [0], [0], [1], [0, 0, 1, 1], [], []>} : vector<8x512xbf16>, vector<512x128xbf16>, vector<8x128xf32> -> vector<8x128xf32>
    %246 = arith.truncf %242 : vector<8x4xf32> to vector<8x4xbf16>
    %c0_42 = arith.constant 0 : index
    %c0_43 = arith.constant 0 : index
    %247 = vector.load %arg8[%c0_42, %c0_43] : memref<4x128xbf16, #tpu.memory_space<vmem>>, vector<4x128xbf16>
    %cst_44 = arith.constant dense<0.000000e+00> : vector<8x128xf32>
    %248 = tpu.matmul %246, %247, %cst_44 {dimension_numbers = #tpu.dot_dimension_numbers<[1], [0], [0], [1], [0, 0, 1, 1], [], []>} : vector<8x4xbf16>, vector<4x128xbf16>, vector<8x128xf32> -> vector<8x128xf32>
    %249 = arith.addf %245, %248 : vector<8x128xf32>
    %c5 = arith.constant 5 : index
    %c0_45 = arith.constant 0 : index
    %250 = vector.load %arg9[%c5, %c0_45] : memref<24x512xf32, #tpu.memory_space<vmem>>, vector<1x128xf32>
    %251 = vector.broadcast %250 : vector<1x128xf32> to vector<8x128xf32>
    %252 = arith.addf %249, %251 : vector<8x128xf32>
    %c20 = arith.constant 20 : index
    %c0_46 = arith.constant 0 : index
    %253 = vector.load %arg9[%c20, %c0_46] : memref<24x512xf32, #tpu.memory_space<vmem>>, vector<1x2xf32>
    %c21 = arith.constant 21 : index
    %c0_47 = arith.constant 0 : index
    %254 = vector.load %arg9[%c21, %c0_47] : memref<24x512xf32, #tpu.memory_space<vmem>>, vector<1x2xf32>
    %c22 = arith.constant 22 : index
    %c0_48 = arith.constant 0 : index
    %255 = vector.load %arg9[%c22, %c0_48] : memref<24x512xf32, #tpu.memory_space<vmem>>, vector<1x2xf32>
    %c23 = arith.constant 23 : index
    %c0_49 = arith.constant 0 : index
    %256 = vector.load %arg9[%c23, %c0_49] : memref<24x512xf32, #tpu.memory_space<vmem>>, vector<1x2xf32>
    %257 = vector.extract_strided_slice %233 {offsets = [0, 0], sizes = [8, 1], strides = [1, 1]} : vector<8x12xf32> to vector<8x1xf32>
    %258 = vector.broadcast %257 : vector<8x1xf32> to vector<8x2xf32>
    %259 = vector.broadcast %253 : vector<1x2xf32> to vector<8x2xf32>
    %260 = arith.mulf %258, %259 : vector<8x2xf32>
    %261 = vector.extract_strided_slice %233 {offsets = [0, 1], sizes = [8, 1], strides = [1, 1]} : vector<8x12xf32> to vector<8x1xf32>
    %262 = vector.broadcast %261 : vector<8x1xf32> to vector<8x2xf32>
    %263 = vector.broadcast %254 : vector<1x2xf32> to vector<8x2xf32>
    %264 = arith.mulf %262, %263 : vector<8x2xf32>
    %265 = arith.addf %260, %264 : vector<8x2xf32>
    %266 = vector.extract_strided_slice %233 {offsets = [0, 2], sizes = [8, 1], strides = [1, 1]} : vector<8x12xf32> to vector<8x1xf32>
    %267 = vector.broadcast %266 : vector<8x1xf32> to vector<8x2xf32>
    %268 = vector.broadcast %255 : vector<1x2xf32> to vector<8x2xf32>
    %269 = arith.mulf %267, %268 : vector<8x2xf32>
    %270 = arith.addf %265, %269 : vector<8x2xf32>
    %271 = vector.extract_strided_slice %233 {offsets = [0, 3], sizes = [8, 1], strides = [1, 1]} : vector<8x12xf32> to vector<8x1xf32>
    %272 = vector.broadcast %271 : vector<8x1xf32> to vector<8x2xf32>
    %273 = vector.broadcast %256 : vector<1x2xf32> to vector<8x2xf32>
    %274 = arith.mulf %272, %273 : vector<8x2xf32>
    %275 = arith.addf %270, %274 : vector<8x2xf32>
    %276 = vector.extract_strided_slice %233 {offsets = [0, 4], sizes = [8, 1], strides = [1, 1]} : vector<8x12xf32> to vector<8x1xf32>
    %277 = vector.broadcast %276 : vector<8x1xf32> to vector<8x2xf32>
    %278 = vector.broadcast %253 : vector<1x2xf32> to vector<8x2xf32>
    %279 = arith.mulf %277, %278 : vector<8x2xf32>
    %280 = vector.extract_strided_slice %233 {offsets = [0, 5], sizes = [8, 1], strides = [1, 1]} : vector<8x12xf32> to vector<8x1xf32>
    %281 = vector.broadcast %280 : vector<8x1xf32> to vector<8x2xf32>
    %282 = vector.broadcast %254 : vector<1x2xf32> to vector<8x2xf32>
    %283 = arith.mulf %281, %282 : vector<8x2xf32>
    %284 = arith.addf %279, %283 : vector<8x2xf32>
    %285 = vector.extract_strided_slice %233 {offsets = [0, 6], sizes = [8, 1], strides = [1, 1]} : vector<8x12xf32> to vector<8x1xf32>
    %286 = vector.broadcast %285 : vector<8x1xf32> to vector<8x2xf32>
    %287 = vector.broadcast %255 : vector<1x2xf32> to vector<8x2xf32>
    %288 = arith.mulf %286, %287 : vector<8x2xf32>
    %289 = arith.addf %284, %288 : vector<8x2xf32>
    %290 = vector.extract_strided_slice %233 {offsets = [0, 7], sizes = [8, 1], strides = [1, 1]} : vector<8x12xf32> to vector<8x1xf32>
    %291 = vector.broadcast %290 : vector<8x1xf32> to vector<8x2xf32>
    %292 = vector.broadcast %256 : vector<1x2xf32> to vector<8x2xf32>
    %293 = arith.mulf %291, %292 : vector<8x2xf32>
    %294 = arith.addf %289, %293 : vector<8x2xf32>
    %295 = vector.extract_strided_slice %233 {offsets = [0, 8], sizes = [8, 1], strides = [1, 1]} : vector<8x12xf32> to vector<8x1xf32>
    %296 = vector.broadcast %295 : vector<8x1xf32> to vector<8x2xf32>
    %297 = vector.broadcast %253 : vector<1x2xf32> to vector<8x2xf32>
    %298 = arith.mulf %296, %297 : vector<8x2xf32>
    %299 = vector.extract_strided_slice %233 {offsets = [0, 9], sizes = [8, 1], strides = [1, 1]} : vector<8x12xf32> to vector<8x1xf32>
    %300 = vector.broadcast %299 : vector<8x1xf32> to vector<8x2xf32>
    %301 = vector.broadcast %254 : vector<1x2xf32> to vector<8x2xf32>
    %302 = arith.mulf %300, %301 : vector<8x2xf32>
    %303 = arith.addf %298, %302 : vector<8x2xf32>
    %304 = vector.extract_strided_slice %233 {offsets = [0, 10], sizes = [8, 1], strides = [1, 1]} : vector<8x12xf32> to vector<8x1xf32>
    %305 = vector.broadcast %304 : vector<8x1xf32> to vector<8x2xf32>
    %306 = vector.broadcast %255 : vector<1x2xf32> to vector<8x2xf32>
    %307 = arith.mulf %305, %306 : vector<8x2xf32>
    %308 = arith.addf %303, %307 : vector<8x2xf32>
    %309 = vector.extract_strided_slice %233 {offsets = [0, 11], sizes = [8, 1], strides = [1, 1]} : vector<8x12xf32> to vector<8x1xf32>
    %310 = vector.broadcast %309 : vector<8x1xf32> to vector<8x2xf32>
    %311 = vector.broadcast %256 : vector<1x2xf32> to vector<8x2xf32>
    %312 = arith.mulf %310, %311 : vector<8x2xf32>
    %313 = arith.addf %308, %312 : vector<8x2xf32>
    %314 = tpu.concatenate %275, %294, %313 in 1 : vector<8x2xf32>, vector<8x2xf32>, vector<8x2xf32> -> vector<8x6xf32>
    %315 = arith.addf %27, %252 : vector<8x128xf32>
    %316 = arith.addf %42, %314 : vector<8x6xf32>
    %cst_50 = arith.constant dense<0.000000e+00> : vector<8xf32>
    %317 = vector.multi_reduction <add>, %315, %cst_50 [1] : vector<8x128xf32> to vector<8xf32>
    %318 = vector.shape_cast %317 : vector<8xf32> to vector<8x1xf32>
    %cst_51 = arith.constant 1.280000e+02 : f32
    %319 = vector.broadcast %cst_51 : f32 to vector<8x1xf32>
    %320 = arith.divf %318, %319 : vector<8x1xf32>
    %321 = vector.broadcast %320 : vector<8x1xf32> to vector<8x128xf32>
    %322 = arith.subf %315, %321 : vector<8x128xf32>
    %323 = arith.mulf %322, %322 : vector<8x128xf32>
    %cst_52 = arith.constant dense<0.000000e+00> : vector<8xf32>
    %324 = vector.multi_reduction <add>, %323, %cst_52 [1] : vector<8x128xf32> to vector<8xf32>
    %325 = vector.shape_cast %324 : vector<8xf32> to vector<8x1xf32>
    %cst_53 = arith.constant 1.280000e+02 : f32
    %326 = vector.broadcast %cst_53 : f32 to vector<8x1xf32>
    %327 = arith.divf %325, %326 : vector<8x1xf32>
    %cst_54 = arith.constant 9.99999974E-6 : f32
    %328 = vector.broadcast %cst_54 : f32 to vector<8x1xf32>
    %329 = arith.addf %327, %328 : vector<8x1xf32>
    %330 = math.rsqrt %329 : vector<8x1xf32>
    %331 = vector.broadcast %330 : vector<8x1xf32> to vector<8x128xf32>
    %332 = arith.mulf %322, %331 : vector<8x128xf32>
    %c3 = arith.constant 3 : index
    %c0_55 = arith.constant 0 : index
    %333 = vector.load %arg9[%c3, %c0_55] : memref<24x512xf32, #tpu.memory_space<vmem>>, vector<1x128xf32>
    %334 = vector.broadcast %333 : vector<1x128xf32> to vector<8x128xf32>
    %335 = arith.mulf %332, %334 : vector<8x128xf32>
    %c4 = arith.constant 4 : index
    %c0_56 = arith.constant 0 : index
    %336 = vector.load %arg9[%c4, %c0_56] : memref<24x512xf32, #tpu.memory_space<vmem>>, vector<1x128xf32>
    %337 = vector.broadcast %336 : vector<1x128xf32> to vector<8x128xf32>
    %338 = arith.addf %335, %337 : vector<8x128xf32>
    %339 = arith.mulf %316, %316 : vector<8x6xf32>
    %340 = vector.extract_strided_slice %339 {offsets = [0, 0], sizes = [8, 2], strides = [1, 1]} : vector<8x6xf32> to vector<8x2xf32>
    %341 = vector.extract_strided_slice %339 {offsets = [0, 2], sizes = [8, 2], strides = [1, 1]} : vector<8x6xf32> to vector<8x2xf32>
    %342 = arith.addf %340, %341 : vector<8x2xf32>
    %343 = vector.extract_strided_slice %339 {offsets = [0, 4], sizes = [8, 2], strides = [1, 1]} : vector<8x6xf32> to vector<8x2xf32>
    %344 = arith.addf %342, %343 : vector<8x2xf32>
    %cst_57 = arith.constant 9.99999993E-9 : f32
    %345 = vector.broadcast %cst_57 : f32 to vector<8x2xf32>
    %346 = arith.maximumf %344, %345 : vector<8x2xf32>
    %cst_58 = arith.constant dense<0.000000e+00> : vector<8xf32>
    %347 = vector.multi_reduction <add>, %346, %cst_58 [1] : vector<8x2xf32> to vector<8xf32>
    %348 = vector.shape_cast %347 : vector<8xf32> to vector<8x1xf32>
    %cst_59 = arith.constant 2.000000e+00 : f32
    %349 = vector.broadcast %cst_59 : f32 to vector<8x1xf32>
    %350 = arith.divf %348, %349 : vector<8x1xf32>
    %351 = math.rsqrt %350 : vector<8x1xf32>
    %352 = vector.broadcast %351 : vector<8x1xf32> to vector<8x6xf32>
    %353 = arith.mulf %316, %352 : vector<8x6xf32>
    %354 = arith.addf %338, %0 : vector<8x128xf32>
    %cst_60 = arith.constant 5.000000e-01 : f32
    %355 = vector.broadcast %cst_60 : f32 to vector<8x128xf32>
    %356 = arith.mulf %354, %355 : vector<8x128xf32>
    %c0_61 = arith.constant 0 : index
    %c0_62 = arith.constant 0 : index
    %357 = vector.load %arg10[%c0_61, %c0_62] : memref<8x128xf32, #tpu.memory_space<vmem>>, vector<8x128xf32>
    tpu.vector_store %arg10[%c0_61, %c0_62], %356 {strides = array<i32>} : memref<8x128xf32, #tpu.memory_space<vmem>>, vector<8x128xf32>,
    %358 = arith.addf %353, %1 : vector<8x6xf32>
    %cst_63 = arith.constant 5.000000e-01 : f32
    %359 = vector.broadcast %cst_63 : f32 to vector<8x6xf32>
    %360 = arith.mulf %358, %359 : vector<8x6xf32>
    %c0_64 = arith.constant 0 : index
    %c0_65 = arith.constant 0 : index
    %361 = vector.load %arg11[%c0_64, %c0_65] : memref<8x6xf32, #tpu.memory_space<vmem>>, vector<8x6xf32>
    tpu.vector_store %arg11[%c0_64, %c0_65], %360 {strides = array<i32>} : memref<8x6xf32, #tpu.memory_space<vmem>>, vector<8x6xf32>,
    return
  }
  func.func @transform_0(%arg0: i32) -> (i32, i32) {
    %c0_i32 = arith.constant 0 : i32
    %c0_i32_0 = arith.constant 0 : i32
    return %arg0, %c0_i32 : i32, i32
  }
  func.func @transform_1(%arg0: i32) -> (i32, i32) {
    %c0_i32 = arith.constant 0 : i32
    %c0_i32_0 = arith.constant 0 : i32
    return %arg0, %c0_i32 : i32, i32
  }
  func.func @transform_2(%arg0: i32) -> (i32, i32) {
    %c0_i32 = arith.constant 0 : i32
    %c0_i32_0 = arith.constant 0 : i32
    return %arg0, %c0_i32 : i32, i32
  }
  func.func @transform_3(%arg0: i32) -> (i32, i32) {
    %c0_i32 = arith.constant 0 : i32
    %c0_i32_0 = arith.constant 0 : i32
    return %arg0, %c0_i32 : i32, i32
  }
  func.func @transform_4(%arg0: i32) -> (i32, i32) {
    %c0_i32 = arith.constant 0 : i32
    %c0_i32_0 = arith.constant 0 : i32
    %c0_i32_1 = arith.constant 0 : i32
    return %c0_i32, %c0_i32_0 : i32, i32
  }
  func.func @transform_5(%arg0: i32) -> (i32, i32) {
    %c0_i32 = arith.constant 0 : i32
    %c0_i32_0 = arith.constant 0 : i32
    %c0_i32_1 = arith.constant 0 : i32
    return %c0_i32, %c0_i32_0 : i32, i32
  }
  func.func @transform_6(%arg0: i32) -> (i32, i32) {
    %c0_i32 = arith.constant 0 : i32
    %c0_i32_0 = arith.constant 0 : i32
    %c0_i32_1 = arith.constant 0 : i32
    return %c0_i32, %c0_i32_0 : i32, i32
  }
  func.func @transform_7(%arg0: i32) -> (i32, i32) {
    %c0_i32 = arith.constant 0 : i32
    %c0_i32_0 = arith.constant 0 : i32
    %c0_i32_1 = arith.constant 0 : i32
    return %c0_i32, %c0_i32_0 : i32, i32
  }
  func.func @transform_8(%arg0: i32) -> (i32, i32) {
    %c0_i32 = arith.constant 0 : i32
    %c0_i32_0 = arith.constant 0 : i32
    %c0_i32_1 = arith.constant 0 : i32
    return %c0_i32, %c0_i32_0 : i32, i32
  }
  func.func @transform_9(%arg0: i32) -> (i32, i32) {
    %c0_i32 = arith.constant 0 : i32
    %c0_i32_0 = arith.constant 0 : i32
    return %arg0, %c0_i32 : i32, i32
  }
  func.func @transform_10(%arg0: i32) -> (i32, i32) {
    %c0_i32 = arith.constant 0 : i32
    %c0_i32_0 = arith.constant 0 : i32
    return %arg0, %c0_i32 : i32, i32
  }
}

</mosaic_0001>

<llo_original>
// kernel: scoring_forward.17
$region0: #{scoring_forward.17}
  #allocation0 [shape = 'u32[]', space=smem, size = 0x4, offset = 0x4, fixed_abs, tag = 'smem constant byte address 0x4 - core index']
  #allocation1 [shape = 'u32[144,128]{1,0:T(1,128)}', space=vmem, size = 0x12000, scoped, tag = 'internal scratch']
  %s0 = inlined_call_operand.vmem [shape: f32[16,1433], index: 0, kind: input, shape index: {}]
  %s1 = inlined_call_operand.vmem [shape: bf16[1433,128], index: 1, kind: input, shape index: {}]
  %s2 = inlined_call_operand.vmem [shape: f32[1,128], index: 2, kind: input, shape index: {}]
  %s3 = inlined_call_operand.vmem [shape: f32[16,128], index: 3, kind: output, shape index: {}]
  %s4 = sld [smem:[#allocation0]]
  $region45: #{scoring_forward.17} parent=0
    _
  %s6 = ssub.s32 1, %s4
  %s7 = scalar_select 0, %s6, %s4
  loop: start=0, step=1, limit=4
  $region2: #{scoring_forward.17} parent=0 // loop_pre_header
    _
  $region3: #{scoring_forward.17} parent=0 // loop_header
    %s9 = sphi 0, %s13
    %p10 = scmp.ge.s32.totalorder %s9, 4
    %s19 = sphi 0, %s21
    %s22 = sphi 0, %s19
    %s23 = sphi 0, %s22
    %s39 = sphi 0, %s23
    %s43 = sphi 0, %s43
    %s45 = sphi 0, %s43
    %s46 = sphi 0, %s45
    %s60 = sphi 0, %s46
    %s64 = sphi 0, %s64
    %s66 = sphi 0, %s64
    %s67 = sphi 0, %s66
    %s81 = sphi 0, %s67
    %s87 = sphi 0, %s89
    %s90 = sphi 0, %s87
    %s91 = sphi 0, %s90
    %s107 = sphi 0, %s91
  $region4: #{scoring_forward.17} parent=0 // loop_header_branch
    %12 = sbr.rel (%p10) target = $region8
  $region5: #{scoring_forward.17} parent=0 // loop_body
    %s14 = ssub.s32 %s9, 1
    %s15 = ssub.s32 %s9, 2
    %s16 = sadd.s32 %s9, 1
    %s17 = ssub.s32 %s9, %s16
    %p18 = scmp.eq.s32.totalorder %s17, 0
    %s20 = sadd.s32 %s19, 1
    %s21 = scalar_select %p18, %s19, %s20
    %p24 = pneg %p18
    %p25 = scmp.eq.s32.totalorder %s9, 1
    %p26 = por %p24, %p25
    %p27 = scmp.ne.s32.totalorder %s19, %s22
    %p28 = scmp.eq.s32.totalorder %s9, 0
    %p29 = por %p27, %p28
    %p30 = scmp.ne.s32.totalorder %s19, %s22
    %p31 = scmp.eq.s32.totalorder %s14, 1
    %p32 = por %p30, %p31
    %p33 = scmp.ne.s32.totalorder %s22, %s23
    %p34 = scmp.eq.s32.totalorder %s14, 0
    %p35 = por %p33, %p34
    %p36 = scmp.ne.s32.totalorder %s22, %s23
    %p37 = scmp.eq.s32.totalorder %s15, 1
    %p38 = por %p36, %p37
    %p40 = scmp.ne.s32.totalorder %s23, %s39
    %p41 = scmp.eq.s32.totalorder %s15, 0
    %p42 = por %p40, %p41
    %s44 = sadd.s32 %s43, 1
    %p47 = scmp.eq.s32.totalorder %s9, 1
    %p48 = scmp.ne.s32.totalorder %s43, %s45
    %p49 = scmp.eq.s32.totalorder %s9, 0
    %p50 = por %p48, %p49
    %p51 = scmp.ne.s32.totalorder %s43, %s45
    %p52 = scmp.eq.s32.totalorder %s14, 1
    %p53 = por %p51, %p52
    %p54 = scmp.ne.s32.totalorder %s45, %s46
    %p55 = scmp.eq.s32.totalorder %s14, 0
    %p56 = por %p54, %p55
    %p57 = scmp.ne.s32.totalorder %s45, %s46
    %p58 = scmp.eq.s32.totalorder %s15, 1
    %p59 = por %p57, %p58
    %p61 = scmp.ne.s32.totalorder %s46, %s60
    %p62 = scmp.eq.s32.totalorder %s15, 0
    %p63 = por %p61, %p62
    %s65 = sadd.s32 %s64, 1
    %p68 = scmp.eq.s32.totalorder %s9, 1
    %p69 = scmp.ne.s32.totalorder %s64, %s66
    %p70 = scmp.eq.s32.totalorder %s9, 0
    %p71 = por %p69, %p70
    %p72 = scmp.ne.s32.totalorder %s64, %s66
    %p73 = scmp.eq.s32.totalorder %s14, 1
    %p74 = por %p72, %p73
    %p75 = scmp.ne.s32.totalorder %s66, %s67
    %p76 = scmp.eq.s32.totalorder %s14, 0
    %p77 = por %p75, %p76
    %p78 = scmp.ne.s32.totalorder %s66, %s67
    %p79 = scmp.eq.s32.totalorder %s15, 1
    %p80 = por %p78, %p79
    %p82 = scmp.ne.s32.totalorder %s67, %s81
    %p83 = scmp.eq.s32.totalorder %s15, 0
    %p84 = por %p82, %p83
    %s85 = ssub.s32 %s9, %s16
    %p86 = scmp.eq.s32.totalorder %s85, 0
    %s88 = sadd.s32 %s87, 1
    %s89 = scalar_select %p86, %s87, %s88
    %p92 = pneg %p86
    %p93 = scmp.eq.s32.totalorder %s9, 1
    %p94 = por %p92, %p93
    %p95 = scmp.ne.s32.totalorder %s87, %s90
    %p96 = scmp.eq.s32.totalorder %s9, 0
    %p97 = por %p95, %p96
    %p98 = scmp.ne.s32.totalorder %s87, %s90
    %p99 = scmp.eq.s32.totalorder %s14, 1
    %p100 = por %p98, %p99
    %p101 = scmp.ne.s32.totalorder %s90, %s91
    %p102 = scmp.eq.s32.totalorder %s14, 0
    %p103 = por %p101, %p102
    %p104 = scmp.ne.s32.totalorder %s90, %s91
    %p105 = scmp.eq.s32.totalorder %s15, 1
    %p106 = por %p104, %p105
    %p108 = scmp.ne.s32.totalorder %s91, %s107
    %p109 = scmp.eq.s32.totalorder %s15, 0
    %p110 = por %p108, %p109
    %p111 = scmp.le.s32.totalorder 1, %s9
    %p112 = scmp.lt.s32.totalorder %s9, 3
    %p113 = pnand %p111, %p112
    %p114 = pneg %p113
    // Predicated region
    $region9: #{scoring_forward.17} parent=5 // pred_check
      _
    $region10: #{scoring_forward.17} parent=5 // pred_check_branch
      %116 = sbr.rel (%p113) target = $region12
    $region11: #{scoring_forward.17} parent=5 // pred_region
      %s117 = ssub.s32 %s9, 1
      // Predicated region
      $region13: #{scoring_forward.17} parent=11 // pred_check
        %p118 = pneg %p56
      $region14: #{scoring_forward.17} parent=11 // pred_check_branch
        %120 = sbr.rel (%p118) target = $region16
      $region15: #{scoring_forward.17} parent=11 // pred_region
        _
      $region16: #{scoring_forward.17} parent=11 // pred_fallthru
        _
      // Predicated region
      $region17: #{scoring_forward.17} parent=11 // pred_check
        %p121 = pneg %p77
      $region18: #{scoring_forward.17} parent=11 // pred_check_branch
        %123 = sbr.rel (%p121) target = $region20
      $region19: #{scoring_forward.17} parent=11 // pred_region
        _
      $region20: #{scoring_forward.17} parent=11 // pred_fallthru
        _
    $region12: #{scoring_forward.17} parent=5 // pred_fallthru
      _
    %p124 = scmp.lt.s32.totalorder %s9, 2
    // Predicated region
    $region21: #{scoring_forward.17} parent=5 // pred_check
      %p125 = pneg %p124
    $region22: #{scoring_forward.17} parent=5 // pred_check_branch
      %127 = sbr.rel (%p125) target = $region24
    $region23: #{scoring_forward.17} parent=5 // pred_region
      // Predicated region
      $region25: #{scoring_forward.17} parent=23 // pred_check
        %p128 = pneg %p29
      $region26: #{scoring_forward.17} parent=23 // pred_check_branch
        %130 = sbr.rel (%p128) target = $region28
      $region27: #{scoring_forward.17} parent=23 // pred_region
        %p131 = scmp.lt.s32.totalorder %s9, 1
        %s132 = scalar_select %p131, %s9, 1
        %s133 = smul.addr %s132, 12
        %s134 = smul.addr %s133, 8
        %s135 = scalar_lea.vmem %s0, %s134
      $region28: #{scoring_forward.17} parent=23 // pred_fallthru
        _
    $region24: #{scoring_forward.17} parent=5 // pred_fallthru
      _
    %p136 = scmp.le.s32.totalorder 1, %s9
    %p137 = scmp.lt.s32.totalorder %s9, 3
    %p138 = pnand %p136, %p137
    %p139 = pneg %p138
    // Predicated region
    $region29: #{scoring_forward.17} parent=5 // pred_check
      _
    $region30: #{scoring_forward.17} parent=5 // pred_check_branch
      %141 = sbr.rel (%p138) target = $region32
    $region31: #{scoring_forward.17} parent=5 // pred_region
      %s142 = ssub.s32 %s9, 1
      %p143 = scmp.lt.s32.totalorder %s14, 1
      %s144 = scalar_select %p143, %s14, 1
      %s145 = smul.addr %s144, 12
      %s146 = smul.addr %s145, 8
      %s147 = scalar_lea.vmem %s0, %s146
      %p148 = pneg %p35
      %p149 = pneg %p32
      %p150 = pneg %p56
      %p151 = pneg %p53
      %p152 = pneg %p77
      %p153 = pneg %p74
      %p154 = pneg %p103
      %p155 = pneg %p100
      %p156 = scmp.lt.s32.totalorder %s14, 1
      %s157 = scalar_select %p156, %s14, 1
      %s158 = smul.addr %s157, 8
      %s159 = scalar_lea.vmem %s3, %s158
      %p160 = scmp.lt.s32.totalorder %s14, 1
      %s161 = scalar_select %p160, %s14, 1
      %s162 = smul.addr %s161, 12
      %s163 = smul.addr %s162, 8
      %s164 = scalar_lea.vmem %s0, %s163
      %p165 = scmp.lt.s32.totalorder %s14, 1
      %s166 = scalar_select %p165, %s14, 1
      %s167 = smul.addr %s166, 8
      %s168 = scalar_lea.vmem %s3, %s167
      %v170 = vld [vmem:[%s164] sm:$0xff]
      %v171 = vld [vmem:[%s164 + $0x8] sm:$0xff]
      %v172 = vld [vmem:[%s164 + $0x10] sm:$0xff]
      %v173 = vld [vmem:[%s164 + $0x18] sm:$0xff]
      %v174 = vld [vmem:[%s164 + $0x20] sm:$0xff]
      %v175 = vld [vmem:[%s164 + $0x28] sm:$0xff]
      %v176 = vld [vmem:[%s164 + $0x30] sm:$0xff]
      %v177 = vld [vmem:[%s164 + $0x38] sm:$0xff]
      %v178 = vld [vmem:[%s164 + $0x40] sm:$0xff]
      %v179 = vld [vmem:[%s164 + $0x48] sm:$0xff]
      %v180 = vld [vmem:[%s164 + $0x50] sm:$0xff]
      %v181 = vld [vmem:[%s164 + $0x58] sm:$0xff]
      %v182 = vpack.c.bf16 %v170, %v170
      %v183 = vpack.c.bf16 %v171, %v171
      %v184 = vpack.c.bf16 %v172, %v172
      %v185 = vpack.c.bf16 %v173, %v173
      %v186 = vpack.c.bf16 %v174, %v174
      %v187 = vpack.c.bf16 %v175, %v175
      %v188 = vpack.c.bf16 %v176, %v176
      %v189 = vpack.c.bf16 %v177, %v177
      %v190 = vpack.c.bf16 %v178, %v178
      %v191 = vpack.c.bf16 %v179, %v179
      %v192 = vpack.c.bf16 %v180, %v180
      %v193 = vpack.c.bf16 %v181, %v181
      %v194 = vld [vmem:[%s1] sm:$0xf]
      %v195 = vld [vmem:[%s1 + $0x4] sm:$0xf]
      %v196 = vld [vmem:[%s1 + $0x8] sm:$0xf]
      %v197 = vld [vmem:[%s1 + $0xc] sm:$0xf]
      %v198 = vld [vmem:[%s1 + $0x10] sm:$0xf]
      %v199 = vld [vmem:[%s1 + $0x14] sm:$0xf]
      %v200 = vld [vmem:[%s1 + $0x18] sm:$0xf]
      %v201 = vld [vmem:[%s1 + $0x1c] sm:$0xf]
      %v202 = vld [vmem:[%s1 + $0x20] sm:$0xf]
      %v203 = vld [vmem:[%s1 + $0x24] sm:$0xf]
      %v204 = vld [vmem:[%s1 + $0x28] sm:$0xf]
      %v205 = vld [vmem:[%s1 + $0x2c] sm:$0xf]
      %v206 = vld [vmem:[%s1 + $0x30] sm:$0xf]
      %v207 = vld [vmem:[%s1 + $0x34] sm:$0xf]
      %v208 = vld [vmem:[%s1 + $0x38] sm:$0xf]
      %v209 = vld [vmem:[%s1 + $0x3c] sm:$0xf]
      %v210 = vld [vmem:[%s1 + $0x40] sm:$0xf]
      %v211 = vld [vmem:[%s1 + $0x44] sm:$0xf]
      %v212 = vld [vmem:[%s1 + $0x48] sm:$0xf]
      %v213 = vld [vmem:[%s1 + $0x4c] sm:$0xf]
      %v214 = vld [vmem:[%s1 + $0x50] sm:$0xf]
      %v215 = vld [vmem:[%s1 + $0x54] sm:$0xf]
      %v216 = vld [vmem:[%s1 + $0x58] sm:$0xf]
      %v217 = vld [vmem:[%s1 + $0x5c] sm:$0xf]
      %v218 = vld [vmem:[%s1 + $0x60] sm:$0xf]
      %v219 = vld [vmem:[%s1 + $0x64] sm:$0xf]
      %v220 = vld [vmem:[%s1 + $0x68] sm:$0xf]
      %v221 = vld [vmem:[%s1 + $0x6c] sm:$0xf]
      %v222 = vld [vmem:[%s1 + $0x70] sm:$0xf]
      %v223 = vld [vmem:[%s1 + $0x74] sm:$0xf]
      %v224 = vld [vmem:[%s1 + $0x78] sm:$0xf]
      %v225 = vld [vmem:[%s1 + $0x7c] sm:$0xf]
      %v226 = vld [vmem:[%s1 + $0x80] sm:$0xf]
      %v227 = vld [vmem:[%s1 + $0x84] sm:$0xf]
      %v228 = vld [vmem:[%s1 + $0x88] sm:$0xf]
      %v229 = vld [vmem:[%s1 + $0x8c] sm:$0xf]
      %v230 = vld [vmem:[%s1 + $0x90] sm:$0xf]
      %v231 = vld [vmem:[%s1 + $0x94] sm:$0xf]
      %v232 = vld [vmem:[%s1 + $0x98] sm:$0xf]
      %v233 = vld [vmem:[%s1 + $0x9c] sm:$0xf]
      %v234 = vld [vmem:[%s1 + $0xa0] sm:$0xf]
      %v235 = vld [vmem:[%s1 + $0xa4] sm:$0xf]
      %v236 = vld [vmem:[%s1 + $0xa8] sm:$0xf]
      %v237 = vld [vmem:[%s1 + $0xac] sm:$0xf]
      %v238 = vld [vmem:[%s1 + $0xb0] sm:$0xf]
      %v239 = vld [vmem:[%s1 + $0xb4] sm:$0xf]
      %v240 = vld [vmem:[%s1 + $0xb8] sm:$0xf]
      %v241 = vld [vmem:[%s1 + $0xbc] sm:$0xf]
      %v242 = vld [vmem:[%s1 + $0xc0] sm:$0xf]
      %v243 = vld [vmem:[%s1 + $0xc4] sm:$0xf]
      %v244 = vld [vmem:[%s1 + $0xc8] sm:$0xf]
      %v245 = vld [vmem:[%s1 + $0xcc] sm:$0xf]
      %v246 = vld [vmem:[%s1 + $0xd0] sm:$0xf]
      %v247 = vld [vmem:[%s1 + $0xd4] sm:$0xf]
      %v248 = vld [vmem:[%s1 + $0xd8] sm:$0xf]
      %v249 = vld [vmem:[%s1 + $0xdc] sm:$0xf]
      %v250 = vld [vmem:[%s1 + $0xe0] sm:$0xf]
      %v251 = vld [vmem:[%s1 + $0xe4] sm:$0xf]
      %v252 = vld [vmem:[%s1 + $0xe8] sm:$0xf]
      %v253 = vld [vmem:[%s1 + $0xec] sm:$0xf]
      %v254 = vld [vmem:[%s1 + $0xf0] sm:$0xf]
      %v255 = vld [vmem:[%s1 + $0xf4] sm:$0xf]
      %v256 = vld [vmem:[%s1 + $0xf8] sm:$0xf]
      %v257 = vld [vmem:[%s1 + $0xfc] sm:$0xf]
      %v258 = vld [vmem:[%s1 + $0x100] sm:$0xf]
      %v259 = vld [vmem:[%s1 + $0x104] sm:$0xf]
      %v260 = vld [vmem:[%s1 + $0x108] sm:$0xf]
      %v261 = vld [vmem:[%s1 + $0x10c] sm:$0xf]
      %v262 = vld [vmem:[%s1 + $0x110] sm:$0xf]
      %v263 = vld [vmem:[%s1 + $0x114] sm:$0xf]
      %v264 = vld [vmem:[%s1 + $0x118] sm:$0xf]
      %v265 = vld [vmem:[%s1 + $0x11c] sm:$0xf]
      %v266 = vld [vmem:[%s1 + $0x120] sm:$0xf]
      %v267 = vld [vmem:[%s1 + $0x124] sm:$0xf]
      %v268 = vld [vmem:[%s1 + $0x128] sm:$0xf]
      %v269 = vld [vmem:[%s1 + $0x12c] sm:$0xf]
      %v270 = vld [vmem:[%s1 + $0x130] sm:$0xf]
      %v271 = vld [vmem:[%s1 + $0x134] sm:$0xf]
      %v272 = vld [vmem:[%s1 + $0x138] sm:$0xf]
      %v273 = vld [vmem:[%s1 + $0x13c] sm:$0xf]
      %v274 = vld [vmem:[%s1 + $0x140] sm:$0xf]
      %v275 = vld [vmem:[%s1 + $0x144] sm:$0xf]
      %v276 = vld [vmem:[%s1 + $0x148] sm:$0xf]
      %v277 = vld [vmem:[%s1 + $0x14c] sm:$0xf]
      %v278 = vld [vmem:[%s1 + $0x150] sm:$0xf]
      %v279 = vld [vmem:[%s1 + $0x154] sm:$0xf]
      %v280 = vld [vmem:[%s1 + $0x158] sm:$0xf]
      %v281 = vld [vmem:[%s1 + $0x15c] sm:$0xf]
      %v282 = vld [vmem:[%s1 + $0x160] sm:$0xf]
      %v283 = vld [vmem:[%s1 + $0x164] sm:$0xf]
      %v284 = vld [vmem:[%s1 + $0x168] sm:$0xf]
      %v285 = vld [vmem:[%s1 + $0x16c] sm:$0xf]
      %v286 = vld [vmem:[%s1 + $0x170] sm:$0xf]
      %v287 = vld [vmem:[%s1 + $0x174] sm:$0xf]
      %v288 = vld [vmem:[%s1 + $0x178] sm:$0xf]
      %v289 = vld [vmem:[%s1 + $0x17c] sm:$0xf]
      %v290 = vld [vmem:[%s1 + $0x180] sm:$0xf]
      %v291 = vld [vmem:[%s1 + $0x184] sm:$0xf]
      %v292 = vld [vmem:[%s1 + $0x188] sm:$0xf]
      %v293 = vld [vmem:[%s1 + $0x18c] sm:$0xf]
      %v294 = vld [vmem:[%s1 + $0x190] sm:$0xf]
      %v295 = vld [vmem:[%s1 + $0x194] sm:$0xf]
      %v296 = vld [vmem:[%s1 + $0x198] sm:$0xf]
      %v297 = vld [vmem:[%s1 + $0x19c] sm:$0xf]
      %v298 = vld [vmem:[%s1 + $0x1a0] sm:$0xf]
      %v299 = vld [vmem:[%s1 + $0x1a4] sm:$0xf]
      %v300 = vld [vmem:[%s1 + $0x1a8] sm:$0xf]
      %v301 = vld [vmem:[%s1 + $0x1ac] sm:$0xf]
      %v302 = vld [vmem:[%s1 + $0x1b0] sm:$0xf]
      %v303 = vld [vmem:[%s1 + $0x1b4] sm:$0xf]
      %v304 = vld [vmem:[%s1 + $0x1b8] sm:$0xf]
      %v305 = vld [vmem:[%s1 + $0x1bc] sm:$0xf]
      %v306 = vld [vmem:[%s1 + $0x1c0] sm:$0xf]
      %v307 = vld [vmem:[%s1 + $0x1c4] sm:$0xf]
      %v308 = vld [vmem:[%s1 + $0x1c8] sm:$0xf]
      %v309 = vld [vmem:[%s1 + $0x1cc] sm:$0xf]
      %v310 = vld [vmem:[%s1 + $0x1d0] sm:$0xf]
      %v311 = vld [vmem:[%s1 + $0x1d4] sm:$0xf]
      %v312 = vld [vmem:[%s1 + $0x1d8] sm:$0xf]
      %v313 = vld [vmem:[%s1 + $0x1dc] sm:$0xf]
      %v314 = vld [vmem:[%s1 + $0x1e0] sm:$0xf]
      %v315 = vld [vmem:[%s1 + $0x1e4] sm:$0xf]
      %v316 = vld [vmem:[%s1 + $0x1e8] sm:$0xf]
      %v317 = vld [vmem:[%s1 + $0x1ec] sm:$0xf]
      %v318 = vld [vmem:[%s1 + $0x1f0] sm:$0xf]
      %v319 = vld [vmem:[%s1 + $0x1f4] sm:$0xf]
      %v320 = vld [vmem:[%s1 + $0x1f8] sm:$0xf]
      %v321 = vld [vmem:[%s1 + $0x1fc] sm:$0xf]
      %v322 = vld [vmem:[%s1 + $0x200] sm:$0xf]
      %v323 = vld [vmem:[%s1 + $0x204] sm:$0xf]
      %v324 = vld [vmem:[%s1 + $0x208] sm:$0xf]
      %v325 = vld [vmem:[%s1 + $0x20c] sm:$0xf]
      %v326 = vld [vmem:[%s1 + $0x210] sm:$0xf]
      %v327 = vld [vmem:[%s1 + $0x214] sm:$0xf]
      %v328 = vld [vmem:[%s1 + $0x218] sm:$0xf]
      %v329 = vld [vmem:[%s1 + $0x21c] sm:$0xf]
      %v330 = vld [vmem:[%s1 + $0x220] sm:$0xf]
      %v331 = vld [vmem:[%s1 + $0x224] sm:$0xf]
      %v332 = vld [vmem:[%s1 + $0x228] sm:$0xf]
      %v333 = vld [vmem:[%s1 + $0x22c] sm:$0xf]
      %v334 = vld [vmem:[%s1 + $0x230] sm:$0xf]
      %v335 = vld [vmem:[%s1 + $0x234] sm:$0xf]
      %v336 = vld [vmem:[%s1 + $0x238] sm:$0xf]
      %v337 = vld [vmem:[%s1 + $0x23c] sm:$0xf]
      %v338 = vld [vmem:[%s1 + $0x240] sm:$0xf]
      %v339 = vld [vmem:[%s1 + $0x244] sm:$0xf]
      %v340 = vld [vmem:[%s1 + $0x248] sm:$0xf]
      %v341 = vld [vmem:[%s1 + $0x24c] sm:$0xf]
      %v342 = vld [vmem:[%s1 + $0x250] sm:$0xf]
      %v343 = vld [vmem:[%s1 + $0x254] sm:$0xf]
      %v344 = vld [vmem:[%s1 + $0x258] sm:$0xf]
      %v345 = vld [vmem:[%s1 + $0x25c] sm:$0xf]
      %v346 = vld [vmem:[%s1 + $0x260] sm:$0xf]
      %v347 = vld [vmem:[%s1 + $0x264] sm:$0xf]
      %v348 = vld [vmem:[%s1 + $0x268] sm:$0xf]
      %v349 = vld [vmem:[%s1 + $0x26c] sm:$0xf]
      %v350 = vld [vmem:[%s1 + $0x270] sm:$0xf]
      %v351 = vld [vmem:[%s1 + $0x274] sm:$0xf]
      %v352 = vld [vmem:[%s1 + $0x278] sm:$0xf]
      %v353 = vld [vmem:[%s1 + $0x27c] sm:$0xf]
      %v354 = vld [vmem:[%s1 + $0x280] sm:$0xf]
      %v355 = vld [vmem:[%s1 + $0x284] sm:$0xf]
      %v356 = vld [vmem:[%s1 + $0x288] sm:$0xf]
      %v357 = vld [vmem:[%s1 + $0x28c] sm:$0xf]
      %v358 = vld [vmem:[%s1 + $0x290] sm:$0xf]
      %v359 = vld [vmem:[%s1 + $0x294] sm:$0xf]
      %v360 = vld [vmem:[%s1 + $0x298] sm:$0xf]
      %v361 = vld [vmem:[%s1 + $0x29c] sm:$0xf]
      %v362 = vld [vmem:[%s1 + $0x2a0] sm:$0xf]
      %v363 = vld [vmem:[%s1 + $0x2a4] sm:$0xf]
      %v364 = vld [vmem:[%s1 + $0x2a8] sm:$0xf]
      %v365 = vld [vmem:[%s1 + $0x2ac] sm:$0xf]
      %v366 = vld [vmem:[%s1 + $0x2b0] sm:$0xf]
      %v367 = vld [vmem:[%s1 + $0x2b4] sm:$0xf]
      %v368 = vld [vmem:[%s1 + $0x2b8] sm:$0xf]
      %v369 = vld [vmem:[%s1 + $0x2bc] sm:$0xf]
      %v370 = vld [vmem:[%s1 + $0x2c0] sm:$0xf]
      %v371 = vld [vmem:[%s1 + $0x2c4] sm:$0xf]
      %v372 = vld [vmem:[%s1 + $0x2c8] sm:$0xf]
      %v373 = vld [vmem:[%s1 + $0x2cc] sm:$0x1]
      %v374 = vld [vmem:[%s2] sm:$0x1]
      %v376 = vlaneseq
      %v377 = vshrl.u32 %v376, 7
      %v378 = vsub.s32 0, %v377
      %v379 = vrot.slane %v374, %v378
      %v561 = vunpack.c.l.b16 %v194
      %v562 = vunpack.c.l.b16 %v195
      %v563 = vunpack.c.l.b16 %v196
      %v564 = vunpack.c.l.b16 %v197
      %v565 = vunpack.c.l.b16 %v198
      %v566 = vunpack.c.l.b16 %v199
      %v567 = vunpack.c.l.b16 %v200
      %v568 = vunpack.c.l.b16 %v201
      %v569 = vunpack.c.l.b16 %v202
      %v570 = vunpack.c.l.b16 %v203
      %v571 = vunpack.c.l.b16 %v204
      %v572 = vunpack.c.l.b16 %v205
      %v573 = vunpack.c.l.b16 %v206
      %v574 = vunpack.c.l.b16 %v207
      %v575 = vunpack.c.l.b16 %v208
      %v576 = vunpack.c.l.b16 %v209
      %v577 = vunpack.c.l.b16 %v210
      %v578 = vunpack.c.l.b16 %v211
      %v579 = vunpack.c.l.b16 %v212
      %v580 = vunpack.c.l.b16 %v213
      %v581 = vunpack.c.l.b16 %v214
      %v582 = vunpack.c.l.b16 %v215
      %v583 = vunpack.c.l.b16 %v216
      %v584 = vunpack.c.l.b16 %v217
      %v585 = vunpack.c.l.b16 %v218
      %v586 = vunpack.c.l.b16 %v219
      %v587 = vunpack.c.l.b16 %v220
      %v588 = vunpack.c.l.b16 %v221
      %v589 = vunpack.c.l.b16 %v222
      %v590 = vunpack.c.l.b16 %v223
      %v591 = vunpack.c.l.b16 %v224
      %v592 = vunpack.c.l.b16 %v225
      %v593 = vunpack.c.l.b16 %v226
      %v594 = vunpack.c.l.b16 %v227
      %v595 = vunpack.c.l.b16 %v228
      %v596 = vunpack.c.l.b16 %v229
      %v597 = vunpack.c.l.b16 %v230
      %v598 = vunpack.c.l.b16 %v231
      %v599 = vunpack.c.l.b16 %v232
      %v600 = vunpack.c.l.b16 %v233
      %v601 = vunpack.c.l.b16 %v234
      %v602 = vunpack.c.l.b16 %v235
      %v603 = vunpack.c.l.b16 %v236
      %v604 = vunpack.c.l.b16 %v237
      %v605 = vunpack.c.l.b16 %v238
      %v606 = vunpack.c.l.b16 %v239
      %v607 = vunpack.c.l.b16 %v240
      %v608 = vunpack.c.l.b16 %v241
      %v609 = vunpack.c.l.b16 %v242
      %v610 = vunpack.c.l.b16 %v243
      %v611 = vunpack.c.l.b16 %v244
      %v612 = vunpack.c.l.b16 %v245
      %v613 = vunpack.c.l.b16 %v246
      %v614 = vunpack.c.l.b16 %v247
      %v615 = vunpack.c.l.b16 %v248
      %v616 = vunpack.c.l.b16 %v249
      %v617 = vunpack.c.l.b16 %v250
      %v618 = vunpack.c.l.b16 %v251
      %v619 = vunpack.c.l.b16 %v252
      %v620 = vunpack.c.l.b16 %v253
      %v621 = vunpack.c.l.b16 %v254
      %v622 = vunpack.c.l.b16 %v255
      %v623 = vunpack.c.l.b16 %v256
      %v624 = vunpack.c.l.b16 %v257
      %v625 = vunpack.c.l.b16 %v258
      %v626 = vunpack.c.l.b16 %v259
      %v627 = vunpack.c.l.b16 %v260
      %v628 = vunpack.c.l.b16 %v261
      %v629 = vunpack.c.l.b16 %v262
      %v630 = vunpack.c.l.b16 %v263
      %v631 = vunpack.c.l.b16 %v264
      %v632 = vunpack.c.l.b16 %v265
      %v633 = vunpack.c.l.b16 %v266
      %v634 = vunpack.c.l.b16 %v267
      %v635 = vunpack.c.l.b16 %v268
      %v636 = vunpack.c.l.b16 %v269
      %v637 = vunpack.c.l.b16 %v270
      %v638 = vunpack.c.l.b16 %v271
      %v639 = vunpack.c.l.b16 %v272
      %v640 = vunpack.c.l.b16 %v273
      %v641 = vunpack.c.l.b16 %v274
      %v642 = vunpack.c.l.b16 %v275
      %v643 = vunpack.c.l.b16 %v276
      %v644 = vunpack.c.l.b16 %v277
      %v645 = vunpack.c.l.b16 %v278
      %v646 = vunpack.c.l.b16 %v279
      %v647 = vunpack.c.l.b16 %v280
      %v648 = vunpack.c.l.b16 %v281
      %v649 = vunpack.c.l.b16 %v282
      %v650 = vunpack.c.l.b16 %v283
      %v651 = vunpack.c.l.b16 %v284
      %v652 = vunpack.c.l.b16 %v285
      %v653 = vunpack.c.l.b16 %v286
      %v654 = vunpack.c.l.b16 %v287
      %v655 = vunpack.c.l.b16 %v288
      %v656 = vunpack.c.l.b16 %v289
      %v657 = vunpack.c.l.b16 %v290
      %v658 = vunpack.c.l.b16 %v291
      %v659 = vunpack.c.l.b16 %v292
      %v660 = vunpack.c.l.b16 %v293
      %v661 = vunpack.c.l.b16 %v294
      %v662 = vunpack.c.l.b16 %v295
      %v663 = vunpack.c.l.b16 %v296
      %v664 = vunpack.c.l.b16 %v297
      %v665 = vunpack.c.l.b16 %v298
      %v666 = vunpack.c.l.b16 %v299
      %v667 = vunpack.c.l.b16 %v300
      %v668 = vunpack.c.l.b16 %v301
      %v669 = vunpack.c.l.b16 %v302
      %v670 = vunpack.c.l.b16 %v303
      %v671 = vunpack.c.l.b16 %v304
      %v672 = vunpack.c.l.b16 %v305
      %v673 = vunpack.c.l.b16 %v306
      %v674 = vunpack.c.l.b16 %v307
      %v675 = vunpack.c.l.b16 %v308
      %v676 = vunpack.c.l.b16 %v309
      %v677 = vunpack.c.l.b16 %v310
      %v678 = vunpack.c.l.b16 %v311
      %v679 = vunpack.c.l.b16 %v312
      %v680 = vunpack.c.l.b16 %v313
      %v681 = vunpack.c.l.b16 %v314
      %v682 = vunpack.c.l.b16 %v315
      %v683 = vunpack.c.l.b16 %v316
      %v684 = vunpack.c.l.b16 %v317
      %v685 = vunpack.c.l.b16 %v318
      %v686 = vunpack.c.l.b16 %v319
      %v687 = vunpack.c.l.b16 %v320
      %v688 = vunpack.c.l.b16 %v321
      %v689 = vunpack.c.l.b16 %v322
      %v690 = vunpack.c.l.b16 %v323
      %v691 = vunpack.c.l.b16 %v324
      %v692 = vunpack.c.l.b16 %v325
      %v693 = vunpack.c.l.b16 %v326
      %v694 = vunpack.c.l.b16 %v327
      %v695 = vunpack.c.l.b16 %v328
      %v696 = vunpack.c.l.b16 %v329
      %v697 = vunpack.c.l.b16 %v330
      %v698 = vunpack.c.l.b16 %v331
      %v699 = vunpack.c.l.b16 %v332
      %v700 = vunpack.c.l.b16 %v333
      %v701 = vunpack.c.l.b16 %v334
      %v702 = vunpack.c.l.b16 %v335
      %v703 = vunpack.c.l.b16 %v336
      %v704 = vunpack.c.l.b16 %v337
      %v705 = vunpack.c.l.b16 %v338
      %v706 = vunpack.c.l.b16 %v339
      %v707 = vunpack.c.l.b16 %v340
      %v708 = vunpack.c.l.b16 %v341
      %v709 = vunpack.c.l.b16 %v342
      %v710 = vunpack.c.l.b16 %v343
      %v711 = vunpack.c.l.b16 %v344
      %v712 = vunpack.c.l.b16 %v345
      %v713 = vunpack.c.l.b16 %v346
      %v714 = vunpack.c.l.b16 %v347
      %v715 = vunpack.c.l.b16 %v348
      %v716 = vunpack.c.l.b16 %v349
      %v717 = vunpack.c.l.b16 %v350
      %v718 = vunpack.c.l.b16 %v351
      %v719 = vunpack.c.l.b16 %v352
      %v720 = vunpack.c.l.b16 %v353
      %v721 = vunpack.c.l.b16 %v354
      %v722 = vunpack.c.l.b16 %v355
      %v723 = vunpack.c.l.b16 %v356
      %v724 = vunpack.c.l.b16 %v357
      %v725 = vunpack.c.l.b16 %v358
      %v726 = vunpack.c.l.b16 %v359
      %v727 = vunpack.c.l.b16 %v360
      %v728 = vunpack.c.l.b16 %v361
      %v729 = vunpack.c.l.b16 %v362
      %v730 = vunpack.c.l.b16 %v363
      %v731 = vunpack.c.l.b16 %v364
      %v732 = vunpack.c.l.b16 %v365
      %v733 = vunpack.c.l.b16 %v366
      %v734 = vunpack.c.l.b16 %v367
      %v735 = vunpack.c.l.b16 %v368
      %v736 = vunpack.c.l.b16 %v369
      %v737 = vunpack.c.l.b16 %v370
      %v738 = vunpack.c.l.b16 %v371
      %v739 = vunpack.c.l.b16 %v372
      %v740 = vunpack.c.l.b16 %v373
      %v741 = vpack.c.b16 %v562, %v561
      %v742 = vpack.c.b16 %v564, %v563
      %v743 = vpack.c.b16 %v566, %v565
      %v744 = vpack.c.b16 %v568, %v567
      %v745 = vpack.c.b16 %v570, %v569
      %v746 = vpack.c.b16 %v572, %v571
      %v747 = vpack.c.b16 %v574, %v573
      %v748 = vpack.c.b16 %v576, %v575
      %v749 = vpack.c.b16 %v578, %v577
      %v750 = vpack.c.b16 %v580, %v579
      %v751 = vpack.c.b16 %v582, %v581
      %v752 = vpack.c.b16 %v584, %v583
      %v753 = vpack.c.b16 %v586, %v585
      %v754 = vpack.c.b16 %v588, %v587
      %v755 = vpack.c.b16 %v590, %v589
      %v756 = vpack.c.b16 %v592, %v591
      %v757 = vpack.c.b16 %v594, %v593
      %v758 = vpack.c.b16 %v596, %v595
      %v759 = vpack.c.b16 %v598, %v597
      %v760 = vpack.c.b16 %v600, %v599
      %v761 = vpack.c.b16 %v602, %v601
      %v762 = vpack.c.b16 %v604, %v603
      %v763 = vpack.c.b16 %v606, %v605
      %v764 = vpack.c.b16 %v608, %v607
      %v765 = vpack.c.b16 %v610, %v609
      %v766 = vpack.c.b16 %v612, %v611
      %v767 = vpack.c.b16 %v614, %v613
      %v768 = vpack.c.b16 %v616, %v615
      %v769 = vpack.c.b16 %v618, %v617
      %v770 = vpack.c.b16 %v620, %v619
      %v771 = vpack.c.b16 %v622, %v621
      %v772 = vpack.c.b16 %v624, %v623
      %v773 = vpack.c.b16 %v626, %v625
      %v774 = vpack.c.b16 %v628, %v627
      %v775 = vpack.c.b16 %v630, %v629
      %v776 = vpack.c.b16 %v632, %v631
      %v777 = vpack.c.b16 %v634, %v633
      %v778 = vpack.c.b16 %v636, %v635
      %v779 = vpack.c.b16 %v638, %v637
      %v780 = vpack.c.b16 %v640, %v639
      %v781 = vpack.c.b16 %v642, %v641
      %v782 = vpack.c.b16 %v644, %v643
      %v783 = vpack.c.b16 %v646, %v645
      %v784 = vpack.c.b16 %v648, %v647
      %v785 = vpack.c.b16 %v650, %v649
      %v786 = vpack.c.b16 %v652, %v651
      %v787 = vpack.c.b16 %v654, %v653
      %v788 = vpack.c.b16 %v656, %v655
      %v789 = vpack.c.b16 %v658, %v657
      %v790 = vpack.c.b16 %v660, %v659
      %v791 = vpack.c.b16 %v662, %v661
      %v792 = vpack.c.b16 %v664, %v663
      %v793 = vpack.c.b16 %v666, %v665
      %v794 = vpack.c.b16 %v668, %v667
      %v795 = vpack.c.b16 %v670, %v669
      %v796 = vpack.c.b16 %v672, %v671
      %v797 = vpack.c.b16 %v674, %v673
      %v798 = vpack.c.b16 %v676, %v675
      %v799 = vpack.c.b16 %v678, %v677
      %v800 = vpack.c.b16 %v680, %v679
      %v801 = vpack.c.b16 %v682, %v681
      %v802 = vpack.c.b16 %v684, %v683
      %v803 = vpack.c.b16 %v686, %v685
      %v804 = vpack.c.b16 %v688, %v687
      %v805 = vpack.c.b16 %v690, %v689
      %v806 = vpack.c.b16 %v692, %v691
      %v807 = vpack.c.b16 %v694, %v693
      %v808 = vpack.c.b16 %v696, %v695
      %v809 = vpack.c.b16 %v698, %v697
      %v810 = vpack.c.b16 %v700, %v699
      %v811 = vpack.c.b16 %v702, %v701
      %v812 = vpack.c.b16 %v704, %v703
      %v813 = vpack.c.b16 %v706, %v705
      %v814 = vpack.c.b16 %v708, %v707
      %v815 = vpack.c.b16 %v710, %v709
      %v816 = vpack.c.b16 %v712, %v711
      %v817 = vpack.c.b16 %v714, %v713
      %v818 = vpack.c.b16 %v716, %v715
      %v819 = vpack.c.b16 %v718, %v717
      %v820 = vpack.c.b16 %v720, %v719
      %v821 = vpack.c.b16 %v722, %v721
      %v822 = vpack.c.b16 %v724, %v723
      %v823 = vpack.c.b16 %v726, %v725
      %v824 = vpack.c.b16 %v728, %v727
      %v825 = vpack.c.b16 %v730, %v729
      %v826 = vpack.c.b16 %v732, %v731
      %v827 = vpack.c.b16 %v734, %v733
      %v828 = vpack.c.b16 %v736, %v735
      %v829 = vpack.c.b16 %v738, %v737
      %v830 = vpack.c.b16 %v740, %v739
      %vm920 = vcmask 203776
      %v922 = vsel %vm920, %v193, 0
      %vm924 = vcmask 1043456
      %vm925 = vcmask 1044480
      %v926 = vsel %vm924, 4294967295, 65535
      %v927 = vsel %vm925, %v926, 0
      %v929 = vand.u32 %v830, %v927
      %931 = vmatprep.subr.bf16.mxu0 0
      %932 = vmatpush1.bf16.msra.mxu0 %v741
      %933 = vmatprep.subr.bf16.mxu0 0
      %934 = vmatpush1.bf16.msra.mxu0 %v742
      %935 = vmatprep.subr.bf16.mxu0 0
      %936 = vmatpush1.bf16.msra.mxu0 %v743
      %937 = vmatprep.subr.bf16.mxu0 0
      %938 = vmatpush1.bf16.msra.mxu0 %v744
      %939 = vmatprep.subr.bf16.mxu0 0
      %940 = vmatpush1.bf16.msra.mxu0 %v745
      %941 = vmatprep.subr.bf16.mxu0 0
      %942 = vmatpush1.bf16.msra.mxu0 %v746
      %943 = vmatprep.subr.bf16.mxu0 0
      %944 = vmatpush1.bf16.msra.mxu0 %v747
      %945 = vmatprep.subr.bf16.mxu0 0
      %946 = vmatpush1.bf16.msra.mxu0 %v748
      %947 = vmatprep.subr.bf16.mxu0 0
      %948 = vmatpush1.bf16.msra.mxu0 %v749
      %949 = vmatprep.subr.bf16.mxu0 0
      %950 = vmatpush1.bf16.msra.mxu0 %v750
      %951 = vmatprep.subr.bf16.mxu0 0
      %952 = vmatpush1.bf16.msra.mxu0 %v751
      %953 = vmatprep.subr.bf16.mxu0 0
      %954 = vmatpush1.bf16.msra.mxu0 %v752
      %955 = vmatprep.subr.bf16.mxu0 0
      %956 = vmatpush1.bf16.msra.mxu0 %v753
      %957 = vmatprep.subr.bf16.mxu0 0
      %958 = vmatpush1.bf16.msra.mxu0 %v754
      %959 = vmatprep.subr.bf16.mxu0 0
      %960 = vmatpush1.bf16.msra.mxu0 %v755
      %961 = vmatprep.subr.bf16.mxu0 0
      %962 = vmatpush1.bf16.msra.mxu0 %v756
      %963 = vmatprep.mubr.bf16.mxu0 %v183
      %964 = vmatmul.mubr.bf16.gmra.mrb[0].mxu0 %v182
      %v965 = vpop.f32.mrb[0].mxu0
      %v966 = vadd.f32 %v379, %v965
      %v967 = vpop.f32.mrb[0].mxu0
      %v968 = vpop.f32.mrb[0].mxu0
      %v969 = vpop.f32.mrb[0].mxu0
      %970 = vdwg.mxu0
      %971 = vmatprep.subr.bf16.mxu0 0
      %972 = vmatpush1.bf16.msra.mxu0 %v757
      %973 = vmatprep.subr.bf16.mxu0 0
      %974 = vmatpush1.bf16.msra.mxu0 %v758
      %975 = vmatprep.subr.bf16.mxu0 0
      %976 = vmatpush1.bf16.msra.mxu0 %v759
      %977 = vmatprep.subr.bf16.mxu0 0
      %978 = vmatpush1.bf16.msra.mxu0 %v760
      %979 = vmatprep.subr.bf16.mxu0 0
      %980 = vmatpush1.bf16.msra.mxu0 %v761
      %981 = vmatprep.subr.bf16.mxu0 0
      %982 = vmatpush1.bf16.msra.mxu0 %v762
      %983 = vmatprep.subr.bf16.mxu0 0
      %984 = vmatpush1.bf16.msra.mxu0 %v763
      %985 = vmatprep.subr.bf16.mxu0 0
      %986 = vmatpush1.bf16.msra.mxu0 %v764
      %987 = vmatprep.subr.bf16.mxu0 0
      %988 = vmatpush1.bf16.msra.mxu0 %v765
      %989 = vmatprep.subr.bf16.mxu0 0
      %990 = vmatpush1.bf16.msra.mxu0 %v766
      %991 = vmatprep.subr.bf16.mxu0 0
      %992 = vmatpush1.bf16.msra.mxu0 %v767
      %993 = vmatprep.subr.bf16.mxu0 0
      %994 = vmatpush1.bf16.msra.mxu0 %v768
      %995 = vmatprep.subr.bf16.mxu0 0
      %996 = vmatpush1.bf16.msra.mxu0 %v769
      %997 = vmatprep.subr.bf16.mxu0 0
      %998 = vmatpush1.bf16.msra.mxu0 %v770
      %999 = vmatprep.subr.bf16.mxu0 0
      %1000 = vmatpush1.bf16.msra.mxu0 %v771
      %1001 = vmatprep.subr.bf16.mxu0 0
      %1002 = vmatpush1.bf16.msra.mxu0 %v772
      %1003 = vmatprep.mubr.bf16.mxu0 %v185
      %1004 = vmatmul.mubr.bf16.gmra.mrb[0].mxu0 %v184
      %v1005 = vpop.f32.mrb[0].mxu0
      %v1006 = vadd.f32 %v966, %v1005
      %v1007 = vpop.f32.mrb[0].mxu0
      %v1008 = vpop.f32.mrb[0].mxu0
      %v1009 = vpop.f32.mrb[0].mxu0
      %1010 = vdwg.mxu0
      %1011 = vmatprep.subr.bf16.mxu0 0
      %1012 = vmatpush1.bf16.msra.mxu0 %v773
      %1013 = vmatprep.subr.bf16.mxu0 0
      %1014 = vmatpush1.bf16.msra.mxu0 %v774
      %1015 = vmatprep.subr.bf16.mxu0 0
      %1016 = vmatpush1.bf16.msra.mxu0 %v775
      %1017 = vmatprep.subr.bf16.mxu0 0
      %1018 = vmatpush1.bf16.msra.mxu0 %v776
      %1019 = vmatprep.subr.bf16.mxu0 0
      %1020 = vmatpush1.bf16.msra.mxu0 %v777
      %1021 = vmatprep.subr.bf16.mxu0 0
      %1022 = vmatpush1.bf16.msra.mxu0 %v778
      %1023 = vmatprep.subr.bf16.mxu0 0
      %1024 = vmatpush1.bf16.msra.mxu0 %v779
      %1025 = vmatprep.subr.bf16.mxu0 0
      %1026 = vmatpush1.bf16.msra.mxu0 %v780
      %1027 = vmatprep.subr.bf16.mxu0 0
      %1028 = vmatpush1.bf16.msra.mxu0 %v781
      %1029 = vmatprep.subr.bf16.mxu0 0
      %1030 = vmatpush1.bf16.msra.mxu0 %v782
      %1031 = vmatprep.subr.bf16.mxu0 0
      %1032 = vmatpush1.bf16.msra.mxu0 %v783
      %1033 = vmatprep.subr.bf16.mxu0 0
      %1034 = vmatpush1.bf16.msra.mxu0 %v784
      %1035 = vmatprep.subr.bf16.mxu0 0
      %1036 = vmatpush1.bf16.msra.mxu0 %v785
      %1037 = vmatprep.subr.bf16.mxu0 0
      %1038 = vmatpush1.bf16.msra.mxu0 %v786
      %1039 = vmatprep.subr.bf16.mxu0 0
      %1040 = vmatpush1.bf16.msra.mxu0 %v787
      %1041 = vmatprep.subr.bf16.mxu0 0
      %1042 = vmatpush1.bf16.msra.mxu0 %v788
      %1043 = vmatprep.mubr.bf16.mxu0 %v187
      %1044 = vmatmul.mubr.bf16.gmra.mrb[0].mxu0 %v186
      %v1045 = vpop.f32.mrb[0].mxu0
      %v1046 = vadd.f32 %v1006, %v1045
      %v1047 = vpop.f32.mrb[0].mxu0
      %v1048 = vpop.f32.mrb[0].mxu0
      %v1049 = vpop.f32.mrb[0].mxu0
      %1050 = vdwg.mxu0
      %1051 = vmatprep.subr.bf16.mxu0 0
      %1052 = vmatpush1.bf16.msra.mxu0 %v789
      %1053 = vmatprep.subr.bf16.mxu0 0
      %1054 = vmatpush1.bf16.msra.mxu0 %v790
      %1055 = vmatprep.subr.bf16.mxu0 0
      %1056 = vmatpush1.bf16.msra.mxu0 %v791
      %1057 = vmatprep.subr.bf16.mxu0 0
      %1058 = vmatpush1.bf16.msra.mxu0 %v792
      %1059 = vmatprep.subr.bf16.mxu0 0
      %1060 = vmatpush1.bf16.msra.mxu0 %v793
      %1061 = vmatprep.subr.bf16.mxu0 0
      %1062 = vmatpush1.bf16.msra.mxu0 %v794
      %1063 = vmatprep.subr.bf16.mxu0 0
      %1064 = vmatpush1.bf16.msra.mxu0 %v795
      %1065 = vmatprep.subr.bf16.mxu0 0
      %1066 = vmatpush1.bf16.msra.mxu0 %v796
      %1067 = vmatprep.subr.bf16.mxu0 0
      %1068 = vmatpush1.bf16.msra.mxu0 %v797
      %1069 = vmatprep.subr.bf16.mxu0 0
      %1070 = vmatpush1.bf16.msra.mxu0 %v798
      %1071 = vmatprep.subr.bf16.mxu0 0
      %1072 = vmatpush1.bf16.msra.mxu0 %v799
      %1073 = vmatprep.subr.bf16.mxu0 0
      %1074 = vmatpush1.bf16.msra.mxu0 %v800
      %1075 = vmatprep.subr.bf16.mxu0 0
      %1076 = vmatpush1.bf16.msra.mxu0 %v801
      %1077 = vmatprep.subr.bf16.mxu0 0
      %1078 = vmatpush1.bf16.msra.mxu0 %v802
      %1079 = vmatprep.subr.bf16.mxu0 0
      %1080 = vmatpush1.bf16.msra.mxu0 %v803
      %1081 = vmatprep.subr.bf16.mxu0 0
      %1082 = vmatpush1.bf16.msra.mxu0 %v804
      %1083 = vmatprep.mubr.bf16.mxu0 %v189
      %1084 = vmatmul.mubr.bf16.gmra.mrb[0].mxu0 %v188
      %v1085 = vpop.f32.mrb[0].mxu0
      %v1086 = vadd.f32 %v1046, %v1085
      %v1087 = vpop.f32.mrb[0].mxu0
      %v1088 = vpop.f32.mrb[0].mxu0
      %v1089 = vpop.f32.mrb[0].mxu0
      %1090 = vdwg.mxu0
      %1091 = vmatprep.subr.bf16.mxu0 0
      %1092 = vmatpush1.bf16.msra.mxu0 %v805
      %1093 = vmatprep.subr.bf16.mxu0 0
      %1094 = vmatpush1.bf16.msra.mxu0 %v806
      %1095 = vmatprep.subr.bf16.mxu0 0
      %1096 = vmatpush1.bf16.msra.mxu0 %v807
      %1097 = vmatprep.subr.bf16.mxu0 0
      %1098 = vmatpush1.bf16.msra.mxu0 %v808
      %1099 = vmatprep.subr.bf16.mxu0 0
      %1100 = vmatpush1.bf16.msra.mxu0 %v809
      %1101 = vmatprep.subr.bf16.mxu0 0
      %1102 = vmatpush1.bf16.msra.mxu0 %v810
      %1103 = vmatprep.subr.bf16.mxu0 0
      %1104 = vmatpush1.bf16.msra.mxu0 %v811
      %1105 = vmatprep.subr.bf16.mxu0 0
      %1106 = vmatpush1.bf16.msra.mxu0 %v812
      %1107 = vmatprep.subr.bf16.mxu0 0
      %1108 = vmatpush1.bf16.msra.mxu0 %v813
      %1109 = vmatprep.subr.bf16.mxu0 0
      %1110 = vmatpush1.bf16.msra.mxu0 %v814
      %1111 = vmatprep.subr.bf16.mxu0 0
      %1112 = vmatpush1.bf16.msra.mxu0 %v815
      %1113 = vmatprep.subr.bf16.mxu0 0
      %1114 = vmatpush1.bf16.msra.mxu0 %v816
      %1115 = vmatprep.subr.bf16.mxu0 0
      %1116 = vmatpush1.bf16.msra.mxu0 %v817
      %1117 = vmatprep.subr.bf16.mxu0 0
      %1118 = vmatpush1.bf16.msra.mxu0 %v818
      %1119 = vmatprep.subr.bf16.mxu0 0
      %1120 = vmatpush1.bf16.msra.mxu0 %v819
      %1121 = vmatprep.subr.bf16.mxu0 0
      %1122 = vmatpush1.bf16.msra.mxu0 %v820
      %1123 = vmatprep.mubr.bf16.mxu0 %v191
      %1124 = vmatmul.mubr.bf16.gmra.mrb[0].mxu0 %v190
      %v1125 = vpop.f32.mrb[0].mxu0
      %v1126 = vadd.f32 %v1086, %v1125
      %v1127 = vpop.f32.mrb[0].mxu0
      %v1128 = vpop.f32.mrb[0].mxu0
      %v1129 = vpop.f32.mrb[0].mxu0
      %1130 = vdwg.mxu0
      %1131 = vmatprep.subr.bf16.mxu0 0
      %1132 = vmatpush1.bf16.msra.mxu0 %v821
      %1133 = vmatprep.subr.bf16.mxu0 0
      %1134 = vmatpush1.bf16.msra.mxu0 %v822
      %1135 = vmatprep.subr.bf16.mxu0 0
      %1136 = vmatpush1.bf16.msra.mxu0 %v823
      %1137 = vmatprep.subr.bf16.mxu0 0
      %1138 = vmatpush1.bf16.msra.mxu0 %v824
      %1139 = vmatprep.subr.bf16.mxu0 0
      %1140 = vmatpush1.bf16.msra.mxu0 %v825
      %1141 = vmatprep.subr.bf16.mxu0 0
      %1142 = vmatpush1.bf16.msra.mxu0 %v826
      %1143 = vmatprep.subr.bf16.mxu0 0
      %1144 = vmatpush1.bf16.msra.mxu0 %v827
      %1145 = vmatprep.subr.bf16.mxu0 0
      %1146 = vmatpush1.bf16.msra.mxu0 %v828
      %1147 = vmatprep.subr.bf16.mxu0 0
      %1148 = vmatpush1.bf16.msra.mxu0 %v829
      %1149 = vmatprep.subr.bf16.mxu0 0
      %1150 = vmatpush1.bf16.msra.mxu0 %v929
      %1151 = vmatprep.subr.bf16.mxu0 0
      %1152 = vmatpush1.bf16.msra.mxu0 0
      %1153 = vmatprep.subr.bf16.mxu0 0
      %1154 = vmatpush1.bf16.msra.mxu0 0
      %1155 = vmatprep.subr.bf16.mxu0 0
      %1156 = vmatpush1.bf16.msra.mxu0 0
      %1157 = vmatprep.subr.bf16.mxu0 0
      %1158 = vmatpush1.bf16.msra.mxu0 0
      %1159 = vmatprep.subr.bf16.mxu0 0
      %1160 = vmatpush1.bf16.msra.mxu0 0
      %1161 = vmatprep.subr.bf16.mxu0 0
      %1162 = vmatpush1.bf16.msra.mxu0 0
      %1163 = vmatprep.mubr.bf16.mxu0 %v922
      %1164 = vmatmul.mubr.bf16.gmra.mrb[0].mxu0 %v192
      %v1165 = vpop.f32.mrb[0].mxu0
      %v1166 = vadd.f32 %v1126, %v1165
      %v1167 = vpop.f32.mrb[0].mxu0
      %v1168 = vpop.f32.mrb[0].mxu0
      %v1169 = vpop.f32.mrb[0].mxu0
      %1170 = vdwg.mxu0
      %1171 = vst [vmem:[%s168] sm:$0xff] %v1166
      %p1172 = scmp.lt.s32.totalorder %s14, 1
      %s1173 = scalar_select %p1172, %s14, 1
      %s1174 = smul.addr %s1173, 8
      %s1175 = scalar_lea.vmem %s3, %s1174
      // Predicated region
      $region33: #{scoring_forward.17} parent=31 // pred_check
        %p1176 = pneg %p100
      $region34: #{scoring_forward.17} parent=31 // pred_check_branch
        %1178 = sbr.rel (%p1176) target = $region36
      $region35: #{scoring_forward.17} parent=31 // pred_region
        _
      $region36: #{scoring_forward.17} parent=31 // pred_fallthru
        _
    $region32: #{scoring_forward.17} parent=5 // pred_fallthru
      _
    %p1179 = scmp.le.s32.totalorder 2, %s9
    // Predicated region
    $region37: #{scoring_forward.17} parent=5 // pred_check
      %p1180 = pneg %p1179
    $region38: #{scoring_forward.17} parent=5 // pred_check_branch
      %1182 = sbr.rel (%p1180) target = $region40
    $region39: #{scoring_forward.17} parent=5 // pred_region
      %s1183 = ssub.s32 %s9, 2
      // Predicated region
      $region41: #{scoring_forward.17} parent=39 // pred_check
        %p1184 = pneg %p106
      $region42: #{scoring_forward.17} parent=39 // pred_check_branch
        %1186 = sbr.rel (%p1184) target = $region44
      $region43: #{scoring_forward.17} parent=39 // pred_region
        %p1187 = scmp.lt.s32.totalorder %s15, 1
        %s1188 = scalar_select %p1187, %s15, 1
        %s1189 = smul.addr %s1188, 8
        %s1190 = scalar_lea.vmem %s3, %s1189
      $region44: #{scoring_forward.17} parent=39 // pred_fallthru
        _
    $region40: #{scoring_forward.17} parent=5 // pred_fallthru
      _
  $region6: #{scoring_forward.17} parent=0 // loop_footer
    %s13 = sadd.s32 1, %s9
  $region7: #{scoring_forward.17} parent=0 // loop_footer_branch
    %8 = sbr.rel target = $region3
  $region8: #{scoring_forward.17} parent=0 // loop_exit
    _

// kernel: scoring_forward.18
$region0: #{scoring_forward.18}
  #allocation0 [shape = 'u32[]', space=smem, size = 0x4, offset = 0x4, fixed_abs, tag = 'smem constant byte address 0x4 - core index']
  #allocation1 [shape = 'u32[144,128]{1,0:T(1,128)}', space=vmem, size = 0x12000, scoped, tag = 'internal scratch']
  %s0 = inlined_call_operand.vmem [shape: f32[48,256], index: 0, kind: input, shape index: {}]
  %s1 = inlined_call_operand.vmem [shape: f32[48,8], index: 1, kind: input, shape index: {}]
  %s2 = inlined_call_operand.vmem [shape: f32[48,15], index: 2, kind: input, shape index: {}]
  %s3 = inlined_call_operand.vmem [shape: bf16[256,128], index: 3, kind: input, shape index: {}]
  %s4 = inlined_call_operand.vmem [shape: bf16[8,128], index: 4, kind: input, shape index: {}]
  %s5 = inlined_call_operand.vmem [shape: bf16[5,128], index: 5, kind: input, shape index: {}]
  %s6 = inlined_call_operand.vmem [shape: bf16[128,128], index: 6, kind: input, shape index: {}]
  %s7 = inlined_call_operand.vmem [shape: bf16[2,128], index: 7, kind: input, shape index: {}]
  %s8 = inlined_call_operand.vmem [shape: bf16[128,128], index: 8, kind: input, shape index: {}]
  %s9 = inlined_call_operand.vmem [shape: bf16[2,128], index: 9, kind: input, shape index: {}]
  %s10 = inlined_call_operand.vmem [shape: f32[40,128], index: 10, kind: input, shape index: {}]
  %s11 = inlined_call_operand.vmem [shape: f32[48,128], index: 11, kind: output, shape index: {0}]
  %s12 = inlined_call_operand.vmem [shape: f32[48,6], index: 12, kind: output, shape index: {1}]
  %13 = xla_tuple %s11, %s12
  %s14 = sld [smem:[#allocation0]]
  $region85: #{scoring_forward.18} parent=0
    _
  %s16 = ssub.s32 1, %s14
  %s17 = scalar_select 0, %s16, %s14
  loop: start=0, step=1, limit=4
  $region2: #{scoring_forward.18} parent=0 // loop_pre_header
    _
  $region3: #{scoring_forward.18} parent=0 // loop_header
    %s19 = sphi 0, %s23
    %p20 = scmp.ge.s32.totalorder %s19, 4
    %s29 = sphi 0, %s31
    %s32 = sphi 0, %s29
    %s33 = sphi 0, %s32
    %s49 = sphi 0, %s33
    %s55 = sphi 0, %s57
    %s58 = sphi 0, %s55
    %s59 = sphi 0, %s58
    %s75 = sphi 0, %s59
    %s81 = sphi 0, %s83
    %s84 = sphi 0, %s81
    %s85 = sphi 0, %s84
    %s101 = sphi 0, %s85
    %s105 = sphi 0, %s105
    %s107 = sphi 0, %s105
    %s108 = sphi 0, %s107
    %s122 = sphi 0, %s108
    %s126 = sphi 0, %s126
    %s128 = sphi 0, %s126
    %s129 = sphi 0, %s128
    %s143 = sphi 0, %s129
    %s147 = sphi 0, %s147
    %s149 = sphi 0, %s147
    %s150 = sphi 0, %s149
    %s164 = sphi 0, %s150
    %s168 = sphi 0, %s168
    %s170 = sphi 0, %s168
    %s171 = sphi 0, %s170
    %s185 = sphi 0, %s171
    %s189 = sphi 0, %s189
    %s191 = sphi 0, %s189
    %s192 = sphi 0, %s191
    %s206 = sphi 0, %s192
    %s210 = sphi 0, %s210
    %s212 = sphi 0, %s210
    %s213 = sphi 0, %s212
    %s227 = sphi 0, %s213
    %s231 = sphi 0, %s231
    %s233 = sphi 0, %s231
    %s234 = sphi 0, %s233
    %s248 = sphi 0, %s234
    %s252 = sphi 0, %s252
    %s254 = sphi 0, %s252
    %s255 = sphi 0, %s254
    %s269 = sphi 0, %s255
    %s275 = sphi 0, %s277
    %s278 = sphi 0, %s275
    %s279 = sphi 0, %s278
    %s295 = sphi 0, %s279
    %s301 = sphi 0, %s303
    %s304 = sphi 0, %s301
    %s305 = sphi 0, %s304
    %s321 = sphi 0, %s305
  $region4: #{scoring_forward.18} parent=0 // loop_header_branch
    %22 = sbr.rel (%p20) target = $region8
  $region5: #{scoring_forward.18} parent=0 // loop_body
    %s24 = ssub.s32 %s19, 1
    %s25 = ssub.s32 %s19, 2
    %s26 = sadd.s32 %s19, 1
    %s27 = ssub.s32 %s19, %s26
    %p28 = scmp.eq.s32.totalorder %s27, 0
    %s30 = sadd.s32 %s29, 1
    %s31 = scalar_select %p28, %s29, %s30
    %p34 = pneg %p28
    %p35 = scmp.eq.s32.totalorder %s19, 1
    %p36 = por %p34, %p35
    %p37 = scmp.ne.s32.totalorder %s29, %s32
    %p38 = scmp.eq.s32.totalorder %s19, 0
    %p39 = por %p37, %p38
    %p40 = scmp.ne.s32.totalorder %s29, %s32
    %p41 = scmp.eq.s32.totalorder %s24, 1
    %p42 = por %p40, %p41
    %p43 = scmp.ne.s32.totalorder %s32, %s33
    %p44 = scmp.eq.s32.totalorder %s24, 0
    %p45 = por %p43, %p44
    %p46 = scmp.ne.s32.totalorder %s32, %s33
    %p47 = scmp.eq.s32.totalorder %s25, 1
    %p48 = por %p46, %p47
    %p50 = scmp.ne.s32.totalorder %s33, %s49
    %p51 = scmp.eq.s32.totalorder %s25, 0
    %p52 = por %p50, %p51
    %s53 = ssub.s32 %s19, %s26
    %p54 = scmp.eq.s32.totalorder %s53, 0
    %s56 = sadd.s32 %s55, 1
    %s57 = scalar_select %p54, %s55, %s56
    %p60 = pneg %p54
    %p61 = scmp.eq.s32.totalorder %s19, 1
    %p62 = por %p60, %p61
    %p63 = scmp.ne.s32.totalorder %s55, %s58
    %p64 = scmp.eq.s32.totalorder %s19, 0
    %p65 = por %p63, %p64
    %p66 = scmp.ne.s32.totalorder %s55, %s58
    %p67 = scmp.eq.s32.totalorder %s24, 1
    %p68 = por %p66, %p67
    %p69 = scmp.ne.s32.totalorder %s58, %s59
    %p70 = scmp.eq.s32.totalorder %s24, 0
    %p71 = por %p69, %p70
    %p72 = scmp.ne.s32.totalorder %s58, %s59
    %p73 = scmp.eq.s32.totalorder %s25, 1
    %p74 = por %p72, %p73
    %p76 = scmp.ne.s32.totalorder %s59, %s75
    %p77 = scmp.eq.s32.totalorder %s25, 0
    %p78 = por %p76, %p77
    %s79 = ssub.s32 %s19, %s26
    %p80 = scmp.eq.s32.totalorder %s79, 0
    %s82 = sadd.s32 %s81, 1
    %s83 = scalar_select %p80, %s81, %s82
    %p86 = pneg %p80
    %p87 = scmp.eq.s32.totalorder %s19, 1
    %p88 = por %p86, %p87
    %p89 = scmp.ne.s32.totalorder %s81, %s84
    %p90 = scmp.eq.s32.totalorder %s19, 0
    %p91 = por %p89, %p90
    %p92 = scmp.ne.s32.totalorder %s81, %s84
    %p93 = scmp.eq.s32.totalorder %s24, 1
    %p94 = por %p92, %p93
    %p95 = scmp.ne.s32.totalorder %s84, %s85
    %p96 = scmp.eq.s32.totalorder %s24, 0
    %p97 = por %p95, %p96
    %p98 = scmp.ne.s32.totalorder %s84, %s85
    %p99 = scmp.eq.s32.totalorder %s25, 1
    %p100 = por %p98, %p99
    %p102 = scmp.ne.s32.totalorder %s85, %s101
    %p103 = scmp.eq.s32.totalorder %s25, 0
    %p104 = por %p102, %p103
    %s106 = sadd.s32 %s105, 1
    %p109 = scmp.eq.s32.totalorder %s19, 1
    %p110 = scmp.ne.s32.totalorder %s105, %s107
    %p111 = scmp.eq.s32.totalorder %s19, 0
    %p112 = por %p110, %p111
    %p113 = scmp.ne.s32.totalorder %s105, %s107
    %p114 = scmp.eq.s32.totalorder %s24, 1
    %p115 = por %p113, %p114
    %p116 = scmp.ne.s32.totalorder %s107, %s108
    %p117 = scmp.eq.s32.totalorder %s24, 0
    %p118 = por %p116, %p117
    %p119 = scmp.ne.s32.totalorder %s107, %s108
    %p120 = scmp.eq.s32.totalorder %s25, 1
    %p121 = por %p119, %p120
    %p123 = scmp.ne.s32.totalorder %s108, %s122
    %p124 = scmp.eq.s32.totalorder %s25, 0
    %p125 = por %p123, %p124
    %s127 = sadd.s32 %s126, 1
    %p130 = scmp.eq.s32.totalorder %s19, 1
    %p131 = scmp.ne.s32.totalorder %s126, %s128
    %p132 = scmp.eq.s32.totalorder %s19, 0
    %p133 = por %p131, %p132
    %p134 = scmp.ne.s32.totalorder %s126, %s128
    %p135 = scmp.eq.s32.totalorder %s24, 1
    %p136 = por %p134, %p135
    %p137 = scmp.ne.s32.totalorder %s128, %s129
    %p138 = scmp.eq.s32.totalorder %s24, 0
    %p139 = por %p137, %p138
    %p140 = scmp.ne.s32.totalorder %s128, %s129
    %p141 = scmp.eq.s32.totalorder %s25, 1
    %p142 = por %p140, %p141
    %p144 = scmp.ne.s32.totalorder %s129, %s143
    %p145 = scmp.eq.s32.totalorder %s25, 0
    %p146 = por %p144, %p145
    %s148 = sadd.s32 %s147, 1
    %p151 = scmp.eq.s32.totalorder %s19, 1
    %p152 = scmp.ne.s32.totalorder %s147, %s149
    %p153 = scmp.eq.s32.totalorder %s19, 0
    %p154 = por %p152, %p153
    %p155 = scmp.ne.s32.totalorder %s147, %s149
    %p156 = scmp.eq.s32.totalorder %s24, 1
    %p157 = por %p155, %p156
    %p158 = scmp.ne.s32.totalorder %s149, %s150
    %p159 = scmp.eq.s32.totalorder %s24, 0
    %p160 = por %p158, %p159
    %p161 = scmp.ne.s32.totalorder %s149, %s150
    %p162 = scmp.eq.s32.totalorder %s25, 1
    %p163 = por %p161, %p162
    %p165 = scmp.ne.s32.totalorder %s150, %s164
    %p166 = scmp.eq.s32.totalorder %s25, 0
    %p167 = por %p165, %p166
    %s169 = sadd.s32 %s168, 1
    %p172 = scmp.eq.s32.totalorder %s19, 1
    %p173 = scmp.ne.s32.totalorder %s168, %s170
    %p174 = scmp.eq.s32.totalorder %s19, 0
    %p175 = por %p173, %p174
    %p176 = scmp.ne.s32.totalorder %s168, %s170
    %p177 = scmp.eq.s32.totalorder %s24, 1
    %p178 = por %p176, %p177
    %p179 = scmp.ne.s32.totalorder %s170, %s171
    %p180 = scmp.eq.s32.totalorder %s24, 0
    %p181 = por %p179, %p180
    %p182 = scmp.ne.s32.totalorder %s170, %s171
    %p183 = scmp.eq.s32.totalorder %s25, 1
    %p184 = por %p182, %p183
    %p186 = scmp.ne.s32.totalorder %s171, %s185
    %p187 = scmp.eq.s32.totalorder %s25, 0
    %p188 = por %p186, %p187
    %s190 = sadd.s32 %s189, 1
    %p193 = scmp.eq.s32.totalorder %s19, 1
    %p194 = scmp.ne.s32.totalorder %s189, %s191
    %p195 = scmp.eq.s32.totalorder %s19, 0
    %p196 = por %p194, %p195
    %p197 = scmp.ne.s32.totalorder %s189, %s191
    %p198 = scmp.eq.s32.totalorder %s24, 1
    %p199 = por %p197, %p198
    %p200 = scmp.ne.s32.totalorder %s191, %s192
    %p201 = scmp.eq.s32.totalorder %s24, 0
    %p202 = por %p200, %p201
    %p203 = scmp.ne.s32.totalorder %s191, %s192
    %p204 = scmp.eq.s32.totalorder %s25, 1
    %p205 = por %p203, %p204
    %p207 = scmp.ne.s32.totalorder %s192, %s206
    %p208 = scmp.eq.s32.totalorder %s25, 0
    %p209 = por %p207, %p208
    %s211 = sadd.s32 %s210, 1
    %p214 = scmp.eq.s32.totalorder %s19, 1
    %p215 = scmp.ne.s32.totalorder %s210, %s212
    %p216 = scmp.eq.s32.totalorder %s19, 0
    %p217 = por %p215, %p216
    %p218 = scmp.ne.s32.totalorder %s210, %s212
    %p219 = scmp.eq.s32.totalorder %s24, 1
    %p220 = por %p218, %p219
    %p221 = scmp.ne.s32.totalorder %s212, %s213
    %p222 = scmp.eq.s32.totalorder %s24, 0
    %p223 = por %p221, %p222
    %p224 = scmp.ne.s32.totalorder %s212, %s213
    %p225 = scmp.eq.s32.totalorder %s25, 1
    %p226 = por %p224, %p225
    %p228 = scmp.ne.s32.totalorder %s213, %s227
    %p229 = scmp.eq.s32.totalorder %s25, 0
    %p230 = por %p228, %p229
    %s232 = sadd.s32 %s231, 1
    %p235 = scmp.eq.s32.totalorder %s19, 1
    %p236 = scmp.ne.s32.totalorder %s231, %s233
    %p237 = scmp.eq.s32.totalorder %s19, 0
    %p238 = por %p236, %p237
    %p239 = scmp.ne.s32.totalorder %s231, %s233
    %p240 = scmp.eq.s32.totalorder %s24, 1
    %p241 = por %p239, %p240
    %p242 = scmp.ne.s32.totalorder %s233, %s234
    %p243 = scmp.eq.s32.totalorder %s24, 0
    %p244 = por %p242, %p243
    %p245 = scmp.ne.s32.totalorder %s233, %s234
    %p246 = scmp.eq.s32.totalorder %s25, 1
    %p247 = por %p245, %p246
    %p249 = scmp.ne.s32.totalorder %s234, %s248
    %p250 = scmp.eq.s32.totalorder %s25, 0
    %p251 = por %p249, %p250
    %s253 = sadd.s32 %s252, 1
    %p256 = scmp.eq.s32.totalorder %s19, 1
    %p257 = scmp.ne.s32.totalorder %s252, %s254
    %p258 = scmp.eq.s32.totalorder %s19, 0
    %p259 = por %p257, %p258
    %p260 = scmp.ne.s32.totalorder %s252, %s254
    %p261 = scmp.eq.s32.totalorder %s24, 1
    %p262 = por %p260, %p261
    %p263 = scmp.ne.s32.totalorder %s254, %s255
    %p264 = scmp.eq.s32.totalorder %s24, 0
    %p265 = por %p263, %p264
    %p266 = scmp.ne.s32.totalorder %s254, %s255
    %p267 = scmp.eq.s32.totalorder %s25, 1
    %p268 = por %p266, %p267
    %p270 = scmp.ne.s32.totalorder %s255, %s269
    %p271 = scmp.eq.s32.totalorder %s25, 0
    %p272 = por %p270, %p271
    %s273 = ssub.s32 %s19, %s26
    %p274 = scmp.eq.s32.totalorder %s273, 0
    %s276 = sadd.s32 %s275, 1
    %s277 = scalar_select %p274, %s275, %s276
    %p280 = pneg %p274
    %p281 = scmp.eq.s32.totalorder %s19, 1
    %p282 = por %p280, %p281
    %p283 = scmp.ne.s32.totalorder %s275, %s278
    %p284 = scmp.eq.s32.totalorder %s19, 0
    %p285 = por %p283, %p284
    %p286 = scmp.ne.s32.totalorder %s275, %s278
    %p287 = scmp.eq.s32.totalorder %s24, 1
    %p288 = por %p286, %p287
    %p289 = scmp.ne.s32.totalorder %s278, %s279
    %p290 = scmp.eq.s32.totalorder %s24, 0
    %p291 = por %p289, %p290
    %p292 = scmp.ne.s32.totalorder %s278, %s279
    %p293 = scmp.eq.s32.totalorder %s25, 1
    %p294 = por %p292, %p293
    %p296 = scmp.ne.s32.totalorder %s279, %s295
    %p297 = scmp.eq.s32.totalorder %s25, 0
    %p298 = por %p296, %p297
    %s299 = ssub.s32 %s19, %s26
    %p300 = scmp.eq.s32.totalorder %s299, 0
    %s302 = sadd.s32 %s301, 1
    %s303 = scalar_select %p300, %s301, %s302
    %p306 = pneg %p300
    %p307 = scmp.eq.s32.totalorder %s19, 1
    %p308 = por %p306, %p307
    %p309 = scmp.ne.s32.totalorder %s301, %s304
    %p310 = scmp.eq.s32.totalorder %s19, 0
    %p311 = por %p309, %p310
    %p312 = scmp.ne.s32.totalorder %s301, %s304
    %p313 = scmp.eq.s32.totalorder %s24, 1
    %p314 = por %p312, %p313
    %p315 = scmp.ne.s32.totalorder %s304, %s305
    %p316 = scmp.eq.s32.totalorder %s24, 0
    %p317 = por %p315, %p316
    %p318 = scmp.ne.s32.totalorder %s304, %s305
    %p319 = scmp.eq.s32.totalorder %s25, 1
    %p320 = por %p318, %p319
    %p322 = scmp.ne.s32.totalorder %s305, %s321
    %p323 = scmp.eq.s32.totalorder %s25, 0
    %p324 = por %p322, %p323
    %p325 = scmp.le.s32.totalorder 1, %s19
    %p326 = scmp.lt.s32.totalorder %s19, 3
    %p327 = pnand %p325, %p326
    %p328 = pneg %p327
    // Predicated region
    $region9: #{scoring_forward.18} parent=5 // pred_check
      _
    $region10: #{scoring_forward.18} parent=5 // pred_check_branch
      %330 = sbr.rel (%p327) target = $region12
    $region11: #{scoring_forward.18} parent=5 // pred_region
      %s331 = ssub.s32 %s19, 1
      // Predicated region
      $region13: #{scoring_forward.18} parent=11 // pred_check
        %p332 = pneg %p118
      $region14: #{scoring_forward.18} parent=11 // pred_check_branch
        %334 = sbr.rel (%p332) target = $region16
      $region15: #{scoring_forward.18} parent=11 // pred_region
        _
      $region16: #{scoring_forward.18} parent=11 // pred_fallthru
        _
      // Predicated region
      $region17: #{scoring_forward.18} parent=11 // pred_check
        %p335 = pneg %p139
      $region18: #{scoring_forward.18} parent=11 // pred_check_branch
        %337 = sbr.rel (%p335) target = $region20
      $region19: #{scoring_forward.18} parent=11 // pred_region
        _
      $region20: #{scoring_forward.18} parent=11 // pred_fallthru
        _
      // Predicated region
      $region21: #{scoring_forward.18} parent=11 // pred_check
        %p338 = pneg %p160
      $region22: #{scoring_forward.18} parent=11 // pred_check_branch
        %340 = sbr.rel (%p338) target = $region24
      $region23: #{scoring_forward.18} parent=11 // pred_region
        _
      $region24: #{scoring_forward.18} parent=11 // pred_fallthru
        _
      // Predicated region
      $region25: #{scoring_forward.18} parent=11 // pred_check
        %p341 = pneg %p181
      $region26: #{scoring_forward.18} parent=11 // pred_check_branch
        %343 = sbr.rel (%p341) target = $region28
      $region27: #{scoring_forward.18} parent=11 // pred_region
        _
      $region28: #{scoring_forward.18} parent=11 // pred_fallthru
        _
      // Predicated region
      $region29: #{scoring_forward.18} parent=11 // pred_check
        %p344 = pneg %p202
      $region30: #{scoring_forward.18} parent=11 // pred_check_branch
        %346 = sbr.rel (%p344) target = $region32
      $region31: #{scoring_forward.18} parent=11 // pred_region
        _
      $region32: #{scoring_forward.18} parent=11 // pred_fallthru
        _
      // Predicated region
      $region33: #{scoring_forward.18} parent=11 // pred_check
        %p347 = pneg %p223
      $region34: #{scoring_forward.18} parent=11 // pred_check_branch
        %349 = sbr.rel (%p347) target = $region36
      $region35: #{scoring_forward.18} parent=11 // pred_region
        _
      $region36: #{scoring_forward.18} parent=11 // pred_fallthru
        _
      // Predicated region
      $region37: #{scoring_forward.18} parent=11 // pred_check
        %p350 = pneg %p244
      $region38: #{scoring_forward.18} parent=11 // pred_check_branch
        %352 = sbr.rel (%p350) target = $region40
      $region39: #{scoring_forward.18} parent=11 // pred_region
        _
      $region40: #{scoring_forward.18} parent=11 // pred_fallthru
        _
      // Predicated region
      $region41: #{scoring_forward.18} parent=11 // pred_check
        %p353 = pneg %p265
      $region42: #{scoring_forward.18} parent=11 // pred_check_branch
        %355 = sbr.rel (%p353) target = $region44
      $region43: #{scoring_forward.18} parent=11 // pred_region
        _
      $region44: #{scoring_forward.18} parent=11 // pred_fallthru
        _
    $region12: #{scoring_forward.18} parent=5 // pred_fallthru
      _
    %p356 = scmp.lt.s32.totalorder %s19, 2
    // Predicated region
    $region45: #{scoring_forward.18} parent=5 // pred_check
      %p357 = pneg %p356
    $region46: #{scoring_forward.18} parent=5 // pred_check_branch
      %359 = sbr.rel (%p357) target = $region48
    $region47: #{scoring_forward.18} parent=5 // pred_region
      // Predicated region
      $region49: #{scoring_forward.18} parent=47 // pred_check
        %p360 = pneg %p39
      $region50: #{scoring_forward.18} parent=47 // pred_check_branch
        %362 = sbr.rel (%p360) target = $region52
      $region51: #{scoring_forward.18} parent=47 // pred_region
        %s363 = smul.u32 3, %s19
        %p364 = scmp.lt.s32.totalorder %s363, 5
        %s365 = scalar_select %p364, %s363, 5
        %s366 = smul.addr %s365, 2
        %s367 = smul.addr %s366, 8
        %s368 = scalar_lea.vmem %s0, %s367
        %s369 = smul.u32 3, %s19
      $region52: #{scoring_forward.18} parent=47 // pred_fallthru
        _
      // Predicated region
      $region53: #{scoring_forward.18} parent=47 // pred_check
        %p370 = pneg %p65
      $region54: #{scoring_forward.18} parent=47 // pred_check_branch
        %372 = sbr.rel (%p370) target = $region56
      $region55: #{scoring_forward.18} parent=47 // pred_region
        %s373 = smul.u32 3, %s19
        %p374 = scmp.lt.s32.totalorder %s373, 5
        %s375 = scalar_select %p374, %s373, 5
        %s376 = smul.addr %s375, 8
        %s377 = scalar_lea.vmem %s1, %s376
        %s378 = smul.u32 3, %s19
      $region56: #{scoring_forward.18} parent=47 // pred_fallthru
        _
      // Predicated region
      $region57: #{scoring_forward.18} parent=47 // pred_check
        %p379 = pneg %p91
      $region58: #{scoring_forward.18} parent=47 // pred_check_branch
        %381 = sbr.rel (%p379) target = $region60
      $region59: #{scoring_forward.18} parent=47 // pred_region
        %s382 = smul.u32 3, %s19
        %p383 = scmp.lt.s32.totalorder %s382, 5
        %s384 = scalar_select %p383, %s382, 5
        %s385 = smul.addr %s384, 8
        %s386 = scalar_lea.vmem %s2, %s385
        %s387 = smul.u32 3, %s19
      $region60: #{scoring_forward.18} parent=47 // pred_fallthru
        _
    $region48: #{scoring_forward.18} parent=5 // pred_fallthru
      _
    %p388 = scmp.le.s32.totalorder 1, %s19
    %p389 = scmp.lt.s32.totalorder %s19, 3
    %p390 = pnand %p388, %p389
    %p391 = pneg %p390
    // Predicated region
    $region61: #{scoring_forward.18} parent=5 // pred_check
      _
    $region62: #{scoring_forward.18} parent=5 // pred_check_branch
      %393 = sbr.rel (%p390) target = $region64
    $region63: #{scoring_forward.18} parent=5 // pred_region
      %s394 = ssub.s32 %s19, 1
      %s395 = smul.u32 3, %s24
      %p396 = scmp.lt.s32.totalorder %s395, 5
      %s397 = scalar_select %p396, %s395, 5
      %s398 = smul.addr %s397, 2
      %s399 = smul.addr %s398, 8
      %s400 = scalar_lea.vmem %s0, %s399
      %p401 = pneg %p45
      %p402 = pneg %p42
      %s403 = smul.u32 3, %s24
      %p404 = scmp.lt.s32.totalorder %s403, 5
      %s405 = scalar_select %p404, %s403, 5
      %s406 = smul.addr %s405, 8
      %s407 = scalar_lea.vmem %s1, %s406
      %p408 = pneg %p71
      %p409 = pneg %p68
      %s410 = smul.u32 3, %s24
      %p411 = scmp.lt.s32.totalorder %s410, 5
      %s412 = scalar_select %p411, %s410, 5
      %s413 = smul.addr %s412, 8
      %s414 = scalar_lea.vmem %s2, %s413
      %p415 = pneg %p97
      %p416 = pneg %p94
      %p417 = pneg %p118
      %p418 = pneg %p115
      %p419 = pneg %p139
      %p420 = pneg %p136
      %p421 = pneg %p160
      %p422 = pneg %p157
      %p423 = pneg %p181
      %p424 = pneg %p178
      %p425 = pneg %p202
      %p426 = pneg %p199
      %p427 = pneg %p223
      %p428 = pneg %p220
      %p429 = pneg %p244
      %p430 = pneg %p241
      %p431 = pneg %p265
      %p432 = pneg %p262
      %p433 = pneg %p291
      %p434 = pneg %p288
      %s435 = smul.u32 3, %s24
      %p436 = scmp.lt.s32.totalorder %s435, 5
      %s437 = scalar_select %p436, %s435, 5
      %s438 = smul.addr %s437, 8
      %s439 = scalar_lea.vmem %s11, %s438
      %p440 = pneg %p317
      %p441 = pneg %p314
      %s442 = smul.u32 3, %s24
      %p443 = scmp.lt.s32.totalorder %s442, 5
      %s444 = scalar_select %p443, %s442, 5
      %s445 = smul.addr %s444, 8
      %s446 = scalar_lea.vmem %s12, %s445
      %s447 = smul.u32 3, %s24
      %p448 = scmp.lt.s32.totalorder %s447, 5
      %s449 = scalar_select %p448, %s447, 5
      %s450 = smul.addr %s449, 2
      %s451 = smul.addr %s450, 8
      %s452 = scalar_lea.vmem %s0, %s451
      %s453 = smul.u32 3, %s24
      %s454 = smul.u32 3, %s24
      %p455 = scmp.lt.s32.totalorder %s454, 5
      %s456 = scalar_select %p455, %s454, 5
      %s457 = smul.addr %s456, 8
      %s458 = scalar_lea.vmem %s1, %s457
      %s459 = smul.u32 3, %s24
      %s460 = smul.u32 3, %s24
      %p461 = scmp.lt.s32.totalorder %s460, 5
      %s462 = scalar_select %p461, %s460, 5
      %s463 = smul.addr %s462, 8
      %s464 = scalar_lea.vmem %s2, %s463
      %s465 = smul.u32 3, %s24
      %s466 = smul.u32 3, %s24
      %p467 = scmp.lt.s32.totalorder %s466, 5
      %s468 = scalar_select %p467, %s466, 5
      %s469 = smul.addr %s468, 8
      %s470 = scalar_lea.vmem %s11, %s469
      %s471 = smul.u32 3, %s24
      %s472 = smul.u32 3, %s24
      %p473 = scmp.lt.s32.totalorder %s472, 5
      %s474 = scalar_select %p473, %s472, 5
      %s475 = smul.addr %s474, 8
      %s476 = scalar_lea.vmem %s12, %s475
      %s477 = smul.u32 3, %s24
      %v479 = vld [vmem:[%s464] sm:$0xff]
      %v480 = vld [vmem:[%s464 + $0x8] sm:$0xff]
      %v481 = vld [vmem:[%s464 + $0x10] sm:$0xff]
      %v482 = vld [vmem:[%s10 + $0x8] sm:$0x1]
      %v483 = vld [vmem:[%s10 + $0x9] sm:$0x1]
      %v484 = vld [vmem:[%s10 + $0xa] sm:$0x1]
      %v485 = vld [vmem:[%s10 + $0xb] sm:$0x1]
      %v486 = vld [vmem:[%s10 + $0xc] sm:$0x1]
      %488 = vset.pattern.permute.xlu0 0
      %489 = vperm.xlu0 %488, %v479
      %v490 = vpop.permute.xlu0 %489
      %493 = vset.pattern.permute.xlu0 0
      %494 = vperm.xlu0 %493, %v480
      %v495 = vpop.permute.xlu0 %494
      %498 = vset.pattern.permute.xlu0 0
      %499 = vperm.xlu0 %498, %v481
      %v500 = vpop.permute.xlu0 %499
      %v502 = vlaneseq
      %v503 = vshrl.u32 %v502, 7
      %v504 = vsub.s32 0, %v503
      %v505 = vrot.slane %v482, %v504
      %v506 = vmul.f32 %v490, %v505
      %v507 = vmul.f32 %v495, %v505
      %v508 = vmul.f32 %v500, %v505
      %509 = vset.pattern.permute.xlu0 1
      %510 = vperm.xlu0 %509, %v479
      %v511 = vpop.permute.xlu0 %510
      %513 = vset.pattern.permute.xlu0 1
      %514 = vperm.xlu0 %513, %v480
      %v515 = vpop.permute.xlu0 %514
      %517 = vset.pattern.permute.xlu0 1
      %518 = vperm.xlu0 %517, %v481
      %v519 = vpop.permute.xlu0 %518
      %v521 = vlaneseq
      %v522 = vshrl.u32 %v521, 7
      %v523 = vsub.s32 0, %v522
      %v524 = vrot.slane %v483, %v523
      %v525 = vmul.f32 %v511, %v524
      %v526 = vmul.f32 %v515, %v524
      %v527 = vmul.f32 %v519, %v524
      %v528 = vadd.f32 %v506, %v525
      %v529 = vadd.f32 %v507, %v526
      %v530 = vadd.f32 %v508, %v527
      %531 = vset.pattern.permute.xlu0 2
      %532 = vperm.xlu0 %531, %v479
      %v533 = vpop.permute.xlu0 %532
      %535 = vset.pattern.permute.xlu0 2
      %536 = vperm.xlu0 %535, %v480
      %v537 = vpop.permute.xlu0 %536
      %539 = vset.pattern.permute.xlu0 2
      %540 = vperm.xlu0 %539, %v481
      %v541 = vpop.permute.xlu0 %540
      %v543 = vlaneseq
      %v544 = vshrl.u32 %v543, 7
      %v545 = vsub.s32 0, %v544
      %v546 = vrot.slane %v484, %v545
      %v547 = vmul.f32 %v533, %v546
      %v548 = vmul.f32 %v537, %v546
      %v549 = vmul.f32 %v541, %v546
      %v550 = vadd.f32 %v528, %v547
      %v551 = vadd.f32 %v529, %v548
      %v552 = vadd.f32 %v530, %v549
      %553 = vset.pattern.permute.xlu0 3
      %554 = vperm.xlu0 %553, %v479
      %v555 = vpop.permute.xlu0 %554
      %557 = vset.pattern.permute.xlu0 3
      %558 = vperm.xlu0 %557, %v480
      %v559 = vpop.permute.xlu0 %558
      %561 = vset.pattern.permute.xlu0 3
      %562 = vperm.xlu0 %561, %v481
      %v563 = vpop.permute.xlu0 %562
      %v565 = vlaneseq
      %v566 = vshrl.u32 %v565, 7
      %v567 = vsub.s32 0, %v566
      %v568 = vrot.slane %v485, %v567
      %v569 = vmul.f32 %v555, %v568
      %v570 = vmul.f32 %v559, %v568
      %v571 = vmul.f32 %v563, %v568
      %v572 = vadd.f32 %v550, %v569
      %v573 = vadd.f32 %v551, %v570
      %v574 = vadd.f32 %v552, %v571
      %575 = vset.pattern.permute.xlu0 4
      %576 = vperm.xlu0 %575, %v479
      %v577 = vpop.permute.xlu0 %576
      %579 = vset.pattern.permute.xlu0 4
      %580 = vperm.xlu0 %579, %v480
      %v581 = vpop.permute.xlu0 %580
      %583 = vset.pattern.permute.xlu0 4
      %584 = vperm.xlu0 %583, %v481
      %v585 = vpop.permute.xlu0 %584
      %v587 = vlaneseq
      %v588 = vshrl.u32 %v587, 7
      %v589 = vsub.s32 0, %v588
      %v590 = vrot.slane %v486, %v589
      %v591 = vmul.f32 %v577, %v590
      %v592 = vmul.f32 %v581, %v590
      %v593 = vmul.f32 %v585, %v590
      %v594 = vadd.f32 %v572, %v591
      %v595 = vadd.f32 %v573, %v592
      %v596 = vadd.f32 %v574, %v593
      %597 = vset.pattern.permute.xlu0 5
      %598 = vperm.xlu0 %597, %v479
      %v599 = vpop.permute.xlu0 %598
      %601 = vset.pattern.permute.xlu0 5
      %602 = vperm.xlu0 %601, %v480
      %v603 = vpop.permute.xlu0 %602
      %605 = vset.pattern.permute.xlu0 5
      %606 = vperm.xlu0 %605, %v481
      %v607 = vpop.permute.xlu0 %606
      %v609 = vmul.f32 %v599, %v505
      %v610 = vmul.f32 %v603, %v505
      %v611 = vmul.f32 %v607, %v505
      %612 = vset.pattern.permute.xlu0 6
      %613 = vperm.xlu0 %612, %v479
      %v614 = vpop.permute.xlu0 %613
      %616 = vset.pattern.permute.xlu0 6
      %617 = vperm.xlu0 %616, %v480
      %v618 = vpop.permute.xlu0 %617
      %620 = vset.pattern.permute.xlu0 6
      %621 = vperm.xlu0 %620, %v481
      %v622 = vpop.permute.xlu0 %621
      %v624 = vmul.f32 %v614, %v524
      %v625 = vmul.f32 %v618, %v524
      %v626 = vmul.f32 %v622, %v524
      %v627 = vadd.f32 %v609, %v624
      %v628 = vadd.f32 %v610, %v625
      %v629 = vadd.f32 %v611, %v626
      %630 = vset.pattern.permute.xlu0 7
      %631 = vperm.xlu0 %630, %v479
      %v632 = vpop.permute.xlu0 %631
      %634 = vset.pattern.permute.xlu0 7
      %635 = vperm.xlu0 %634, %v480
      %v636 = vpop.permute.xlu0 %635
      %638 = vset.pattern.permute.xlu0 7
      %639 = vperm.xlu0 %638, %v481
      %v640 = vpop.permute.xlu0 %639
      %v642 = vmul.f32 %v632, %v546
      %v643 = vmul.f32 %v636, %v546
      %v644 = vmul.f32 %v640, %v546
      %v645 = vadd.f32 %v627, %v642
      %v646 = vadd.f32 %v628, %v643
      %v647 = vadd.f32 %v629, %v644
      %648 = vset.pattern.permute.xlu0 8
      %649 = vperm.xlu0 %648, %v479
      %v650 = vpop.permute.xlu0 %649
      %652 = vset.pattern.permute.xlu0 8
      %653 = vperm.xlu0 %652, %v480
      %v654 = vpop.permute.xlu0 %653
      %656 = vset.pattern.permute.xlu0 8
      %657 = vperm.xlu0 %656, %v481
      %v658 = vpop.permute.xlu0 %657
      %v660 = vmul.f32 %v650, %v568
      %v661 = vmul.f32 %v654, %v568
      %v662 = vmul.f32 %v658, %v568
      %v663 = vadd.f32 %v645, %v660
      %v664 = vadd.f32 %v646, %v661
      %v665 = vadd.f32 %v647, %v662
      %666 = vset.pattern.permute.xlu0 9
      %667 = vperm.xlu0 %666, %v479
      %v668 = vpop.permute.xlu0 %667
      %670 = vset.pattern.permute.xlu0 9
      %671 = vperm.xlu0 %670, %v480
      %v672 = vpop.permute.xlu0 %671
      %674 = vset.pattern.permute.xlu0 9
      %675 = vperm.xlu0 %674, %v481
      %v676 = vpop.permute.xlu0 %675
      %v678 = vmul.f32 %v668, %v590
      %v679 = vmul.f32 %v672, %v590
      %v680 = vmul.f32 %v676, %v590
      %v681 = vadd.f32 %v663, %v678
      %v682 = vadd.f32 %v664, %v679
      %v683 = vadd.f32 %v665, %v680
      %684 = vset.pattern.permute.xlu0 10
      %685 = vperm.xlu0 %684, %v479
      %v686 = vpop.permute.xlu0 %685
      %688 = vset.pattern.permute.xlu0 10
      %689 = vperm.xlu0 %688, %v480
      %v690 = vpop.permute.xlu0 %689
      %692 = vset.pattern.permute.xlu0 10
      %693 = vperm.xlu0 %692, %v481
      %v694 = vpop.permute.xlu0 %693
      %v696 = vmul.f32 %v686, %v505
      %v697 = vmul.f32 %v690, %v505
      %v698 = vmul.f32 %v694, %v505
      %699 = vset.pattern.permute.xlu0 11
      %700 = vperm.xlu0 %699, %v479
      %v701 = vpop.permute.xlu0 %700
      %703 = vset.pattern.permute.xlu0 11
      %704 = vperm.xlu0 %703, %v480
      %v705 = vpop.permute.xlu0 %704
      %707 = vset.pattern.permute.xlu0 11
      %708 = vperm.xlu0 %707, %v481
      %v709 = vpop.permute.xlu0 %708
      %v711 = vmul.f32 %v701, %v524
      %v712 = vmul.f32 %v705, %v524
      %v713 = vmul.f32 %v709, %v524
      %v714 = vadd.f32 %v696, %v711
      %v715 = vadd.f32 %v697, %v712
      %v716 = vadd.f32 %v698, %v713
      %717 = vset.pattern.permute.xlu0 12
      %718 = vperm.xlu0 %717, %v479
      %v719 = vpop.permute.xlu0 %718
      %721 = vset.pattern.permute.xlu0 12
      %722 = vperm.xlu0 %721, %v480
      %v723 = vpop.permute.xlu0 %722
      %725 = vset.pattern.permute.xlu0 12
      %726 = vperm.xlu0 %725, %v481
      %v727 = vpop.permute.xlu0 %726
      %v729 = vmul.f32 %v719, %v546
      %v730 = vmul.f32 %v723, %v546
      %v731 = vmul.f32 %v727, %v546
      %v732 = vadd.f32 %v714, %v729
      %v733 = vadd.f32 %v715, %v730
      %v734 = vadd.f32 %v716, %v731
      %735 = vset.pattern.permute.xlu0 13
      %736 = vperm.xlu0 %735, %v479
      %v737 = vpop.permute.xlu0 %736
      %739 = vset.pattern.permute.xlu0 13
      %740 = vperm.xlu0 %739, %v480
      %v741 = vpop.permute.xlu0 %740
      %743 = vset.pattern.permute.xlu0 13
      %744 = vperm.xlu0 %743, %v481
      %v745 = vpop.permute.xlu0 %744
      %v747 = vmul.f32 %v737, %v568
      %v748 = vmul.f32 %v741, %v568
      %v749 = vmul.f32 %v745, %v568
      %v750 = vadd.f32 %v732, %v747
      %v751 = vadd.f32 %v733, %v748
      %v752 = vadd.f32 %v734, %v749
      %753 = vset.pattern.permute.xlu0 14
      %754 = vperm.xlu0 %753, %v479
      %v755 = vpop.permute.xlu0 %754
      %757 = vset.pattern.permute.xlu0 14
      %758 = vperm.xlu0 %757, %v480
      %v759 = vpop.permute.xlu0 %758
      %761 = vset.pattern.permute.xlu0 14
      %762 = vperm.xlu0 %761, %v481
      %v763 = vpop.permute.xlu0 %762
      %v765 = vmul.f32 %v755, %v590
      %v766 = vmul.f32 %v759, %v590
      %v767 = vmul.f32 %v763, %v590
      %v768 = vadd.f32 %v750, %v765
      %v769 = vadd.f32 %v751, %v766
      %v770 = vadd.f32 %v752, %v767
      %774 = vrot.lane.b32.xlu0 %v681, 5
      %v775 = vpop.permute.xlu0 %774
      %776 = vrot.lane.b32.xlu0 %v682, 5
      %v777 = vpop.permute.xlu0 %776
      %778 = vrot.lane.b32.xlu0 %v683, 5
      %v779 = vpop.permute.xlu0 %778
      %786 = vrot.lane.b32.xlu0 %v768, 10
      %v787 = vpop.permute.xlu0 %786
      %788 = vrot.lane.b32.xlu0 %v769, 10
      %v789 = vpop.permute.xlu0 %788
      %790 = vrot.lane.b32.xlu0 %v770, 10
      %v791 = vpop.permute.xlu0 %790
      %vm795 = vcmask 39936
      %v796 = vsel %vm795, %v594, %v775
      %v797 = vsel %vm795, %v595, %v777
      %v798 = vsel %vm795, %v596, %v779
      %vm799 = vcmask 80896
      %v800 = vsel %vm799, %v796, %v787
      %v801 = vsel %vm799, %v797, %v789
      %v802 = vsel %vm799, %v798, %v791
      %v803 = vmul.f32 %v800, %v800
      %v804 = vmul.f32 %v801, %v801
      %v805 = vmul.f32 %v802, %v802
      %809 = vrot.lane.b32.xlu0 %v803, 123
      %v810 = vpop.permute.xlu0 %809
      %811 = vrot.lane.b32.xlu0 %v804, 123
      %v812 = vpop.permute.xlu0 %811
      %813 = vrot.lane.b32.xlu0 %v805, 123
      %v814 = vpop.permute.xlu0 %813
      %v818 = vadd.f32 %v803, %v810
      %v819 = vadd.f32 %v804, %v812
      %v820 = vadd.f32 %v805, %v814
      %821 = vrot.lane.b32.xlu0 %v803, 118
      %v822 = vpop.permute.xlu0 %821
      %823 = vrot.lane.b32.xlu0 %v804, 118
      %v824 = vpop.permute.xlu0 %823
      %825 = vrot.lane.b32.xlu0 %v805, 118
      %v826 = vpop.permute.xlu0 %825
      %v830 = vadd.f32 %v818, %v822
      %v831 = vadd.f32 %v819, %v824
      %v832 = vadd.f32 %v820, %v826
      %v833 = vmax.f32 %v830, 1e-08
      %v834 = vmax.f32 %v831, 1e-08
      %v835 = vmax.f32 %v832, 1e-08
      %v836 = vrsqrt.pop %v833
      %v837 = vmul.f32 %v833, %v836
      %vm838 = vcmp.eq.f32.partialorder %v833, inf
      %v839 = vsel %vm838, %v833, %v837
      %vm840 = vcmp.eq.f32.partialorder %v833, 0.0
      %v841 = vand.u32 %v833, 2147483648
      %v842 = vsel %vm840, %v841, %v839
      %v843 = vrsqrt.pop %v834
      %v844 = vmul.f32 %v834, %v843
      %vm845 = vcmp.eq.f32.partialorder %v834, inf
      %v846 = vsel %vm845, %v834, %v844
      %vm847 = vcmp.eq.f32.partialorder %v834, 0.0
      %v848 = vand.u32 %v834, 2147483648
      %v849 = vsel %vm847, %v848, %v846
      %v850 = vrsqrt.pop %v835
      %v851 = vmul.f32 %v835, %v850
      %vm852 = vcmp.eq.f32.partialorder %v835, inf
      %v853 = vsel %vm852, %v835, %v851
      %vm854 = vcmp.eq.f32.partialorder %v835, 0.0
      %v855 = vand.u32 %v835, 2147483648
      %v856 = vsel %vm854, %v855, %v853
      %v857 = vld [vmem:[%s452] sm:$0xff]
      %v858 = vld [vmem:[%s452 + $0x8] sm:$0xff]
      %v859 = vld [vmem:[%s452 + $0x10] sm:$0xff]
      %v860 = vld [vmem:[%s452 + $0x18] sm:$0xff]
      %v861 = vld [vmem:[%s452 + $0x20] sm:$0xff]
      %v862 = vld [vmem:[%s452 + $0x28] sm:$0xff]
      %v863 = vpack.c.bf16 %v859, %v857
      %v864 = vpack.c.bf16 %v860, %v858
      %v865 = vpack.c.bf16 %v861, %v861
      %v866 = vpack.c.bf16 %v862, %v862
      %v867 = vld [vmem:[%s3] sm:$0xf]
      %v868 = vld [vmem:[%s3 + $0x4] sm:$0xf]
      %v869 = vld [vmem:[%s3 + $0x8] sm:$0xf]
      %v870 = vld [vmem:[%s3 + $0xc] sm:$0xf]
      %v871 = vld [vmem:[%s3 + $0x10] sm:$0xf]
      %v872 = vld [vmem:[%s3 + $0x14] sm:$0xf]
      %v873 = vld [vmem:[%s3 + $0x18] sm:$0xf]
      %v874 = vld [vmem:[%s3 + $0x1c] sm:$0xf]
      %v875 = vld [vmem:[%s3 + $0x20] sm:$0xf]
      %v876 = vld [vmem:[%s3 + $0x24] sm:$0xf]
      %v877 = vld [vmem:[%s3 + $0x28] sm:$0xf]
      %v878 = vld [vmem:[%s3 + $0x2c] sm:$0xf]
      %v879 = vld [vmem:[%s3 + $0x30] sm:$0xf]
      %v880 = vld [vmem:[%s3 + $0x34] sm:$0xf]
      %v881 = vld [vmem:[%s3 + $0x38] sm:$0xf]
      %v882 = vld [vmem:[%s3 + $0x3c] sm:$0xf]
      %v883 = vld [vmem:[%s3 + $0x40] sm:$0xf]
      %v884 = vld [vmem:[%s3 + $0x44] sm:$0xf]
      %v885 = vld [vmem:[%s3 + $0x48] sm:$0xf]
      %v886 = vld [vmem:[%s3 + $0x4c] sm:$0xf]
      %v887 = vld [vmem:[%s3 + $0x50] sm:$0xf]
      %v888 = vld [vmem:[%s3 + $0x54] sm:$0xf]
      %v889 = vld [vmem:[%s3 + $0x58] sm:$0xf]
      %v890 = vld [vmem:[%s3 + $0x5c] sm:$0xf]
      %v891 = vld [vmem:[%s3 + $0x60] sm:$0xf]
      %v892 = vld [vmem:[%s3 + $0x64] sm:$0xf]
      %v893 = vld [vmem:[%s3 + $0x68] sm:$0xf]
      %v894 = vld [vmem:[%s3 + $0x6c] sm:$0xf]
      %v895 = vld [vmem:[%s3 + $0x70] sm:$0xf]
      %v896 = vld [vmem:[%s3 + $0x74] sm:$0xf]
      %v897 = vld [vmem:[%s3 + $0x78] sm:$0xf]
      %v898 = vld [vmem:[%s3 + $0x7c] sm:$0xf]
      %v899 = vld [vmem:[%s458] sm:$0xff]
      %v900 = vld [vmem:[%s458 + $0x8] sm:$0xff]
      %v901 = vld [vmem:[%s458 + $0x10] sm:$0xff]
      %v902 = vpack.c.bf16 %v900, %v899
      %v903 = vpack.c.bf16 %v901, %v901
      %v904 = vld [vmem:[%s4] sm:$0xf]
      %vm905 = vcmask 64512
      %v907 = vsel %vm905, %v902, 0
      %v910 = vsel %vm905, %v903, 0
      %vm912 = vcmask 1043456
      %v914 = vsel %vm912, %v904, 0
      %916 = vmatprep.subr.bf16.mxu0 0
      %917 = vmatpush1.bf16.msra.mxu0 %v914
      %918 = vmatprep.subr.bf16.mxu0 0
      %919 = vmatpush1.bf16.msra.mxu0 0
      %920 = vmatprep.subr.bf16.mxu0 0
      %921 = vmatpush1.bf16.msra.mxu0 0
      %922 = vmatprep.subr.bf16.mxu0 0
      %923 = vmatpush1.bf16.msra.mxu0 0
      %924 = vmatprep.subr.bf16.mxu0 0
      %925 = vmatpush1.bf16.msra.mxu0 0
      %926 = vmatprep.subr.bf16.mxu0 0
      %927 = vmatpush1.bf16.msra.mxu0 0
      %928 = vmatprep.subr.bf16.mxu0 0
      %929 = vmatpush1.bf16.msra.mxu0 0
      %930 = vmatprep.subr.bf16.mxu0 0
      %931 = vmatpush1.bf16.msra.mxu0 0
      %932 = vmatprep.subr.bf16.mxu0 0
      %933 = vmatpush1.bf16.msra.mxu0 0
      %934 = vmatprep.subr.bf16.mxu0 0
      %935 = vmatpush1.bf16.msra.mxu0 0
      %936 = vmatprep.subr.bf16.mxu0 0
      %937 = vmatpush1.bf16.msra.mxu0 0
      %938 = vmatprep.subr.bf16.mxu0 0
      %939 = vmatpush1.bf16.msra.mxu0 0
      %940 = vmatprep.subr.bf16.mxu0 0
      %941 = vmatpush1.bf16.msra.mxu0 0
      %942 = vmatprep.subr.bf16.mxu0 0
      %943 = vmatpush1.bf16.msra.mxu0 0
      %944 = vmatprep.subr.bf16.mxu0 0
      %945 = vmatpush1.bf16.msra.mxu0 0
      %946 = vmatprep.subr.bf16.mxu0 0
      %947 = vmatpush1.bf16.msra.mxu0 0
      %948 = vmatprep.mubr.bf16.mxu0 0
      %949 = vmatmul.mubr.bf16.gmra.mrb[0].mxu0 %v907
      %v950 = vpop.f32.mrb[0].mxu0
      %v951 = vadd.f32 0.0, %v950
      %v952 = vpop.f32.mrb[0].mxu0
      %v953 = vpop.f32.mrb[0].mxu0
      %v954 = vadd.f32 0.0, %v953
      %v955 = vpop.f32.mrb[0].mxu0
      %956 = vmatprep.mubr.bf16.mxu0 0
      %957 = vmatmul.mubr.bf16.gmra.mrb[0].mxu0 %v910
      %v958 = vpop.f32.mrb[0].mxu0
      %v959 = vadd.f32 0.0, %v958
      %v960 = vpop.f32.mrb[0].mxu0
      %v961 = vpop.f32.mrb[0].mxu0
      %v962 = vpop.f32.mrb[0].mxu0
      %963 = vdwg.mxu0
      %v996 = vunpack.c.l.b16 %v867
      %v997 = vunpack.c.l.b16 %v868
      %v998 = vunpack.c.l.b16 %v869
      %v999 = vunpack.c.l.b16 %v870
      %v1000 = vunpack.c.l.b16 %v871
      %v1001 = vunpack.c.l.b16 %v872
      %v1002 = vunpack.c.l.b16 %v873
      %v1003 = vunpack.c.l.b16 %v874
      %v1004 = vunpack.c.l.b16 %v875
      %v1005 = vunpack.c.l.b16 %v876
      %v1006 = vunpack.c.l.b16 %v877
      %v1007 = vunpack.c.l.b16 %v878
      %v1008 = vunpack.c.l.b16 %v879
      %v1009 = vunpack.c.l.b16 %v880
      %v1010 = vunpack.c.l.b16 %v881
      %v1011 = vunpack.c.l.b16 %v882
      %v1012 = vunpack.c.l.b16 %v883
      %v1013 = vunpack.c.l.b16 %v884
      %v1014 = vunpack.c.l.b16 %v885
      %v1015 = vunpack.c.l.b16 %v886
      %v1016 = vunpack.c.l.b16 %v887
      %v1017 = vunpack.c.l.b16 %v888
      %v1018 = vunpack.c.l.b16 %v889
      %v1019 = vunpack.c.l.b16 %v890
      %v1020 = vunpack.c.l.b16 %v891
      %v1021 = vunpack.c.l.b16 %v892
      %v1022 = vunpack.c.l.b16 %v893
      %v1023 = vunpack.c.l.b16 %v894
      %v1024 = vunpack.c.l.b16 %v895
      %v1025 = vunpack.c.l.b16 %v896
      %v1026 = vunpack.c.l.b16 %v897
      %v1027 = vunpack.c.l.b16 %v898
      %v1028 = vpack.c.b16 %v997, %v996
      %v1029 = vpack.c.b16 %v999, %v998
      %v1030 = vpack.c.b16 %v1001, %v1000
      %v1031 = vpack.c.b16 %v1003, %v1002
      %v1032 = vpack.c.b16 %v1005, %v1004
      %v1033 = vpack.c.b16 %v1007, %v1006
      %v1034 = vpack.c.b16 %v1009, %v1008
      %v1035 = vpack.c.b16 %v1011, %v1010
      %v1036 = vpack.c.b16 %v1013, %v1012
      %v1037 = vpack.c.b16 %v1015, %v1014
      %v1038 = vpack.c.b16 %v1017, %v1016
      %v1039 = vpack.c.b16 %v1019, %v1018
      %v1040 = vpack.c.b16 %v1021, %v1020
      %v1041 = vpack.c.b16 %v1023, %v1022
      %v1042 = vpack.c.b16 %v1025, %v1024
      %v1043 = vpack.c.b16 %v1027, %v1026
      %1060 = vmatprep.subr.bf16.mxu0 0
      %1061 = vmatpush1.bf16.msra.mxu0 %v1028
      %1062 = vmatprep.subr.bf16.mxu0 0
      %1063 = vmatpush1.bf16.msra.mxu0 %v1029
      %1064 = vmatprep.subr.bf16.mxu0 0
      %1065 = vmatpush1.bf16.msra.mxu0 %v1030
      %1066 = vmatprep.subr.bf16.mxu0 0
      %1067 = vmatpush1.bf16.msra.mxu0 %v1031
      %1068 = vmatprep.subr.bf16.mxu0 0
      %1069 = vmatpush1.bf16.msra.mxu0 %v1032
      %1070 = vmatprep.subr.bf16.mxu0 0
      %1071 = vmatpush1.bf16.msra.mxu0 %v1033
      %1072 = vmatprep.subr.bf16.mxu0 0
      %1073 = vmatpush1.bf16.msra.mxu0 %v1034
      %1074 = vmatprep.subr.bf16.mxu0 0
      %1075 = vmatpush1.bf16.msra.mxu0 %v1035
      %1076 = vmatprep.subr.bf16.mxu0 0
      %1077 = vmatpush1.bf16.msra.mxu0 %v1036
      %1078 = vmatprep.subr.bf16.mxu0 0
      %1079 = vmatpush1.bf16.msra.mxu0 %v1037
      %1080 = vmatprep.subr.bf16.mxu0 0
      %1081 = vmatpush1.bf16.msra.mxu0 %v1038
      %1082 = vmatprep.subr.bf16.mxu0 0
      %1083 = vmatpush1.bf16.msra.mxu0 %v1039
      %1084 = vmatprep.subr.bf16.mxu0 0
      %1085 = vmatpush1.bf16.msra.mxu0 %v1040
      %1086 = vmatprep.subr.bf16.mxu0 0
      %1087 = vmatpush1.bf16.msra.mxu0 %v1041
      %1088 = vmatprep.subr.bf16.mxu0 0
      %1089 = vmatpush1.bf16.msra.mxu0 %v1042
      %1090 = vmatprep.subr.bf16.mxu0 0
      %1091 = vmatpush1.bf16.msra.mxu0 %v1043
      %1092 = vmatprep.mubr.bf16.mxu0 %v864
      %1093 = vmatmul.mubr.bf16.gmra.mrb[0].mxu0 %v863
      %v1094 = vpop.f32.mrb[0].mxu0
      %v1095 = vadd.f32 %v951, %v1094
      %v1096 = vpop.f32.mrb[0].mxu0
      %v1097 = vpop.f32.mrb[0].mxu0
      %v1098 = vadd.f32 %v954, %v1097
      %v1099 = vpop.f32.mrb[0].mxu0
      %1100 = vmatprep.mubr.bf16.mxu0 %v866
      %1101 = vmatmul.mubr.bf16.gmra.mrb[0].mxu0 %v865
      %v1102 = vpop.f32.mrb[0].mxu0
      %v1103 = vadd.f32 %v959, %v1102
      %v1104 = vpop.f32.mrb[0].mxu0
      %v1105 = vpop.f32.mrb[0].mxu0
      %v1106 = vpop.f32.mrb[0].mxu0
      %1107 = vdwg.mxu0
      %v1108 = vpack.c.bf16 %v849, %v842
      %v1109 = vpack.c.bf16 %v856, %v856
      %v1110 = vld [vmem:[%s5] sm:$0x7]
      %v1112 = vsel %vm795, %v1108, 0
      %v1115 = vsel %vm795, %v1109, 0
      %vm1117 = vcmask 1041408
      %vm1118 = vcmask 1042432
      %v1119 = vsel %vm1117, 4294967295, 65535
      %v1120 = vsel %vm1118, %v1119, 0
      %v1122 = vand.u32 %v1110, %v1120
      %1124 = vmatprep.subr.bf16.mxu0 0
      %1125 = vmatpush1.bf16.msra.mxu0 %v1122
      %1126 = vmatprep.subr.bf16.mxu0 0
      %1127 = vmatpush1.bf16.msra.mxu0 0
      %1128 = vmatprep.subr.bf16.mxu0 0
      %1129 = vmatpush1.bf16.msra.mxu0 0
      %1130 = vmatprep.subr.bf16.mxu0 0
      %1131 = vmatpush1.bf16.msra.mxu0 0
      %1132 = vmatprep.subr.bf16.mxu0 0
      %1133 = vmatpush1.bf16.msra.mxu0 0
      %1134 = vmatprep.subr.bf16.mxu0 0
      %1135 = vmatpush1.bf16.msra.mxu0 0
      %1136 = vmatprep.subr.bf16.mxu0 0
      %1137 = vmatpush1.bf16.msra.mxu0 0
      %1138 = vmatprep.subr.bf16.mxu0 0
      %1139 = vmatpush1.bf16.msra.mxu0 0
      %1140 = vmatprep.subr.bf16.mxu0 0
      %1141 = vmatpush1.bf16.msra.mxu0 0
      %1142 = vmatprep.subr.bf16.mxu0 0
      %1143 = vmatpush1.bf16.msra.mxu0 0
      %1144 = vmatprep.subr.bf16.mxu0 0
      %1145 = vmatpush1.bf16.msra.mxu0 0
      %1146 = vmatprep.subr.bf16.mxu0 0
      %1147 = vmatpush1.bf16.msra.mxu0 0
      %1148 = vmatprep.subr.bf16.mxu0 0
      %1149 = vmatpush1.bf16.msra.mxu0 0
      %1150 = vmatprep.subr.bf16.mxu0 0
      %1151 = vmatpush1.bf16.msra.mxu0 0
      %1152 = vmatprep.subr.bf16.mxu0 0
      %1153 = vmatpush1.bf16.msra.mxu0 0
      %1154 = vmatprep.subr.bf16.mxu0 0
      %1155 = vmatpush1.bf16.msra.mxu0 0
      %1156 = vmatprep.mubr.bf16.mxu0 0
      %1157 = vmatmul.mubr.bf16.gmra.mrb[0].mxu0 %v1112
      %v1158 = vpop.f32.mrb[0].mxu0
      %v1159 = vadd.f32 0.0, %v1158
      %v1160 = vpop.f32.mrb[0].mxu0
      %v1161 = vpop.f32.mrb[0].mxu0
      %v1162 = vadd.f32 0.0, %v1161
      %v1163 = vpop.f32.mrb[0].mxu0
      %1164 = vmatprep.mubr.bf16.mxu0 0
      %1165 = vmatmul.mubr.bf16.gmra.mrb[0].mxu0 %v1115
      %v1166 = vpop.f32.mrb[0].mxu0
      %v1167 = vadd.f32 0.0, %v1166
      %v1168 = vpop.f32.mrb[0].mxu0
      %v1169 = vpop.f32.mrb[0].mxu0
      %v1170 = vpop.f32.mrb[0].mxu0
      %1171 = vdwg.mxu0
      %v1172 = vadd.f32 %v1095, %v1159
      %v1173 = vadd.f32 %v1098, %v1162
      %v1174 = vadd.f32 %v1103, %v1167
      %v1175 = vld [vmem:[%s10] sm:$0x1]
      %v1176 = vlaneseq
      %v1177 = vshrl.u32 %v1176, 7
      %v1178 = vsub.s32 0, %v1177
      %v1179 = vrot.slane %v1175, %v1178
      %v1180 = vadd.f32 %v1172, %v1179
      %v1181 = vadd.f32 %v1173, %v1179
      %v1182 = vadd.f32 %v1174, %v1179
      %v1183 = vld [vmem:[%s10 + $0x10] sm:$0x1]
      %v1184 = vld [vmem:[%s10 + $0x11] sm:$0x1]
      %v1185 = vld [vmem:[%s10 + $0x12] sm:$0x1]
      %v1186 = vld [vmem:[%s10 + $0x13] sm:$0x1]
      %v1187 = vld [vmem:[%s10 + $0x14] sm:$0x1]
      %1189 = vset.pattern.permute.xlu0 0
      %1190 = vperm.xlu0 %1189, %v800
      %v1191 = vpop.permute.xlu0 %1190
      %1194 = vset.pattern.permute.xlu0 0
      %1195 = vperm.xlu0 %1194, %v801
      %v1196 = vpop.permute.xlu0 %1195
      %1199 = vset.pattern.permute.xlu0 0
      %1200 = vperm.xlu0 %1199, %v802
      %v1201 = vpop.permute.xlu0 %1200
      %v1203 = vlaneseq
      %v1204 = vshrl.u32 %v1203, 7
      %v1205 = vsub.s32 0, %v1204
      %v1206 = vrot.slane %v1183, %v1205
      %v1207 = vmul.f32 %v1191, %v1206
      %v1208 = vmul.f32 %v1196, %v1206
      %v1209 = vmul.f32 %v1201, %v1206
      %1210 = vset.pattern.permute.xlu0 1
      %1211 = vperm.xlu0 %1210, %v800
      %v1212 = vpop.permute.xlu0 %1211
      %1214 = vset.pattern.permute.xlu0 1
      %1215 = vperm.xlu0 %1214, %v801
      %v1216 = vpop.permute.xlu0 %1215
      %1218 = vset.pattern.permute.xlu0 1
      %1219 = vperm.xlu0 %1218, %v802
      %v1220 = vpop.permute.xlu0 %1219
      %v1222 = vlaneseq
      %v1223 = vshrl.u32 %v1222, 7
      %v1224 = vsub.s32 0, %v1223
      %v1225 = vrot.slane %v1184, %v1224
      %v1226 = vmul.f32 %v1212, %v1225
      %v1227 = vmul.f32 %v1216, %v1225
      %v1228 = vmul.f32 %v1220, %v1225
      %v1229 = vadd.f32 %v1207, %v1226
      %v1230 = vadd.f32 %v1208, %v1227
      %v1231 = vadd.f32 %v1209, %v1228
      %1232 = vset.pattern.permute.xlu0 2
      %1233 = vperm.xlu0 %1232, %v800
      %v1234 = vpop.permute.xlu0 %1233
      %1236 = vset.pattern.permute.xlu0 2
      %1237 = vperm.xlu0 %1236, %v801
      %v1238 = vpop.permute.xlu0 %1237
      %1240 = vset.pattern.permute.xlu0 2
      %1241 = vperm.xlu0 %1240, %v802
      %v1242 = vpop.permute.xlu0 %1241
      %v1244 = vlaneseq
      %v1245 = vshrl.u32 %v1244, 7
      %v1246 = vsub.s32 0, %v1245
      %v1247 = vrot.slane %v1185, %v1246
      %v1248 = vmul.f32 %v1234, %v1247
      %v1249 = vmul.f32 %v1238, %v1247
      %v1250 = vmul.f32 %v1242, %v1247
      %v1251 = vadd.f32 %v1229, %v1248
      %v1252 = vadd.f32 %v1230, %v1249
      %v1253 = vadd.f32 %v1231, %v1250
      %1254 = vset.pattern.permute.xlu0 3
      %1255 = vperm.xlu0 %1254, %v800
      %v1256 = vpop.permute.xlu0 %1255
      %1258 = vset.pattern.permute.xlu0 3
      %1259 = vperm.xlu0 %1258, %v801
      %v1260 = vpop.permute.xlu0 %1259
      %1262 = vset.pattern.permute.xlu0 3
      %1263 = vperm.xlu0 %1262, %v802
      %v1264 = vpop.permute.xlu0 %1263
      %v1266 = vlaneseq
      %v1267 = vshrl.u32 %v1266, 7
      %v1268 = vsub.s32 0, %v1267
      %v1269 = vrot.slane %v1186, %v1268
      %v1270 = vmul.f32 %v1256, %v1269
      %v1271 = vmul.f32 %v1260, %v1269
      %v1272 = vmul.f32 %v1264, %v1269
      %v1273 = vadd.f32 %v1251, %v1270
      %v1274 = vadd.f32 %v1252, %v1271
      %v1275 = vadd.f32 %v1253, %v1272
      %1276 = vset.pattern.permute.xlu0 4
      %1277 = vperm.xlu0 %1276, %v800
      %v1278 = vpop.permute.xlu0 %1277
      %1280 = vset.pattern.permute.xlu0 4
      %1281 = vperm.xlu0 %1280, %v801
      %v1282 = vpop.permute.xlu0 %1281
      %1284 = vset.pattern.permute.xlu0 4
      %1285 = vperm.xlu0 %1284, %v802
      %v1286 = vpop.permute.xlu0 %1285
      %v1288 = vlaneseq
      %v1289 = vshrl.u32 %v1288, 7
      %v1290 = vsub.s32 0, %v1289
      %v1291 = vrot.slane %v1187, %v1290
      %v1292 = vmul.f32 %v1278, %v1291
      %v1293 = vmul.f32 %v1282, %v1291
      %v1294 = vmul.f32 %v1286, %v1291
      %v1295 = vadd.f32 %v1273, %v1292
      %v1296 = vadd.f32 %v1274, %v1293
      %v1297 = vadd.f32 %v1275, %v1294
      %1298 = vset.pattern.permute.xlu0 5
      %1299 = vperm.xlu0 %1298, %v800
      %v1300 = vpop.permute.xlu0 %1299
      %1302 = vset.pattern.permute.xlu0 5
      %1303 = vperm.xlu0 %1302, %v801
      %v1304 = vpop.permute.xlu0 %1303
      %1306 = vset.pattern.permute.xlu0 5
      %1307 = vperm.xlu0 %1306, %v802
      %v1308 = vpop.permute.xlu0 %1307
      %v1310 = vmul.f32 %v1300, %v1206
      %v1311 = vmul.f32 %v1304, %v1206
      %v1312 = vmul.f32 %v1308, %v1206
      %1313 = vset.pattern.permute.xlu0 6
      %1314 = vperm.xlu0 %1313, %v800
      %v1315 = vpop.permute.xlu0 %1314
      %1317 = vset.pattern.permute.xlu0 6
      %1318 = vperm.xlu0 %1317, %v801
      %v1319 = vpop.permute.xlu0 %1318
      %1321 = vset.pattern.permute.xlu0 6
      %1322 = vperm.xlu0 %1321, %v802
      %v1323 = vpop.permute.xlu0 %1322
      %v1325 = vmul.f32 %v1315, %v1225
      %v1326 = vmul.f32 %v1319, %v1225
      %v1327 = vmul.f32 %v1323, %v1225
      %v1328 = vadd.f32 %v1310, %v1325
      %v1329 = vadd.f32 %v1311, %v1326
      %v1330 = vadd.f32 %v1312, %v1327
      %1331 = vset.pattern.permute.xlu0 7
      %1332 = vperm.xlu0 %1331, %v800
      %v1333 = vpop.permute.xlu0 %1332
      %1335 = vset.pattern.permute.xlu0 7
      %1336 = vperm.xlu0 %1335, %v801
      %v1337 = vpop.permute.xlu0 %1336
      %1339 = vset.pattern.permute.xlu0 7
      %1340 = vperm.xlu0 %1339, %v802
      %v1341 = vpop.permute.xlu0 %1340
      %v1343 = vmul.f32 %v1333, %v1247
      %v1344 = vmul.f32 %v1337, %v1247
      %v1345 = vmul.f32 %v1341, %v1247
      %v1346 = vadd.f32 %v1328, %v1343
      %v1347 = vadd.f32 %v1329, %v1344
      %v1348 = vadd.f32 %v1330, %v1345
      %1349 = vset.pattern.permute.xlu0 8
      %1350 = vperm.xlu0 %1349, %v800
      %v1351 = vpop.permute.xlu0 %1350
      %1353 = vset.pattern.permute.xlu0 8
      %1354 = vperm.xlu0 %1353, %v801
      %v1355 = vpop.permute.xlu0 %1354
      %1357 = vset.pattern.permute.xlu0 8
      %1358 = vperm.xlu0 %1357, %v802
      %v1359 = vpop.permute.xlu0 %1358
      %v1361 = vmul.f32 %v1351, %v1269
      %v1362 = vmul.f32 %v1355, %v1269
      %v1363 = vmul.f32 %v1359, %v1269
      %v1364 = vadd.f32 %v1346, %v1361
      %v1365 = vadd.f32 %v1347, %v1362
      %v1366 = vadd.f32 %v1348, %v1363
      %1367 = vset.pattern.permute.xlu0 9
      %1368 = vperm.xlu0 %1367, %v800
      %v1369 = vpop.permute.xlu0 %1368
      %1371 = vset.pattern.permute.xlu0 9
      %1372 = vperm.xlu0 %1371, %v801
      %v1373 = vpop.permute.xlu0 %1372
      %1375 = vset.pattern.permute.xlu0 9
      %1376 = vperm.xlu0 %1375, %v802
      %v1377 = vpop.permute.xlu0 %1376
      %v1379 = vmul.f32 %v1369, %v1291
      %v1380 = vmul.f32 %v1373, %v1291
      %v1381 = vmul.f32 %v1377, %v1291
      %v1382 = vadd.f32 %v1364, %v1379
      %v1383 = vadd.f32 %v1365, %v1380
      %v1384 = vadd.f32 %v1366, %v1381
      %1385 = vset.pattern.permute.xlu0 10
      %1386 = vperm.xlu0 %1385, %v800
      %v1387 = vpop.permute.xlu0 %1386
      %1389 = vset.pattern.permute.xlu0 10
      %1390 = vperm.xlu0 %1389, %v801
      %v1391 = vpop.permute.xlu0 %1390
      %1393 = vset.pattern.permute.xlu0 10
      %1394 = vperm.xlu0 %1393, %v802
      %v1395 = vpop.permute.xlu0 %1394
      %v1397 = vmul.f32 %v1387, %v1206
      %v1398 = vmul.f32 %v1391, %v1206
      %v1399 = vmul.f32 %v1395, %v1206
      %1400 = vset.pattern.permute.xlu0 11
      %1401 = vperm.xlu0 %1400, %v800
      %v1402 = vpop.permute.xlu0 %1401
      %1404 = vset.pattern.permute.xlu0 11
      %1405 = vperm.xlu0 %1404, %v801
      %v1406 = vpop.permute.xlu0 %1405
      %1408 = vset.pattern.permute.xlu0 11
      %1409 = vperm.xlu0 %1408, %v802
      %v1410 = vpop.permute.xlu0 %1409
      %v1412 = vmul.f32 %v1402, %v1225
      %v1413 = vmul.f32 %v1406, %v1225
      %v1414 = vmul.f32 %v1410, %v1225
      %v1415 = vadd.f32 %v1397, %v1412
      %v1416 = vadd.f32 %v1398, %v1413
      %v1417 = vadd.f32 %v1399, %v1414
      %1418 = vset.pattern.permute.xlu0 12
      %1419 = vperm.xlu0 %1418, %v800
      %v1420 = vpop.permute.xlu0 %1419
      %1422 = vset.pattern.permute.xlu0 12
      %1423 = vperm.xlu0 %1422, %v801
      %v1424 = vpop.permute.xlu0 %1423
      %1426 = vset.pattern.permute.xlu0 12
      %1427 = vperm.xlu0 %1426, %v802
      %v1428 = vpop.permute.xlu0 %1427
      %v1430 = vmul.f32 %v1420, %v1247
      %v1431 = vmul.f32 %v1424, %v1247
      %v1432 = vmul.f32 %v1428, %v1247
      %v1433 = vadd.f32 %v1415, %v1430
      %v1434 = vadd.f32 %v1416, %v1431
      %v1435 = vadd.f32 %v1417, %v1432
      %1436 = vset.pattern.permute.xlu0 13
      %1437 = vperm.xlu0 %1436, %v800
      %v1438 = vpop.permute.xlu0 %1437
      %1440 = vset.pattern.permute.xlu0 13
      %1441 = vperm.xlu0 %1440, %v801
      %v1442 = vpop.permute.xlu0 %1441
      %1444 = vset.pattern.permute.xlu0 13
      %1445 = vperm.xlu0 %1444, %v802
      %v1446 = vpop.permute.xlu0 %1445
      %v1448 = vmul.f32 %v1438, %v1269
      %v1449 = vmul.f32 %v1442, %v1269
      %v1450 = vmul.f32 %v1446, %v1269
      %v1451 = vadd.f32 %v1433, %v1448
      %v1452 = vadd.f32 %v1434, %v1449
      %v1453 = vadd.f32 %v1435, %v1450
      %1454 = vset.pattern.permute.xlu0 14
      %1455 = vperm.xlu0 %1454, %v800
      %v1456 = vpop.permute.xlu0 %1455
      %1458 = vset.pattern.permute.xlu0 14
      %1459 = vperm.xlu0 %1458, %v801
      %v1460 = vpop.permute.xlu0 %1459
      %1462 = vset.pattern.permute.xlu0 14
      %1463 = vperm.xlu0 %1462, %v802
      %v1464 = vpop.permute.xlu0 %1463
      %v1466 = vmul.f32 %v1456, %v1291
      %v1467 = vmul.f32 %v1460, %v1291
      %v1468 = vmul.f32 %v1464, %v1291
      %v1469 = vadd.f32 %v1451, %v1466
      %v1470 = vadd.f32 %v1452, %v1467
      %v1471 = vadd.f32 %v1453, %v1468
      %1475 = vrot.lane.b32.xlu0 %v1382, 2
      %v1476 = vpop.permute.xlu0 %1475
      %1477 = vrot.lane.b32.xlu0 %v1383, 2
      %v1478 = vpop.permute.xlu0 %1477
      %1479 = vrot.lane.b32.xlu0 %v1384, 2
      %v1480 = vpop.permute.xlu0 %1479
      %1487 = vrot.lane.b32.xlu0 %v1469, 4
      %v1488 = vpop.permute.xlu0 %1487
      %1489 = vrot.lane.b32.xlu0 %v1470, 4
      %v1490 = vpop.permute.xlu0 %1489
      %1491 = vrot.lane.b32.xlu0 %v1471, 4
      %v1492 = vpop.permute.xlu0 %1491
      %vm1496 = vcmask 15360
      %v1497 = vsel %vm1496, %v1295, %v1476
      %v1498 = vsel %vm1496, %v1296, %v1478
      %v1499 = vsel %vm1496, %v1297, %v1480
      %vm1500 = vcmask 31744
      %v1501 = vsel %vm1500, %v1497, %v1488
      %v1502 = vsel %vm1500, %v1498, %v1490
      %v1503 = vsel %vm1500, %v1499, %v1492
      %v1504 = vmul.f32 %v1501, %v1501
      %v1505 = vmul.f32 %v1502, %v1502
      %v1506 = vmul.f32 %v1503, %v1503
      %1510 = vrot.lane.b32.xlu0 %v1504, 126
      %v1511 = vpop.permute.xlu0 %1510
      %1512 = vrot.lane.b32.xlu0 %v1505, 126
      %v1513 = vpop.permute.xlu0 %1512
      %1514 = vrot.lane.b32.xlu0 %v1506, 126
      %v1515 = vpop.permute.xlu0 %1514
      %v1519 = vadd.f32 %v1504, %v1511
      %v1520 = vadd.f32 %v1505, %v1513
      %v1521 = vadd.f32 %v1506, %v1515
      %1522 = vrot.lane.b32.xlu0 %v1504, 124
      %v1523 = vpop.permute.xlu0 %1522
      %1524 = vrot.lane.b32.xlu0 %v1505, 124
      %v1525 = vpop.permute.xlu0 %1524
      %1526 = vrot.lane.b32.xlu0 %v1506, 124
      %v1527 = vpop.permute.xlu0 %1526
      %v1531 = vadd.f32 %v1519, %v1523
      %v1532 = vadd.f32 %v1520, %v1525
      %v1533 = vadd.f32 %v1521, %v1527
      %v1534 = vmax.f32 %v1531, 1e-08
      %v1535 = vmax.f32 %v1532, 1e-08
      %v1536 = vmax.f32 %v1533, 1e-08
      %v1537 = vrsqrt.pop %v1534
      %v1538 = vmul.f32 %v1534, %v1537
      %vm1539 = vcmp.eq.f32.partialorder %v1534, inf
      %v1540 = vsel %vm1539, %v1534, %v1538
      %vm1541 = vcmp.eq.f32.partialorder %v1534, 0.0
      %v1542 = vand.u32 %v1534, 2147483648
      %v1543 = vsel %vm1541, %v1542, %v1540
      %v1544 = vrsqrt.pop %v1535
      %v1545 = vmul.f32 %v1535, %v1544
      %vm1546 = vcmp.eq.f32.partialorder %v1535, inf
      %v1547 = vsel %vm1546, %v1535, %v1545
      %vm1548 = vcmp.eq.f32.partialorder %v1535, 0.0
      %v1549 = vand.u32 %v1535, 2147483648
      %v1550 = vsel %vm1548, %v1549, %v1547
      %v1551 = vrsqrt.pop %v1536
      %v1552 = vmul.f32 %v1536, %v1551
      %vm1553 = vcmp.eq.f32.partialorder %v1536, inf
      %v1554 = vsel %vm1553, %v1536, %v1552
      %vm1555 = vcmp.eq.f32.partialorder %v1536, 0.0
      %v1556 = vand.u32 %v1536, 2147483648
      %v1557 = vsel %vm1555, %v1556, %v1554
      %v1558 = vxor.u32 %v1543, 2147483648
      %v1559 = vxor.u32 %v1550, 2147483648
      %v1560 = vxor.u32 %v1557, 2147483648
      %v1561 = vmul.f32 %v1558, 1.442695
      %v1562 = vpow.pop %v1561
      %v1563 = vmul.f32 %v1559, 1.442695
      %v1564 = vpow.pop %v1563
      %v1565 = vmul.f32 %v1560, 1.442695
      %v1566 = vpow.pop %v1565
      %v1567 = vadd.f32 %v1562, 1.0
      %v1568 = vadd.f32 %v1564, 1.0
      %v1569 = vadd.f32 %v1566, 1.0
      %v1570 = vrcp.pop %v1567
      %v1571 = vmul.f32 1.0, %v1570
      %v1572 = vrcp.pop %v1568
      %v1573 = vmul.f32 1.0, %v1572
      %v1574 = vrcp.pop %v1569
      %v1575 = vmul.f32 1.0, %v1574
      %1579 = vrot.lane.b32.xlu0 %v1571, 2
      %v1580 = vpop.permute.xlu0 %1579
      %1581 = vrot.lane.b32.xlu0 %v1573, 2
      %v1582 = vpop.permute.xlu0 %1581
      %1583 = vrot.lane.b32.xlu0 %v1575, 2
      %v1584 = vpop.permute.xlu0 %1583
      %1588 = vrot.lane.b32.xlu0 %v1571, 4
      %v1589 = vpop.permute.xlu0 %1588
      %1590 = vrot.lane.b32.xlu0 %v1573, 4
      %v1591 = vpop.permute.xlu0 %1590
      %1592 = vrot.lane.b32.xlu0 %v1575, 4
      %v1593 = vpop.permute.xlu0 %1592
      %v1597 = vsel %vm1496, %v1571, %v1580
      %v1598 = vsel %vm1496, %v1573, %v1582
      %v1599 = vsel %vm1496, %v1575, %v1584
      %v1600 = vsel %vm1500, %v1597, %v1589
      %v1601 = vsel %vm1500, %v1598, %v1591
      %v1602 = vsel %vm1500, %v1599, %v1593
      %v1603 = vmul.f32 %v1501, %v1600
      %v1604 = vmul.f32 %v1502, %v1601
      %v1605 = vmul.f32 %v1503, %v1602
      %v1606 = vmax.f32 %v1180, 0.0
      %v1607 = vmax.f32 %v1181, 0.0
      %v1608 = vmax.f32 %v1182, 0.0
      %v1609 = vld [vmem:[%s10 + $0x18] sm:$0x1]
      %v1610 = vld [vmem:[%s10 + $0x19] sm:$0x1]
      %1612 = vset.pattern.permute.xlu0 0
      %1613 = vperm.xlu0 %1612, %v1603
      %v1614 = vpop.permute.xlu0 %1613
      %1617 = vset.pattern.permute.xlu0 0
      %1618 = vperm.xlu0 %1617, %v1604
      %v1619 = vpop.permute.xlu0 %1618
      %1622 = vset.pattern.permute.xlu0 0
      %1623 = vperm.xlu0 %1622, %v1605
      %v1624 = vpop.permute.xlu0 %1623
      %v1626 = vlaneseq
      %v1627 = vshrl.u32 %v1626, 7
      %v1628 = vsub.s32 0, %v1627
      %v1629 = vrot.slane %v1609, %v1628
      %v1630 = vmul.f32 %v1614, %v1629
      %v1631 = vmul.f32 %v1619, %v1629
      %v1632 = vmul.f32 %v1624, %v1629
      %1633 = vset.pattern.permute.xlu0 1
      %1634 = vperm.xlu0 %1633, %v1603
      %v1635 = vpop.permute.xlu0 %1634
      %1637 = vset.pattern.permute.xlu0 1
      %1638 = vperm.xlu0 %1637, %v1604
      %v1639 = vpop.permute.xlu0 %1638
      %1641 = vset.pattern.permute.xlu0 1
      %1642 = vperm.xlu0 %1641, %v1605
      %v1643 = vpop.permute.xlu0 %1642
      %v1645 = vlaneseq
      %v1646 = vshrl.u32 %v1645, 7
      %v1647 = vsub.s32 0, %v1646
      %v1648 = vrot.slane %v1610, %v1647
      %v1649 = vmul.f32 %v1635, %v1648
      %v1650 = vmul.f32 %v1639, %v1648
      %v1651 = vmul.f32 %v1643, %v1648
      %v1652 = vadd.f32 %v1630, %v1649
      %v1653 = vadd.f32 %v1631, %v1650
      %v1654 = vadd.f32 %v1632, %v1651
      %1655 = vset.pattern.permute.xlu0 2
      %1656 = vperm.xlu0 %1655, %v1603
      %v1657 = vpop.permute.xlu0 %1656
      %1659 = vset.pattern.permute.xlu0 2
      %1660 = vperm.xlu0 %1659, %v1604
      %v1661 = vpop.permute.xlu0 %1660
      %1663 = vset.pattern.permute.xlu0 2
      %1664 = vperm.xlu0 %1663, %v1605
      %v1665 = vpop.permute.xlu0 %1664
      %v1667 = vmul.f32 %v1657, %v1629
      %v1668 = vmul.f32 %v1661, %v1629
      %v1669 = vmul.f32 %v1665, %v1629
      %1670 = vset.pattern.permute.xlu0 3
      %1671 = vperm.xlu0 %1670, %v1603
      %v1672 = vpop.permute.xlu0 %1671
      %1674 = vset.pattern.permute.xlu0 3
      %1675 = vperm.xlu0 %1674, %v1604
      %v1676 = vpop.permute.xlu0 %1675
      %1678 = vset.pattern.permute.xlu0 3
      %1679 = vperm.xlu0 %1678, %v1605
      %v1680 = vpop.permute.xlu0 %1679
      %v1682 = vmul.f32 %v1672, %v1648
      %v1683 = vmul.f32 %v1676, %v1648
      %v1684 = vmul.f32 %v1680, %v1648
      %v1685 = vadd.f32 %v1667, %v1682
      %v1686 = vadd.f32 %v1668, %v1683
      %v1687 = vadd.f32 %v1669, %v1684
      %1688 = vset.pattern.permute.xlu0 4
      %1689 = vperm.xlu0 %1688, %v1603
      %v1690 = vpop.permute.xlu0 %1689
      %1692 = vset.pattern.permute.xlu0 4
      %1693 = vperm.xlu0 %1692, %v1604
      %v1694 = vpop.permute.xlu0 %1693
      %1696 = vset.pattern.permute.xlu0 4
      %1697 = vperm.xlu0 %1696, %v1605
      %v1698 = vpop.permute.xlu0 %1697
      %v1700 = vmul.f32 %v1690, %v1629
      %v1701 = vmul.f32 %v1694, %v1629
      %v1702 = vmul.f32 %v1698, %v1629
      %1703 = vset.pattern.permute.xlu0 5
      %1704 = vperm.xlu0 %1703, %v1603
      %v1705 = vpop.permute.xlu0 %1704
      %1707 = vset.pattern.permute.xlu0 5
      %1708 = vperm.xlu0 %1707, %v1604
      %v1709 = vpop.permute.xlu0 %1708
      %1711 = vset.pattern.permute.xlu0 5
      %1712 = vperm.xlu0 %1711, %v1605
      %v1713 = vpop.permute.xlu0 %1712
      %v1715 = vmul.f32 %v1705, %v1648
      %v1716 = vmul.f32 %v1709, %v1648
      %v1717 = vmul.f32 %v1713, %v1648
      %v1718 = vadd.f32 %v1700, %v1715
      %v1719 = vadd.f32 %v1701, %v1716
      %v1720 = vadd.f32 %v1702, %v1717
      %1724 = vrot.lane.b32.xlu0 %v1685, 2
      %v1725 = vpop.permute.xlu0 %1724
      %1726 = vrot.lane.b32.xlu0 %v1686, 2
      %v1727 = vpop.permute.xlu0 %1726
      %1728 = vrot.lane.b32.xlu0 %v1687, 2
      %v1729 = vpop.permute.xlu0 %1728
      %1736 = vrot.lane.b32.xlu0 %v1718, 4
      %v1737 = vpop.permute.xlu0 %1736
      %1738 = vrot.lane.b32.xlu0 %v1719, 4
      %v1739 = vpop.permute.xlu0 %1738
      %1740 = vrot.lane.b32.xlu0 %v1720, 4
      %v1741 = vpop.permute.xlu0 %1740
      %v1745 = vsel %vm1496, %v1652, %v1725
      %v1746 = vsel %vm1496, %v1653, %v1727
      %v1747 = vsel %vm1496, %v1654, %v1729
      %v1748 = vsel %vm1500, %v1745, %v1737
      %v1749 = vsel %vm1500, %v1746, %v1739
      %v1750 = vsel %vm1500, %v1747, %v1741
      %v1751 = vmul.f32 %v1748, %v1748
      %v1752 = vmul.f32 %v1749, %v1749
      %v1753 = vmul.f32 %v1750, %v1750
      %1757 = vrot.lane.b32.xlu0 %v1751, 126
      %v1758 = vpop.permute.xlu0 %1757
      %1759 = vrot.lane.b32.xlu0 %v1752, 126
      %v1760 = vpop.permute.xlu0 %1759
      %1761 = vrot.lane.b32.xlu0 %v1753, 126
      %v1762 = vpop.permute.xlu0 %1761
      %v1766 = vadd.f32 %v1751, %v1758
      %v1767 = vadd.f32 %v1752, %v1760
      %v1768 = vadd.f32 %v1753, %v1762
      %1769 = vrot.lane.b32.xlu0 %v1751, 124
      %v1770 = vpop.permute.xlu0 %1769
      %1771 = vrot.lane.b32.xlu0 %v1752, 124
      %v1772 = vpop.permute.xlu0 %1771
      %1773 = vrot.lane.b32.xlu0 %v1753, 124
      %v1774 = vpop.permute.xlu0 %1773
      %v1778 = vadd.f32 %v1766, %v1770
      %v1779 = vadd.f32 %v1767, %v1772
      %v1780 = vadd.f32 %v1768, %v1774
      %v1781 = vmax.f32 %v1778, 1e-08
      %v1782 = vmax.f32 %v1779, 1e-08
      %v1783 = vmax.f32 %v1780, 1e-08
      %v1784 = vrsqrt.pop %v1781
      %v1785 = vmul.f32 %v1781, %v1784
      %vm1786 = vcmp.eq.f32.partialorder %v1781, inf
      %v1787 = vsel %vm1786, %v1781, %v1785
      %vm1788 = vcmp.eq.f32.partialorder %v1781, 0.0
      %v1789 = vand.u32 %v1781, 2147483648
      %v1790 = vsel %vm1788, %v1789, %v1787
      %v1791 = vrsqrt.pop %v1782
      %v1792 = vmul.f32 %v1782, %v1791
      %vm1793 = vcmp.eq.f32.partialorder %v1782, inf
      %v1794 = vsel %vm1793, %v1782, %v1792
      %vm1795 = vcmp.eq.f32.partialorder %v1782, 0.0
      %v1796 = vand.u32 %v1782, 2147483648
      %v1797 = vsel %vm1795, %v1796, %v1794
      %v1798 = vrsqrt.pop %v1783
      %v1799 = vmul.f32 %v1783, %v1798
      %vm1800 = vcmp.eq.f32.partialorder %v1783, inf
      %v1801 = vsel %vm1800, %v1783, %v1799
      %vm1802 = vcmp.eq.f32.partialorder %v1783, 0.0
      %v1803 = vand.u32 %v1783, 2147483648
      %v1804 = vsel %vm1802, %v1803, %v1801
      %v1805 = vpack.c.bf16 %v1607, %v1606
      %v1806 = vpack.c.bf16 %v1608, %v1608
      %v1807 = vld [vmem:[%s6] sm:$0xf]
      %v1808 = vld [vmem:[%s6 + $0x4] sm:$0xf]
      %v1809 = vld [vmem:[%s6 + $0x8] sm:$0xf]
      %v1810 = vld [vmem:[%s6 + $0xc] sm:$0xf]
      %v1811 = vld [vmem:[%s6 + $0x10] sm:$0xf]
      %v1812 = vld [vmem:[%s6 + $0x14] sm:$0xf]
      %v1813 = vld [vmem:[%s6 + $0x18] sm:$0xf]
      %v1814 = vld [vmem:[%s6 + $0x1c] sm:$0xf]
      %v1815 = vld [vmem:[%s6 + $0x20] sm:$0xf]
      %v1816 = vld [vmem:[%s6 + $0x24] sm:$0xf]
      %v1817 = vld [vmem:[%s6 + $0x28] sm:$0xf]
      %v1818 = vld [vmem:[%s6 + $0x2c] sm:$0xf]
      %v1819 = vld [vmem:[%s6 + $0x30] sm:$0xf]
      %v1820 = vld [vmem:[%s6 + $0x34] sm:$0xf]
      %v1821 = vld [vmem:[%s6 + $0x38] sm:$0xf]
      %v1822 = vld [vmem:[%s6 + $0x3c] sm:$0xf]
      %v1823 = vpack.c.bf16 %v1797, %v1790
      %v1824 = vpack.c.bf16 %v1804, %v1804
      %v1825 = vld [vmem:[%s7] sm:$0x1]
      %v1827 = vsel %vm1496, %v1823, 0
      %v1830 = vsel %vm1496, %v1824, 0
      %vm1832 = vcmask 1040384
      %v1834 = vsel %vm1832, %v1825, 0
      %1836 = vmatprep.subr.bf16.mxu0 0
      %1837 = vmatpush1.bf16.msra.mxu0 %v1834
      %1838 = vmatprep.subr.bf16.mxu0 0
      %1839 = vmatpush1.bf16.msra.mxu0 0
      %1840 = vmatprep.subr.bf16.mxu0 0
      %1841 = vmatpush1.bf16.msra.mxu0 0
      %1842 = vmatprep.subr.bf16.mxu0 0
      %1843 = vmatpush1.bf16.msra.mxu0 0
      %1844 = vmatprep.subr.bf16.mxu0 0
      %1845 = vmatpush1.bf16.msra.mxu0 0
      %1846 = vmatprep.subr.bf16.mxu0 0
      %1847 = vmatpush1.bf16.msra.mxu0 0
      %1848 = vmatprep.subr.bf16.mxu0 0
      %1849 = vmatpush1.bf16.msra.mxu0 0
      %1850 = vmatprep.subr.bf16.mxu0 0
      %1851 = vmatpush1.bf16.msra.mxu0 0
      %1852 = vmatprep.subr.bf16.mxu0 0
      %1853 = vmatpush1.bf16.msra.mxu0 0
      %1854 = vmatprep.subr.bf16.mxu0 0
      %1855 = vmatpush1.bf16.msra.mxu0 0
      %1856 = vmatprep.subr.bf16.mxu0 0
      %1857 = vmatpush1.bf16.msra.mxu0 0
      %1858 = vmatprep.subr.bf16.mxu0 0
      %1859 = vmatpush1.bf16.msra.mxu0 0
      %1860 = vmatprep.subr.bf16.mxu0 0
      %1861 = vmatpush1.bf16.msra.mxu0 0
      %1862 = vmatprep.subr.bf16.mxu0 0
      %1863 = vmatpush1.bf16.msra.mxu0 0
      %1864 = vmatprep.subr.bf16.mxu0 0
      %1865 = vmatpush1.bf16.msra.mxu0 0
      %1866 = vmatprep.subr.bf16.mxu0 0
      %1867 = vmatpush1.bf16.msra.mxu0 0
      %1868 = vmatprep.mubr.bf16.mxu0 0
      %1869 = vmatmul.mubr.bf16.gmra.mrb[0].mxu0 %v1827
      %v1870 = vpop.f32.mrb[0].mxu0
      %v1871 = vadd.f32 0.0, %v1870
      %v1872 = vpop.f32.mrb[0].mxu0
      %v1873 = vpop.f32.mrb[0].mxu0
      %v1874 = vadd.f32 0.0, %v1873
      %v1875 = vpop.f32.mrb[0].mxu0
      %1876 = vmatprep.mubr.bf16.mxu0 0
      %1877 = vmatmul.mubr.bf16.gmra.mrb[0].mxu0 %v1830
      %v1878 = vpop.f32.mrb[0].mxu0
      %v1879 = vadd.f32 0.0, %v1878
      %v1880 = vpop.f32.mrb[0].mxu0
      %v1881 = vpop.f32.mrb[0].mxu0
      %v1882 = vpop.f32.mrb[0].mxu0
      %1883 = vdwg.mxu0
      %v1900 = vunpack.c.l.b16 %v1807
      %v1901 = vunpack.c.l.b16 %v1808
      %v1902 = vunpack.c.l.b16 %v1809
      %v1903 = vunpack.c.l.b16 %v1810
      %v1904 = vunpack.c.l.b16 %v1811
      %v1905 = vunpack.c.l.b16 %v1812
      %v1906 = vunpack.c.l.b16 %v1813
      %v1907 = vunpack.c.l.b16 %v1814
      %v1908 = vunpack.c.l.b16 %v1815
      %v1909 = vunpack.c.l.b16 %v1816
      %v1910 = vunpack.c.l.b16 %v1817
      %v1911 = vunpack.c.l.b16 %v1818
      %v1912 = vunpack.c.l.b16 %v1819
      %v1913 = vunpack.c.l.b16 %v1820
      %v1914 = vunpack.c.l.b16 %v1821
      %v1915 = vunpack.c.l.b16 %v1822
      %v1916 = vpack.c.b16 %v1901, %v1900
      %v1917 = vpack.c.b16 %v1903, %v1902
      %v1918 = vpack.c.b16 %v1905, %v1904
      %v1919 = vpack.c.b16 %v1907, %v1906
      %v1920 = vpack.c.b16 %v1909, %v1908
      %v1921 = vpack.c.b16 %v1911, %v1910
      %v1922 = vpack.c.b16 %v1913, %v1912
      %v1923 = vpack.c.b16 %v1915, %v1914
      %1932 = vmatprep.subr.bf16.mxu0 0
      %1933 = vmatpush1.bf16.msra.mxu0 %v1916
      %1934 = vmatprep.subr.bf16.mxu0 0
      %1935 = vmatpush1.bf16.msra.mxu0 %v1917
      %1936 = vmatprep.subr.bf16.mxu0 0
      %1937 = vmatpush1.bf16.msra.mxu0 %v1918
      %1938 = vmatprep.subr.bf16.mxu0 0
      %1939 = vmatpush1.bf16.msra.mxu0 %v1919
      %1940 = vmatprep.subr.bf16.mxu0 0
      %1941 = vmatpush1.bf16.msra.mxu0 %v1920
      %1942 = vmatprep.subr.bf16.mxu0 0
      %1943 = vmatpush1.bf16.msra.mxu0 %v1921
      %1944 = vmatprep.subr.bf16.mxu0 0
      %1945 = vmatpush1.bf16.msra.mxu0 %v1922
      %1946 = vmatprep.subr.bf16.mxu0 0
      %1947 = vmatpush1.bf16.msra.mxu0 %v1923
      %1948 = vmatprep.subr.bf16.mxu0 0
      %1949 = vmatpush1.bf16.msra.mxu0 0
      %1950 = vmatprep.subr.bf16.mxu0 0
      %1951 = vmatpush1.bf16.msra.mxu0 0
      %1952 = vmatprep.subr.bf16.mxu0 0
      %1953 = vmatpush1.bf16.msra.mxu0 0
      %1954 = vmatprep.subr.bf16.mxu0 0
      %1955 = vmatpush1.bf16.msra.mxu0 0
      %1956 = vmatprep.subr.bf16.mxu0 0
      %1957 = vmatpush1.bf16.msra.mxu0 0
      %1958 = vmatprep.subr.bf16.mxu0 0
      %1959 = vmatpush1.bf16.msra.mxu0 0
      %1960 = vmatprep.subr.bf16.mxu0 0
      %1961 = vmatpush1.bf16.msra.mxu0 0
      %1962 = vmatprep.subr.bf16.mxu0 0
      %1963 = vmatpush1.bf16.msra.mxu0 0
      %1964 = vmatprep.mubr.bf16.mxu0 0
      %1965 = vmatmul.mubr.bf16.gmra.mrb[0].mxu0 %v1805
      %v1966 = vpop.f32.mrb[0].mxu0
      %v1967 = vadd.f32 %v1871, %v1966
      %v1968 = vpop.f32.mrb[0].mxu0
      %v1969 = vpop.f32.mrb[0].mxu0
      %v1970 = vadd.f32 %v1874, %v1969
      %v1971 = vpop.f32.mrb[0].mxu0
      %1972 = vmatprep.mubr.bf16.mxu0 0
      %1973 = vmatmul.mubr.bf16.gmra.mrb[0].mxu0 %v1806
      %v1974 = vpop.f32.mrb[0].mxu0
      %v1975 = vadd.f32 %v1879, %v1974
      %v1976 = vpop.f32.mrb[0].mxu0
      %v1977 = vpop.f32.mrb[0].mxu0
      %v1978 = vpop.f32.mrb[0].mxu0
      %1979 = vdwg.mxu0
      %v1980 = vld [vmem:[%s10 + $0x1] sm:$0x1]
      %v1981 = vlaneseq
      %v1982 = vshrl.u32 %v1981, 7
      %v1983 = vsub.s32 0, %v1982
      %v1984 = vrot.slane %v1980, %v1983
      %v1985 = vadd.f32 %v1967, %v1984
      %v1986 = vadd.f32 %v1970, %v1984
      %v1987 = vadd.f32 %v1975, %v1984
      %v1988 = vld [vmem:[%s10 + $0x1c] sm:$0x1]
      %v1989 = vld [vmem:[%s10 + $0x1d] sm:$0x1]
      %1991 = vset.pattern.permute.xlu0 0
      %1992 = vperm.xlu0 %1991, %v1748
      %v1993 = vpop.permute.xlu0 %1992
      %1996 = vset.pattern.permute.xlu0 0
      %1997 = vperm.xlu0 %1996, %v1749
      %v1998 = vpop.permute.xlu0 %1997
      %2001 = vset.pattern.permute.xlu0 0
      %2002 = vperm.xlu0 %2001, %v1750
      %v2003 = vpop.permute.xlu0 %2002
      %v2005 = vlaneseq
      %v2006 = vshrl.u32 %v2005, 7
      %v2007 = vsub.s32 0, %v2006
      %v2008 = vrot.slane %v1988, %v2007
      %v2009 = vmul.f32 %v1993, %v2008
      %v2010 = vmul.f32 %v1998, %v2008
      %v2011 = vmul.f32 %v2003, %v2008
      %2012 = vset.pattern.permute.xlu0 1
      %2013 = vperm.xlu0 %2012, %v1748
      %v2014 = vpop.permute.xlu0 %2013
      %2016 = vset.pattern.permute.xlu0 1
      %2017 = vperm.xlu0 %2016, %v1749
      %v2018 = vpop.permute.xlu0 %2017
      %2020 = vset.pattern.permute.xlu0 1
      %2021 = vperm.xlu0 %2020, %v1750
      %v2022 = vpop.permute.xlu0 %2021
      %v2024 = vlaneseq
      %v2025 = vshrl.u32 %v2024, 7
      %v2026 = vsub.s32 0, %v2025
      %v2027 = vrot.slane %v1989, %v2026
      %v2028 = vmul.f32 %v2014, %v2027
      %v2029 = vmul.f32 %v2018, %v2027
      %v2030 = vmul.f32 %v2022, %v2027
      %v2031 = vadd.f32 %v2009, %v2028
      %v2032 = vadd.f32 %v2010, %v2029
      %v2033 = vadd.f32 %v2011, %v2030
      %2034 = vset.pattern.permute.xlu0 2
      %2035 = vperm.xlu0 %2034, %v1748
      %v2036 = vpop.permute.xlu0 %2035
      %2038 = vset.pattern.permute.xlu0 2
      %2039 = vperm.xlu0 %2038, %v1749
      %v2040 = vpop.permute.xlu0 %2039
      %2042 = vset.pattern.permute.xlu0 2
      %2043 = vperm.xlu0 %2042, %v1750
      %v2044 = vpop.permute.xlu0 %2043
      %v2046 = vmul.f32 %v2036, %v2008
      %v2047 = vmul.f32 %v2040, %v2008
      %v2048 = vmul.f32 %v2044, %v2008
      %2049 = vset.pattern.permute.xlu0 3
      %2050 = vperm.xlu0 %2049, %v1748
      %v2051 = vpop.permute.xlu0 %2050
      %2053 = vset.pattern.permute.xlu0 3
      %2054 = vperm.xlu0 %2053, %v1749
      %v2055 = vpop.permute.xlu0 %2054
      %2057 = vset.pattern.permute.xlu0 3
      %2058 = vperm.xlu0 %2057, %v1750
      %v2059 = vpop.permute.xlu0 %2058
      %v2061 = vmul.f32 %v2051, %v2027
      %v2062 = vmul.f32 %v2055, %v2027
      %v2063 = vmul.f32 %v2059, %v2027
      %v2064 = vadd.f32 %v2046, %v2061
      %v2065 = vadd.f32 %v2047, %v2062
      %v2066 = vadd.f32 %v2048, %v2063
      %2067 = vset.pattern.permute.xlu0 4
      %2068 = vperm.xlu0 %2067, %v1748
      %v2069 = vpop.permute.xlu0 %2068
      %2071 = vset.pattern.permute.xlu0 4
      %2072 = vperm.xlu0 %2071, %v1749
      %v2073 = vpop.permute.xlu0 %2072
      %2075 = vset.pattern.permute.xlu0 4
      %2076 = vperm.xlu0 %2075, %v1750
      %v2077 = vpop.permute.xlu0 %2076
      %v2079 = vmul.f32 %v2069, %v2008
      %v2080 = vmul.f32 %v2073, %v2008
      %v2081 = vmul.f32 %v2077, %v2008
      %2082 = vset.pattern.permute.xlu0 5
      %2083 = vperm.xlu0 %2082, %v1748
      %v2084 = vpop.permute.xlu0 %2083
      %2086 = vset.pattern.permute.xlu0 5
      %2087 = vperm.xlu0 %2086, %v1749
      %v2088 = vpop.permute.xlu0 %2087
      %2090 = vset.pattern.permute.xlu0 5
      %2091 = vperm.xlu0 %2090, %v1750
      %v2092 = vpop.permute.xlu0 %2091
      %v2094 = vmul.f32 %v2084, %v2027
      %v2095 = vmul.f32 %v2088, %v2027
      %v2096 = vmul.f32 %v2092, %v2027
      %v2097 = vadd.f32 %v2079, %v2094
      %v2098 = vadd.f32 %v2080, %v2095
      %v2099 = vadd.f32 %v2081, %v2096
      %2103 = vrot.lane.b32.xlu0 %v2064, 2
      %v2104 = vpop.permute.xlu0 %2103
      %2105 = vrot.lane.b32.xlu0 %v2065, 2
      %v2106 = vpop.permute.xlu0 %2105
      %2107 = vrot.lane.b32.xlu0 %v2066, 2
      %v2108 = vpop.permute.xlu0 %2107
      %2115 = vrot.lane.b32.xlu0 %v2097, 4
      %v2116 = vpop.permute.xlu0 %2115
      %2117 = vrot.lane.b32.xlu0 %v2098, 4
      %v2118 = vpop.permute.xlu0 %2117
      %2119 = vrot.lane.b32.xlu0 %v2099, 4
      %v2120 = vpop.permute.xlu0 %2119
      %v2124 = vsel %vm1496, %v2031, %v2104
      %v2125 = vsel %vm1496, %v2032, %v2106
      %v2126 = vsel %vm1496, %v2033, %v2108
      %v2127 = vsel %vm1500, %v2124, %v2116
      %v2128 = vsel %vm1500, %v2125, %v2118
      %v2129 = vsel %vm1500, %v2126, %v2120
      %v2130 = vmul.f32 %v2127, %v2127
      %v2131 = vmul.f32 %v2128, %v2128
      %v2132 = vmul.f32 %v2129, %v2129
      %2136 = vrot.lane.b32.xlu0 %v2130, 126
      %v2137 = vpop.permute.xlu0 %2136
      %2138 = vrot.lane.b32.xlu0 %v2131, 126
      %v2139 = vpop.permute.xlu0 %2138
      %2140 = vrot.lane.b32.xlu0 %v2132, 126
      %v2141 = vpop.permute.xlu0 %2140
      %v2145 = vadd.f32 %v2130, %v2137
      %v2146 = vadd.f32 %v2131, %v2139
      %v2147 = vadd.f32 %v2132, %v2141
      %2148 = vrot.lane.b32.xlu0 %v2130, 124
      %v2149 = vpop.permute.xlu0 %2148
      %2150 = vrot.lane.b32.xlu0 %v2131, 124
      %v2151 = vpop.permute.xlu0 %2150
      %2152 = vrot.lane.b32.xlu0 %v2132, 124
      %v2153 = vpop.permute.xlu0 %2152
      %v2157 = vadd.f32 %v2145, %v2149
      %v2158 = vadd.f32 %v2146, %v2151
      %v2159 = vadd.f32 %v2147, %v2153
      %v2160 = vmax.f32 %v2157, 1e-08
      %v2161 = vmax.f32 %v2158, 1e-08
      %v2162 = vmax.f32 %v2159, 1e-08
      %v2163 = vrsqrt.pop %v2160
      %v2164 = vmul.f32 %v2160, %v2163
      %vm2165 = vcmp.eq.f32.partialorder %v2160, inf
      %v2166 = vsel %vm2165, %v2160, %v2164
      %vm2167 = vcmp.eq.f32.partialorder %v2160, 0.0
      %v2168 = vand.u32 %v2160, 2147483648
      %v2169 = vsel %vm2167, %v2168, %v2166
      %v2170 = vrsqrt.pop %v2161
      %v2171 = vmul.f32 %v2161, %v2170
      %vm2172 = vcmp.eq.f32.partialorder %v2161, inf
      %v2173 = vsel %vm2172, %v2161, %v2171
      %vm2174 = vcmp.eq.f32.partialorder %v2161, 0.0
      %v2175 = vand.u32 %v2161, 2147483648
      %v2176 = vsel %vm2174, %v2175, %v2173
      %v2177 = vrsqrt.pop %v2162
      %v2178 = vmul.f32 %v2162, %v2177
      %vm2179 = vcmp.eq.f32.partialorder %v2162, inf
      %v2180 = vsel %vm2179, %v2162, %v2178
      %vm2181 = vcmp.eq.f32.partialorder %v2162, 0.0
      %v2182 = vand.u32 %v2162, 2147483648
      %v2183 = vsel %vm2181, %v2182, %v2180
      %v2184 = vxor.u32 %v2169, 2147483648
      %v2185 = vxor.u32 %v2176, 2147483648
      %v2186 = vxor.u32 %v2183, 2147483648
      %v2187 = vmul.f32 %v2184, 1.442695
      %v2188 = vpow.pop %v2187
      %v2189 = vmul.f32 %v2185, 1.442695
      %v2190 = vpow.pop %v2189
      %v2191 = vmul.f32 %v2186, 1.442695
      %v2192 = vpow.pop %v2191
      %v2193 = vadd.f32 %v2188, 1.0
      %v2194 = vadd.f32 %v2190, 1.0
      %v2195 = vadd.f32 %v2192, 1.0
      %v2196 = vrcp.pop %v2193
      %v2197 = vmul.f32 1.0, %v2196
      %v2198 = vrcp.pop %v2194
      %v2199 = vmul.f32 1.0, %v2198
      %v2200 = vrcp.pop %v2195
      %v2201 = vmul.f32 1.0, %v2200
      %2205 = vrot.lane.b32.xlu0 %v2197, 2
      %v2206 = vpop.permute.xlu0 %2205
      %2207 = vrot.lane.b32.xlu0 %v2199, 2
      %v2208 = vpop.permute.xlu0 %2207
      %2209 = vrot.lane.b32.xlu0 %v2201, 2
      %v2210 = vpop.permute.xlu0 %2209
      %2214 = vrot.lane.b32.xlu0 %v2197, 4
      %v2215 = vpop.permute.xlu0 %2214
      %2216 = vrot.lane.b32.xlu0 %v2199, 4
      %v2217 = vpop.permute.xlu0 %2216
      %2218 = vrot.lane.b32.xlu0 %v2201, 4
      %v2219 = vpop.permute.xlu0 %2218
      %v2223 = vsel %vm1496, %v2197, %v2206
      %v2224 = vsel %vm1496, %v2199, %v2208
      %v2225 = vsel %vm1496, %v2201, %v2210
      %v2226 = vsel %vm1500, %v2223, %v2215
      %v2227 = vsel %vm1500, %v2224, %v2217
      %v2228 = vsel %vm1500, %v2225, %v2219
      %v2229 = vmul.f32 %v2127, %v2226
      %v2230 = vmul.f32 %v2128, %v2227
      %v2231 = vmul.f32 %v2129, %v2228
      %v2232 = vmax.f32 %v1985, 0.0
      %v2233 = vmax.f32 %v1986, 0.0
      %v2234 = vmax.f32 %v1987, 0.0
      %v2235 = vld [vmem:[%s10 + $0x20] sm:$0x1]
      %v2236 = vld [vmem:[%s10 + $0x21] sm:$0x1]
      %2238 = vset.pattern.permute.xlu0 0
      %2239 = vperm.xlu0 %2238, %v2229
      %v2240 = vpop.permute.xlu0 %2239
      %2243 = vset.pattern.permute.xlu0 0
      %2244 = vperm.xlu0 %2243, %v2230
      %v2245 = vpop.permute.xlu0 %2244
      %2248 = vset.pattern.permute.xlu0 0
      %2249 = vperm.xlu0 %2248, %v2231
      %v2250 = vpop.permute.xlu0 %2249
      %v2252 = vlaneseq
      %v2253 = vshrl.u32 %v2252, 7
      %v2254 = vsub.s32 0, %v2253
      %v2255 = vrot.slane %v2235, %v2254
      %v2256 = vmul.f32 %v2240, %v2255
      %v2257 = vmul.f32 %v2245, %v2255
      %v2258 = vmul.f32 %v2250, %v2255
      %2259 = vset.pattern.permute.xlu0 1
      %2260 = vperm.xlu0 %2259, %v2229
      %v2261 = vpop.permute.xlu0 %2260
      %2263 = vset.pattern.permute.xlu0 1
      %2264 = vperm.xlu0 %2263, %v2230
      %v2265 = vpop.permute.xlu0 %2264
      %2267 = vset.pattern.permute.xlu0 1
      %2268 = vperm.xlu0 %2267, %v2231
      %v2269 = vpop.permute.xlu0 %2268
      %v2271 = vlaneseq
      %v2272 = vshrl.u32 %v2271, 7
      %v2273 = vsub.s32 0, %v2272
      %v2274 = vrot.slane %v2236, %v2273
      %v2275 = vmul.f32 %v2261, %v2274
      %v2276 = vmul.f32 %v2265, %v2274
      %v2277 = vmul.f32 %v2269, %v2274
      %v2278 = vadd.f32 %v2256, %v2275
      %v2279 = vadd.f32 %v2257, %v2276
      %v2280 = vadd.f32 %v2258, %v2277
      %2281 = vset.pattern.permute.xlu0 2
      %2282 = vperm.xlu0 %2281, %v2229
      %v2283 = vpop.permute.xlu0 %2282
      %2285 = vset.pattern.permute.xlu0 2
      %2286 = vperm.xlu0 %2285, %v2230
      %v2287 = vpop.permute.xlu0 %2286
      %2289 = vset.pattern.permute.xlu0 2
      %2290 = vperm.xlu0 %2289, %v2231
      %v2291 = vpop.permute.xlu0 %2290
      %v2293 = vmul.f32 %v2283, %v2255
      %v2294 = vmul.f32 %v2287, %v2255
      %v2295 = vmul.f32 %v2291, %v2255
      %2296 = vset.pattern.permute.xlu0 3
      %2297 = vperm.xlu0 %2296, %v2229
      %v2298 = vpop.permute.xlu0 %2297
      %2300 = vset.pattern.permute.xlu0 3
      %2301 = vperm.xlu0 %2300, %v2230
      %v2302 = vpop.permute.xlu0 %2301
      %2304 = vset.pattern.permute.xlu0 3
      %2305 = vperm.xlu0 %2304, %v2231
      %v2306 = vpop.permute.xlu0 %2305
      %v2308 = vmul.f32 %v2298, %v2274
      %v2309 = vmul.f32 %v2302, %v2274
      %v2310 = vmul.f32 %v2306, %v2274
      %v2311 = vadd.f32 %v2293, %v2308
      %v2312 = vadd.f32 %v2294, %v2309
      %v2313 = vadd.f32 %v2295, %v2310
      %2314 = vset.pattern.permute.xlu0 4
      %2315 = vperm.xlu0 %2314, %v2229
      %v2316 = vpop.permute.xlu0 %2315
      %2318 = vset.pattern.permute.xlu0 4
      %2319 = vperm.xlu0 %2318, %v2230
      %v2320 = vpop.permute.xlu0 %2319
      %2322 = vset.pattern.permute.xlu0 4
      %2323 = vperm.xlu0 %2322, %v2231
      %v2324 = vpop.permute.xlu0 %2323
      %v2326 = vmul.f32 %v2316, %v2255
      %v2327 = vmul.f32 %v2320, %v2255
      %v2328 = vmul.f32 %v2324, %v2255
      %2329 = vset.pattern.permute.xlu0 5
      %2330 = vperm.xlu0 %2329, %v2229
      %v2331 = vpop.permute.xlu0 %2330
      %2333 = vset.pattern.permute.xlu0 5
      %2334 = vperm.xlu0 %2333, %v2230
      %v2335 = vpop.permute.xlu0 %2334
      %2337 = vset.pattern.permute.xlu0 5
      %2338 = vperm.xlu0 %2337, %v2231
      %v2339 = vpop.permute.xlu0 %2338
      %v2341 = vmul.f32 %v2331, %v2274
      %v2342 = vmul.f32 %v2335, %v2274
      %v2343 = vmul.f32 %v2339, %v2274
      %v2344 = vadd.f32 %v2326, %v2341
      %v2345 = vadd.f32 %v2327, %v2342
      %v2346 = vadd.f32 %v2328, %v2343
      %2350 = vrot.lane.b32.xlu0 %v2311, 2
      %v2351 = vpop.permute.xlu0 %2350
      %2352 = vrot.lane.b32.xlu0 %v2312, 2
      %v2353 = vpop.permute.xlu0 %2352
      %2354 = vrot.lane.b32.xlu0 %v2313, 2
      %v2355 = vpop.permute.xlu0 %2354
      %2362 = vrot.lane.b32.xlu0 %v2344, 4
      %v2363 = vpop.permute.xlu0 %2362
      %2364 = vrot.lane.b32.xlu0 %v2345, 4
      %v2365 = vpop.permute.xlu0 %2364
      %2366 = vrot.lane.b32.xlu0 %v2346, 4
      %v2367 = vpop.permute.xlu0 %2366
      %v2371 = vsel %vm1496, %v2278, %v2351
      %v2372 = vsel %vm1496, %v2279, %v2353
      %v2373 = vsel %vm1496, %v2280, %v2355
      %v2374 = vsel %vm1500, %v2371, %v2363
      %v2375 = vsel %vm1500, %v2372, %v2365
      %v2376 = vsel %vm1500, %v2373, %v2367
      %v2377 = vmul.f32 %v2374, %v2374
      %v2378 = vmul.f32 %v2375, %v2375
      %v2379 = vmul.f32 %v2376, %v2376
      %2383 = vrot.lane.b32.xlu0 %v2377, 126
      %v2384 = vpop.permute.xlu0 %2383
      %2385 = vrot.lane.b32.xlu0 %v2378, 126
      %v2386 = vpop.permute.xlu0 %2385
      %2387 = vrot.lane.b32.xlu0 %v2379, 126
      %v2388 = vpop.permute.xlu0 %2387
      %v2392 = vadd.f32 %v2377, %v2384
      %v2393 = vadd.f32 %v2378, %v2386
      %v2394 = vadd.f32 %v2379, %v2388
      %2395 = vrot.lane.b32.xlu0 %v2377, 124
      %v2396 = vpop.permute.xlu0 %2395
      %2397 = vrot.lane.b32.xlu0 %v2378, 124
      %v2398 = vpop.permute.xlu0 %2397
      %2399 = vrot.lane.b32.xlu0 %v2379, 124
      %v2400 = vpop.permute.xlu0 %2399
      %v2404 = vadd.f32 %v2392, %v2396
      %v2405 = vadd.f32 %v2393, %v2398
      %v2406 = vadd.f32 %v2394, %v2400
      %v2407 = vmax.f32 %v2404, 1e-08
      %v2408 = vmax.f32 %v2405, 1e-08
      %v2409 = vmax.f32 %v2406, 1e-08
      %v2410 = vrsqrt.pop %v2407
      %v2411 = vmul.f32 %v2407, %v2410
      %vm2412 = vcmp.eq.f32.partialorder %v2407, inf
      %v2413 = vsel %vm2412, %v2407, %v2411
      %vm2414 = vcmp.eq.f32.partialorder %v2407, 0.0
      %v2415 = vand.u32 %v2407, 2147483648
      %v2416 = vsel %vm2414, %v2415, %v2413
      %v2417 = vrsqrt.pop %v2408
      %v2418 = vmul.f32 %v2408, %v2417
      %vm2419 = vcmp.eq.f32.partialorder %v2408, inf
      %v2420 = vsel %vm2419, %v2408, %v2418
      %vm2421 = vcmp.eq.f32.partialorder %v2408, 0.0
      %v2422 = vand.u32 %v2408, 2147483648
      %v2423 = vsel %vm2421, %v2422, %v2420
      %v2424 = vrsqrt.pop %v2409
      %v2425 = vmul.f32 %v2409, %v2424
      %vm2426 = vcmp.eq.f32.partialorder %v2409, inf
      %v2427 = vsel %vm2426, %v2409, %v2425
      %vm2428 = vcmp.eq.f32.partialorder %v2409, 0.0
      %v2429 = vand.u32 %v2409, 2147483648
      %v2430 = vsel %vm2428, %v2429, %v2427
      %v2431 = vpack.c.bf16 %v2233, %v2232
      %v2432 = vpack.c.bf16 %v2234, %v2234
      %v2433 = vld [vmem:[%s8] sm:$0xf]
      %v2434 = vld [vmem:[%s8 + $0x4] sm:$0xf]
      %v2435 = vld [vmem:[%s8 + $0x8] sm:$0xf]
      %v2436 = vld [vmem:[%s8 + $0xc] sm:$0xf]
      %v2437 = vld [vmem:[%s8 + $0x10] sm:$0xf]
      %v2438 = vld [vmem:[%s8 + $0x14] sm:$0xf]
      %v2439 = vld [vmem:[%s8 + $0x18] sm:$0xf]
      %v2440 = vld [vmem:[%s8 + $0x1c] sm:$0xf]
      %v2441 = vld [vmem:[%s8 + $0x20] sm:$0xf]
      %v2442 = vld [vmem:[%s8 + $0x24] sm:$0xf]
      %v2443 = vld [vmem:[%s8 + $0x28] sm:$0xf]
      %v2444 = vld [vmem:[%s8 + $0x2c] sm:$0xf]
      %v2445 = vld [vmem:[%s8 + $0x30] sm:$0xf]
      %v2446 = vld [vmem:[%s8 + $0x34] sm:$0xf]
      %v2447 = vld [vmem:[%s8 + $0x38] sm:$0xf]
      %v2448 = vld [vmem:[%s8 + $0x3c] sm:$0xf]
      %v2449 = vpack.c.bf16 %v2423, %v2416
      %v2450 = vpack.c.bf16 %v2430, %v2430
      %v2451 = vld [vmem:[%s9] sm:$0x1]
      %v2453 = vsel %vm1496, %v2449, 0
      %v2456 = vsel %vm1496, %v2450, 0
      %v2459 = vsel %vm1832, %v2451, 0
      %2461 = vmatprep.subr.bf16.mxu0 0
      %2462 = vmatpush1.bf16.msra.mxu0 %v2459
      %2463 = vmatprep.subr.bf16.mxu0 0
      %2464 = vmatpush1.bf16.msra.mxu0 0
      %2465 = vmatprep.subr.bf16.mxu0 0
      %2466 = vmatpush1.bf16.msra.mxu0 0
      %2467 = vmatprep.subr.bf16.mxu0 0
      %2468 = vmatpush1.bf16.msra.mxu0 0
      %2469 = vmatprep.subr.bf16.mxu0 0
      %2470 = vmatpush1.bf16.msra.mxu0 0
      %2471 = vmatprep.subr.bf16.mxu0 0
      %2472 = vmatpush1.bf16.msra.mxu0 0
      %2473 = vmatprep.subr.bf16.mxu0 0
      %2474 = vmatpush1.bf16.msra.mxu0 0
      %2475 = vmatprep.subr.bf16.mxu0 0
      %2476 = vmatpush1.bf16.msra.mxu0 0
      %2477 = vmatprep.subr.bf16.mxu0 0
      %2478 = vmatpush1.bf16.msra.mxu0 0
      %2479 = vmatprep.subr.bf16.mxu0 0
      %2480 = vmatpush1.bf16.msra.mxu0 0
      %2481 = vmatprep.subr.bf16.mxu0 0
      %2482 = vmatpush1.bf16.msra.mxu0 0
      %2483 = vmatprep.subr.bf16.mxu0 0
      %2484 = vmatpush1.bf16.msra.mxu0 0
      %2485 = vmatprep.subr.bf16.mxu0 0
      %2486 = vmatpush1.bf16.msra.mxu0 0
      %2487 = vmatprep.subr.bf16.mxu0 0
      %2488 = vmatpush1.bf16.msra.mxu0 0
      %2489 = vmatprep.subr.bf16.mxu0 0
      %2490 = vmatpush1.bf16.msra.mxu0 0
      %2491 = vmatprep.subr.bf16.mxu0 0
      %2492 = vmatpush1.bf16.msra.mxu0 0
      %2493 = vmatprep.mubr.bf16.mxu0 0
      %2494 = vmatmul.mubr.bf16.gmra.mrb[0].mxu0 %v2453
      %v2495 = vpop.f32.mrb[0].mxu0
      %v2496 = vadd.f32 0.0, %v2495
      %v2497 = vpop.f32.mrb[0].mxu0
      %v2498 = vpop.f32.mrb[0].mxu0
      %v2499 = vadd.f32 0.0, %v2498
      %v2500 = vpop.f32.mrb[0].mxu0
      %2501 = vmatprep.mubr.bf16.mxu0 0
      %2502 = vmatmul.mubr.bf16.gmra.mrb[0].mxu0 %v2456
      %v2503 = vpop.f32.mrb[0].mxu0
      %v2504 = vadd.f32 0.0, %v2503
      %v2505 = vpop.f32.mrb[0].mxu0
      %v2506 = vpop.f32.mrb[0].mxu0
      %v2507 = vpop.f32.mrb[0].mxu0
      %2508 = vdwg.mxu0
      %v2525 = vunpack.c.l.b16 %v2433
      %v2526 = vunpack.c.l.b16 %v2434
      %v2527 = vunpack.c.l.b16 %v2435
      %v2528 = vunpack.c.l.b16 %v2436
      %v2529 = vunpack.c.l.b16 %v2437
      %v2530 = vunpack.c.l.b16 %v2438
      %v2531 = vunpack.c.l.b16 %v2439
      %v2532 = vunpack.c.l.b16 %v2440
      %v2533 = vunpack.c.l.b16 %v2441
      %v2534 = vunpack.c.l.b16 %v2442
      %v2535 = vunpack.c.l.b16 %v2443
      %v2536 = vunpack.c.l.b16 %v2444
      %v2537 = vunpack.c.l.b16 %v2445
      %v2538 = vunpack.c.l.b16 %v2446
      %v2539 = vunpack.c.l.b16 %v2447
      %v2540 = vunpack.c.l.b16 %v2448
      %v2541 = vpack.c.b16 %v2526, %v2525
      %v2542 = vpack.c.b16 %v2528, %v2527
      %v2543 = vpack.c.b16 %v2530, %v2529
      %v2544 = vpack.c.b16 %v2532, %v2531
      %v2545 = vpack.c.b16 %v2534, %v2533
      %v2546 = vpack.c.b16 %v2536, %v2535
      %v2547 = vpack.c.b16 %v2538, %v2537
      %v2548 = vpack.c.b16 %v2540, %v2539
      %2557 = vmatprep.subr.bf16.mxu0 0
      %2558 = vmatpush1.bf16.msra.mxu0 %v2541
      %2559 = vmatprep.subr.bf16.mxu0 0
      %2560 = vmatpush1.bf16.msra.mxu0 %v2542
      %2561 = vmatprep.subr.bf16.mxu0 0
      %2562 = vmatpush1.bf16.msra.mxu0 %v2543
      %2563 = vmatprep.subr.bf16.mxu0 0
      %2564 = vmatpush1.bf16.msra.mxu0 %v2544
      %2565 = vmatprep.subr.bf16.mxu0 0
      %2566 = vmatpush1.bf16.msra.mxu0 %v2545
      %2567 = vmatprep.subr.bf16.mxu0 0
      %2568 = vmatpush1.bf16.msra.mxu0 %v2546
      %2569 = vmatprep.subr.bf16.mxu0 0
      %2570 = vmatpush1.bf16.msra.mxu0 %v2547
      %2571 = vmatprep.subr.bf16.mxu0 0
      %2572 = vmatpush1.bf16.msra.mxu0 %v2548
      %2573 = vmatprep.subr.bf16.mxu0 0
      %2574 = vmatpush1.bf16.msra.mxu0 0
      %2575 = vmatprep.subr.bf16.mxu0 0
      %2576 = vmatpush1.bf16.msra.mxu0 0
      %2577 = vmatprep.subr.bf16.mxu0 0
      %2578 = vmatpush1.bf16.msra.mxu0 0
      %2579 = vmatprep.subr.bf16.mxu0 0
      %2580 = vmatpush1.bf16.msra.mxu0 0
      %2581 = vmatprep.subr.bf16.mxu0 0
      %2582 = vmatpush1.bf16.msra.mxu0 0
      %2583 = vmatprep.subr.bf16.mxu0 0
      %2584 = vmatpush1.bf16.msra.mxu0 0
      %2585 = vmatprep.subr.bf16.mxu0 0
      %2586 = vmatpush1.bf16.msra.mxu0 0
      %2587 = vmatprep.subr.bf16.mxu0 0
      %2588 = vmatpush1.bf16.msra.mxu0 0
      %2589 = vmatprep.mubr.bf16.mxu0 0
      %2590 = vmatmul.mubr.bf16.gmra.mrb[0].mxu0 %v2431
      %v2591 = vpop.f32.mrb[0].mxu0
      %v2592 = vadd.f32 %v2496, %v2591
      %v2593 = vpop.f32.mrb[0].mxu0
      %v2594 = vpop.f32.mrb[0].mxu0
      %v2595 = vadd.f32 %v2499, %v2594
      %v2596 = vpop.f32.mrb[0].mxu0
      %2597 = vmatprep.mubr.bf16.mxu0 0
      %2598 = vmatmul.mubr.bf16.gmra.mrb[0].mxu0 %v2432
      %v2599 = vpop.f32.mrb[0].mxu0
      %v2600 = vadd.f32 %v2504, %v2599
      %v2601 = vpop.f32.mrb[0].mxu0
      %v2602 = vpop.f32.mrb[0].mxu0
      %v2603 = vpop.f32.mrb[0].mxu0
      %2604 = vdwg.mxu0
      %v2605 = vld [vmem:[%s10 + $0x2] sm:$0x1]
      %v2606 = vlaneseq
      %v2607 = vshrl.u32 %v2606, 7
      %v2608 = vsub.s32 0, %v2607
      %v2609 = vrot.slane %v2605, %v2608
      %v2610 = vadd.f32 %v2592, %v2609
      %v2611 = vadd.f32 %v2595, %v2609
      %v2612 = vadd.f32 %v2600, %v2609
      %v2613 = vld [vmem:[%s10 + $0x24] sm:$0x1]
      %v2614 = vld [vmem:[%s10 + $0x25] sm:$0x1]
      %2616 = vset.pattern.permute.xlu0 0
      %2617 = vperm.xlu0 %2616, %v2374
      %v2618 = vpop.permute.xlu0 %2617
      %2621 = vset.pattern.permute.xlu0 0
      %2622 = vperm.xlu0 %2621, %v2375
      %v2623 = vpop.permute.xlu0 %2622
      %2626 = vset.pattern.permute.xlu0 0
      %2627 = vperm.xlu0 %2626, %v2376
      %v2628 = vpop.permute.xlu0 %2627
      %v2630 = vlaneseq
      %v2631 = vshrl.u32 %v2630, 7
      %v2632 = vsub.s32 0, %v2631
      %v2633 = vrot.slane %v2613, %v2632
      %v2634 = vmul.f32 %v2618, %v2633
      %v2635 = vmul.f32 %v2623, %v2633
      %v2636 = vmul.f32 %v2628, %v2633
      %2637 = vset.pattern.permute.xlu0 1
      %2638 = vperm.xlu0 %2637, %v2374
      %v2639 = vpop.permute.xlu0 %2638
      %2641 = vset.pattern.permute.xlu0 1
      %2642 = vperm.xlu0 %2641, %v2375
      %v2643 = vpop.permute.xlu0 %2642
      %2645 = vset.pattern.permute.xlu0 1
      %2646 = vperm.xlu0 %2645, %v2376
      %v2647 = vpop.permute.xlu0 %2646
      %v2649 = vlaneseq
      %v2650 = vshrl.u32 %v2649, 7
      %v2651 = vsub.s32 0, %v2650
      %v2652 = vrot.slane %v2614, %v2651
      %v2653 = vmul.f32 %v2639, %v2652
      %v2654 = vmul.f32 %v2643, %v2652
      %v2655 = vmul.f32 %v2647, %v2652
      %v2656 = vadd.f32 %v2634, %v2653
      %v2657 = vadd.f32 %v2635, %v2654
      %v2658 = vadd.f32 %v2636, %v2655
      %2659 = vset.pattern.permute.xlu0 2
      %2660 = vperm.xlu0 %2659, %v2374
      %v2661 = vpop.permute.xlu0 %2660
      %2663 = vset.pattern.permute.xlu0 2
      %2664 = vperm.xlu0 %2663, %v2375
      %v2665 = vpop.permute.xlu0 %2664
      %2667 = vset.pattern.permute.xlu0 2
      %2668 = vperm.xlu0 %2667, %v2376
      %v2669 = vpop.permute.xlu0 %2668
      %v2671 = vmul.f32 %v2661, %v2633
      %v2672 = vmul.f32 %v2665, %v2633
      %v2673 = vmul.f32 %v2669, %v2633
      %2674 = vset.pattern.permute.xlu0 3
      %2675 = vperm.xlu0 %2674, %v2374
      %v2676 = vpop.permute.xlu0 %2675
      %2678 = vset.pattern.permute.xlu0 3
      %2679 = vperm.xlu0 %2678, %v2375
      %v2680 = vpop.permute.xlu0 %2679
      %2682 = vset.pattern.permute.xlu0 3
      %2683 = vperm.xlu0 %2682, %v2376
      %v2684 = vpop.permute.xlu0 %2683
      %v2686 = vmul.f32 %v2676, %v2652
      %v2687 = vmul.f32 %v2680, %v2652
      %v2688 = vmul.f32 %v2684, %v2652
      %v2689 = vadd.f32 %v2671, %v2686
      %v2690 = vadd.f32 %v2672, %v2687
      %v2691 = vadd.f32 %v2673, %v2688
      %2692 = vset.pattern.permute.xlu0 4
      %2693 = vperm.xlu0 %2692, %v2374
      %v2694 = vpop.permute.xlu0 %2693
      %2696 = vset.pattern.permute.xlu0 4
      %2697 = vperm.xlu0 %2696, %v2375
      %v2698 = vpop.permute.xlu0 %2697
      %2700 = vset.pattern.permute.xlu0 4
      %2701 = vperm.xlu0 %2700, %v2376
      %v2702 = vpop.permute.xlu0 %2701
      %v2704 = vmul.f32 %v2694, %v2633
      %v2705 = vmul.f32 %v2698, %v2633
      %v2706 = vmul.f32 %v2702, %v2633
      %2707 = vset.pattern.permute.xlu0 5
      %2708 = vperm.xlu0 %2707, %v2374
      %v2709 = vpop.permute.xlu0 %2708
      %2711 = vset.pattern.permute.xlu0 5
      %2712 = vperm.xlu0 %2711, %v2375
      %v2713 = vpop.permute.xlu0 %2712
      %2715 = vset.pattern.permute.xlu0 5
      %2716 = vperm.xlu0 %2715, %v2376
      %v2717 = vpop.permute.xlu0 %2716
      %v2719 = vmul.f32 %v2709, %v2652
      %v2720 = vmul.f32 %v2713, %v2652
      %v2721 = vmul.f32 %v2717, %v2652
      %v2722 = vadd.f32 %v2704, %v2719
      %v2723 = vadd.f32 %v2705, %v2720
      %v2724 = vadd.f32 %v2706, %v2721
      %2728 = vrot.lane.b32.xlu0 %v2689, 2
      %v2729 = vpop.permute.xlu0 %2728
      %2730 = vrot.lane.b32.xlu0 %v2690, 2
      %v2731 = vpop.permute.xlu0 %2730
      %2732 = vrot.lane.b32.xlu0 %v2691, 2
      %v2733 = vpop.permute.xlu0 %2732
      %2740 = vrot.lane.b32.xlu0 %v2722, 4
      %v2741 = vpop.permute.xlu0 %2740
      %2742 = vrot.lane.b32.xlu0 %v2723, 4
      %v2743 = vpop.permute.xlu0 %2742
      %2744 = vrot.lane.b32.xlu0 %v2724, 4
      %v2745 = vpop.permute.xlu0 %2744
      %v2749 = vsel %vm1496, %v2656, %v2729
      %v2750 = vsel %vm1496, %v2657, %v2731
      %v2751 = vsel %vm1496, %v2658, %v2733
      %v2752 = vsel %vm1500, %v2749, %v2741
      %v2753 = vsel %vm1500, %v2750, %v2743
      %v2754 = vsel %vm1500, %v2751, %v2745
      %2755 = vst [vmem:[%s470] sm:$0xff] %v2610
      %2756 = vst [vmem:[%s470 + $0x8] sm:$0xff] %v2611
      %2757 = vst [vmem:[%s470 + $0x10] sm:$0xff] %v2612
      %vm2758 = vcmask 48128
      %2759 = vst.msk [vmem:[%s476] sm:$0xff] %vm2758, %v2752
      %2760 = vst.msk [vmem:[%s476 + $0x8] sm:$0xff] %vm2758, %v2753
      %2761 = vst.msk [vmem:[%s476 + $0x10] sm:$0xff] %vm2758, %v2754
      %s2762 = smul.u32 3, %s24
      %p2763 = scmp.lt.s32.totalorder %s2762, 5
      %s2764 = scalar_select %p2763, %s2762, 5
      %s2765 = smul.addr %s2764, 8
      %s2766 = scalar_lea.vmem %s11, %s2765
      %s2767 = smul.u32 3, %s24
      %p2768 = scmp.lt.s32.totalorder %s2767, 5
      %s2769 = scalar_select %p2768, %s2767, 5
      %s2770 = smul.addr %s2769, 8
      %s2771 = scalar_lea.vmem %s12, %s2770
      // Predicated region
      $region65: #{scoring_forward.18} parent=63 // pred_check
        %p2772 = pneg %p288
      $region66: #{scoring_forward.18} parent=63 // pred_check_branch
        %2774 = sbr.rel (%p2772) target = $region68
      $region67: #{scoring_forward.18} parent=63 // pred_region
        %s2775 = smul.u32 3, %s24
      $region68: #{scoring_forward.18} parent=63 // pred_fallthru
        _
      // Predicated region
      $region69: #{scoring_forward.18} parent=63 // pred_check
        %p2776 = pneg %p314
      $region70: #{scoring_forward.18} parent=63 // pred_check_branch
        %2778 = sbr.rel (%p2776) target = $region72
      $region71: #{scoring_forward.18} parent=63 // pred_region
        %s2779 = smul.u32 3, %s24
      $region72: #{scoring_forward.18} parent=63 // pred_fallthru
        _
    $region64: #{scoring_forward.18} parent=5 // pred_fallthru
      _
    %p2780 = scmp.le.s32.totalorder 2, %s19
    // Predicated region
    $region73: #{scoring_forward.18} parent=5 // pred_check
      %p2781 = pneg %p2780
    $region74: #{scoring_forward.18} parent=5 // pred_check_branch
      %2783 = sbr.rel (%p2781) target = $region76
    $region75: #{scoring_forward.18} parent=5 // pred_region
      %s2784 = ssub.s32 %s19, 2
      // Predicated region
      $region77: #{scoring_forward.18} parent=75 // pred_check
        %p2785 = pneg %p294
      $region78: #{scoring_forward.18} parent=75 // pred_check_branch
        %2787 = sbr.rel (%p2785) target = $region80
      $region79: #{scoring_forward.18} parent=75 // pred_region
        %s2788 = smul.u32 3, %s25
        %p2789 = scmp.lt.s32.totalorder %s2788, 5
        %s2790 = scalar_select %p2789, %s2788, 5
        %s2791 = smul.addr %s2790, 8
        %s2792 = scalar_lea.vmem %s11, %s2791
      $region80: #{scoring_forward.18} parent=75 // pred_fallthru
        _
      // Predicated region
      $region81: #{scoring_forward.18} parent=75 // pred_check
        %p2793 = pneg %p320
      $region82: #{scoring_forward.18} parent=75 // pred_check_branch
        %2795 = sbr.rel (%p2793) target = $region84
      $region83: #{scoring_forward.18} parent=75 // pred_region
        %s2796 = smul.u32 3, %s25
        %p2797 = scmp.lt.s32.totalorder %s2796, 5
        %s2798 = scalar_select %p2797, %s2796, 5
        %s2799 = smul.addr %s2798, 8
        %s2800 = scalar_lea.vmem %s12, %s2799
      $region84: #{scoring_forward.18} parent=75 // pred_fallthru
        _
    $region76: #{scoring_forward.18} parent=5 // pred_fallthru
      _
  $region6: #{scoring_forward.18} parent=0 // loop_footer
    %s23 = sadd.s32 1, %s19
  $region7: #{scoring_forward.18} parent=0 // loop_footer_branch
    %18 = sbr.rel target = $region3
  $region8: #{scoring_forward.18} parent=0 // loop_exit
    _

// kernel: scoring_forward.19
$region0: #{scoring_forward.19}
  #allocation0 [shape = 'u32[]', space=smem, size = 0x4, offset = 0x4, fixed_abs, tag = 'smem constant byte address 0x4 - core index']
  #allocation1 [shape = 'u32[144,128]{1,0:T(1,128)}', space=vmem, size = 0x12000, scoped, tag = 'internal scratch']
  %s0 = inlined_call_operand.vmem [shape: f32[16,128], index: 0, kind: input, shape index: {}]
  %s1 = inlined_call_operand.vmem [shape: f32[16,128], index: 1, kind: input, shape index: {}]
  %s2 = inlined_call_operand.vmem [shape: f32[16,6], index: 2, kind: input, shape index: {}]
  %s3 = inlined_call_operand.vmem [shape: f32[16,6], index: 3, kind: input, shape index: {}]
  %s4 = inlined_call_operand.vmem [shape: bf16[128,512], index: 4, kind: input, shape index: {}]
  %s5 = inlined_call_operand.vmem [shape: bf16[4,512], index: 5, kind: input, shape index: {}]
  %s6 = inlined_call_operand.vmem [shape: bf16[512,128], index: 6, kind: input, shape index: {}]
  %s7 = inlined_call_operand.vmem [shape: bf16[4,128], index: 7, kind: input, shape index: {}]
  %s8 = inlined_call_operand.vmem [shape: f32[24,512], index: 8, kind: input, shape index: {}]
  %s9 = inlined_call_operand.vmem [shape: f32[16,128], index: 9, kind: output, shape index: {0}]
  %s10 = inlined_call_operand.vmem [shape: f32[16,6], index: 10, kind: output, shape index: {1}]
  %11 = xla_tuple %s9, %s10
  %s12 = sld [smem:[#allocation0]]
  $region77: #{scoring_forward.19} parent=0
    _
  %s14 = ssub.s32 1, %s12
  %s15 = scalar_select 0, %s14, %s12
  loop: start=0, step=1, limit=4
  $region2: #{scoring_forward.19} parent=0 // loop_pre_header
    _
  $region3: #{scoring_forward.19} parent=0 // loop_header
    %s17 = sphi 0, %s21
    %p18 = scmp.ge.s32.totalorder %s17, 4
    %s27 = sphi 0, %s29
    %s30 = sphi 0, %s27
    %s31 = sphi 0, %s30
    %s47 = sphi 0, %s31
    %s53 = sphi 0, %s55
    %s56 = sphi 0, %s53
    %s57 = sphi 0, %s56
    %s73 = sphi 0, %s57
    %s79 = sphi 0, %s81
    %s82 = sphi 0, %s79
    %s83 = sphi 0, %s82
    %s99 = sphi 0, %s83
    %s105 = sphi 0, %s107
    %s108 = sphi 0, %s105
    %s109 = sphi 0, %s108
    %s125 = sphi 0, %s109
    %s129 = sphi 0, %s129
    %s131 = sphi 0, %s129
    %s132 = sphi 0, %s131
    %s146 = sphi 0, %s132
    %s150 = sphi 0, %s150
    %s152 = sphi 0, %s150
    %s153 = sphi 0, %s152
    %s167 = sphi 0, %s153
    %s171 = sphi 0, %s171
    %s173 = sphi 0, %s171
    %s174 = sphi 0, %s173
    %s188 = sphi 0, %s174
    %s192 = sphi 0, %s192
    %s194 = sphi 0, %s192
    %s195 = sphi 0, %s194
    %s209 = sphi 0, %s195
    %s213 = sphi 0, %s213
    %s215 = sphi 0, %s213
    %s216 = sphi 0, %s215
    %s230 = sphi 0, %s216
    %s236 = sphi 0, %s238
    %s239 = sphi 0, %s236
    %s240 = sphi 0, %s239
    %s256 = sphi 0, %s240
    %s262 = sphi 0, %s264
    %s265 = sphi 0, %s262
    %s266 = sphi 0, %s265
    %s282 = sphi 0, %s266
  $region4: #{scoring_forward.19} parent=0 // loop_header_branch
    %20 = sbr.rel (%p18) target = $region8
  $region5: #{scoring_forward.19} parent=0 // loop_body
    %s22 = ssub.s32 %s17, 1
    %s23 = ssub.s32 %s17, 2
    %s24 = sadd.s32 %s17, 1
    %s25 = ssub.s32 %s17, %s24
    %p26 = scmp.eq.s32.totalorder %s25, 0
    %s28 = sadd.s32 %s27, 1
    %s29 = scalar_select %p26, %s27, %s28
    %p32 = pneg %p26
    %p33 = scmp.eq.s32.totalorder %s17, 1
    %p34 = por %p32, %p33
    %p35 = scmp.ne.s32.totalorder %s27, %s30
    %p36 = scmp.eq.s32.totalorder %s17, 0
    %p37 = por %p35, %p36
    %p38 = scmp.ne.s32.totalorder %s27, %s30
    %p39 = scmp.eq.s32.totalorder %s22, 1
    %p40 = por %p38, %p39
    %p41 = scmp.ne.s32.totalorder %s30, %s31
    %p42 = scmp.eq.s32.totalorder %s22, 0
    %p43 = por %p41, %p42
    %p44 = scmp.ne.s32.totalorder %s30, %s31
    %p45 = scmp.eq.s32.totalorder %s23, 1
    %p46 = por %p44, %p45
    %p48 = scmp.ne.s32.totalorder %s31, %s47
    %p49 = scmp.eq.s32.totalorder %s23, 0
    %p50 = por %p48, %p49
    %s51 = ssub.s32 %s17, %s24
    %p52 = scmp.eq.s32.totalorder %s51, 0
    %s54 = sadd.s32 %s53, 1
    %s55 = scalar_select %p52, %s53, %s54
    %p58 = pneg %p52
    %p59 = scmp.eq.s32.totalorder %s17, 1
    %p60 = por %p58, %p59
    %p61 = scmp.ne.s32.totalorder %s53, %s56
    %p62 = scmp.eq.s32.totalorder %s17, 0
    %p63 = por %p61, %p62
    %p64 = scmp.ne.s32.totalorder %s53, %s56
    %p65 = scmp.eq.s32.totalorder %s22, 1
    %p66 = por %p64, %p65
    %p67 = scmp.ne.s32.totalorder %s56, %s57
    %p68 = scmp.eq.s32.totalorder %s22, 0
    %p69 = por %p67, %p68
    %p70 = scmp.ne.s32.totalorder %s56, %s57
    %p71 = scmp.eq.s32.totalorder %s23, 1
    %p72 = por %p70, %p71
    %p74 = scmp.ne.s32.totalorder %s57, %s73
    %p75 = scmp.eq.s32.totalorder %s23, 0
    %p76 = por %p74, %p75
    %s77 = ssub.s32 %s17, %s24
    %p78 = scmp.eq.s32.totalorder %s77, 0
    %s80 = sadd.s32 %s79, 1
    %s81 = scalar_select %p78, %s79, %s80
    %p84 = pneg %p78
    %p85 = scmp.eq.s32.totalorder %s17, 1
    %p86 = por %p84, %p85
    %p87 = scmp.ne.s32.totalorder %s79, %s82
    %p88 = scmp.eq.s32.totalorder %s17, 0
    %p89 = por %p87, %p88
    %p90 = scmp.ne.s32.totalorder %s79, %s82
    %p91 = scmp.eq.s32.totalorder %s22, 1
    %p92 = por %p90, %p91
    %p93 = scmp.ne.s32.totalorder %s82, %s83
    %p94 = scmp.eq.s32.totalorder %s22, 0
    %p95 = por %p93, %p94
    %p96 = scmp.ne.s32.totalorder %s82, %s83
    %p97 = scmp.eq.s32.totalorder %s23, 1
    %p98 = por %p96, %p97
    %p100 = scmp.ne.s32.totalorder %s83, %s99
    %p101 = scmp.eq.s32.totalorder %s23, 0
    %p102 = por %p100, %p101
    %s103 = ssub.s32 %s17, %s24
    %p104 = scmp.eq.s32.totalorder %s103, 0
    %s106 = sadd.s32 %s105, 1
    %s107 = scalar_select %p104, %s105, %s106
    %p110 = pneg %p104
    %p111 = scmp.eq.s32.totalorder %s17, 1
    %p112 = por %p110, %p111
    %p113 = scmp.ne.s32.totalorder %s105, %s108
    %p114 = scmp.eq.s32.totalorder %s17, 0
    %p115 = por %p113, %p114
    %p116 = scmp.ne.s32.totalorder %s105, %s108
    %p117 = scmp.eq.s32.totalorder %s22, 1
    %p118 = por %p116, %p117
    %p119 = scmp.ne.s32.totalorder %s108, %s109
    %p120 = scmp.eq.s32.totalorder %s22, 0
    %p121 = por %p119, %p120
    %p122 = scmp.ne.s32.totalorder %s108, %s109
    %p123 = scmp.eq.s32.totalorder %s23, 1
    %p124 = por %p122, %p123
    %p126 = scmp.ne.s32.totalorder %s109, %s125
    %p127 = scmp.eq.s32.totalorder %s23, 0
    %p128 = por %p126, %p127
    %s130 = sadd.s32 %s129, 1
    %p133 = scmp.eq.s32.totalorder %s17, 1
    %p134 = scmp.ne.s32.totalorder %s129, %s131
    %p135 = scmp.eq.s32.totalorder %s17, 0
    %p136 = por %p134, %p135
    %p137 = scmp.ne.s32.totalorder %s129, %s131
    %p138 = scmp.eq.s32.totalorder %s22, 1
    %p139 = por %p137, %p138
    %p140 = scmp.ne.s32.totalorder %s131, %s132
    %p141 = scmp.eq.s32.totalorder %s22, 0
    %p142 = por %p140, %p141
    %p143 = scmp.ne.s32.totalorder %s131, %s132
    %p144 = scmp.eq.s32.totalorder %s23, 1
    %p145 = por %p143, %p144
    %p147 = scmp.ne.s32.totalorder %s132, %s146
    %p148 = scmp.eq.s32.totalorder %s23, 0
    %p149 = por %p147, %p148
    %s151 = sadd.s32 %s150, 1
    %p154 = scmp.eq.s32.totalorder %s17, 1
    %p155 = scmp.ne.s32.totalorder %s150, %s152
    %p156 = scmp.eq.s32.totalorder %s17, 0
    %p157 = por %p155, %p156
    %p158 = scmp.ne.s32.totalorder %s150, %s152
    %p159 = scmp.eq.s32.totalorder %s22, 1
    %p160 = por %p158, %p159
    %p161 = scmp.ne.s32.totalorder %s152, %s153
    %p162 = scmp.eq.s32.totalorder %s22, 0
    %p163 = por %p161, %p162
    %p164 = scmp.ne.s32.totalorder %s152, %s153
    %p165 = scmp.eq.s32.totalorder %s23, 1
    %p166 = por %p164, %p165
    %p168 = scmp.ne.s32.totalorder %s153, %s167
    %p169 = scmp.eq.s32.totalorder %s23, 0
    %p170 = por %p168, %p169
    %s172 = sadd.s32 %s171, 1
    %p175 = scmp.eq.s32.totalorder %s17, 1
    %p176 = scmp.ne.s32.totalorder %s171, %s173
    %p177 = scmp.eq.s32.totalorder %s17, 0
    %p178 = por %p176, %p177
    %p179 = scmp.ne.s32.totalorder %s171, %s173
    %p180 = scmp.eq.s32.totalorder %s22, 1
    %p181 = por %p179, %p180
    %p182 = scmp.ne.s32.totalorder %s173, %s174
    %p183 = scmp.eq.s32.totalorder %s22, 0
    %p184 = por %p182, %p183
    %p185 = scmp.ne.s32.totalorder %s173, %s174
    %p186 = scmp.eq.s32.totalorder %s23, 1
    %p187 = por %p185, %p186
    %p189 = scmp.ne.s32.totalorder %s174, %s188
    %p190 = scmp.eq.s32.totalorder %s23, 0
    %p191 = por %p189, %p190
    %s193 = sadd.s32 %s192, 1
    %p196 = scmp.eq.s32.totalorder %s17, 1
    %p197 = scmp.ne.s32.totalorder %s192, %s194
    %p198 = scmp.eq.s32.totalorder %s17, 0
    %p199 = por %p197, %p198
    %p200 = scmp.ne.s32.totalorder %s192, %s194
    %p201 = scmp.eq.s32.totalorder %s22, 1
    %p202 = por %p200, %p201
    %p203 = scmp.ne.s32.totalorder %s194, %s195
    %p204 = scmp.eq.s32.totalorder %s22, 0
    %p205 = por %p203, %p204
    %p206 = scmp.ne.s32.totalorder %s194, %s195
    %p207 = scmp.eq.s32.totalorder %s23, 1
    %p208 = por %p206, %p207
    %p210 = scmp.ne.s32.totalorder %s195, %s209
    %p211 = scmp.eq.s32.totalorder %s23, 0
    %p212 = por %p210, %p211
    %s214 = sadd.s32 %s213, 1
    %p217 = scmp.eq.s32.totalorder %s17, 1
    %p218 = scmp.ne.s32.totalorder %s213, %s215
    %p219 = scmp.eq.s32.totalorder %s17, 0
    %p220 = por %p218, %p219
    %p221 = scmp.ne.s32.totalorder %s213, %s215
    %p222 = scmp.eq.s32.totalorder %s22, 1
    %p223 = por %p221, %p222
    %p224 = scmp.ne.s32.totalorder %s215, %s216
    %p225 = scmp.eq.s32.totalorder %s22, 0
    %p226 = por %p224, %p225
    %p227 = scmp.ne.s32.totalorder %s215, %s216
    %p228 = scmp.eq.s32.totalorder %s23, 1
    %p229 = por %p227, %p228
    %p231 = scmp.ne.s32.totalorder %s216, %s230
    %p232 = scmp.eq.s32.totalorder %s23, 0
    %p233 = por %p231, %p232
    %s234 = ssub.s32 %s17, %s24
    %p235 = scmp.eq.s32.totalorder %s234, 0
    %s237 = sadd.s32 %s236, 1
    %s238 = scalar_select %p235, %s236, %s237
    %p241 = pneg %p235
    %p242 = scmp.eq.s32.totalorder %s17, 1
    %p243 = por %p241, %p242
    %p244 = scmp.ne.s32.totalorder %s236, %s239
    %p245 = scmp.eq.s32.totalorder %s17, 0
    %p246 = por %p244, %p245
    %p247 = scmp.ne.s32.totalorder %s236, %s239
    %p248 = scmp.eq.s32.totalorder %s22, 1
    %p249 = por %p247, %p248
    %p250 = scmp.ne.s32.totalorder %s239, %s240
    %p251 = scmp.eq.s32.totalorder %s22, 0
    %p252 = por %p250, %p251
    %p253 = scmp.ne.s32.totalorder %s239, %s240
    %p254 = scmp.eq.s32.totalorder %s23, 1
    %p255 = por %p253, %p254
    %p257 = scmp.ne.s32.totalorder %s240, %s256
    %p258 = scmp.eq.s32.totalorder %s23, 0
    %p259 = por %p257, %p258
    %s260 = ssub.s32 %s17, %s24
    %p261 = scmp.eq.s32.totalorder %s260, 0
    %s263 = sadd.s32 %s262, 1
    %s264 = scalar_select %p261, %s262, %s263
    %p267 = pneg %p261
    %p268 = scmp.eq.s32.totalorder %s17, 1
    %p269 = por %p267, %p268
    %p270 = scmp.ne.s32.totalorder %s262, %s265
    %p271 = scmp.eq.s32.totalorder %s17, 0
    %p272 = por %p270, %p271
    %p273 = scmp.ne.s32.totalorder %s262, %s265
    %p274 = scmp.eq.s32.totalorder %s22, 1
    %p275 = por %p273, %p274
    %p276 = scmp.ne.s32.totalorder %s265, %s266
    %p277 = scmp.eq.s32.totalorder %s22, 0
    %p278 = por %p276, %p277
    %p279 = scmp.ne.s32.totalorder %s265, %s266
    %p280 = scmp.eq.s32.totalorder %s23, 1
    %p281 = por %p279, %p280
    %p283 = scmp.ne.s32.totalorder %s266, %s282
    %p284 = scmp.eq.s32.totalorder %s23, 0
    %p285 = por %p283, %p284
    %p286 = scmp.le.s32.totalorder 1, %s17
    %p287 = scmp.lt.s32.totalorder %s17, 3
    %p288 = pnand %p286, %p287
    %p289 = pneg %p288
    // Predicated region
    $region9: #{scoring_forward.19} parent=5 // pred_check
      _
    $region10: #{scoring_forward.19} parent=5 // pred_check_branch
      %291 = sbr.rel (%p288) target = $region12
    $region11: #{scoring_forward.19} parent=5 // pred_region
      %s292 = ssub.s32 %s17, 1
      // Predicated region
      $region13: #{scoring_forward.19} parent=11 // pred_check
        %p293 = pneg %p142
      $region14: #{scoring_forward.19} parent=11 // pred_check_branch
        %295 = sbr.rel (%p293) target = $region16
      $region15: #{scoring_forward.19} parent=11 // pred_region
        _
      $region16: #{scoring_forward.19} parent=11 // pred_fallthru
        _
      // Predicated region
      $region17: #{scoring_forward.19} parent=11 // pred_check
        %p296 = pneg %p163
      $region18: #{scoring_forward.19} parent=11 // pred_check_branch
        %298 = sbr.rel (%p296) target = $region20
      $region19: #{scoring_forward.19} parent=11 // pred_region
        _
      $region20: #{scoring_forward.19} parent=11 // pred_fallthru
        _
      // Predicated region
      $region21: #{scoring_forward.19} parent=11 // pred_check
        %p299 = pneg %p184
      $region22: #{scoring_forward.19} parent=11 // pred_check_branch
        %301 = sbr.rel (%p299) target = $region24
      $region23: #{scoring_forward.19} parent=11 // pred_region
        _
      $region24: #{scoring_forward.19} parent=11 // pred_fallthru
        _
      // Predicated region
      $region25: #{scoring_forward.19} parent=11 // pred_check
        %p302 = pneg %p205
      $region26: #{scoring_forward.19} parent=11 // pred_check_branch
        %304 = sbr.rel (%p302) target = $region28
      $region27: #{scoring_forward.19} parent=11 // pred_region
        _
      $region28: #{scoring_forward.19} parent=11 // pred_fallthru
        _
      // Predicated region
      $region29: #{scoring_forward.19} parent=11 // pred_check
        %p305 = pneg %p226
      $region30: #{scoring_forward.19} parent=11 // pred_check_branch
        %307 = sbr.rel (%p305) target = $region32
      $region31: #{scoring_forward.19} parent=11 // pred_region
        _
      $region32: #{scoring_forward.19} parent=11 // pred_fallthru
        _
    $region12: #{scoring_forward.19} parent=5 // pred_fallthru
      _
    %p308 = scmp.lt.s32.totalorder %s17, 2
    // Predicated region
    $region33: #{scoring_forward.19} parent=5 // pred_check
      %p309 = pneg %p308
    $region34: #{scoring_forward.19} parent=5 // pred_check_branch
      %311 = sbr.rel (%p309) target = $region36
    $region35: #{scoring_forward.19} parent=5 // pred_region
      // Predicated region
      $region37: #{scoring_forward.19} parent=35 // pred_check
        %p312 = pneg %p37
      $region38: #{scoring_forward.19} parent=35 // pred_check_branch
        %314 = sbr.rel (%p312) target = $region40
      $region39: #{scoring_forward.19} parent=35 // pred_region
        %p315 = scmp.lt.s32.totalorder %s17, 1
        %s316 = scalar_select %p315, %s17, 1
        %s317 = smul.addr %s316, 8
        %s318 = scalar_lea.vmem %s0, %s317
      $region40: #{scoring_forward.19} parent=35 // pred_fallthru
        _
      // Predicated region
      $region41: #{scoring_forward.19} parent=35 // pred_check
        %p319 = pneg %p63
      $region42: #{scoring_forward.19} parent=35 // pred_check_branch
        %321 = sbr.rel (%p319) target = $region44
      $region43: #{scoring_forward.19} parent=35 // pred_region
        %p322 = scmp.lt.s32.totalorder %s17, 1
        %s323 = scalar_select %p322, %s17, 1
        %s324 = smul.addr %s323, 8
        %s325 = scalar_lea.vmem %s1, %s324
      $region44: #{scoring_forward.19} parent=35 // pred_fallthru
        _
      // Predicated region
      $region45: #{scoring_forward.19} parent=35 // pred_check
        %p326 = pneg %p89
      $region46: #{scoring_forward.19} parent=35 // pred_check_branch
        %328 = sbr.rel (%p326) target = $region48
      $region47: #{scoring_forward.19} parent=35 // pred_region
        %p329 = scmp.lt.s32.totalorder %s17, 1
        %s330 = scalar_select %p329, %s17, 1
        %s331 = smul.addr %s330, 8
        %s332 = scalar_lea.vmem %s2, %s331
      $region48: #{scoring_forward.19} parent=35 // pred_fallthru
        _
      // Predicated region
      $region49: #{scoring_forward.19} parent=35 // pred_check
        %p333 = pneg %p115
      $region50: #{scoring_forward.19} parent=35 // pred_check_branch
        %335 = sbr.rel (%p333) target = $region52
      $region51: #{scoring_forward.19} parent=35 // pred_region
        %p336 = scmp.lt.s32.totalorder %s17, 1
        %s337 = scalar_select %p336, %s17, 1
        %s338 = smul.addr %s337, 8
        %s339 = scalar_lea.vmem %s3, %s338
      $region52: #{scoring_forward.19} parent=35 // pred_fallthru
        _
    $region36: #{scoring_forward.19} parent=5 // pred_fallthru
      _
    %p340 = scmp.le.s32.totalorder 1, %s17
    %p341 = scmp.lt.s32.totalorder %s17, 3
    %p342 = pnand %p340, %p341
    %p343 = pneg %p342
    // Predicated region
    $region53: #{scoring_forward.19} parent=5 // pred_check
      _
    $region54: #{scoring_forward.19} parent=5 // pred_check_branch
      %345 = sbr.rel (%p342) target = $region56
    $region55: #{scoring_forward.19} parent=5 // pred_region
      %s346 = ssub.s32 %s17, 1
      %p347 = scmp.lt.s32.totalorder %s22, 1
      %s348 = scalar_select %p347, %s22, 1
      %s349 = smul.addr %s348, 8
      %s350 = scalar_lea.vmem %s0, %s349
      %p351 = pneg %p43
      %p352 = pneg %p40
      %p353 = scmp.lt.s32.totalorder %s22, 1
      %s354 = scalar_select %p353, %s22, 1
      %s355 = smul.addr %s354, 8
      %s356 = scalar_lea.vmem %s1, %s355
      %p357 = pneg %p69
      %p358 = pneg %p66
      %p359 = scmp.lt.s32.totalorder %s22, 1
      %s360 = scalar_select %p359, %s22, 1
      %s361 = smul.addr %s360, 8
      %s362 = scalar_lea.vmem %s2, %s361
      %p363 = pneg %p95
      %p364 = pneg %p92
      %p365 = scmp.lt.s32.totalorder %s22, 1
      %s366 = scalar_select %p365, %s22, 1
      %s367 = smul.addr %s366, 8
      %s368 = scalar_lea.vmem %s3, %s367
      %p369 = pneg %p121
      %p370 = pneg %p118
      %p371 = pneg %p142
      %p372 = pneg %p139
      %p373 = pneg %p163
      %p374 = pneg %p160
      %p375 = pneg %p184
      %p376 = pneg %p181
      %p377 = pneg %p205
      %p378 = pneg %p202
      %p379 = pneg %p226
      %p380 = pneg %p223
      %p381 = pneg %p252
      %p382 = pneg %p249
      %p383 = scmp.lt.s32.totalorder %s22, 1
      %s384 = scalar_select %p383, %s22, 1
      %s385 = smul.addr %s384, 8
      %s386 = scalar_lea.vmem %s9, %s385
      %p387 = pneg %p278
      %p388 = pneg %p275
      %p389 = scmp.lt.s32.totalorder %s22, 1
      %s390 = scalar_select %p389, %s22, 1
      %s391 = smul.addr %s390, 8
      %s392 = scalar_lea.vmem %s10, %s391
      %p393 = scmp.lt.s32.totalorder %s22, 1
      %s394 = scalar_select %p393, %s22, 1
      %s395 = smul.addr %s394, 8
      %s396 = scalar_lea.vmem %s0, %s395
      %p397 = scmp.lt.s32.totalorder %s22, 1
      %s398 = scalar_select %p397, %s22, 1
      %s399 = smul.addr %s398, 8
      %s400 = scalar_lea.vmem %s1, %s399
      %p401 = scmp.lt.s32.totalorder %s22, 1
      %s402 = scalar_select %p401, %s22, 1
      %s403 = smul.addr %s402, 8
      %s404 = scalar_lea.vmem %s2, %s403
      %p405 = scmp.lt.s32.totalorder %s22, 1
      %s406 = scalar_select %p405, %s22, 1
      %s407 = smul.addr %s406, 8
      %s408 = scalar_lea.vmem %s3, %s407
      %p409 = scmp.lt.s32.totalorder %s22, 1
      %s410 = scalar_select %p409, %s22, 1
      %s411 = smul.addr %s410, 8
      %s412 = scalar_lea.vmem %s9, %s411
      %p413 = scmp.lt.s32.totalorder %s22, 1
      %s414 = scalar_select %p413, %s22, 1
      %s415 = smul.addr %s414, 8
      %s416 = scalar_lea.vmem %s10, %s415
      %v418 = vld [vmem:[%s396] sm:$0xff]
      %v419 = vld [vmem:[%s404] sm:$0xff]
      %v420 = vld [vmem:[%s400] sm:$0xff]
      %v421 = vadd.f32 %v418, %v420
      %v422 = vld [vmem:[%s408] sm:$0xff]
      %v423 = vadd.f32 %v419, %v422
      %424 = vadd.xlane.f32.xlu0 %v421
      %v425 = vpop.xlane.xlu0 %424
      %v426 = vrcp.pop 128.0
      %v427 = vmul.f32 %v425, %v426
      %v428 = vsub.f32 %v421, %v427
      %v429 = vmul.f32 %v428, %v428
      %430 = vadd.xlane.f32.xlu0 %v429
      %v431 = vpop.xlane.xlu0 %430
      %v432 = vmul.f32 %v431, %v426
      %v433 = vadd.f32 %v432, 1e-05
      %v434 = vrsqrt.pop %v433
      %v435 = vmul.f32 %v428, %v434
      %v436 = vld [vmem:[%s8 + $0x1] ss:$0 sm:$0xff]
      %v437 = vmul.f32 %v435, %v436
      %v438 = vld [vmem:[%s8 + $0x2] ss:$0 sm:$0xff]
      %v439 = vadd.f32 %v437, %v438
      %v440 = vmul.f32 %v423, %v423
      %442 = vrot.lane.b32.xlu0 %v440, 126
      %v443 = vpop.permute.xlu0 %442
      %v445 = vadd.f32 %v440, %v443
      %446 = vrot.lane.b32.xlu0 %v440, 124
      %v447 = vpop.permute.xlu0 %446
      %v449 = vadd.f32 %v445, %v447
      %v450 = vmax.f32 %v449, 1e-08
      %vm451 = vcmask 15360
      %v452 = vsel %vm451, %v450, 0.0
      %453 = vadd.xlane.f32.xlu0 %v452
      %v454 = vpop.xlane.xlu0 %453
      %v455 = vrcp.pop 2.0
      %v456 = vmul.f32 %v454, %v455
      %v457 = vrsqrt.pop %v456
      %v458 = vmul.f32 %v423, %v457
      %v459 = vld [vmem:[%s8 + $0x20] ss:$0 sm:$0xff]
      %v460 = vld [vmem:[%s8 + $0x21] ss:$0 sm:$0xff]
      %462 = vset.pattern.permute.xlu0 0
      %463 = vperm.xlu0 %462, %v458
      %v464 = vpop.permute.xlu0 %463
      %v466 = vmul.f32 %v464, %v459
      %467 = vset.pattern.permute.xlu0 1
      %468 = vperm.xlu0 %467, %v458
      %v469 = vpop.permute.xlu0 %468
      %v471 = vmul.f32 %v469, %v460
      %v472 = vadd.f32 %v466, %v471
      %473 = vset.pattern.permute.xlu0 2
      %474 = vperm.xlu0 %473, %v458
      %v475 = vpop.permute.xlu0 %474
      %v477 = vmul.f32 %v475, %v459
      %478 = vset.pattern.permute.xlu0 3
      %479 = vperm.xlu0 %478, %v458
      %v480 = vpop.permute.xlu0 %479
      %v482 = vmul.f32 %v480, %v460
      %v483 = vadd.f32 %v477, %v482
      %484 = vset.pattern.permute.xlu0 4
      %485 = vperm.xlu0 %484, %v458
      %v486 = vpop.permute.xlu0 %485
      %v488 = vmul.f32 %v486, %v459
      %489 = vset.pattern.permute.xlu0 5
      %490 = vperm.xlu0 %489, %v458
      %v491 = vpop.permute.xlu0 %490
      %v493 = vmul.f32 %v491, %v460
      %v494 = vadd.f32 %v488, %v493
      %496 = vrot.lane.b32.xlu0 %v483, 4
      %v497 = vpop.permute.xlu0 %496
      %500 = vrot.lane.b32.xlu0 %v494, 8
      %v501 = vpop.permute.xlu0 %500
      %vm503 = vcmask 31744
      %v504 = vsel %vm503, %v472, %v497
      %vm505 = vcmask 64512
      %v506 = vsel %vm505, %v504, %v501
      %v507 = vmul.f32 %v506, %v506
      %509 = vrot.lane.b32.xlu0 %v507, 124
      %v510 = vpop.permute.xlu0 %509
      %v512 = vadd.f32 %v507, %v510
      %513 = vrot.lane.b32.xlu0 %v507, 120
      %v514 = vpop.permute.xlu0 %513
      %v516 = vadd.f32 %v512, %v514
      %v517 = vmax.f32 %v516, 1e-08
      %v518 = vrsqrt.pop %v517
      %v519 = vmul.f32 %v517, %v518
      %vm520 = vcmp.eq.f32.partialorder %v517, inf
      %v521 = vsel %vm520, %v517, %v519
      %vm522 = vcmp.eq.f32.partialorder %v517, 0.0
      %v523 = vand.u32 %v517, 2147483648
      %v524 = vsel %vm522, %v523, %v521
      %v525 = vpack.c.bf16 %v439, %v439
      %v526 = vld [vmem:[%s4] sm:$0xff]
      %v527 = vld [vmem:[%s4 + $0x8] sm:$0xff]
      %v528 = vld [vmem:[%s4 + $0x10] sm:$0xff]
      %v529 = vld [vmem:[%s4 + $0x18] sm:$0xff]
      %v530 = vld [vmem:[%s4 + $0x20] sm:$0xff]
      %v531 = vld [vmem:[%s4 + $0x28] sm:$0xff]
      %v532 = vld [vmem:[%s4 + $0x30] sm:$0xff]
      %v533 = vld [vmem:[%s4 + $0x38] sm:$0xff]
      %v534 = vld [vmem:[%s4 + $0x40] sm:$0xff]
      %v535 = vld [vmem:[%s4 + $0x48] sm:$0xff]
      %v536 = vld [vmem:[%s4 + $0x50] sm:$0xff]
      %v537 = vld [vmem:[%s4 + $0x58] sm:$0xff]
      %v538 = vld [vmem:[%s4 + $0x60] sm:$0xff]
      %v539 = vld [vmem:[%s4 + $0x68] sm:$0xff]
      %v540 = vld [vmem:[%s4 + $0x70] sm:$0xff]
      %v541 = vld [vmem:[%s4 + $0x78] sm:$0xff]
      %v542 = vld [vmem:[%s4 + $0x80] sm:$0xff]
      %v543 = vld [vmem:[%s4 + $0x88] sm:$0xff]
      %v544 = vld [vmem:[%s4 + $0x90] sm:$0xff]
      %v545 = vld [vmem:[%s4 + $0x98] sm:$0xff]
      %v546 = vld [vmem:[%s4 + $0xa0] sm:$0xff]
      %v547 = vld [vmem:[%s4 + $0xa8] sm:$0xff]
      %v548 = vld [vmem:[%s4 + $0xb0] sm:$0xff]
      %v549 = vld [vmem:[%s4 + $0xb8] sm:$0xff]
      %v550 = vld [vmem:[%s4 + $0xc0] sm:$0xff]
      %v551 = vld [vmem:[%s4 + $0xc8] sm:$0xff]
      %v552 = vld [vmem:[%s4 + $0xd0] sm:$0xff]
      %v553 = vld [vmem:[%s4 + $0xd8] sm:$0xff]
      %v554 = vld [vmem:[%s4 + $0xe0] sm:$0xff]
      %v555 = vld [vmem:[%s4 + $0xe8] sm:$0xff]
      %v556 = vld [vmem:[%s4 + $0xf0] sm:$0xff]
      %v557 = vld [vmem:[%s4 + $0xf8] sm:$0xff]
      %v558 = vpack.c.bf16 %v524, %v524
      %v559 = vld [vmem:[%s5] sm:$0xff]
      %v561 = vcombine.high %v559, %v559
      %v563 = vunpack.c.l.s4 1983009808
      %v564 = vunpack.c.0.s8 %v563
      %v565 = vlaneseq
      %v566 = vshrl.u32 %v565, 7
      %v567 = vsub.s32 %v564, %v566
      %v568 = vrot.slane %v559, %v567
      %v570 = vunpack.c.l.s4 1983009808
      %v571 = vunpack.c.0.s8 %v570
      %v572 = vlaneseq
      %v573 = vshrl.u32 %v572, 7
      %v574 = vsub.s32 %v571, %v573
      %v575 = vrot.slane %v561, %v574
      %v576 = vcombine.high %v568, %v568
      %v577 = vcombine.high %v575, %v575
      %v579 = vsel %vm503, %v558, 0
      %vm581 = vcmask 1041408
      %v583 = vsel %vm581, %v568, 0
      %v586 = vsel %vm581, %v576, 0
      %v589 = vsel %vm581, %v575, 0
      %v592 = vsel %vm581, %v577, 0
      %594 = vmatprep.subr.bf16.mxu0 %v586
      %595 = vmatpush1.bf16.msra.mxu0 %v583
      %596 = vmatprep.subr.bf16.mxu0 0
      %597 = vmatpush1.bf16.msra.mxu0 0
      %598 = vmatprep.subr.bf16.mxu0 0
      %599 = vmatpush1.bf16.msra.mxu0 0
      %600 = vmatprep.subr.bf16.mxu0 0
      %601 = vmatpush1.bf16.msra.mxu0 0
      %602 = vmatprep.subr.bf16.mxu0 0
      %603 = vmatpush1.bf16.msra.mxu0 0
      %604 = vmatprep.subr.bf16.mxu0 0
      %605 = vmatpush1.bf16.msra.mxu0 0
      %606 = vmatprep.subr.bf16.mxu0 0
      %607 = vmatpush1.bf16.msra.mxu0 0
      %608 = vmatprep.subr.bf16.mxu0 0
      %609 = vmatpush1.bf16.msra.mxu0 0
      %610 = vmatprep.subr.bf16.mxu0 0
      %611 = vmatpush1.bf16.msra.mxu0 0
      %612 = vmatprep.subr.bf16.mxu0 0
      %613 = vmatpush1.bf16.msra.mxu0 0
      %614 = vmatprep.subr.bf16.mxu0 0
      %615 = vmatpush1.bf16.msra.mxu0 0
      %616 = vmatprep.subr.bf16.mxu0 0
      %617 = vmatpush1.bf16.msra.mxu0 0
      %618 = vmatprep.subr.bf16.mxu0 0
      %619 = vmatpush1.bf16.msra.mxu0 0
      %620 = vmatprep.subr.bf16.mxu0 0
      %621 = vmatpush1.bf16.msra.mxu0 0
      %622 = vmatprep.subr.bf16.mxu0 0
      %623 = vmatpush1.bf16.msra.mxu0 0
      %624 = vmatprep.subr.bf16.mxu0 0
      %625 = vmatpush1.bf16.msra.mxu0 0
      %626 = vmatprep.mubr.bf16.mxu0 0
      %627 = vmatmul.mubr.bf16.gmra.mrb[0].mxu0 %v579
      %v628 = vpop.f32.mrb[0].mxu0
      %v629 = vadd.f32 0.0, %v628
      %v630 = vpop.f32.mrb[0].mxu0
      %v631 = vadd.f32 0.0, %v630
      %v632 = vpop.f32.mrb[0].mxu0
      %v633 = vpop.f32.mrb[0].mxu0
      %634 = vdwg.mxu0
      %635 = vmatprep.subr.bf16.mxu0 %v592
      %636 = vmatpush1.bf16.msra.mxu0 %v589
      %637 = vmatprep.subr.bf16.mxu0 0
      %638 = vmatpush1.bf16.msra.mxu0 0
      %639 = vmatprep.subr.bf16.mxu0 0
      %640 = vmatpush1.bf16.msra.mxu0 0
      %641 = vmatprep.subr.bf16.mxu0 0
      %642 = vmatpush1.bf16.msra.mxu0 0
      %643 = vmatprep.subr.bf16.mxu0 0
      %644 = vmatpush1.bf16.msra.mxu0 0
      %645 = vmatprep.subr.bf16.mxu0 0
      %646 = vmatpush1.bf16.msra.mxu0 0
      %647 = vmatprep.subr.bf16.mxu0 0
      %648 = vmatpush1.bf16.msra.mxu0 0
      %649 = vmatprep.subr.bf16.mxu0 0
      %650 = vmatpush1.bf16.msra.mxu0 0
      %651 = vmatprep.subr.bf16.mxu0 0
      %652 = vmatpush1.bf16.msra.mxu0 0
      %653 = vmatprep.subr.bf16.mxu0 0
      %654 = vmatpush1.bf16.msra.mxu0 0
      %655 = vmatprep.subr.bf16.mxu0 0
      %656 = vmatpush1.bf16.msra.mxu0 0
      %657 = vmatprep.subr.bf16.mxu0 0
      %658 = vmatpush1.bf16.msra.mxu0 0
      %659 = vmatprep.subr.bf16.mxu0 0
      %660 = vmatpush1.bf16.msra.mxu0 0
      %661 = vmatprep.subr.bf16.mxu0 0
      %662 = vmatpush1.bf16.msra.mxu0 0
      %663 = vmatprep.subr.bf16.mxu0 0
      %664 = vmatpush1.bf16.msra.mxu0 0
      %665 = vmatprep.subr.bf16.mxu0 0
      %666 = vmatpush1.bf16.msra.mxu0 0
      %667 = vmatprep.mubr.bf16.mxu0 0
      %668 = vmatmul.mubr.bf16.gmra.mrb[0].mxu0 %v579
      %v669 = vpop.f32.mrb[0].mxu0
      %v670 = vadd.f32 0.0, %v669
      %v671 = vpop.f32.mrb[0].mxu0
      %v672 = vadd.f32 0.0, %v671
      %v673 = vpop.f32.mrb[0].mxu0
      %v674 = vpop.f32.mrb[0].mxu0
      %675 = vdwg.mxu0
      %v708 = vunpack.c.l.b16 %v526
      %v709 = vunpack.c.h.b16 %v526
      %v710 = vunpack.c.l.b16 %v527
      %v711 = vunpack.c.h.b16 %v527
      %v712 = vunpack.c.l.b16 %v528
      %v713 = vunpack.c.h.b16 %v528
      %v714 = vunpack.c.l.b16 %v529
      %v715 = vunpack.c.h.b16 %v529
      %v716 = vunpack.c.l.b16 %v530
      %v717 = vunpack.c.h.b16 %v530
      %v718 = vunpack.c.l.b16 %v531
      %v719 = vunpack.c.h.b16 %v531
      %v720 = vunpack.c.l.b16 %v532
      %v721 = vunpack.c.h.b16 %v532
      %v722 = vunpack.c.l.b16 %v533
      %v723 = vunpack.c.h.b16 %v533
      %v724 = vunpack.c.l.b16 %v534
      %v725 = vunpack.c.h.b16 %v534
      %v726 = vunpack.c.l.b16 %v535
      %v727 = vunpack.c.h.b16 %v535
      %v728 = vunpack.c.l.b16 %v536
      %v729 = vunpack.c.h.b16 %v536
      %v730 = vunpack.c.l.b16 %v537
      %v731 = vunpack.c.h.b16 %v537
      %v732 = vunpack.c.l.b16 %v538
      %v733 = vunpack.c.h.b16 %v538
      %v734 = vunpack.c.l.b16 %v539
      %v735 = vunpack.c.h.b16 %v539
      %v736 = vunpack.c.l.b16 %v540
      %v737 = vunpack.c.h.b16 %v540
      %v738 = vunpack.c.l.b16 %v541
      %v739 = vunpack.c.h.b16 %v541
      %v740 = vunpack.c.l.b16 %v542
      %v741 = vunpack.c.h.b16 %v542
      %v742 = vunpack.c.l.b16 %v543
      %v743 = vunpack.c.h.b16 %v543
      %v744 = vunpack.c.l.b16 %v544
      %v745 = vunpack.c.h.b16 %v544
      %v746 = vunpack.c.l.b16 %v545
      %v747 = vunpack.c.h.b16 %v545
      %v748 = vunpack.c.l.b16 %v546
      %v749 = vunpack.c.h.b16 %v546
      %v750 = vunpack.c.l.b16 %v547
      %v751 = vunpack.c.h.b16 %v547
      %v752 = vunpack.c.l.b16 %v548
      %v753 = vunpack.c.h.b16 %v548
      %v754 = vunpack.c.l.b16 %v549
      %v755 = vunpack.c.h.b16 %v549
      %v756 = vunpack.c.l.b16 %v550
      %v757 = vunpack.c.h.b16 %v550
      %v758 = vunpack.c.l.b16 %v551
      %v759 = vunpack.c.h.b16 %v551
      %v760 = vunpack.c.l.b16 %v552
      %v761 = vunpack.c.h.b16 %v552
      %v762 = vunpack.c.l.b16 %v553
      %v763 = vunpack.c.h.b16 %v553
      %v764 = vunpack.c.l.b16 %v554
      %v765 = vunpack.c.h.b16 %v554
      %v766 = vunpack.c.l.b16 %v555
      %v767 = vunpack.c.h.b16 %v555
      %v768 = vunpack.c.l.b16 %v556
      %v769 = vunpack.c.h.b16 %v556
      %v770 = vunpack.c.l.b16 %v557
      %v771 = vunpack.c.h.b16 %v557
      %v772 = vpack.c.b16 %v712, %v708
      %v773 = vpack.c.b16 %v713, %v709
      %v774 = vpack.c.b16 %v714, %v710
      %v775 = vpack.c.b16 %v715, %v711
      %v776 = vpack.c.b16 %v720, %v716
      %v777 = vpack.c.b16 %v721, %v717
      %v778 = vpack.c.b16 %v722, %v718
      %v779 = vpack.c.b16 %v723, %v719
      %v780 = vpack.c.b16 %v728, %v724
      %v781 = vpack.c.b16 %v729, %v725
      %v782 = vpack.c.b16 %v730, %v726
      %v783 = vpack.c.b16 %v731, %v727
      %v784 = vpack.c.b16 %v736, %v732
      %v785 = vpack.c.b16 %v737, %v733
      %v786 = vpack.c.b16 %v738, %v734
      %v787 = vpack.c.b16 %v739, %v735
      %v788 = vpack.c.b16 %v744, %v740
      %v789 = vpack.c.b16 %v745, %v741
      %v790 = vpack.c.b16 %v746, %v742
      %v791 = vpack.c.b16 %v747, %v743
      %v792 = vpack.c.b16 %v752, %v748
      %v793 = vpack.c.b16 %v753, %v749
      %v794 = vpack.c.b16 %v754, %v750
      %v795 = vpack.c.b16 %v755, %v751
      %v796 = vpack.c.b16 %v760, %v756
      %v797 = vpack.c.b16 %v761, %v757
      %v798 = vpack.c.b16 %v762, %v758
      %v799 = vpack.c.b16 %v763, %v759
      %v800 = vpack.c.b16 %v768, %v764
      %v801 = vpack.c.b16 %v769, %v765
      %v802 = vpack.c.b16 %v770, %v766
      %v803 = vpack.c.b16 %v771, %v767
      %836 = vmatprep.subr.bf16.mxu0 %v773
      %837 = vmatpush1.bf16.msra.mxu0 %v772
      %838 = vmatprep.subr.bf16.mxu0 %v777
      %839 = vmatpush1.bf16.msra.mxu0 %v776
      %840 = vmatprep.subr.bf16.mxu0 %v781
      %841 = vmatpush1.bf16.msra.mxu0 %v780
      %842 = vmatprep.subr.bf16.mxu0 %v785
      %843 = vmatpush1.bf16.msra.mxu0 %v784
      %844 = vmatprep.subr.bf16.mxu0 %v789
      %845 = vmatpush1.bf16.msra.mxu0 %v788
      %846 = vmatprep.subr.bf16.mxu0 %v793
      %847 = vmatpush1.bf16.msra.mxu0 %v792
      %848 = vmatprep.subr.bf16.mxu0 %v797
      %849 = vmatpush1.bf16.msra.mxu0 %v796
      %850 = vmatprep.subr.bf16.mxu0 %v801
      %851 = vmatpush1.bf16.msra.mxu0 %v800
      %852 = vmatprep.subr.bf16.mxu0 0
      %853 = vmatpush1.bf16.msra.mxu0 0
      %854 = vmatprep.subr.bf16.mxu0 0
      %855 = vmatpush1.bf16.msra.mxu0 0
      %856 = vmatprep.subr.bf16.mxu0 0
      %857 = vmatpush1.bf16.msra.mxu0 0
      %858 = vmatprep.subr.bf16.mxu0 0
      %859 = vmatpush1.bf16.msra.mxu0 0
      %860 = vmatprep.subr.bf16.mxu0 0
      %861 = vmatpush1.bf16.msra.mxu0 0
      %862 = vmatprep.subr.bf16.mxu0 0
      %863 = vmatpush1.bf16.msra.mxu0 0
      %864 = vmatprep.subr.bf16.mxu0 0
      %865 = vmatpush1.bf16.msra.mxu0 0
      %866 = vmatprep.subr.bf16.mxu0 0
      %867 = vmatpush1.bf16.msra.mxu0 0
      %868 = vmatprep.mubr.bf16.mxu0 0
      %869 = vmatmul.mubr.bf16.gmra.mrb[0].mxu0 %v525
      %v870 = vpop.f32.mrb[0].mxu0
      %v871 = vadd.f32 %v629, %v870
      %v872 = vpop.f32.mrb[0].mxu0
      %v873 = vadd.f32 %v631, %v872
      %v874 = vpop.f32.mrb[0].mxu0
      %v875 = vpop.f32.mrb[0].mxu0
      %876 = vdwg.mxu0
      %877 = vmatprep.subr.bf16.mxu0 %v775
      %878 = vmatpush1.bf16.msra.mxu0 %v774
      %879 = vmatprep.subr.bf16.mxu0 %v779
      %880 = vmatpush1.bf16.msra.mxu0 %v778
      %881 = vmatprep.subr.bf16.mxu0 %v783
      %882 = vmatpush1.bf16.msra.mxu0 %v782
      %883 = vmatprep.subr.bf16.mxu0 %v787
      %884 = vmatpush1.bf16.msra.mxu0 %v786
      %885 = vmatprep.subr.bf16.mxu0 %v791
      %886 = vmatpush1.bf16.msra.mxu0 %v790
      %887 = vmatprep.subr.bf16.mxu0 %v795
      %888 = vmatpush1.bf16.msra.mxu0 %v794
      %889 = vmatprep.subr.bf16.mxu0 %v799
      %890 = vmatpush1.bf16.msra.mxu0 %v798
      %891 = vmatprep.subr.bf16.mxu0 %v803
      %892 = vmatpush1.bf16.msra.mxu0 %v802
      %893 = vmatprep.subr.bf16.mxu0 0
      %894 = vmatpush1.bf16.msra.mxu0 0
      %895 = vmatprep.subr.bf16.mxu0 0
      %896 = vmatpush1.bf16.msra.mxu0 0
      %897 = vmatprep.subr.bf16.mxu0 0
      %898 = vmatpush1.bf16.msra.mxu0 0
      %899 = vmatprep.subr.bf16.mxu0 0
      %900 = vmatpush1.bf16.msra.mxu0 0
      %901 = vmatprep.subr.bf16.mxu0 0
      %902 = vmatpush1.bf16.msra.mxu0 0
      %903 = vmatprep.subr.bf16.mxu0 0
      %904 = vmatpush1.bf16.msra.mxu0 0
      %905 = vmatprep.subr.bf16.mxu0 0
      %906 = vmatpush1.bf16.msra.mxu0 0
      %907 = vmatprep.subr.bf16.mxu0 0
      %908 = vmatpush1.bf16.msra.mxu0 0
      %909 = vmatprep.mubr.bf16.mxu0 0
      %910 = vmatmul.mubr.bf16.gmra.mrb[0].mxu0 %v525
      %v911 = vpop.f32.mrb[0].mxu0
      %v912 = vadd.f32 %v670, %v911
      %v913 = vpop.f32.mrb[0].mxu0
      %v914 = vadd.f32 %v672, %v913
      %v915 = vpop.f32.mrb[0].mxu0
      %v916 = vpop.f32.mrb[0].mxu0
      %917 = vdwg.mxu0
      %v918 = vld [vmem:[%s8] ss:$8 sm:$0xf]
      %v920 = vlaneseq
      %v921 = vshrl.u32 %v920, 7
      %v922 = vsub.s32 0, %v921
      %v923 = vrot.slane %v918, %v922
      %v924 = vlaneseq
      %v925 = vshrl.u32 %v924, 7
      %v926 = vsub.s32 1, %v925
      %v927 = vrot.slane %v918, %v926
      %v928 = vlaneseq
      %v929 = vshrl.u32 %v928, 7
      %v930 = vsub.s32 2, %v929
      %v931 = vrot.slane %v918, %v930
      %v932 = vlaneseq
      %v933 = vshrl.u32 %v932, 7
      %v934 = vsub.s32 3, %v933
      %v935 = vrot.slane %v918, %v934
      %v940 = vadd.f32 %v871, %v923
      %v941 = vadd.f32 %v873, %v927
      %v942 = vadd.f32 %v912, %v931
      %v943 = vadd.f32 %v914, %v935
      %v944 = vld [vmem:[%s8 + $0x24] ss:$0 sm:$0xff]
      %v945 = vld [vmem:[%s8 + $0x25] ss:$0 sm:$0xff]
      %v946 = vld [vmem:[%s8 + $0x26] ss:$0 sm:$0xff]
      %v947 = vld [vmem:[%s8 + $0x27] ss:$0 sm:$0xff]
      %949 = vset.pattern.permute.xlu0 0
      %950 = vperm.xlu0 %949, %v506
      %v951 = vpop.permute.xlu0 %950
      %v953 = vmul.f32 %v951, %v944
      %954 = vset.pattern.permute.xlu0 1
      %955 = vperm.xlu0 %954, %v506
      %v956 = vpop.permute.xlu0 %955
      %v958 = vmul.f32 %v956, %v945
      %v959 = vadd.f32 %v953, %v958
      %960 = vset.pattern.permute.xlu0 2
      %961 = vperm.xlu0 %960, %v506
      %v962 = vpop.permute.xlu0 %961
      %v964 = vmul.f32 %v962, %v946
      %v965 = vadd.f32 %v959, %v964
      %966 = vset.pattern.permute.xlu0 3
      %967 = vperm.xlu0 %966, %v506
      %v968 = vpop.permute.xlu0 %967
      %v970 = vmul.f32 %v968, %v947
      %v971 = vadd.f32 %v965, %v970
      %972 = vset.pattern.permute.xlu0 4
      %973 = vperm.xlu0 %972, %v506
      %v974 = vpop.permute.xlu0 %973
      %v976 = vmul.f32 %v974, %v944
      %977 = vset.pattern.permute.xlu0 5
      %978 = vperm.xlu0 %977, %v506
      %v979 = vpop.permute.xlu0 %978
      %v981 = vmul.f32 %v979, %v945
      %v982 = vadd.f32 %v976, %v981
      %983 = vset.pattern.permute.xlu0 6
      %984 = vperm.xlu0 %983, %v506
      %v985 = vpop.permute.xlu0 %984
      %v987 = vmul.f32 %v985, %v946
      %v988 = vadd.f32 %v982, %v987
      %989 = vset.pattern.permute.xlu0 7
      %990 = vperm.xlu0 %989, %v506
      %v991 = vpop.permute.xlu0 %990
      %v993 = vmul.f32 %v991, %v947
      %v994 = vadd.f32 %v988, %v993
      %995 = vset.pattern.permute.xlu0 8
      %996 = vperm.xlu0 %995, %v506
      %v997 = vpop.permute.xlu0 %996
      %v999 = vmul.f32 %v997, %v944
      %1000 = vset.pattern.permute.xlu0 9
      %1001 = vperm.xlu0 %1000, %v506
      %v1002 = vpop.permute.xlu0 %1001
      %v1004 = vmul.f32 %v1002, %v945
      %v1005 = vadd.f32 %v999, %v1004
      %1006 = vset.pattern.permute.xlu0 10
      %1007 = vperm.xlu0 %1006, %v506
      %v1008 = vpop.permute.xlu0 %1007
      %v1010 = vmul.f32 %v1008, %v946
      %v1011 = vadd.f32 %v1005, %v1010
      %1012 = vset.pattern.permute.xlu0 11
      %1013 = vperm.xlu0 %1012, %v506
      %v1014 = vpop.permute.xlu0 %1013
      %v1016 = vmul.f32 %v1014, %v947
      %v1017 = vadd.f32 %v1011, %v1016
      %1019 = vrot.lane.b32.xlu0 %v994, 4
      %v1020 = vpop.permute.xlu0 %1019
      %1023 = vrot.lane.b32.xlu0 %v1017, 8
      %v1024 = vpop.permute.xlu0 %1023
      %v1026 = vsel %vm503, %v971, %v1020
      %v1027 = vsel %vm505, %v1026, %v1024
      %v1028 = vmul.f32 %v1027, %v1027
      %1030 = vrot.lane.b32.xlu0 %v1028, 124
      %v1031 = vpop.permute.xlu0 %1030
      %v1033 = vadd.f32 %v1028, %v1031
      %1034 = vrot.lane.b32.xlu0 %v1028, 120
      %v1035 = vpop.permute.xlu0 %1034
      %v1037 = vadd.f32 %v1033, %v1035
      %v1038 = vmax.f32 %v1037, 1e-08
      %v1039 = vrsqrt.pop %v1038
      %v1040 = vmul.f32 %v1038, %v1039
      %vm1041 = vcmp.eq.f32.partialorder %v1038, inf
      %v1042 = vsel %vm1041, %v1038, %v1040
      %vm1043 = vcmp.eq.f32.partialorder %v1038, 0.0
      %v1044 = vand.u32 %v1038, 2147483648
      %v1045 = vsel %vm1043, %v1044, %v1042
      %v1046 = vxor.u32 %v1045, 2147483648
      %v1047 = vmul.f32 %v1046, 1.442695
      %v1048 = vpow.pop %v1047
      %v1049 = vadd.f32 %v1048, 1.0
      %v1050 = vrcp.pop %v1049
      %v1051 = vmul.f32 1.0, %v1050
      %1053 = vrot.lane.b32.xlu0 %v1051, 4
      %v1054 = vpop.permute.xlu0 %1053
      %1056 = vrot.lane.b32.xlu0 %v1051, 8
      %v1057 = vpop.permute.xlu0 %1056
      %v1059 = vsel %vm503, %v1051, %v1054
      %v1060 = vsel %vm505, %v1059, %v1057
      %v1061 = vmul.f32 %v1027, %v1060
      %v1062 = vmax.f32 %v940, 0.0
      %v1063 = vmax.f32 %v941, 0.0
      %v1064 = vmax.f32 %v942, 0.0
      %v1065 = vmax.f32 %v943, 0.0
      %v1066 = vld [vmem:[%s8 + $0x40] ss:$0 sm:$0xff]
      %v1067 = vld [vmem:[%s8 + $0x41] ss:$0 sm:$0xff]
      %v1068 = vld [vmem:[%s8 + $0x42] ss:$0 sm:$0xff]
      %v1069 = vld [vmem:[%s8 + $0x43] ss:$0 sm:$0xff]
      %1071 = vset.pattern.permute.xlu0 0
      %1072 = vperm.xlu0 %1071, %v1061
      %v1073 = vpop.permute.xlu0 %1072
      %v1075 = vmul.f32 %v1073, %v1066
      %1076 = vset.pattern.permute.xlu0 1
      %1077 = vperm.xlu0 %1076, %v1061
      %v1078 = vpop.permute.xlu0 %1077
      %v1080 = vmul.f32 %v1078, %v1067
      %v1081 = vadd.f32 %v1075, %v1080
      %1082 = vset.pattern.permute.xlu0 2
      %1083 = vperm.xlu0 %1082, %v1061
      %v1084 = vpop.permute.xlu0 %1083
      %v1086 = vmul.f32 %v1084, %v1068
      %v1087 = vadd.f32 %v1081, %v1086
      %1088 = vset.pattern.permute.xlu0 3
      %1089 = vperm.xlu0 %1088, %v1061
      %v1090 = vpop.permute.xlu0 %1089
      %v1092 = vmul.f32 %v1090, %v1069
      %v1093 = vadd.f32 %v1087, %v1092
      %1094 = vset.pattern.permute.xlu0 4
      %1095 = vperm.xlu0 %1094, %v1061
      %v1096 = vpop.permute.xlu0 %1095
      %v1098 = vmul.f32 %v1096, %v1066
      %1099 = vset.pattern.permute.xlu0 5
      %1100 = vperm.xlu0 %1099, %v1061
      %v1101 = vpop.permute.xlu0 %1100
      %v1103 = vmul.f32 %v1101, %v1067
      %v1104 = vadd.f32 %v1098, %v1103
      %1105 = vset.pattern.permute.xlu0 6
      %1106 = vperm.xlu0 %1105, %v1061
      %v1107 = vpop.permute.xlu0 %1106
      %v1109 = vmul.f32 %v1107, %v1068
      %v1110 = vadd.f32 %v1104, %v1109
      %1111 = vset.pattern.permute.xlu0 7
      %1112 = vperm.xlu0 %1111, %v1061
      %v1113 = vpop.permute.xlu0 %1112
      %v1115 = vmul.f32 %v1113, %v1069
      %v1116 = vadd.f32 %v1110, %v1115
      %1117 = vset.pattern.permute.xlu0 8
      %1118 = vperm.xlu0 %1117, %v1061
      %v1119 = vpop.permute.xlu0 %1118
      %v1121 = vmul.f32 %v1119, %v1066
      %1122 = vset.pattern.permute.xlu0 9
      %1123 = vperm.xlu0 %1122, %v1061
      %v1124 = vpop.permute.xlu0 %1123
      %v1126 = vmul.f32 %v1124, %v1067
      %v1127 = vadd.f32 %v1121, %v1126
      %1128 = vset.pattern.permute.xlu0 10
      %1129 = vperm.xlu0 %1128, %v1061
      %v1130 = vpop.permute.xlu0 %1129
      %v1132 = vmul.f32 %v1130, %v1068
      %v1133 = vadd.f32 %v1127, %v1132
      %1134 = vset.pattern.permute.xlu0 11
      %1135 = vperm.xlu0 %1134, %v1061
      %v1136 = vpop.permute.xlu0 %1135
      %v1138 = vmul.f32 %v1136, %v1069
      %v1139 = vadd.f32 %v1133, %v1138
      %1141 = vrot.lane.b32.xlu0 %v1116, 4
      %v1142 = vpop.permute.xlu0 %1141
      %1145 = vrot.lane.b32.xlu0 %v1139, 8
      %v1146 = vpop.permute.xlu0 %1145
      %v1148 = vsel %vm503, %v1093, %v1142
      %v1149 = vsel %vm505, %v1148, %v1146
      %v1150 = vmul.f32 %v1149, %v1149
      %1152 = vrot.lane.b32.xlu0 %v1150, 124
      %v1153 = vpop.permute.xlu0 %1152
      %v1155 = vadd.f32 %v1150, %v1153
      %1156 = vrot.lane.b32.xlu0 %v1150, 120
      %v1157 = vpop.permute.xlu0 %1156
      %v1159 = vadd.f32 %v1155, %v1157
      %v1160 = vmax.f32 %v1159, 1e-08
      %v1161 = vrsqrt.pop %v1160
      %v1162 = vmul.f32 %v1160, %v1161
      %vm1163 = vcmp.eq.f32.partialorder %v1160, inf
      %v1164 = vsel %vm1163, %v1160, %v1162
      %vm1165 = vcmp.eq.f32.partialorder %v1160, 0.0
      %v1166 = vand.u32 %v1160, 2147483648
      %v1167 = vsel %vm1165, %v1166, %v1164
      %v1168 = vpack.c.bf16 %v1062, %v1062
      %v1169 = vpack.c.bf16 %v1063, %v1063
      %v1170 = vpack.c.bf16 %v1064, %v1064
      %v1171 = vpack.c.bf16 %v1065, %v1065
      %v1172 = vld [vmem:[%s6] sm:$0xf]
      %v1173 = vld [vmem:[%s6 + $0x4] sm:$0xf]
      %v1174 = vld [vmem:[%s6 + $0x8] sm:$0xf]
      %v1175 = vld [vmem:[%s6 + $0xc] sm:$0xf]
      %v1176 = vld [vmem:[%s6 + $0x10] sm:$0xf]
      %v1177 = vld [vmem:[%s6 + $0x14] sm:$0xf]
      %v1178 = vld [vmem:[%s6 + $0x18] sm:$0xf]
      %v1179 = vld [vmem:[%s6 + $0x1c] sm:$0xf]
      %v1180 = vld [vmem:[%s6 + $0x20] sm:$0xf]
      %v1181 = vld [vmem:[%s6 + $0x24] sm:$0xf]
      %v1182 = vld [vmem:[%s6 + $0x28] sm:$0xf]
      %v1183 = vld [vmem:[%s6 + $0x2c] sm:$0xf]
      %v1184 = vld [vmem:[%s6 + $0x30] sm:$0xf]
      %v1185 = vld [vmem:[%s6 + $0x34] sm:$0xf]
      %v1186 = vld [vmem:[%s6 + $0x38] sm:$0xf]
      %v1187 = vld [vmem:[%s6 + $0x3c] sm:$0xf]
      %v1188 = vld [vmem:[%s6 + $0x40] sm:$0xf]
      %v1189 = vld [vmem:[%s6 + $0x44] sm:$0xf]
      %v1190 = vld [vmem:[%s6 + $0x48] sm:$0xf]
      %v1191 = vld [vmem:[%s6 + $0x4c] sm:$0xf]
      %v1192 = vld [vmem:[%s6 + $0x50] sm:$0xf]
      %v1193 = vld [vmem:[%s6 + $0x54] sm:$0xf]
      %v1194 = vld [vmem:[%s6 + $0x58] sm:$0xf]
      %v1195 = vld [vmem:[%s6 + $0x5c] sm:$0xf]
      %v1196 = vld [vmem:[%s6 + $0x60] sm:$0xf]
      %v1197 = vld [vmem:[%s6 + $0x64] sm:$0xf]
      %v1198 = vld [vmem:[%s6 + $0x68] sm:$0xf]
      %v1199 = vld [vmem:[%s6 + $0x6c] sm:$0xf]
      %v1200 = vld [vmem:[%s6 + $0x70] sm:$0xf]
      %v1201 = vld [vmem:[%s6 + $0x74] sm:$0xf]
      %v1202 = vld [vmem:[%s6 + $0x78] sm:$0xf]
      %v1203 = vld [vmem:[%s6 + $0x7c] sm:$0xf]
      %v1204 = vld [vmem:[%s6 + $0x80] sm:$0xf]
      %v1205 = vld [vmem:[%s6 + $0x84] sm:$0xf]
      %v1206 = vld [vmem:[%s6 + $0x88] sm:$0xf]
      %v1207 = vld [vmem:[%s6 + $0x8c] sm:$0xf]
      %v1208 = vld [vmem:[%s6 + $0x90] sm:$0xf]
      %v1209 = vld [vmem:[%s6 + $0x94] sm:$0xf]
      %v1210 = vld [vmem:[%s6 + $0x98] sm:$0xf]
      %v1211 = vld [vmem:[%s6 + $0x9c] sm:$0xf]
      %v1212 = vld [vmem:[%s6 + $0xa0] sm:$0xf]
      %v1213 = vld [vmem:[%s6 + $0xa4] sm:$0xf]
      %v1214 = vld [vmem:[%s6 + $0xa8] sm:$0xf]
      %v1215 = vld [vmem:[%s6 + $0xac] sm:$0xf]
      %v1216 = vld [vmem:[%s6 + $0xb0] sm:$0xf]
      %v1217 = vld [vmem:[%s6 + $0xb4] sm:$0xf]
      %v1218 = vld [vmem:[%s6 + $0xb8] sm:$0xf]
      %v1219 = vld [vmem:[%s6 + $0xbc] sm:$0xf]
      %v1220 = vld [vmem:[%s6 + $0xc0] sm:$0xf]
      %v1221 = vld [vmem:[%s6 + $0xc4] sm:$0xf]
      %v1222 = vld [vmem:[%s6 + $0xc8] sm:$0xf]
      %v1223 = vld [vmem:[%s6 + $0xcc] sm:$0xf]
      %v1224 = vld [vmem:[%s6 + $0xd0] sm:$0xf]
      %v1225 = vld [vmem:[%s6 + $0xd4] sm:$0xf]
      %v1226 = vld [vmem:[%s6 + $0xd8] sm:$0xf]
      %v1227 = vld [vmem:[%s6 + $0xdc] sm:$0xf]
      %v1228 = vld [vmem:[%s6 + $0xe0] sm:$0xf]
      %v1229 = vld [vmem:[%s6 + $0xe4] sm:$0xf]
      %v1230 = vld [vmem:[%s6 + $0xe8] sm:$0xf]
      %v1231 = vld [vmem:[%s6 + $0xec] sm:$0xf]
      %v1232 = vld [vmem:[%s6 + $0xf0] sm:$0xf]
      %v1233 = vld [vmem:[%s6 + $0xf4] sm:$0xf]
      %v1234 = vld [vmem:[%s6 + $0xf8] sm:$0xf]
      %v1235 = vld [vmem:[%s6 + $0xfc] sm:$0xf]
      %v1236 = vpack.c.bf16 %v1167, %v1167
      %v1237 = vld [vmem:[%s7] sm:$0x3]
      %v1239 = vsel %vm503, %v1236, 0
      %v1242 = vsel %vm581, %v1237, 0
      %1244 = vmatprep.subr.bf16.mxu0 0
      %1245 = vmatpush1.bf16.msra.mxu0 %v1242
      %1246 = vmatprep.subr.bf16.mxu0 0
      %1247 = vmatpush1.bf16.msra.mxu0 0
      %1248 = vmatprep.subr.bf16.mxu0 0
      %1249 = vmatpush1.bf16.msra.mxu0 0
      %1250 = vmatprep.subr.bf16.mxu0 0
      %1251 = vmatpush1.bf16.msra.mxu0 0
      %1252 = vmatprep.subr.bf16.mxu0 0
      %1253 = vmatpush1.bf16.msra.mxu0 0
      %1254 = vmatprep.subr.bf16.mxu0 0
      %1255 = vmatpush1.bf16.msra.mxu0 0
      %1256 = vmatprep.subr.bf16.mxu0 0
      %1257 = vmatpush1.bf16.msra.mxu0 0
      %1258 = vmatprep.subr.bf16.mxu0 0
      %1259 = vmatpush1.bf16.msra.mxu0 0
      %1260 = vmatprep.subr.bf16.mxu0 0
      %1261 = vmatpush1.bf16.msra.mxu0 0
      %1262 = vmatprep.subr.bf16.mxu0 0
      %1263 = vmatpush1.bf16.msra.mxu0 0
      %1264 = vmatprep.subr.bf16.mxu0 0
      %1265 = vmatpush1.bf16.msra.mxu0 0
      %1266 = vmatprep.subr.bf16.mxu0 0
      %1267 = vmatpush1.bf16.msra.mxu0 0
      %1268 = vmatprep.subr.bf16.mxu0 0
      %1269 = vmatpush1.bf16.msra.mxu0 0
      %1270 = vmatprep.subr.bf16.mxu0 0
      %1271 = vmatpush1.bf16.msra.mxu0 0
      %1272 = vmatprep.subr.bf16.mxu0 0
      %1273 = vmatpush1.bf16.msra.mxu0 0
      %1274 = vmatprep.subr.bf16.mxu0 0
      %1275 = vmatpush1.bf16.msra.mxu0 0
      %1276 = vmatprep.mubr.bf16.mxu0 0
      %1277 = vmatmul.mubr.bf16.gmra.mrb[0].mxu0 %v1239
      %v1278 = vpop.f32.mrb[0].mxu0
      %v1279 = vadd.f32 0.0, %v1278
      %v1280 = vpop.f32.mrb[0].mxu0
      %v1281 = vpop.f32.mrb[0].mxu0
      %v1282 = vpop.f32.mrb[0].mxu0
      %1283 = vdwg.mxu0
      %v1348 = vunpack.c.l.b16 %v1172
      %v1349 = vunpack.c.l.b16 %v1173
      %v1350 = vunpack.c.l.b16 %v1174
      %v1351 = vunpack.c.l.b16 %v1175
      %v1352 = vunpack.c.l.b16 %v1176
      %v1353 = vunpack.c.l.b16 %v1177
      %v1354 = vunpack.c.l.b16 %v1178
      %v1355 = vunpack.c.l.b16 %v1179
      %v1356 = vunpack.c.l.b16 %v1180
      %v1357 = vunpack.c.l.b16 %v1181
      %v1358 = vunpack.c.l.b16 %v1182
      %v1359 = vunpack.c.l.b16 %v1183
      %v1360 = vunpack.c.l.b16 %v1184
      %v1361 = vunpack.c.l.b16 %v1185
      %v1362 = vunpack.c.l.b16 %v1186
      %v1363 = vunpack.c.l.b16 %v1187
      %v1364 = vunpack.c.l.b16 %v1188
      %v1365 = vunpack.c.l.b16 %v1189
      %v1366 = vunpack.c.l.b16 %v1190
      %v1367 = vunpack.c.l.b16 %v1191
      %v1368 = vunpack.c.l.b16 %v1192
      %v1369 = vunpack.c.l.b16 %v1193
      %v1370 = vunpack.c.l.b16 %v1194
      %v1371 = vunpack.c.l.b16 %v1195
      %v1372 = vunpack.c.l.b16 %v1196
      %v1373 = vunpack.c.l.b16 %v1197
      %v1374 = vunpack.c.l.b16 %v1198
      %v1375 = vunpack.c.l.b16 %v1199
      %v1376 = vunpack.c.l.b16 %v1200
      %v1377 = vunpack.c.l.b16 %v1201
      %v1378 = vunpack.c.l.b16 %v1202
      %v1379 = vunpack.c.l.b16 %v1203
      %v1380 = vunpack.c.l.b16 %v1204
      %v1381 = vunpack.c.l.b16 %v1205
      %v1382 = vunpack.c.l.b16 %v1206
      %v1383 = vunpack.c.l.b16 %v1207
      %v1384 = vunpack.c.l.b16 %v1208
      %v1385 = vunpack.c.l.b16 %v1209
      %v1386 = vunpack.c.l.b16 %v1210
      %v1387 = vunpack.c.l.b16 %v1211
      %v1388 = vunpack.c.l.b16 %v1212
      %v1389 = vunpack.c.l.b16 %v1213
      %v1390 = vunpack.c.l.b16 %v1214
      %v1391 = vunpack.c.l.b16 %v1215
      %v1392 = vunpack.c.l.b16 %v1216
      %v1393 = vunpack.c.l.b16 %v1217
      %v1394 = vunpack.c.l.b16 %v1218
      %v1395 = vunpack.c.l.b16 %v1219
      %v1396 = vunpack.c.l.b16 %v1220
      %v1397 = vunpack.c.l.b16 %v1221
      %v1398 = vunpack.c.l.b16 %v1222
      %v1399 = vunpack.c.l.b16 %v1223
      %v1400 = vunpack.c.l.b16 %v1224
      %v1401 = vunpack.c.l.b16 %v1225
      %v1402 = vunpack.c.l.b16 %v1226
      %v1403 = vunpack.c.l.b16 %v1227
      %v1404 = vunpack.c.l.b16 %v1228
      %v1405 = vunpack.c.l.b16 %v1229
      %v1406 = vunpack.c.l.b16 %v1230
      %v1407 = vunpack.c.l.b16 %v1231
      %v1408 = vunpack.c.l.b16 %v1232
      %v1409 = vunpack.c.l.b16 %v1233
      %v1410 = vunpack.c.l.b16 %v1234
      %v1411 = vunpack.c.l.b16 %v1235
      %v1412 = vpack.c.b16 %v1349, %v1348
      %v1413 = vpack.c.b16 %v1351, %v1350
      %v1414 = vpack.c.b16 %v1353, %v1352
      %v1415 = vpack.c.b16 %v1355, %v1354
      %v1416 = vpack.c.b16 %v1357, %v1356
      %v1417 = vpack.c.b16 %v1359, %v1358
      %v1418 = vpack.c.b16 %v1361, %v1360
      %v1419 = vpack.c.b16 %v1363, %v1362
      %v1420 = vpack.c.b16 %v1365, %v1364
      %v1421 = vpack.c.b16 %v1367, %v1366
      %v1422 = vpack.c.b16 %v1369, %v1368
      %v1423 = vpack.c.b16 %v1371, %v1370
      %v1424 = vpack.c.b16 %v1373, %v1372
      %v1425 = vpack.c.b16 %v1375, %v1374
      %v1426 = vpack.c.b16 %v1377, %v1376
      %v1427 = vpack.c.b16 %v1379, %v1378
      %v1428 = vpack.c.b16 %v1381, %v1380
      %v1429 = vpack.c.b16 %v1383, %v1382
      %v1430 = vpack.c.b16 %v1385, %v1384
      %v1431 = vpack.c.b16 %v1387, %v1386
      %v1432 = vpack.c.b16 %v1389, %v1388
      %v1433 = vpack.c.b16 %v1391, %v1390
      %v1434 = vpack.c.b16 %v1393, %v1392
      %v1435 = vpack.c.b16 %v1395, %v1394
      %v1436 = vpack.c.b16 %v1397, %v1396
      %v1437 = vpack.c.b16 %v1399, %v1398
      %v1438 = vpack.c.b16 %v1401, %v1400
      %v1439 = vpack.c.b16 %v1403, %v1402
      %v1440 = vpack.c.b16 %v1405, %v1404
      %v1441 = vpack.c.b16 %v1407, %v1406
      %v1442 = vpack.c.b16 %v1409, %v1408
      %v1443 = vpack.c.b16 %v1411, %v1410
      %1476 = vmatprep.subr.bf16.mxu0 0
      %1477 = vmatpush1.bf16.msra.mxu0 %v1412
      %1478 = vmatprep.subr.bf16.mxu0 0
      %1479 = vmatpush1.bf16.msra.mxu0 %v1413
      %1480 = vmatprep.subr.bf16.mxu0 0
      %1481 = vmatpush1.bf16.msra.mxu0 %v1414
      %1482 = vmatprep.subr.bf16.mxu0 0
      %1483 = vmatpush1.bf16.msra.mxu0 %v1415
      %1484 = vmatprep.subr.bf16.mxu0 0
      %1485 = vmatpush1.bf16.msra.mxu0 %v1416
      %1486 = vmatprep.subr.bf16.mxu0 0
      %1487 = vmatpush1.bf16.msra.mxu0 %v1417
      %1488 = vmatprep.subr.bf16.mxu0 0
      %1489 = vmatpush1.bf16.msra.mxu0 %v1418
      %1490 = vmatprep.subr.bf16.mxu0 0
      %1491 = vmatpush1.bf16.msra.mxu0 %v1419
      %1492 = vmatprep.subr.bf16.mxu0 0
      %1493 = vmatpush1.bf16.msra.mxu0 %v1420
      %1494 = vmatprep.subr.bf16.mxu0 0
      %1495 = vmatpush1.bf16.msra.mxu0 %v1421
      %1496 = vmatprep.subr.bf16.mxu0 0
      %1497 = vmatpush1.bf16.msra.mxu0 %v1422
      %1498 = vmatprep.subr.bf16.mxu0 0
      %1499 = vmatpush1.bf16.msra.mxu0 %v1423
      %1500 = vmatprep.subr.bf16.mxu0 0
      %1501 = vmatpush1.bf16.msra.mxu0 %v1424
      %1502 = vmatprep.subr.bf16.mxu0 0
      %1503 = vmatpush1.bf16.msra.mxu0 %v1425
      %1504 = vmatprep.subr.bf16.mxu0 0
      %1505 = vmatpush1.bf16.msra.mxu0 %v1426
      %1506 = vmatprep.subr.bf16.mxu0 0
      %1507 = vmatpush1.bf16.msra.mxu0 %v1427
      %1508 = vmatprep.mubr.bf16.mxu0 %v1169
      %1509 = vmatmul.mubr.bf16.gmra.mrb[0].mxu0 %v1168
      %v1510 = vpop.f32.mrb[0].mxu0
      %v1511 = vadd.f32 %v1279, %v1510
      %v1512 = vpop.f32.mrb[0].mxu0
      %v1513 = vpop.f32.mrb[0].mxu0
      %v1514 = vpop.f32.mrb[0].mxu0
      %1515 = vdwg.mxu0
      %1516 = vmatprep.subr.bf16.mxu0 0
      %1517 = vmatpush1.bf16.msra.mxu0 %v1428
      %1518 = vmatprep.subr.bf16.mxu0 0
      %1519 = vmatpush1.bf16.msra.mxu0 %v1429
      %1520 = vmatprep.subr.bf16.mxu0 0
      %1521 = vmatpush1.bf16.msra.mxu0 %v1430
      %1522 = vmatprep.subr.bf16.mxu0 0
      %1523 = vmatpush1.bf16.msra.mxu0 %v1431
      %1524 = vmatprep.subr.bf16.mxu0 0
      %1525 = vmatpush1.bf16.msra.mxu0 %v1432
      %1526 = vmatprep.subr.bf16.mxu0 0
      %1527 = vmatpush1.bf16.msra.mxu0 %v1433
      %1528 = vmatprep.subr.bf16.mxu0 0
      %1529 = vmatpush1.bf16.msra.mxu0 %v1434
      %1530 = vmatprep.subr.bf16.mxu0 0
      %1531 = vmatpush1.bf16.msra.mxu0 %v1435
      %1532 = vmatprep.subr.bf16.mxu0 0
      %1533 = vmatpush1.bf16.msra.mxu0 %v1436
      %1534 = vmatprep.subr.bf16.mxu0 0
      %1535 = vmatpush1.bf16.msra.mxu0 %v1437
      %1536 = vmatprep.subr.bf16.mxu0 0
      %1537 = vmatpush1.bf16.msra.mxu0 %v1438
      %1538 = vmatprep.subr.bf16.mxu0 0
      %1539 = vmatpush1.bf16.msra.mxu0 %v1439
      %1540 = vmatprep.subr.bf16.mxu0 0
      %1541 = vmatpush1.bf16.msra.mxu0 %v1440
      %1542 = vmatprep.subr.bf16.mxu0 0
      %1543 = vmatpush1.bf16.msra.mxu0 %v1441
      %1544 = vmatprep.subr.bf16.mxu0 0
      %1545 = vmatpush1.bf16.msra.mxu0 %v1442
      %1546 = vmatprep.subr.bf16.mxu0 0
      %1547 = vmatpush1.bf16.msra.mxu0 %v1443
      %1548 = vmatprep.mubr.bf16.mxu0 %v1171
      %1549 = vmatmul.mubr.bf16.gmra.mrb[0].mxu0 %v1170
      %v1550 = vpop.f32.mrb[0].mxu0
      %v1551 = vadd.f32 %v1511, %v1550
      %v1552 = vpop.f32.mrb[0].mxu0
      %v1553 = vpop.f32.mrb[0].mxu0
      %v1554 = vpop.f32.mrb[0].mxu0
      %1555 = vdwg.mxu0
      %v1556 = vld [vmem:[%s8 + $0x5] ss:$0 sm:$0xff]
      %v1557 = vadd.f32 %v1551, %v1556
      %v1558 = vld [vmem:[%s8 + $0x44] ss:$0 sm:$0xff]
      %v1559 = vld [vmem:[%s8 + $0x45] ss:$0 sm:$0xff]
      %v1560 = vld [vmem:[%s8 + $0x46] ss:$0 sm:$0xff]
      %v1561 = vld [vmem:[%s8 + $0x47] ss:$0 sm:$0xff]
      %1563 = vset.pattern.permute.xlu0 0
      %1564 = vperm.xlu0 %1563, %v1149
      %v1565 = vpop.permute.xlu0 %1564
      %v1567 = vmul.f32 %v1565, %v1558
      %1568 = vset.pattern.permute.xlu0 1
      %1569 = vperm.xlu0 %1568, %v1149
      %v1570 = vpop.permute.xlu0 %1569
      %v1572 = vmul.f32 %v1570, %v1559
      %v1573 = vadd.f32 %v1567, %v1572
      %1574 = vset.pattern.permute.xlu0 2
      %1575 = vperm.xlu0 %1574, %v1149
      %v1576 = vpop.permute.xlu0 %1575
      %v1578 = vmul.f32 %v1576, %v1560
      %v1579 = vadd.f32 %v1573, %v1578
      %1580 = vset.pattern.permute.xlu0 3
      %1581 = vperm.xlu0 %1580, %v1149
      %v1582 = vpop.permute.xlu0 %1581
      %v1584 = vmul.f32 %v1582, %v1561
      %v1585 = vadd.f32 %v1579, %v1584
      %1586 = vset.pattern.permute.xlu0 4
      %1587 = vperm.xlu0 %1586, %v1149
      %v1588 = vpop.permute.xlu0 %1587
      %v1590 = vmul.f32 %v1588, %v1558
      %1591 = vset.pattern.permute.xlu0 5
      %1592 = vperm.xlu0 %1591, %v1149
      %v1593 = vpop.permute.xlu0 %1592
      %v1595 = vmul.f32 %v1593, %v1559
      %v1596 = vadd.f32 %v1590, %v1595
      %1597 = vset.pattern.permute.xlu0 6
      %1598 = vperm.xlu0 %1597, %v1149
      %v1599 = vpop.permute.xlu0 %1598
      %v1601 = vmul.f32 %v1599, %v1560
      %v1602 = vadd.f32 %v1596, %v1601
      %1603 = vset.pattern.permute.xlu0 7
      %1604 = vperm.xlu0 %1603, %v1149
      %v1605 = vpop.permute.xlu0 %1604
      %v1607 = vmul.f32 %v1605, %v1561
      %v1608 = vadd.f32 %v1602, %v1607
      %1609 = vset.pattern.permute.xlu0 8
      %1610 = vperm.xlu0 %1609, %v1149
      %v1611 = vpop.permute.xlu0 %1610
      %v1613 = vmul.f32 %v1611, %v1558
      %1614 = vset.pattern.permute.xlu0 9
      %1615 = vperm.xlu0 %1614, %v1149
      %v1616 = vpop.permute.xlu0 %1615
      %v1618 = vmul.f32 %v1616, %v1559
      %v1619 = vadd.f32 %v1613, %v1618
      %1620 = vset.pattern.permute.xlu0 10
      %1621 = vperm.xlu0 %1620, %v1149
      %v1622 = vpop.permute.xlu0 %1621
      %v1624 = vmul.f32 %v1622, %v1560
      %v1625 = vadd.f32 %v1619, %v1624
      %1626 = vset.pattern.permute.xlu0 11
      %1627 = vperm.xlu0 %1626, %v1149
      %v1628 = vpop.permute.xlu0 %1627
      %v1630 = vmul.f32 %v1628, %v1561
      %v1631 = vadd.f32 %v1625, %v1630
      %1633 = vrot.lane.b32.xlu0 %v1608, 2
      %v1634 = vpop.permute.xlu0 %1633
      %1637 = vrot.lane.b32.xlu0 %v1631, 4
      %v1638 = vpop.permute.xlu0 %1637
      %v1640 = vsel %vm451, %v1585, %v1634
      %v1641 = vsel %vm503, %v1640, %v1638
      %v1642 = vadd.f32 %v439, %v1557
      %v1643 = vadd.f32 %v458, %v1641
      %1644 = vadd.xlane.f32.xlu0 %v1642
      %v1645 = vpop.xlane.xlu0 %1644
      %v1646 = vmul.f32 %v1645, %v426
      %v1647 = vsub.f32 %v1642, %v1646
      %v1648 = vmul.f32 %v1647, %v1647
      %1649 = vadd.xlane.f32.xlu0 %v1648
      %v1650 = vpop.xlane.xlu0 %1649
      %v1651 = vmul.f32 %v1650, %v426
      %v1652 = vadd.f32 %v1651, 1e-05
      %v1653 = vrsqrt.pop %v1652
      %v1654 = vmul.f32 %v1647, %v1653
      %v1655 = vld [vmem:[%s8 + $0x3] ss:$0 sm:$0xff]
      %v1656 = vmul.f32 %v1654, %v1655
      %v1657 = vld [vmem:[%s8 + $0x4] ss:$0 sm:$0xff]
      %v1658 = vadd.f32 %v1656, %v1657
      %v1659 = vmul.f32 %v1643, %v1643
      %1661 = vrot.lane.b32.xlu0 %v1659, 126
      %v1662 = vpop.permute.xlu0 %1661
      %v1664 = vadd.f32 %v1659, %v1662
      %1665 = vrot.lane.b32.xlu0 %v1659, 124
      %v1666 = vpop.permute.xlu0 %1665
      %v1668 = vadd.f32 %v1664, %v1666
      %v1669 = vmax.f32 %v1668, 1e-08
      %v1670 = vsel %vm451, %v1669, 0.0
      %1671 = vadd.xlane.f32.xlu0 %v1670
      %v1672 = vpop.xlane.xlu0 %1671
      %v1673 = vmul.f32 %v1672, %v455
      %v1674 = vrsqrt.pop %v1673
      %v1675 = vmul.f32 %v1643, %v1674
      %v1676 = vadd.f32 %v1658, %v418
      %v1677 = vmul.f32 %v1676, 0.5
      %1678 = vst [vmem:[%s412] sm:$0xff] %v1677
      %v1679 = vadd.f32 %v1675, %v419
      %v1680 = vmul.f32 %v1679, 0.5
      %vm1681 = vcmask 48128
      %1682 = vst.msk [vmem:[%s416] sm:$0xff] %vm1681, %v1680
      %p1683 = scmp.lt.s32.totalorder %s22, 1
      %s1684 = scalar_select %p1683, %s22, 1
      %s1685 = smul.addr %s1684, 8
      %s1686 = scalar_lea.vmem %s9, %s1685
      %p1687 = scmp.lt.s32.totalorder %s22, 1
      %s1688 = scalar_select %p1687, %s22, 1
      %s1689 = smul.addr %s1688, 8
      %s1690 = scalar_lea.vmem %s10, %s1689
      // Predicated region
      $region57: #{scoring_forward.19} parent=55 // pred_check
        %p1691 = pneg %p249
      $region58: #{scoring_forward.19} parent=55 // pred_check_branch
        %1693 = sbr.rel (%p1691) target = $region60
      $region59: #{scoring_forward.19} parent=55 // pred_region
        _
      $region60: #{scoring_forward.19} parent=55 // pred_fallthru
        _
      // Predicated region
      $region61: #{scoring_forward.19} parent=55 // pred_check
        %p1694 = pneg %p275
      $region62: #{scoring_forward.19} parent=55 // pred_check_branch
        %1696 = sbr.rel (%p1694) target = $region64
      $region63: #{scoring_forward.19} parent=55 // pred_region
        _
      $region64: #{scoring_forward.19} parent=55 // pred_fallthru
        _
    $region56: #{scoring_forward.19} parent=5 // pred_fallthru
      _
    %p1697 = scmp.le.s32.totalorder 2, %s17
    // Predicated region
    $region65: #{scoring_forward.19} parent=5 // pred_check
      %p1698 = pneg %p1697
    $region66: #{scoring_forward.19} parent=5 // pred_check_branch
      %1700 = sbr.rel (%p1698) target = $region68
    $region67: #{scoring_forward.19} parent=5 // pred_region
      %s1701 = ssub.s32 %s17, 2
      // Predicated region
      $region69: #{scoring_forward.19} parent=67 // pred_check
        %p1702 = pneg %p255
      $region70: #{scoring_forward.19} parent=67 // pred_check_branch
        %1704 = sbr.rel (%p1702) target = $region72
      $region71: #{scoring_forward.19} parent=67 // pred_region
        %p1705 = scmp.lt.s32.totalorder %s23, 1
        %s1706 = scalar_select %p1705, %s23, 1
        %s1707 = smul.addr %s1706, 8
        %s1708 = scalar_lea.vmem %s9, %s1707
      $region72: #{scoring_forward.19} parent=67 // pred_fallthru
        _
      // Predicated region
      $region73: #{scoring_forward.19} parent=67 // pred_check
        %p1709 = pneg %p281
      $region74: #{scoring_forward.19} parent=67 // pred_check_branch
        %1711 = sbr.rel (%p1709) target = $region76
      $region75: #{scoring_forward.19} parent=67 // pred_region
        %p1712 = scmp.lt.s32.totalorder %s23, 1
        %s1713 = scalar_select %p1712, %s23, 1
        %s1714 = smul.addr %s1713, 8
        %s1715 = scalar_lea.vmem %s10, %s1714
      $region76: #{scoring_forward.19} parent=67 // pred_fallthru
        _
    $region68: #{scoring_forward.19} parent=5 // pred_fallthru
      _
  $region6: #{scoring_forward.19} parent=0 // loop_footer
    %s21 = sadd.s32 1, %s17
  $region7: #{scoring_forward.19} parent=0 // loop_footer_branch
    %16 = sbr.rel target = $region3
  $region8: #{scoring_forward.19} parent=0 // loop_exit
    _

// kernel: scoring_forward.33
$region0: #{scoring_forward.33}
  #allocation0 [shape = 'u32[]', space=smem, size = 0x4, offset = 0x4, fixed_abs, tag = 'smem constant byte address 0x4 - core index']
  #allocation1 [shape = 'u32[144,128]{1,0:T(1,128)}', space=vmem, size = 0x12000, scoped, tag = 'internal scratch']
  %s0 = inlined_call_operand.vmem [shape: f32[16,128], index: 0, kind: input, shape index: {}]
  %s1 = inlined_call_operand.vmem [shape: f32[16,128], index: 1, kind: input, shape index: {}]
  %s2 = inlined_call_operand.vmem [shape: f32[16,6], index: 2, kind: input, shape index: {}]
  %s3 = inlined_call_operand.vmem [shape: f32[16,6], index: 3, kind: input, shape index: {}]
  %s4 = inlined_call_operand.vmem [shape: bf16[128,512], index: 4, kind: input, shape index: {}]
  %s5 = inlined_call_operand.vmem [shape: bf16[4,512], index: 5, kind: input, shape index: {}]
  %s6 = inlined_call_operand.vmem [shape: bf16[512,128], index: 6, kind: input, shape index: {}]
  %s7 = inlined_call_operand.vmem [shape: bf16[4,128], index: 7, kind: input, shape index: {}]
  %s8 = inlined_call_operand.vmem [shape: f32[24,512], index: 8, kind: input, shape index: {}]
  %s9 = inlined_call_operand.vmem [shape: f32[16,128], index: 9, kind: output, shape index: {0}]
  %s10 = inlined_call_operand.hbm [shape: f32[16,6], index: 10, kind: output, shape index: {1}]
  %11 = xla_tuple %s9, %s10
  %s12 = sld [smem:[#allocation0]]
  $region77: #{scoring_forward.33} parent=0
    _
  %s14 = ssub.s32 1, %s12
  %s15 = scalar_select 0, %s14, %s12
  $region1: #{scoring_forward.33} parent=0
    #allocation2 [shape = 'u8[8192]{0}', space=vmem, size = 0x2000, scoped, tag = 'output window, operand 1']
    #allocation3 [shape = 's32[2]{0}', space=sflag, size = 0x8, scoped, tag = 'scoped memory for scoring_forward.33']
    %16 = vsyncpa [#allocation3], 0
    %s17 = scalar_lea.sflag [#allocation3], 1
    %18 = vsyncpa %s17, 0
    loop: start=0, step=1, limit=4
    $region2: #{scoring_forward.33} parent=1 // loop_pre_header
      _
    $region3: #{scoring_forward.33} parent=1 // loop_header
      %s20 = sphi 0, %s24
      %p21 = scmp.ge.s32.totalorder %s20, 4
      %s30 = sphi 0, %s32
      %s33 = sphi 0, %s30
      %s34 = sphi 0, %s33
      %s50 = sphi 0, %s34
      %s56 = sphi 0, %s58
      %s59 = sphi 0, %s56
      %s60 = sphi 0, %s59
      %s76 = sphi 0, %s60
      %s82 = sphi 0, %s84
      %s85 = sphi 0, %s82
      %s86 = sphi 0, %s85
      %s102 = sphi 0, %s86
      %s108 = sphi 0, %s110
      %s111 = sphi 0, %s108
      %s112 = sphi 0, %s111
      %s128 = sphi 0, %s112
      %s132 = sphi 0, %s132
      %s134 = sphi 0, %s132
      %s135 = sphi 0, %s134
      %s149 = sphi 0, %s135
      %s153 = sphi 0, %s153
      %s155 = sphi 0, %s153
      %s156 = sphi 0, %s155
      %s170 = sphi 0, %s156
      %s174 = sphi 0, %s174
      %s176 = sphi 0, %s174
      %s177 = sphi 0, %s176
      %s191 = sphi 0, %s177
      %s195 = sphi 0, %s195
      %s197 = sphi 0, %s195
      %s198 = sphi 0, %s197
      %s212 = sphi 0, %s198
      %s216 = sphi 0, %s216
      %s218 = sphi 0, %s216
      %s219 = sphi 0, %s218
      %s233 = sphi 0, %s219
      %s239 = sphi 0, %s241
      %s242 = sphi 0, %s239
      %s243 = sphi 0, %s242
      %s259 = sphi 0, %s243
      %s265 = sphi 0, %s267
      %s268 = sphi 0, %s265
      %s269 = sphi 0, %s268
      %s285 = sphi 0, %s269
    $region4: #{scoring_forward.33} parent=1 // loop_header_branch
      %23 = sbr.rel (%p21) target = $region8
    $region5: #{scoring_forward.33} parent=1 // loop_body
      %s25 = ssub.s32 %s20, 1
      %s26 = ssub.s32 %s20, 2
      %s27 = sadd.s32 %s20, 1
      %s28 = ssub.s32 %s20, %s27
      %p29 = scmp.eq.s32.totalorder %s28, 0
      %s31 = sadd.s32 %s30, 1
      %s32 = scalar_select %p29, %s30, %s31
      %p35 = pneg %p29
      %p36 = scmp.eq.s32.totalorder %s20, 1
      %p37 = por %p35, %p36
      %p38 = scmp.ne.s32.totalorder %s30, %s33
      %p39 = scmp.eq.s32.totalorder %s20, 0
      %p40 = por %p38, %p39
      %p41 = scmp.ne.s32.totalorder %s30, %s33
      %p42 = scmp.eq.s32.totalorder %s25, 1
      %p43 = por %p41, %p42
      %p44 = scmp.ne.s32.totalorder %s33, %s34
      %p45 = scmp.eq.s32.totalorder %s25, 0
      %p46 = por %p44, %p45
      %p47 = scmp.ne.s32.totalorder %s33, %s34
      %p48 = scmp.eq.s32.totalorder %s26, 1
      %p49 = por %p47, %p48
      %p51 = scmp.ne.s32.totalorder %s34, %s50
      %p52 = scmp.eq.s32.totalorder %s26, 0
      %p53 = por %p51, %p52
      %s54 = ssub.s32 %s20, %s27
      %p55 = scmp.eq.s32.totalorder %s54, 0
      %s57 = sadd.s32 %s56, 1
      %s58 = scalar_select %p55, %s56, %s57
      %p61 = pneg %p55
      %p62 = scmp.eq.s32.totalorder %s20, 1
      %p63 = por %p61, %p62
      %p64 = scmp.ne.s32.totalorder %s56, %s59
      %p65 = scmp.eq.s32.totalorder %s20, 0
      %p66 = por %p64, %p65
      %p67 = scmp.ne.s32.totalorder %s56, %s59
      %p68 = scmp.eq.s32.totalorder %s25, 1
      %p69 = por %p67, %p68
      %p70 = scmp.ne.s32.totalorder %s59, %s60
      %p71 = scmp.eq.s32.totalorder %s25, 0
      %p72 = por %p70, %p71
      %p73 = scmp.ne.s32.totalorder %s59, %s60
      %p74 = scmp.eq.s32.totalorder %s26, 1
      %p75 = por %p73, %p74
      %p77 = scmp.ne.s32.totalorder %s60, %s76
      %p78 = scmp.eq.s32.totalorder %s26, 0
      %p79 = por %p77, %p78
      %s80 = ssub.s32 %s20, %s27
      %p81 = scmp.eq.s32.totalorder %s80, 0
      %s83 = sadd.s32 %s82, 1
      %s84 = scalar_select %p81, %s82, %s83
      %p87 = pneg %p81
      %p88 = scmp.eq.s32.totalorder %s20, 1
      %p89 = por %p87, %p88
      %p90 = scmp.ne.s32.totalorder %s82, %s85
      %p91 = scmp.eq.s32.totalorder %s20, 0
      %p92 = por %p90, %p91
      %p93 = scmp.ne.s32.totalorder %s82, %s85
      %p94 = scmp.eq.s32.totalorder %s25, 1
      %p95 = por %p93, %p94
      %p96 = scmp.ne.s32.totalorder %s85, %s86
      %p97 = scmp.eq.s32.totalorder %s25, 0
      %p98 = por %p96, %p97
      %p99 = scmp.ne.s32.totalorder %s85, %s86
      %p100 = scmp.eq.s32.totalorder %s26, 1
      %p101 = por %p99, %p100
      %p103 = scmp.ne.s32.totalorder %s86, %s102
      %p104 = scmp.eq.s32.totalorder %s26, 0
      %p105 = por %p103, %p104
      %s106 = ssub.s32 %s20, %s27
      %p107 = scmp.eq.s32.totalorder %s106, 0
      %s109 = sadd.s32 %s108, 1
      %s110 = scalar_select %p107, %s108, %s109
      %p113 = pneg %p107
      %p114 = scmp.eq.s32.totalorder %s20, 1
      %p115 = por %p113, %p114
      %p116 = scmp.ne.s32.totalorder %s108, %s111
      %p117 = scmp.eq.s32.totalorder %s20, 0
      %p118 = por %p116, %p117
      %p119 = scmp.ne.s32.totalorder %s108, %s111
      %p120 = scmp.eq.s32.totalorder %s25, 1
      %p121 = por %p119, %p120
      %p122 = scmp.ne.s32.totalorder %s111, %s112
      %p123 = scmp.eq.s32.totalorder %s25, 0
      %p124 = por %p122, %p123
      %p125 = scmp.ne.s32.totalorder %s111, %s112
      %p126 = scmp.eq.s32.totalorder %s26, 1
      %p127 = por %p125, %p126
      %p129 = scmp.ne.s32.totalorder %s112, %s128
      %p130 = scmp.eq.s32.totalorder %s26, 0
      %p131 = por %p129, %p130
      %s133 = sadd.s32 %s132, 1
      %p136 = scmp.eq.s32.totalorder %s20, 1
      %p137 = scmp.ne.s32.totalorder %s132, %s134
      %p138 = scmp.eq.s32.totalorder %s20, 0
      %p139 = por %p137, %p138
      %p140 = scmp.ne.s32.totalorder %s132, %s134
      %p141 = scmp.eq.s32.totalorder %s25, 1
      %p142 = por %p140, %p141
      %p143 = scmp.ne.s32.totalorder %s134, %s135
      %p144 = scmp.eq.s32.totalorder %s25, 0
      %p145 = por %p143, %p144
      %p146 = scmp.ne.s32.totalorder %s134, %s135
      %p147 = scmp.eq.s32.totalorder %s26, 1
      %p148 = por %p146, %p147
      %p150 = scmp.ne.s32.totalorder %s135, %s149
      %p151 = scmp.eq.s32.totalorder %s26, 0
      %p152 = por %p150, %p151
      %s154 = sadd.s32 %s153, 1
      %p157 = scmp.eq.s32.totalorder %s20, 1
      %p158 = scmp.ne.s32.totalorder %s153, %s155
      %p159 = scmp.eq.s32.totalorder %s20, 0
      %p160 = por %p158, %p159
      %p161 = scmp.ne.s32.totalorder %s153, %s155
      %p162 = scmp.eq.s32.totalorder %s25, 1
      %p163 = por %p161, %p162
      %p164 = scmp.ne.s32.totalorder %s155, %s156
      %p165 = scmp.eq.s32.totalorder %s25, 0
      %p166 = por %p164, %p165
      %p167 = scmp.ne.s32.totalorder %s155, %s156
      %p168 = scmp.eq.s32.totalorder %s26, 1
      %p169 = por %p167, %p168
      %p171 = scmp.ne.s32.totalorder %s156, %s170
      %p172 = scmp.eq.s32.totalorder %s26, 0
      %p173 = por %p171, %p172
      %s175 = sadd.s32 %s174, 1
      %p178 = scmp.eq.s32.totalorder %s20, 1
      %p179 = scmp.ne.s32.totalorder %s174, %s176
      %p180 = scmp.eq.s32.totalorder %s20, 0
      %p181 = por %p179, %p180
      %p182 = scmp.ne.s32.totalorder %s174, %s176
      %p183 = scmp.eq.s32.totalorder %s25, 1
      %p184 = por %p182, %p183
      %p185 = scmp.ne.s32.totalorder %s176, %s177
      %p186 = scmp.eq.s32.totalorder %s25, 0
      %p187 = por %p185, %p186
      %p188 = scmp.ne.s32.totalorder %s176, %s177
      %p189 = scmp.eq.s32.totalorder %s26, 1
      %p190 = por %p188, %p189
      %p192 = scmp.ne.s32.totalorder %s177, %s191
      %p193 = scmp.eq.s32.totalorder %s26, 0
      %p194 = por %p192, %p193
      %s196 = sadd.s32 %s195, 1
      %p199 = scmp.eq.s32.totalorder %s20, 1
      %p200 = scmp.ne.s32.totalorder %s195, %s197
      %p201 = scmp.eq.s32.totalorder %s20, 0
      %p202 = por %p200, %p201
      %p203 = scmp.ne.s32.totalorder %s195, %s197
      %p204 = scmp.eq.s32.totalorder %s25, 1
      %p205 = por %p203, %p204
      %p206 = scmp.ne.s32.totalorder %s197, %s198
      %p207 = scmp.eq.s32.totalorder %s25, 0
      %p208 = por %p206, %p207
      %p209 = scmp.ne.s32.totalorder %s197, %s198
      %p210 = scmp.eq.s32.totalorder %s26, 1
      %p211 = por %p209, %p210
      %p213 = scmp.ne.s32.totalorder %s198, %s212
      %p214 = scmp.eq.s32.totalorder %s26, 0
      %p215 = por %p213, %p214
      %s217 = sadd.s32 %s216, 1
      %p220 = scmp.eq.s32.totalorder %s20, 1
      %p221 = scmp.ne.s32.totalorder %s216, %s218
      %p222 = scmp.eq.s32.totalorder %s20, 0
      %p223 = por %p221, %p222
      %p224 = scmp.ne.s32.totalorder %s216, %s218
      %p225 = scmp.eq.s32.totalorder %s25, 1
      %p226 = por %p224, %p225
      %p227 = scmp.ne.s32.totalorder %s218, %s219
      %p228 = scmp.eq.s32.totalorder %s25, 0
      %p229 = por %p227, %p228
      %p230 = scmp.ne.s32.totalorder %s218, %s219
      %p231 = scmp.eq.s32.totalorder %s26, 1
      %p232 = por %p230, %p231
      %p234 = scmp.ne.s32.totalorder %s219, %s233
      %p235 = scmp.eq.s32.totalorder %s26, 0
      %p236 = por %p234, %p235
      %s237 = ssub.s32 %s20, %s27
      %p238 = scmp.eq.s32.totalorder %s237, 0
      %s240 = sadd.s32 %s239, 1
      %s241 = scalar_select %p238, %s239, %s240
      %p244 = pneg %p238
      %p245 = scmp.eq.s32.totalorder %s20, 1
      %p246 = por %p244, %p245
      %p247 = scmp.ne.s32.totalorder %s239, %s242
      %p248 = scmp.eq.s32.totalorder %s20, 0
      %p249 = por %p247, %p248
      %p250 = scmp.ne.s32.totalorder %s239, %s242
      %p251 = scmp.eq.s32.totalorder %s25, 1
      %p252 = por %p250, %p251
      %p253 = scmp.ne.s32.totalorder %s242, %s243
      %p254 = scmp.eq.s32.totalorder %s25, 0
      %p255 = por %p253, %p254
      %p256 = scmp.ne.s32.totalorder %s242, %s243
      %p257 = scmp.eq.s32.totalorder %s26, 1
      %p258 = por %p256, %p257
      %p260 = scmp.ne.s32.totalorder %s243, %s259
      %p261 = scmp.eq.s32.totalorder %s26, 0
      %p262 = por %p260, %p261
      %s263 = ssub.s32 %s20, %s27
      %p264 = scmp.eq.s32.totalorder %s263, 0
      %s266 = sadd.s32 %s265, 1
      %s267 = scalar_select %p264, %s265, %s266
      %p270 = pneg %p264
      %p271 = scmp.eq.s32.totalorder %s20, 1
      %p272 = por %p270, %p271
      %p273 = scmp.ne.s32.totalorder %s265, %s268
      %p274 = scmp.eq.s32.totalorder %s20, 0
      %p275 = por %p273, %p274
      %p276 = scmp.ne.s32.totalorder %s265, %s268
      %p277 = scmp.eq.s32.totalorder %s25, 1
      %p278 = por %p276, %p277
      %p279 = scmp.ne.s32.totalorder %s268, %s269
      %p280 = scmp.eq.s32.totalorder %s25, 0
      %p281 = por %p279, %p280
      %p282 = scmp.ne.s32.totalorder %s268, %s269
      %p283 = scmp.eq.s32.totalorder %s26, 1
      %p284 = por %p282, %p283
      %p286 = scmp.ne.s32.totalorder %s269, %s285
      %p287 = scmp.eq.s32.totalorder %s26, 0
      %p288 = por %p286, %p287
      %p289 = scmp.le.s32.totalorder 1, %s20
      %p290 = scmp.lt.s32.totalorder %s20, 3
      %p291 = pnand %p289, %p290
      %p292 = pneg %p291
      // Predicated region
      $region9: #{scoring_forward.33} parent=5 // pred_check
        _
      $region10: #{scoring_forward.33} parent=5 // pred_check_branch
        %294 = sbr.rel (%p291) target = $region12
      $region11: #{scoring_forward.33} parent=5 // pred_region
        %s295 = ssub.s32 %s20, 1
        // Predicated region
        $region13: #{scoring_forward.33} parent=11 // pred_check
          %p296 = pneg %p145
        $region14: #{scoring_forward.33} parent=11 // pred_check_branch
          %298 = sbr.rel (%p296) target = $region16
        $region15: #{scoring_forward.33} parent=11 // pred_region
          _
        $region16: #{scoring_forward.33} parent=11 // pred_fallthru
          _
        // Predicated region
        $region17: #{scoring_forward.33} parent=11 // pred_check
          %p299 = pneg %p166
        $region18: #{scoring_forward.33} parent=11 // pred_check_branch
          %301 = sbr.rel (%p299) target = $region20
        $region19: #{scoring_forward.33} parent=11 // pred_region
          _
        $region20: #{scoring_forward.33} parent=11 // pred_fallthru
          _
        // Predicated region
        $region21: #{scoring_forward.33} parent=11 // pred_check
          %p302 = pneg %p187
        $region22: #{scoring_forward.33} parent=11 // pred_check_branch
          %304 = sbr.rel (%p302) target = $region24
        $region23: #{scoring_forward.33} parent=11 // pred_region
          _
        $region24: #{scoring_forward.33} parent=11 // pred_fallthru
          _
        // Predicated region
        $region25: #{scoring_forward.33} parent=11 // pred_check
          %p305 = pneg %p208
        $region26: #{scoring_forward.33} parent=11 // pred_check_branch
          %307 = sbr.rel (%p305) target = $region28
        $region27: #{scoring_forward.33} parent=11 // pred_region
          _
        $region28: #{scoring_forward.33} parent=11 // pred_fallthru
          _
        // Predicated region
        $region29: #{scoring_forward.33} parent=11 // pred_check
          %p308 = pneg %p229
        $region30: #{scoring_forward.33} parent=11 // pred_check_branch
          %310 = sbr.rel (%p308) target = $region32
        $region31: #{scoring_forward.33} parent=11 // pred_region
          _
        $region32: #{scoring_forward.33} parent=11 // pred_fallthru
          _
      $region12: #{scoring_forward.33} parent=5 // pred_fallthru
        _
      %p311 = scmp.lt.s32.totalorder %s20, 2
      // Predicated region
      $region33: #{scoring_forward.33} parent=5 // pred_check
        %p312 = pneg %p311
      $region34: #{scoring_forward.33} parent=5 // pred_check_branch
        %314 = sbr.rel (%p312) target = $region36
      $region35: #{scoring_forward.33} parent=5 // pred_region
        // Predicated region
        $region37: #{scoring_forward.33} parent=35 // pred_check
          %p315 = pneg %p40
        $region38: #{scoring_forward.33} parent=35 // pred_check_branch
          %317 = sbr.rel (%p315) target = $region40
        $region39: #{scoring_forward.33} parent=35 // pred_region
          %p318 = scmp.lt.s32.totalorder %s20, 1
          %s319 = scalar_select %p318, %s20, 1
          %s320 = smul.addr %s319, 8
          %s321 = scalar_lea.vmem %s0, %s320
        $region40: #{scoring_forward.33} parent=35 // pred_fallthru
          _
        // Predicated region
        $region41: #{scoring_forward.33} parent=35 // pred_check
          %p322 = pneg %p66
        $region42: #{scoring_forward.33} parent=35 // pred_check_branch
          %324 = sbr.rel (%p322) target = $region44
        $region43: #{scoring_forward.33} parent=35 // pred_region
          %p325 = scmp.lt.s32.totalorder %s20, 1
          %s326 = scalar_select %p325, %s20, 1
          %s327 = smul.addr %s326, 8
          %s328 = scalar_lea.vmem %s1, %s327
        $region44: #{scoring_forward.33} parent=35 // pred_fallthru
          _
        // Predicated region
        $region45: #{scoring_forward.33} parent=35 // pred_check
          %p329 = pneg %p92
        $region46: #{scoring_forward.33} parent=35 // pred_check_branch
          %331 = sbr.rel (%p329) target = $region48
        $region47: #{scoring_forward.33} parent=35 // pred_region
          %p332 = scmp.lt.s32.totalorder %s20, 1
          %s333 = scalar_select %p332, %s20, 1
          %s334 = smul.addr %s333, 8
          %s335 = scalar_lea.vmem %s2, %s334
        $region48: #{scoring_forward.33} parent=35 // pred_fallthru
          _
        // Predicated region
        $region49: #{scoring_forward.33} parent=35 // pred_check
          %p336 = pneg %p118
        $region50: #{scoring_forward.33} parent=35 // pred_check_branch
          %338 = sbr.rel (%p336) target = $region52
        $region51: #{scoring_forward.33} parent=35 // pred_region
          %p339 = scmp.lt.s32.totalorder %s20, 1
          %s340 = scalar_select %p339, %s20, 1
          %s341 = smul.addr %s340, 8
          %s342 = scalar_lea.vmem %s3, %s341
        $region52: #{scoring_forward.33} parent=35 // pred_fallthru
          _
      $region36: #{scoring_forward.33} parent=5 // pred_fallthru
        _
      %p343 = scmp.le.s32.totalorder 1, %s20
      %p344 = scmp.lt.s32.totalorder %s20, 3
      %p345 = pnand %p343, %p344
      %p346 = pneg %p345
      // Predicated region
      $region53: #{scoring_forward.33} parent=5 // pred_check
        _
      $region54: #{scoring_forward.33} parent=5 // pred_check_branch
        %348 = sbr.rel (%p345) target = $region56
      $region55: #{scoring_forward.33} parent=5 // pred_region
        %s349 = ssub.s32 %s20, 1
        %p350 = scmp.lt.s32.totalorder %s25, 1
        %s351 = scalar_select %p350, %s25, 1
        %s352 = smul.addr %s351, 8
        %s353 = scalar_lea.vmem %s0, %s352
        %p354 = pneg %p46
        %p355 = pneg %p43
        %p356 = scmp.lt.s32.totalorder %s25, 1
        %s357 = scalar_select %p356, %s25, 1
        %s358 = smul.addr %s357, 8
        %s359 = scalar_lea.vmem %s1, %s358
        %p360 = pneg %p72
        %p361 = pneg %p69
        %p362 = scmp.lt.s32.totalorder %s25, 1
        %s363 = scalar_select %p362, %s25, 1
        %s364 = smul.addr %s363, 8
        %s365 = scalar_lea.vmem %s2, %s364
        %p366 = pneg %p98
        %p367 = pneg %p95
        %p368 = scmp.lt.s32.totalorder %s25, 1
        %s369 = scalar_select %p368, %s25, 1
        %s370 = smul.addr %s369, 8
        %s371 = scalar_lea.vmem %s3, %s370
        %p372 = pneg %p124
        %p373 = pneg %p121
        %p374 = pneg %p145
        %p375 = pneg %p142
        %p376 = pneg %p166
        %p377 = pneg %p163
        %p378 = pneg %p187
        %p379 = pneg %p184
        %p380 = pneg %p208
        %p381 = pneg %p205
        %p382 = pneg %p229
        %p383 = pneg %p226
        %p384 = pneg %p255
        %p385 = pneg %p252
        %p386 = scmp.lt.s32.totalorder %s25, 1
        %s387 = scalar_select %p386, %s25, 1
        %s388 = smul.addr %s387, 8
        %s389 = scalar_lea.vmem %s9, %s388
        %p390 = pneg %p281
        %p391 = pneg %p278
        %s392 = sand.u32 %s268, 1
        %s393 = scalar_lea.sflag [#allocation3], %s392
        %s394 = sand.u32 %s268, 1
        %s395 = smul.addr %s394, 8
        %s396 = scalar_lea.vmem [#allocation2], %s395
        %p397 = scmp.lt.s32.totalorder %s25, 1
        %s398 = scalar_select %p397, %s25, 1
        %s399 = smul.addr %s398, 8
        %s400 = scalar_lea.vmem %s0, %s399
        %p401 = scmp.lt.s32.totalorder %s25, 1
        %s402 = scalar_select %p401, %s25, 1
        %s403 = smul.addr %s402, 8
        %s404 = scalar_lea.vmem %s1, %s403
        %p405 = scmp.lt.s32.totalorder %s25, 1
        %s406 = scalar_select %p405, %s25, 1
        %s407 = smul.addr %s406, 8
        %s408 = scalar_lea.vmem %s2, %s407
        %p409 = scmp.lt.s32.totalorder %s25, 1
        %s410 = scalar_select %p409, %s25, 1
        %s411 = smul.addr %s410, 8
        %s412 = scalar_lea.vmem %s3, %s411
        %p413 = scmp.lt.s32.totalorder %s25, 1
        %s414 = scalar_select %p413, %s25, 1
        %s415 = smul.addr %s414, 8
        %s416 = scalar_lea.vmem %s9, %s415
        %v418 = vld [vmem:[%s400] sm:$0xff]
        %v419 = vld [vmem:[%s408] sm:$0xff]
        %v420 = vld [vmem:[%s404] sm:$0xff]
        %v421 = vadd.f32 %v418, %v420
        %v422 = vld [vmem:[%s412] sm:$0xff]
        %v423 = vadd.f32 %v419, %v422
        %424 = vadd.xlane.f32.xlu0 %v421
        %v425 = vpop.xlane.xlu0 %424
        %v426 = vrcp.pop 128.0
        %v427 = vmul.f32 %v425, %v426
        %v428 = vsub.f32 %v421, %v427
        %v429 = vmul.f32 %v428, %v428
        %430 = vadd.xlane.f32.xlu0 %v429
        %v431 = vpop.xlane.xlu0 %430
        %v432 = vmul.f32 %v431, %v426
        %v433 = vadd.f32 %v432, 1e-05
        %v434 = vrsqrt.pop %v433
        %v435 = vmul.f32 %v428, %v434
        %v436 = vld [vmem:[%s8 + $0x1] ss:$0 sm:$0xff]
        %v437 = vmul.f32 %v435, %v436
        %v438 = vld [vmem:[%s8 + $0x2] ss:$0 sm:$0xff]
        %v439 = vadd.f32 %v437, %v438
        %v440 = vmul.f32 %v423, %v423
        %442 = vrot.lane.b32.xlu0 %v440, 126
        %v443 = vpop.permute.xlu0 %442
        %v445 = vadd.f32 %v440, %v443
        %446 = vrot.lane.b32.xlu0 %v440, 124
        %v447 = vpop.permute.xlu0 %446
        %v449 = vadd.f32 %v445, %v447
        %v450 = vmax.f32 %v449, 1e-08
        %vm451 = vcmask 15360
        %v452 = vsel %vm451, %v450, 0.0
        %453 = vadd.xlane.f32.xlu0 %v452
        %v454 = vpop.xlane.xlu0 %453
        %v455 = vrcp.pop 2.0
        %v456 = vmul.f32 %v454, %v455
        %v457 = vrsqrt.pop %v456
        %v458 = vmul.f32 %v423, %v457
        %v459 = vld [vmem:[%s8 + $0x20] ss:$0 sm:$0xff]
        %v460 = vld [vmem:[%s8 + $0x21] ss:$0 sm:$0xff]
        %462 = vset.pattern.permute.xlu0 0
        %463 = vperm.xlu0 %462, %v458
        %v464 = vpop.permute.xlu0 %463
        %v466 = vmul.f32 %v464, %v459
        %467 = vset.pattern.permute.xlu0 1
        %468 = vperm.xlu0 %467, %v458
        %v469 = vpop.permute.xlu0 %468
        %v471 = vmul.f32 %v469, %v460
        %v472 = vadd.f32 %v466, %v471
        %473 = vset.pattern.permute.xlu0 2
        %474 = vperm.xlu0 %473, %v458
        %v475 = vpop.permute.xlu0 %474
        %v477 = vmul.f32 %v475, %v459
        %478 = vset.pattern.permute.xlu0 3
        %479 = vperm.xlu0 %478, %v458
        %v480 = vpop.permute.xlu0 %479
        %v482 = vmul.f32 %v480, %v460
        %v483 = vadd.f32 %v477, %v482
        %484 = vset.pattern.permute.xlu0 4
        %485 = vperm.xlu0 %484, %v458
        %v486 = vpop.permute.xlu0 %485
        %v488 = vmul.f32 %v486, %v459
        %489 = vset.pattern.permute.xlu0 5
        %490 = vperm.xlu0 %489, %v458
        %v491 = vpop.permute.xlu0 %490
        %v493 = vmul.f32 %v491, %v460
        %v494 = vadd.f32 %v488, %v493
        %496 = vrot.lane.b32.xlu0 %v483, 4
        %v497 = vpop.permute.xlu0 %496
        %500 = vrot.lane.b32.xlu0 %v494, 8
        %v501 = vpop.permute.xlu0 %500
        %vm503 = vcmask 31744
        %v504 = vsel %vm503, %v472, %v497
        %vm505 = vcmask 64512
        %v506 = vsel %vm505, %v504, %v501
        %v507 = vmul.f32 %v506, %v506
        %509 = vrot.lane.b32.xlu0 %v507, 124
        %v510 = vpop.permute.xlu0 %509
        %v512 = vadd.f32 %v507, %v510
        %513 = vrot.lane.b32.xlu0 %v507, 120
        %v514 = vpop.permute.xlu0 %513
        %v516 = vadd.f32 %v512, %v514
        %v517 = vmax.f32 %v516, 1e-08
        %v518 = vrsqrt.pop %v517
        %v519 = vmul.f32 %v517, %v518
        %vm520 = vcmp.eq.f32.partialorder %v517, inf
        %v521 = vsel %vm520, %v517, %v519
        %vm522 = vcmp.eq.f32.partialorder %v517, 0.0
        %v523 = vand.u32 %v517, 2147483648
        %v524 = vsel %vm522, %v523, %v521
        %v525 = vpack.c.bf16 %v439, %v439
        %v526 = vld [vmem:[%s4] sm:$0xff]
        %v527 = vld [vmem:[%s4 + $0x8] sm:$0xff]
        %v528 = vld [vmem:[%s4 + $0x10] sm:$0xff]
        %v529 = vld [vmem:[%s4 + $0x18] sm:$0xff]
        %v530 = vld [vmem:[%s4 + $0x20] sm:$0xff]
        %v531 = vld [vmem:[%s4 + $0x28] sm:$0xff]
        %v532 = vld [vmem:[%s4 + $0x30] sm:$0xff]
        %v533 = vld [vmem:[%s4 + $0x38] sm:$0xff]
        %v534 = vld [vmem:[%s4 + $0x40] sm:$0xff]
        %v535 = vld [vmem:[%s4 + $0x48] sm:$0xff]
        %v536 = vld [vmem:[%s4 + $0x50] sm:$0xff]
        %v537 = vld [vmem:[%s4 + $0x58] sm:$0xff]
        %v538 = vld [vmem:[%s4 + $0x60] sm:$0xff]
        %v539 = vld [vmem:[%s4 + $0x68] sm:$0xff]
        %v540 = vld [vmem:[%s4 + $0x70] sm:$0xff]
        %v541 = vld [vmem:[%s4 + $0x78] sm:$0xff]
        %v542 = vld [vmem:[%s4 + $0x80] sm:$0xff]
        %v543 = vld [vmem:[%s4 + $0x88] sm:$0xff]
        %v544 = vld [vmem:[%s4 + $0x90] sm:$0xff]
        %v545 = vld [vmem:[%s4 + $0x98] sm:$0xff]
        %v546 = vld [vmem:[%s4 + $0xa0] sm:$0xff]
        %v547 = vld [vmem:[%s4 + $0xa8] sm:$0xff]
        %v548 = vld [vmem:[%s4 + $0xb0] sm:$0xff]
        %v549 = vld [vmem:[%s4 + $0xb8] sm:$0xff]
        %v550 = vld [vmem:[%s4 + $0xc0] sm:$0xff]
        %v551 = vld [vmem:[%s4 + $0xc8] sm:$0xff]
        %v552 = vld [vmem:[%s4 + $0xd0] sm:$0xff]
        %v553 = vld [vmem:[%s4 + $0xd8] sm:$0xff]
        %v554 = vld [vmem:[%s4 + $0xe0] sm:$0xff]
        %v555 = vld [vmem:[%s4 + $0xe8] sm:$0xff]
        %v556 = vld [vmem:[%s4 + $0xf0] sm:$0xff]
        %v557 = vld [vmem:[%s4 + $0xf8] sm:$0xff]
        %v558 = vpack.c.bf16 %v524, %v524
        %v559 = vld [vmem:[%s5] sm:$0xff]
        %v561 = vcombine.high %v559, %v559
        %v563 = vunpack.c.l.s4 1983009808
        %v564 = vunpack.c.0.s8 %v563
        %v565 = vlaneseq
        %v566 = vshrl.u32 %v565, 7
        %v567 = vsub.s32 %v564, %v566
        %v568 = vrot.slane %v559, %v567
        %v570 = vunpack.c.l.s4 1983009808
        %v571 = vunpack.c.0.s8 %v570
        %v572 = vlaneseq
        %v573 = vshrl.u32 %v572, 7
        %v574 = vsub.s32 %v571, %v573
        %v575 = vrot.slane %v561, %v574
        %v576 = vcombine.high %v568, %v568
        %v577 = vcombine.high %v575, %v575
        %v579 = vsel %vm503, %v558, 0
        %vm581 = vcmask 1041408
        %v583 = vsel %vm581, %v568, 0
        %v586 = vsel %vm581, %v576, 0
        %v589 = vsel %vm581, %v575, 0
        %v592 = vsel %vm581, %v577, 0
        %594 = vmatprep.subr.bf16.mxu0 %v586
        %595 = vmatpush1.bf16.msra.mxu0 %v583
        %596 = vmatprep.subr.bf16.mxu0 0
        %597 = vmatpush1.bf16.msra.mxu0 0
        %598 = vmatprep.subr.bf16.mxu0 0
        %599 = vmatpush1.bf16.msra.mxu0 0
        %600 = vmatprep.subr.bf16.mxu0 0
        %601 = vmatpush1.bf16.msra.mxu0 0
        %602 = vmatprep.subr.bf16.mxu0 0
        %603 = vmatpush1.bf16.msra.mxu0 0
        %604 = vmatprep.subr.bf16.mxu0 0
        %605 = vmatpush1.bf16.msra.mxu0 0
        %606 = vmatprep.subr.bf16.mxu0 0
        %607 = vmatpush1.bf16.msra.mxu0 0
        %608 = vmatprep.subr.bf16.mxu0 0
        %609 = vmatpush1.bf16.msra.mxu0 0
        %610 = vmatprep.subr.bf16.mxu0 0
        %611 = vmatpush1.bf16.msra.mxu0 0
        %612 = vmatprep.subr.bf16.mxu0 0
        %613 = vmatpush1.bf16.msra.mxu0 0
        %614 = vmatprep.subr.bf16.mxu0 0
        %615 = vmatpush1.bf16.msra.mxu0 0
        %616 = vmatprep.subr.bf16.mxu0 0
        %617 = vmatpush1.bf16.msra.mxu0 0
        %618 = vmatprep.subr.bf16.mxu0 0
        %619 = vmatpush1.bf16.msra.mxu0 0
        %620 = vmatprep.subr.bf16.mxu0 0
        %621 = vmatpush1.bf16.msra.mxu0 0
        %622 = vmatprep.subr.bf16.mxu0 0
        %623 = vmatpush1.bf16.msra.mxu0 0
        %624 = vmatprep.subr.bf16.mxu0 0
        %625 = vmatpush1.bf16.msra.mxu0 0
        %626 = vmatprep.mubr.bf16.mxu0 0
        %627 = vmatmul.mubr.bf16.gmra.mrb[0].mxu0 %v579
        %v628 = vpop.f32.mrb[0].mxu0
        %v629 = vadd.f32 0.0, %v628
        %v630 = vpop.f32.mrb[0].mxu0
        %v631 = vadd.f32 0.0, %v630
        %v632 = vpop.f32.mrb[0].mxu0
        %v633 = vpop.f32.mrb[0].mxu0
        %634 = vdwg.mxu0
        %635 = vmatprep.subr.bf16.mxu0 %v592
        %636 = vmatpush1.bf16.msra.mxu0 %v589
        %637 = vmatprep.subr.bf16.mxu0 0
        %638 = vmatpush1.bf16.msra.mxu0 0
        %639 = vmatprep.subr.bf16.mxu0 0
        %640 = vmatpush1.bf16.msra.mxu0 0
        %641 = vmatprep.subr.bf16.mxu0 0
        %642 = vmatpush1.bf16.msra.mxu0 0
        %643 = vmatprep.subr.bf16.mxu0 0
        %644 = vmatpush1.bf16.msra.mxu0 0
        %645 = vmatprep.subr.bf16.mxu0 0
        %646 = vmatpush1.bf16.msra.mxu0 0
        %647 = vmatprep.subr.bf16.mxu0 0
        %648 = vmatpush1.bf16.msra.mxu0 0
        %649 = vmatprep.subr.bf16.mxu0 0
        %650 = vmatpush1.bf16.msra.mxu0 0
        %651 = vmatprep.subr.bf16.mxu0 0
        %652 = vmatpush1.bf16.msra.mxu0 0
        %653 = vmatprep.subr.bf16.mxu0 0
        %654 = vmatpush1.bf16.msra.mxu0 0
        %655 = vmatprep.subr.bf16.mxu0 0
        %656 = vmatpush1.bf16.msra.mxu0 0
        %657 = vmatprep.subr.bf16.mxu0 0
        %658 = vmatpush1.bf16.msra.mxu0 0
        %659 = vmatprep.subr.bf16.mxu0 0
        %660 = vmatpush1.bf16.msra.mxu0 0
        %661 = vmatprep.subr.bf16.mxu0 0
        %662 = vmatpush1.bf16.msra.mxu0 0
        %663 = vmatprep.subr.bf16.mxu0 0
        %664 = vmatpush1.bf16.msra.mxu0 0
        %665 = vmatprep.subr.bf16.mxu0 0
        %666 = vmatpush1.bf16.msra.mxu0 0
        %667 = vmatprep.mubr.bf16.mxu0 0
        %668 = vmatmul.mubr.bf16.gmra.mrb[0].mxu0 %v579
        %v669 = vpop.f32.mrb[0].mxu0
        %v670 = vadd.f32 0.0, %v669
        %v671 = vpop.f32.mrb[0].mxu0
        %v672 = vadd.f32 0.0, %v671
        %v673 = vpop.f32.mrb[0].mxu0
        %v674 = vpop.f32.mrb[0].mxu0
        %675 = vdwg.mxu0
        %v708 = vunpack.c.l.b16 %v526
        %v709 = vunpack.c.h.b16 %v526
        %v710 = vunpack.c.l.b16 %v527
        %v711 = vunpack.c.h.b16 %v527
        %v712 = vunpack.c.l.b16 %v528
        %v713 = vunpack.c.h.b16 %v528
        %v714 = vunpack.c.l.b16 %v529
        %v715 = vunpack.c.h.b16 %v529
        %v716 = vunpack.c.l.b16 %v530
        %v717 = vunpack.c.h.b16 %v530
        %v718 = vunpack.c.l.b16 %v531
        %v719 = vunpack.c.h.b16 %v531
        %v720 = vunpack.c.l.b16 %v532
        %v721 = vunpack.c.h.b16 %v532
        %v722 = vunpack.c.l.b16 %v533
        %v723 = vunpack.c.h.b16 %v533
        %v724 = vunpack.c.l.b16 %v534
        %v725 = vunpack.c.h.b16 %v534
        %v726 = vunpack.c.l.b16 %v535
        %v727 = vunpack.c.h.b16 %v535
        %v728 = vunpack.c.l.b16 %v536
        %v729 = vunpack.c.h.b16 %v536
        %v730 = vunpack.c.l.b16 %v537
        %v731 = vunpack.c.h.b16 %v537
        %v732 = vunpack.c.l.b16 %v538
        %v733 = vunpack.c.h.b16 %v538
        %v734 = vunpack.c.l.b16 %v539
        %v735 = vunpack.c.h.b16 %v539
        %v736 = vunpack.c.l.b16 %v540
        %v737 = vunpack.c.h.b16 %v540
        %v738 = vunpack.c.l.b16 %v541
        %v739 = vunpack.c.h.b16 %v541
        %v740 = vunpack.c.l.b16 %v542
        %v741 = vunpack.c.h.b16 %v542
        %v742 = vunpack.c.l.b16 %v543
        %v743 = vunpack.c.h.b16 %v543
        %v744 = vunpack.c.l.b16 %v544
        %v745 = vunpack.c.h.b16 %v544
        %v746 = vunpack.c.l.b16 %v545
        %v747 = vunpack.c.h.b16 %v545
        %v748 = vunpack.c.l.b16 %v546
        %v749 = vunpack.c.h.b16 %v546
        %v750 = vunpack.c.l.b16 %v547
        %v751 = vunpack.c.h.b16 %v547
        %v752 = vunpack.c.l.b16 %v548
        %v753 = vunpack.c.h.b16 %v548
        %v754 = vunpack.c.l.b16 %v549
        %v755 = vunpack.c.h.b16 %v549
        %v756 = vunpack.c.l.b16 %v550
        %v757 = vunpack.c.h.b16 %v550
        %v758 = vunpack.c.l.b16 %v551
        %v759 = vunpack.c.h.b16 %v551
        %v760 = vunpack.c.l.b16 %v552
        %v761 = vunpack.c.h.b16 %v552
        %v762 = vunpack.c.l.b16 %v553
        %v763 = vunpack.c.h.b16 %v553
        %v764 = vunpack.c.l.b16 %v554
        %v765 = vunpack.c.h.b16 %v554
        %v766 = vunpack.c.l.b16 %v555
        %v767 = vunpack.c.h.b16 %v555
        %v768 = vunpack.c.l.b16 %v556
        %v769 = vunpack.c.h.b16 %v556
        %v770 = vunpack.c.l.b16 %v557
        %v771 = vunpack.c.h.b16 %v557
        %v772 = vpack.c.b16 %v712, %v708
        %v773 = vpack.c.b16 %v713, %v709
        %v774 = vpack.c.b16 %v714, %v710
        %v775 = vpack.c.b16 %v715, %v711
        %v776 = vpack.c.b16 %v720, %v716
        %v777 = vpack.c.b16 %v721, %v717
        %v778 = vpack.c.b16 %v722, %v718
        %v779 = vpack.c.b16 %v723, %v719
        %v780 = vpack.c.b16 %v728, %v724
        %v781 = vpack.c.b16 %v729, %v725
        %v782 = vpack.c.b16 %v730, %v726
        %v783 = vpack.c.b16 %v731, %v727
        %v784 = vpack.c.b16 %v736, %v732
        %v785 = vpack.c.b16 %v737, %v733
        %v786 = vpack.c.b16 %v738, %v734
        %v787 = vpack.c.b16 %v739, %v735
        %v788 = vpack.c.b16 %v744, %v740
        %v789 = vpack.c.b16 %v745, %v741
        %v790 = vpack.c.b16 %v746, %v742
        %v791 = vpack.c.b16 %v747, %v743
        %v792 = vpack.c.b16 %v752, %v748
        %v793 = vpack.c.b16 %v753, %v749
        %v794 = vpack.c.b16 %v754, %v750
        %v795 = vpack.c.b16 %v755, %v751
        %v796 = vpack.c.b16 %v760, %v756
        %v797 = vpack.c.b16 %v761, %v757
        %v798 = vpack.c.b16 %v762, %v758
        %v799 = vpack.c.b16 %v763, %v759
        %v800 = vpack.c.b16 %v768, %v764
        %v801 = vpack.c.b16 %v769, %v765
        %v802 = vpack.c.b16 %v770, %v766
        %v803 = vpack.c.b16 %v771, %v767
        %836 = vmatprep.subr.bf16.mxu0 %v773
        %837 = vmatpush1.bf16.msra.mxu0 %v772
        %838 = vmatprep.subr.bf16.mxu0 %v777
        %839 = vmatpush1.bf16.msra.mxu0 %v776
        %840 = vmatprep.subr.bf16.mxu0 %v781
        %841 = vmatpush1.bf16.msra.mxu0 %v780
        %842 = vmatprep.subr.bf16.mxu0 %v785
        %843 = vmatpush1.bf16.msra.mxu0 %v784
        %844 = vmatprep.subr.bf16.mxu0 %v789
        %845 = vmatpush1.bf16.msra.mxu0 %v788
        %846 = vmatprep.subr.bf16.mxu0 %v793
        %847 = vmatpush1.bf16.msra.mxu0 %v792
        %848 = vmatprep.subr.bf16.mxu0 %v797
        %849 = vmatpush1.bf16.msra.mxu0 %v796
        %850 = vmatprep.subr.bf16.mxu0 %v801
        %851 = vmatpush1.bf16.msra.mxu0 %v800
        %852 = vmatprep.subr.bf16.mxu0 0
        %853 = vmatpush1.bf16.msra.mxu0 0
        %854 = vmatprep.subr.bf16.mxu0 0
        %855 = vmatpush1.bf16.msra.mxu0 0
        %856 = vmatprep.subr.bf16.mxu0 0
        %857 = vmatpush1.bf16.msra.mxu0 0
        %858 = vmatprep.subr.bf16.mxu0 0
        %859 = vmatpush1.bf16.msra.mxu0 0
        %860 = vmatprep.subr.bf16.mxu0 0
        %861 = vmatpush1.bf16.msra.mxu0 0
        %862 = vmatprep.subr.bf16.mxu0 0
        %863 = vmatpush1.bf16.msra.mxu0 0
        %864 = vmatprep.subr.bf16.mxu0 0
        %865 = vmatpush1.bf16.msra.mxu0 0
        %866 = vmatprep.subr.bf16.mxu0 0
        %867 = vmatpush1.bf16.msra.mxu0 0
        %868 = vmatprep.mubr.bf16.mxu0 0
        %869 = vmatmul.mubr.bf16.gmra.mrb[0].mxu0 %v525
        %v870 = vpop.f32.mrb[0].mxu0
        %v871 = vadd.f32 %v629, %v870
        %v872 = vpop.f32.mrb[0].mxu0
        %v873 = vadd.f32 %v631, %v872
        %v874 = vpop.f32.mrb[0].mxu0
        %v875 = vpop.f32.mrb[0].mxu0
        %876 = vdwg.mxu0
        %877 = vmatprep.subr.bf16.mxu0 %v775
        %878 = vmatpush1.bf16.msra.mxu0 %v774
        %879 = vmatprep.subr.bf16.mxu0 %v779
        %880 = vmatpush1.bf16.msra.mxu0 %v778
        %881 = vmatprep.subr.bf16.mxu0 %v783
        %882 = vmatpush1.bf16.msra.mxu0 %v782
        %883 = vmatprep.subr.bf16.mxu0 %v787
        %884 = vmatpush1.bf16.msra.mxu0 %v786
        %885 = vmatprep.subr.bf16.mxu0 %v791
        %886 = vmatpush1.bf16.msra.mxu0 %v790
        %887 = vmatprep.subr.bf16.mxu0 %v795
        %888 = vmatpush1.bf16.msra.mxu0 %v794
        %889 = vmatprep.subr.bf16.mxu0 %v799
        %890 = vmatpush1.bf16.msra.mxu0 %v798
        %891 = vmatprep.subr.bf16.mxu0 %v803
        %892 = vmatpush1.bf16.msra.mxu0 %v802
        %893 = vmatprep.subr.bf16.mxu0 0
        %894 = vmatpush1.bf16.msra.mxu0 0
        %895 = vmatprep.subr.bf16.mxu0 0
        %896 = vmatpush1.bf16.msra.mxu0 0
        %897 = vmatprep.subr.bf16.mxu0 0
        %898 = vmatpush1.bf16.msra.mxu0 0
        %899 = vmatprep.subr.bf16.mxu0 0
        %900 = vmatpush1.bf16.msra.mxu0 0
        %901 = vmatprep.subr.bf16.mxu0 0
        %902 = vmatpush1.bf16.msra.mxu0 0
        %903 = vmatprep.subr.bf16.mxu0 0
        %904 = vmatpush1.bf16.msra.mxu0 0
        %905 = vmatprep.subr.bf16.mxu0 0
        %906 = vmatpush1.bf16.msra.mxu0 0
        %907 = vmatprep.subr.bf16.mxu0 0
        %908 = vmatpush1.bf16.msra.mxu0 0
        %909 = vmatprep.mubr.bf16.mxu0 0
        %910 = vmatmul.mubr.bf16.gmra.mrb[0].mxu0 %v525
        %v911 = vpop.f32.mrb[0].mxu0
        %v912 = vadd.f32 %v670, %v911
        %v913 = vpop.f32.mrb[0].mxu0
        %v914 = vadd.f32 %v672, %v913
        %v915 = vpop.f32.mrb[0].mxu0
        %v916 = vpop.f32.mrb[0].mxu0
        %917 = vdwg.mxu0
        %v918 = vld [vmem:[%s8] ss:$8 sm:$0xf]
        %v920 = vlaneseq
        %v921 = vshrl.u32 %v920, 7
        %v922 = vsub.s32 0, %v921
        %v923 = vrot.slane %v918, %v922
        %v924 = vlaneseq
        %v925 = vshrl.u32 %v924, 7
        %v926 = vsub.s32 1, %v925
        %v927 = vrot.slane %v918, %v926
        %v928 = vlaneseq
        %v929 = vshrl.u32 %v928, 7
        %v930 = vsub.s32 2, %v929
        %v931 = vrot.slane %v918, %v930
        %v932 = vlaneseq
        %v933 = vshrl.u32 %v932, 7
        %v934 = vsub.s32 3, %v933
        %v935 = vrot.slane %v918, %v934
        %v940 = vadd.f32 %v871, %v923
        %v941 = vadd.f32 %v873, %v927
        %v942 = vadd.f32 %v912, %v931
        %v943 = vadd.f32 %v914, %v935
        %v944 = vld [vmem:[%s8 + $0x24] ss:$0 sm:$0xff]
        %v945 = vld [vmem:[%s8 + $0x25] ss:$0 sm:$0xff]
        %v946 = vld [vmem:[%s8 + $0x26] ss:$0 sm:$0xff]
        %v947 = vld [vmem:[%s8 + $0x27] ss:$0 sm:$0xff]
        %949 = vset.pattern.permute.xlu0 0
        %950 = vperm.xlu0 %949, %v506
        %v951 = vpop.permute.xlu0 %950
        %v953 = vmul.f32 %v951, %v944
        %954 = vset.pattern.permute.xlu0 1
        %955 = vperm.xlu0 %954, %v506
        %v956 = vpop.permute.xlu0 %955
        %v958 = vmul.f32 %v956, %v945
        %v959 = vadd.f32 %v953, %v958
        %960 = vset.pattern.permute.xlu0 2
        %961 = vperm.xlu0 %960, %v506
        %v962 = vpop.permute.xlu0 %961
        %v964 = vmul.f32 %v962, %v946
        %v965 = vadd.f32 %v959, %v964
        %966 = vset.pattern.permute.xlu0 3
        %967 = vperm.xlu0 %966, %v506
        %v968 = vpop.permute.xlu0 %967
        %v970 = vmul.f32 %v968, %v947
        %v971 = vadd.f32 %v965, %v970
        %972 = vset.pattern.permute.xlu0 4
        %973 = vperm.xlu0 %972, %v506
        %v974 = vpop.permute.xlu0 %973
        %v976 = vmul.f32 %v974, %v944
        %977 = vset.pattern.permute.xlu0 5
        %978 = vperm.xlu0 %977, %v506
        %v979 = vpop.permute.xlu0 %978
        %v981 = vmul.f32 %v979, %v945
        %v982 = vadd.f32 %v976, %v981
        %983 = vset.pattern.permute.xlu0 6
        %984 = vperm.xlu0 %983, %v506
        %v985 = vpop.permute.xlu0 %984
        %v987 = vmul.f32 %v985, %v946
        %v988 = vadd.f32 %v982, %v987
        %989 = vset.pattern.permute.xlu0 7
        %990 = vperm.xlu0 %989, %v506
        %v991 = vpop.permute.xlu0 %990
        %v993 = vmul.f32 %v991, %v947
        %v994 = vadd.f32 %v988, %v993
        %995 = vset.pattern.permute.xlu0 8
        %996 = vperm.xlu0 %995, %v506
        %v997 = vpop.permute.xlu0 %996
        %v999 = vmul.f32 %v997, %v944
        %1000 = vset.pattern.permute.xlu0 9
        %1001 = vperm.xlu0 %1000, %v506
        %v1002 = vpop.permute.xlu0 %1001
        %v1004 = vmul.f32 %v1002, %v945
        %v1005 = vadd.f32 %v999, %v1004
        %1006 = vset.pattern.permute.xlu0 10
        %1007 = vperm.xlu0 %1006, %v506
        %v1008 = vpop.permute.xlu0 %1007
        %v1010 = vmul.f32 %v1008, %v946
        %v1011 = vadd.f32 %v1005, %v1010
        %1012 = vset.pattern.permute.xlu0 11
        %1013 = vperm.xlu0 %1012, %v506
        %v1014 = vpop.permute.xlu0 %1013
        %v1016 = vmul.f32 %v1014, %v947
        %v1017 = vadd.f32 %v1011, %v1016
        %1019 = vrot.lane.b32.xlu0 %v994, 4
        %v1020 = vpop.permute.xlu0 %1019
        %1023 = vrot.lane.b32.xlu0 %v1017, 8
        %v1024 = vpop.permute.xlu0 %1023
        %v1026 = vsel %vm503, %v971, %v1020
        %v1027 = vsel %vm505, %v1026, %v1024
        %v1028 = vmul.f32 %v1027, %v1027
        %1030 = vrot.lane.b32.xlu0 %v1028, 124
        %v1031 = vpop.permute.xlu0 %1030
        %v1033 = vadd.f32 %v1028, %v1031
        %1034 = vrot.lane.b32.xlu0 %v1028, 120
        %v1035 = vpop.permute.xlu0 %1034
        %v1037 = vadd.f32 %v1033, %v1035
        %v1038 = vmax.f32 %v1037, 1e-08
        %v1039 = vrsqrt.pop %v1038
        %v1040 = vmul.f32 %v1038, %v1039
        %vm1041 = vcmp.eq.f32.partialorder %v1038, inf
        %v1042 = vsel %vm1041, %v1038, %v1040
        %vm1043 = vcmp.eq.f32.partialorder %v1038, 0.0
        %v1044 = vand.u32 %v1038, 2147483648
        %v1045 = vsel %vm1043, %v1044, %v1042
        %v1046 = vxor.u32 %v1045, 2147483648
        %v1047 = vmul.f32 %v1046, 1.442695
        %v1048 = vpow.pop %v1047
        %v1049 = vadd.f32 %v1048, 1.0
        %v1050 = vrcp.pop %v1049
        %v1051 = vmul.f32 1.0, %v1050
        %1053 = vrot.lane.b32.xlu0 %v1051, 4
        %v1054 = vpop.permute.xlu0 %1053
        %1056 = vrot.lane.b32.xlu0 %v1051, 8
        %v1057 = vpop.permute.xlu0 %1056
        %v1059 = vsel %vm503, %v1051, %v1054
        %v1060 = vsel %vm505, %v1059, %v1057
        %v1061 = vmul.f32 %v1027, %v1060
        %v1062 = vmax.f32 %v940, 0.0
        %v1063 = vmax.f32 %v941, 0.0
        %v1064 = vmax.f32 %v942, 0.0
        %v1065 = vmax.f32 %v943, 0.0
        %v1066 = vld [vmem:[%s8 + $0x40] ss:$0 sm:$0xff]
        %v1067 = vld [vmem:[%s8 + $0x41] ss:$0 sm:$0xff]
        %v1068 = vld [vmem:[%s8 + $0x42] ss:$0 sm:$0xff]
        %v1069 = vld [vmem:[%s8 + $0x43] ss:$0 sm:$0xff]
        %1071 = vset.pattern.permute.xlu0 0
        %1072 = vperm.xlu0 %1071, %v1061
        %v1073 = vpop.permute.xlu0 %1072
        %v1075 = vmul.f32 %v1073, %v1066
        %1076 = vset.pattern.permute.xlu0 1
        %1077 = vperm.xlu0 %1076, %v1061
        %v1078 = vpop.permute.xlu0 %1077
        %v1080 = vmul.f32 %v1078, %v1067
        %v1081 = vadd.f32 %v1075, %v1080
        %1082 = vset.pattern.permute.xlu0 2
        %1083 = vperm.xlu0 %1082, %v1061
        %v1084 = vpop.permute.xlu0 %1083
        %v1086 = vmul.f32 %v1084, %v1068
        %v1087 = vadd.f32 %v1081, %v1086
        %1088 = vset.pattern.permute.xlu0 3
        %1089 = vperm.xlu0 %1088, %v1061
        %v1090 = vpop.permute.xlu0 %1089
        %v1092 = vmul.f32 %v1090, %v1069
        %v1093 = vadd.f32 %v1087, %v1092
        %1094 = vset.pattern.permute.xlu0 4
        %1095 = vperm.xlu0 %1094, %v1061
        %v1096 = vpop.permute.xlu0 %1095
        %v1098 = vmul.f32 %v1096, %v1066
        %1099 = vset.pattern.permute.xlu0 5
        %1100 = vperm.xlu0 %1099, %v1061
        %v1101 = vpop.permute.xlu0 %1100
        %v1103 = vmul.f32 %v1101, %v1067
        %v1104 = vadd.f32 %v1098, %v1103
        %1105 = vset.pattern.permute.xlu0 6
        %1106 = vperm.xlu0 %1105, %v1061
        %v1107 = vpop.permute.xlu0 %1106
        %v1109 = vmul.f32 %v1107, %v1068
        %v1110 = vadd.f32 %v1104, %v1109
        %1111 = vset.pattern.permute.xlu0 7
        %1112 = vperm.xlu0 %1111, %v1061
        %v1113 = vpop.permute.xlu0 %1112
        %v1115 = vmul.f32 %v1113, %v1069
        %v1116 = vadd.f32 %v1110, %v1115
        %1117 = vset.pattern.permute.xlu0 8
        %1118 = vperm.xlu0 %1117, %v1061
        %v1119 = vpop.permute.xlu0 %1118
        %v1121 = vmul.f32 %v1119, %v1066
        %1122 = vset.pattern.permute.xlu0 9
        %1123 = vperm.xlu0 %1122, %v1061
        %v1124 = vpop.permute.xlu0 %1123
        %v1126 = vmul.f32 %v1124, %v1067
        %v1127 = vadd.f32 %v1121, %v1126
        %1128 = vset.pattern.permute.xlu0 10
        %1129 = vperm.xlu0 %1128, %v1061
        %v1130 = vpop.permute.xlu0 %1129
        %v1132 = vmul.f32 %v1130, %v1068
        %v1133 = vadd.f32 %v1127, %v1132
        %1134 = vset.pattern.permute.xlu0 11
        %1135 = vperm.xlu0 %1134, %v1061
        %v1136 = vpop.permute.xlu0 %1135
        %v1138 = vmul.f32 %v1136, %v1069
        %v1139 = vadd.f32 %v1133, %v1138
        %1141 = vrot.lane.b32.xlu0 %v1116, 4
        %v1142 = vpop.permute.xlu0 %1141
        %1145 = vrot.lane.b32.xlu0 %v1139, 8
        %v1146 = vpop.permute.xlu0 %1145
        %v1148 = vsel %vm503, %v1093, %v1142
        %v1149 = vsel %vm505, %v1148, %v1146
        %v1150 = vmul.f32 %v1149, %v1149
        %1152 = vrot.lane.b32.xlu0 %v1150, 124
        %v1153 = vpop.permute.xlu0 %1152
        %v1155 = vadd.f32 %v1150, %v1153
        %1156 = vrot.lane.b32.xlu0 %v1150, 120
        %v1157 = vpop.permute.xlu0 %1156
        %v1159 = vadd.f32 %v1155, %v1157
        %v1160 = vmax.f32 %v1159, 1e-08
        %v1161 = vrsqrt.pop %v1160
        %v1162 = vmul.f32 %v1160, %v1161
        %vm1163 = vcmp.eq.f32.partialorder %v1160, inf
        %v1164 = vsel %vm1163, %v1160, %v1162
        %vm1165 = vcmp.eq.f32.partialorder %v1160, 0.0
        %v1166 = vand.u32 %v1160, 2147483648
        %v1167 = vsel %vm1165, %v1166, %v1164
        %v1168 = vpack.c.bf16 %v1062, %v1062
        %v1169 = vpack.c.bf16 %v1063, %v1063
        %v1170 = vpack.c.bf16 %v1064, %v1064
        %v1171 = vpack.c.bf16 %v1065, %v1065
        %v1172 = vld [vmem:[%s6] sm:$0xf]
        %v1173 = vld [vmem:[%s6 + $0x4] sm:$0xf]
        %v1174 = vld [vmem:[%s6 + $0x8] sm:$0xf]
        %v1175 = vld [vmem:[%s6 + $0xc] sm:$0xf]
        %v1176 = vld [vmem:[%s6 + $0x10] sm:$0xf]
        %v1177 = vld [vmem:[%s6 + $0x14] sm:$0xf]
        %v1178 = vld [vmem:[%s6 + $0x18] sm:$0xf]
        %v1179 = vld [vmem:[%s6 + $0x1c] sm:$0xf]
        %v1180 = vld [vmem:[%s6 + $0x20] sm:$0xf]
        %v1181 = vld [vmem:[%s6 + $0x24] sm:$0xf]
        %v1182 = vld [vmem:[%s6 + $0x28] sm:$0xf]
        %v1183 = vld [vmem:[%s6 + $0x2c] sm:$0xf]
        %v1184 = vld [vmem:[%s6 + $0x30] sm:$0xf]
        %v1185 = vld [vmem:[%s6 + $0x34] sm:$0xf]
        %v1186 = vld [vmem:[%s6 + $0x38] sm:$0xf]
        %v1187 = vld [vmem:[%s6 + $0x3c] sm:$0xf]
        %v1188 = vld [vmem:[%s6 + $0x40] sm:$0xf]
        %v1189 = vld [vmem:[%s6 + $0x44] sm:$0xf]
        %v1190 = vld [vmem:[%s6 + $0x48] sm:$0xf]
        %v1191 = vld [vmem:[%s6 + $0x4c] sm:$0xf]
        %v1192 = vld [vmem:[%s6 + $0x50] sm:$0xf]
        %v1193 = vld [vmem:[%s6 + $0x54] sm:$0xf]
        %v1194 = vld [vmem:[%s6 + $0x58] sm:$0xf]
        %v1195 = vld [vmem:[%s6 + $0x5c] sm:$0xf]
        %v1196 = vld [vmem:[%s6 + $0x60] sm:$0xf]
        %v1197 = vld [vmem:[%s6 + $0x64] sm:$0xf]
        %v1198 = vld [vmem:[%s6 + $0x68] sm:$0xf]
        %v1199 = vld [vmem:[%s6 + $0x6c] sm:$0xf]
        %v1200 = vld [vmem:[%s6 + $0x70] sm:$0xf]
        %v1201 = vld [vmem:[%s6 + $0x74] sm:$0xf]
        %v1202 = vld [vmem:[%s6 + $0x78] sm:$0xf]
        %v1203 = vld [vmem:[%s6 + $0x7c] sm:$0xf]
        %v1204 = vld [vmem:[%s6 + $0x80] sm:$0xf]
        %v1205 = vld [vmem:[%s6 + $0x84] sm:$0xf]
        %v1206 = vld [vmem:[%s6 + $0x88] sm:$0xf]
        %v1207 = vld [vmem:[%s6 + $0x8c] sm:$0xf]
        %v1208 = vld [vmem:[%s6 + $0x90] sm:$0xf]
        %v1209 = vld [vmem:[%s6 + $0x94] sm:$0xf]
        %v1210 = vld [vmem:[%s6 + $0x98] sm:$0xf]
        %v1211 = vld [vmem:[%s6 + $0x9c] sm:$0xf]
        %v1212 = vld [vmem:[%s6 + $0xa0] sm:$0xf]
        %v1213 = vld [vmem:[%s6 + $0xa4] sm:$0xf]
        %v1214 = vld [vmem:[%s6 + $0xa8] sm:$0xf]
        %v1215 = vld [vmem:[%s6 + $0xac] sm:$0xf]
        %v1216 = vld [vmem:[%s6 + $0xb0] sm:$0xf]
        %v1217 = vld [vmem:[%s6 + $0xb4] sm:$0xf]
        %v1218 = vld [vmem:[%s6 + $0xb8] sm:$0xf]
        %v1219 = vld [vmem:[%s6 + $0xbc] sm:$0xf]
        %v1220 = vld [vmem:[%s6 + $0xc0] sm:$0xf]
        %v1221 = vld [vmem:[%s6 + $0xc4] sm:$0xf]
        %v1222 = vld [vmem:[%s6 + $0xc8] sm:$0xf]
        %v1223 = vld [vmem:[%s6 + $0xcc] sm:$0xf]
        %v1224 = vld [vmem:[%s6 + $0xd0] sm:$0xf]
        %v1225 = vld [vmem:[%s6 + $0xd4] sm:$0xf]
        %v1226 = vld [vmem:[%s6 + $0xd8] sm:$0xf]
        %v1227 = vld [vmem:[%s6 + $0xdc] sm:$0xf]
        %v1228 = vld [vmem:[%s6 + $0xe0] sm:$0xf]
        %v1229 = vld [vmem:[%s6 + $0xe4] sm:$0xf]
        %v1230 = vld [vmem:[%s6 + $0xe8] sm:$0xf]
        %v1231 = vld [vmem:[%s6 + $0xec] sm:$0xf]
        %v1232 = vld [vmem:[%s6 + $0xf0] sm:$0xf]
        %v1233 = vld [vmem:[%s6 + $0xf4] sm:$0xf]
        %v1234 = vld [vmem:[%s6 + $0xf8] sm:$0xf]
        %v1235 = vld [vmem:[%s6 + $0xfc] sm:$0xf]
        %v1236 = vpack.c.bf16 %v1167, %v1167
        %v1237 = vld [vmem:[%s7] sm:$0x3]
        %v1239 = vsel %vm503, %v1236, 0
        %v1242 = vsel %vm581, %v1237, 0
        %1244 = vmatprep.subr.bf16.mxu0 0
        %1245 = vmatpush1.bf16.msra.mxu0 %v1242
        %1246 = vmatprep.subr.bf16.mxu0 0
        %1247 = vmatpush1.bf16.msra.mxu0 0
        %1248 = vmatprep.subr.bf16.mxu0 0
        %1249 = vmatpush1.bf16.msra.mxu0 0
        %1250 = vmatprep.subr.bf16.mxu0 0
        %1251 = vmatpush1.bf16.msra.mxu0 0
        %1252 = vmatprep.subr.bf16.mxu0 0
        %1253 = vmatpush1.bf16.msra.mxu0 0
        %1254 = vmatprep.subr.bf16.mxu0 0
        %1255 = vmatpush1.bf16.msra.mxu0 0
        %1256 = vmatprep.subr.bf16.mxu0 0
        %1257 = vmatpush1.bf16.msra.mxu0 0
        %1258 = vmatprep.subr.bf16.mxu0 0
        %1259 = vmatpush1.bf16.msra.mxu0 0
        %1260 = vmatprep.subr.bf16.mxu0 0
        %1261 = vmatpush1.bf16.msra.mxu0 0
        %1262 = vmatprep.subr.bf16.mxu0 0
        %1263 = vmatpush1.bf16.msra.mxu0 0
        %1264 = vmatprep.subr.bf16.mxu0 0
        %1265 = vmatpush1.bf16.msra.mxu0 0
        %1266 = vmatprep.subr.bf16.mxu0 0
        %1267 = vmatpush1.bf16.msra.mxu0 0
        %1268 = vmatprep.subr.bf16.mxu0 0
        %1269 = vmatpush1.bf16.msra.mxu0 0
        %1270 = vmatprep.subr.bf16.mxu0 0
        %1271 = vmatpush1.bf16.msra.mxu0 0
        %1272 = vmatprep.subr.bf16.mxu0 0
        %1273 = vmatpush1.bf16.msra.mxu0 0
        %1274 = vmatprep.subr.bf16.mxu0 0
        %1275 = vmatpush1.bf16.msra.mxu0 0
        %1276 = vmatprep.mubr.bf16.mxu0 0
        %1277 = vmatmul.mubr.bf16.gmra.mrb[0].mxu0 %v1239
        %v1278 = vpop.f32.mrb[0].mxu0
        %v1279 = vadd.f32 0.0, %v1278
        %v1280 = vpop.f32.mrb[0].mxu0
        %v1281 = vpop.f32.mrb[0].mxu0
        %v1282 = vpop.f32.mrb[0].mxu0
        %1283 = vdwg.mxu0
        %v1348 = vunpack.c.l.b16 %v1172
        %v1349 = vunpack.c.l.b16 %v1173
        %v1350 = vunpack.c.l.b16 %v1174
        %v1351 = vunpack.c.l.b16 %v1175
        %v1352 = vunpack.c.l.b16 %v1176
        %v1353 = vunpack.c.l.b16 %v1177
        %v1354 = vunpack.c.l.b16 %v1178
        %v1355 = vunpack.c.l.b16 %v1179
        %v1356 = vunpack.c.l.b16 %v1180
        %v1357 = vunpack.c.l.b16 %v1181
        %v1358 = vunpack.c.l.b16 %v1182
        %v1359 = vunpack.c.l.b16 %v1183
        %v1360 = vunpack.c.l.b16 %v1184
        %v1361 = vunpack.c.l.b16 %v1185
        %v1362 = vunpack.c.l.b16 %v1186
        %v1363 = vunpack.c.l.b16 %v1187
        %v1364 = vunpack.c.l.b16 %v1188
        %v1365 = vunpack.c.l.b16 %v1189
        %v1366 = vunpack.c.l.b16 %v1190
        %v1367 = vunpack.c.l.b16 %v1191
        %v1368 = vunpack.c.l.b16 %v1192
        %v1369 = vunpack.c.l.b16 %v1193
        %v1370 = vunpack.c.l.b16 %v1194
        %v1371 = vunpack.c.l.b16 %v1195
        %v1372 = vunpack.c.l.b16 %v1196
        %v1373 = vunpack.c.l.b16 %v1197
        %v1374 = vunpack.c.l.b16 %v1198
        %v1375 = vunpack.c.l.b16 %v1199
        %v1376 = vunpack.c.l.b16 %v1200
        %v1377 = vunpack.c.l.b16 %v1201
        %v1378 = vunpack.c.l.b16 %v1202
        %v1379 = vunpack.c.l.b16 %v1203
        %v1380 = vunpack.c.l.b16 %v1204
        %v1381 = vunpack.c.l.b16 %v1205
        %v1382 = vunpack.c.l.b16 %v1206
        %v1383 = vunpack.c.l.b16 %v1207
        %v1384 = vunpack.c.l.b16 %v1208
        %v1385 = vunpack.c.l.b16 %v1209
        %v1386 = vunpack.c.l.b16 %v1210
        %v1387 = vunpack.c.l.b16 %v1211
        %v1388 = vunpack.c.l.b16 %v1212
        %v1389 = vunpack.c.l.b16 %v1213
        %v1390 = vunpack.c.l.b16 %v1214
        %v1391 = vunpack.c.l.b16 %v1215
        %v1392 = vunpack.c.l.b16 %v1216
        %v1393 = vunpack.c.l.b16 %v1217
        %v1394 = vunpack.c.l.b16 %v1218
        %v1395 = vunpack.c.l.b16 %v1219
        %v1396 = vunpack.c.l.b16 %v1220
        %v1397 = vunpack.c.l.b16 %v1221
        %v1398 = vunpack.c.l.b16 %v1222
        %v1399 = vunpack.c.l.b16 %v1223
        %v1400 = vunpack.c.l.b16 %v1224
        %v1401 = vunpack.c.l.b16 %v1225
        %v1402 = vunpack.c.l.b16 %v1226
        %v1403 = vunpack.c.l.b16 %v1227
        %v1404 = vunpack.c.l.b16 %v1228
        %v1405 = vunpack.c.l.b16 %v1229
        %v1406 = vunpack.c.l.b16 %v1230
        %v1407 = vunpack.c.l.b16 %v1231
        %v1408 = vunpack.c.l.b16 %v1232
        %v1409 = vunpack.c.l.b16 %v1233
        %v1410 = vunpack.c.l.b16 %v1234
        %v1411 = vunpack.c.l.b16 %v1235
        %v1412 = vpack.c.b16 %v1349, %v1348
        %v1413 = vpack.c.b16 %v1351, %v1350
        %v1414 = vpack.c.b16 %v1353, %v1352
        %v1415 = vpack.c.b16 %v1355, %v1354
        %v1416 = vpack.c.b16 %v1357, %v1356
        %v1417 = vpack.c.b16 %v1359, %v1358
        %v1418 = vpack.c.b16 %v1361, %v1360
        %v1419 = vpack.c.b16 %v1363, %v1362
        %v1420 = vpack.c.b16 %v1365, %v1364
        %v1421 = vpack.c.b16 %v1367, %v1366
        %v1422 = vpack.c.b16 %v1369, %v1368
        %v1423 = vpack.c.b16 %v1371, %v1370
        %v1424 = vpack.c.b16 %v1373, %v1372
        %v1425 = vpack.c.b16 %v1375, %v1374
        %v1426 = vpack.c.b16 %v1377, %v1376
        %v1427 = vpack.c.b16 %v1379, %v1378
        %v1428 = vpack.c.b16 %v1381, %v1380
        %v1429 = vpack.c.b16 %v1383, %v1382
        %v1430 = vpack.c.b16 %v1385, %v1384
        %v1431 = vpack.c.b16 %v1387, %v1386
        %v1432 = vpack.c.b16 %v1389, %v1388
        %v1433 = vpack.c.b16 %v1391, %v1390
        %v1434 = vpack.c.b16 %v1393, %v1392
        %v1435 = vpack.c.b16 %v1395, %v1394
        %v1436 = vpack.c.b16 %v1397, %v1396
        %v1437 = vpack.c.b16 %v1399, %v1398
        %v1438 = vpack.c.b16 %v1401, %v1400
        %v1439 = vpack.c.b16 %v1403, %v1402
        %v1440 = vpack.c.b16 %v1405, %v1404
        %v1441 = vpack.c.b16 %v1407, %v1406
        %v1442 = vpack.c.b16 %v1409, %v1408
        %v1443 = vpack.c.b16 %v1411, %v1410
        %1476 = vmatprep.subr.bf16.mxu0 0
        %1477 = vmatpush1.bf16.msra.mxu0 %v1412
        %1478 = vmatprep.subr.bf16.mxu0 0
        %1479 = vmatpush1.bf16.msra.mxu0 %v1413
        %1480 = vmatprep.subr.bf16.mxu0 0
        %1481 = vmatpush1.bf16.msra.mxu0 %v1414
        %1482 = vmatprep.subr.bf16.mxu0 0
        %1483 = vmatpush1.bf16.msra.mxu0 %v1415
        %1484 = vmatprep.subr.bf16.mxu0 0
        %1485 = vmatpush1.bf16.msra.mxu0 %v1416
        %1486 = vmatprep.subr.bf16.mxu0 0
        %1487 = vmatpush1.bf16.msra.mxu0 %v1417
        %1488 = vmatprep.subr.bf16.mxu0 0
        %1489 = vmatpush1.bf16.msra.mxu0 %v1418
        %1490 = vmatprep.subr.bf16.mxu0 0
        %1491 = vmatpush1.bf16.msra.mxu0 %v1419
        %1492 = vmatprep.subr.bf16.mxu0 0
        %1493 = vmatpush1.bf16.msra.mxu0 %v1420
        %1494 = vmatprep.subr.bf16.mxu0 0
        %1495 = vmatpush1.bf16.msra.mxu0 %v1421
        %1496 = vmatprep.subr.bf16.mxu0 0
        %1497 = vmatpush1.bf16.msra.mxu0 %v1422
        %1498 = vmatprep.subr.bf16.mxu0 0
        %1499 = vmatpush1.bf16.msra.mxu0 %v1423
        %1500 = vmatprep.subr.bf16.mxu0 0
        %1501 = vmatpush1.bf16.msra.mxu0 %v1424
        %1502 = vmatprep.subr.bf16.mxu0 0
        %1503 = vmatpush1.bf16.msra.mxu0 %v1425
        %1504 = vmatprep.subr.bf16.mxu0 0
        %1505 = vmatpush1.bf16.msra.mxu0 %v1426
        %1506 = vmatprep.subr.bf16.mxu0 0
        %1507 = vmatpush1.bf16.msra.mxu0 %v1427
        %1508 = vmatprep.mubr.bf16.mxu0 %v1169
        %1509 = vmatmul.mubr.bf16.gmra.mrb[0].mxu0 %v1168
        %v1510 = vpop.f32.mrb[0].mxu0
        %v1511 = vadd.f32 %v1279, %v1510
        %v1512 = vpop.f32.mrb[0].mxu0
        %v1513 = vpop.f32.mrb[0].mxu0
        %v1514 = vpop.f32.mrb[0].mxu0
        %1515 = vdwg.mxu0
        %1516 = vmatprep.subr.bf16.mxu0 0
        %1517 = vmatpush1.bf16.msra.mxu0 %v1428
        %1518 = vmatprep.subr.bf16.mxu0 0
        %1519 = vmatpush1.bf16.msra.mxu0 %v1429
        %1520 = vmatprep.subr.bf16.mxu0 0
        %1521 = vmatpush1.bf16.msra.mxu0 %v1430
        %1522 = vmatprep.subr.bf16.mxu0 0
        %1523 = vmatpush1.bf16.msra.mxu0 %v1431
        %1524 = vmatprep.subr.bf16.mxu0 0
        %1525 = vmatpush1.bf16.msra.mxu0 %v1432
        %1526 = vmatprep.subr.bf16.mxu0 0
        %1527 = vmatpush1.bf16.msra.mxu0 %v1433
        %1528 = vmatprep.subr.bf16.mxu0 0
        %1529 = vmatpush1.bf16.msra.mxu0 %v1434
        %1530 = vmatprep.subr.bf16.mxu0 0
        %1531 = vmatpush1.bf16.msra.mxu0 %v1435
        %1532 = vmatprep.subr.bf16.mxu0 0
        %1533 = vmatpush1.bf16.msra.mxu0 %v1436
        %1534 = vmatprep.subr.bf16.mxu0 0
        %1535 = vmatpush1.bf16.msra.mxu0 %v1437
        %1536 = vmatprep.subr.bf16.mxu0 0
        %1537 = vmatpush1.bf16.msra.mxu0 %v1438
        %1538 = vmatprep.subr.bf16.mxu0 0
        %1539 = vmatpush1.bf16.msra.mxu0 %v1439
        %1540 = vmatprep.subr.bf16.mxu0 0
        %1541 = vmatpush1.bf16.msra.mxu0 %v1440
        %1542 = vmatprep.subr.bf16.mxu0 0
        %1543 = vmatpush1.bf16.msra.mxu0 %v1441
        %1544 = vmatprep.subr.bf16.mxu0 0
        %1545 = vmatpush1.bf16.msra.mxu0 %v1442
        %1546 = vmatprep.subr.bf16.mxu0 0
        %1547 = vmatpush1.bf16.msra.mxu0 %v1443
        %1548 = vmatprep.mubr.bf16.mxu0 %v1171
        %1549 = vmatmul.mubr.bf16.gmra.mrb[0].mxu0 %v1170
        %v1550 = vpop.f32.mrb[0].mxu0
        %v1551 = vadd.f32 %v1511, %v1550
        %v1552 = vpop.f32.mrb[0].mxu0
        %v1553 = vpop.f32.mrb[0].mxu0
        %v1554 = vpop.f32.mrb[0].mxu0
        %1555 = vdwg.mxu0
        %v1556 = vld [vmem:[%s8 + $0x5] ss:$0 sm:$0xff]
        %v1557 = vadd.f32 %v1551, %v1556
        %v1558 = vld [vmem:[%s8 + $0x44] ss:$0 sm:$0xff]
        %v1559 = vld [vmem:[%s8 + $0x45] ss:$0 sm:$0xff]
        %v1560 = vld [vmem:[%s8 + $0x46] ss:$0 sm:$0xff]
        %v1561 = vld [vmem:[%s8 + $0x47] ss:$0 sm:$0xff]
        %1563 = vset.pattern.permute.xlu0 0
        %1564 = vperm.xlu0 %1563, %v1149
        %v1565 = vpop.permute.xlu0 %1564
        %v1567 = vmul.f32 %v1565, %v1558
        %1568 = vset.pattern.permute.xlu0 1
        %1569 = vperm.xlu0 %1568, %v1149
        %v1570 = vpop.permute.xlu0 %1569
        %v1572 = vmul.f32 %v1570, %v1559
        %v1573 = vadd.f32 %v1567, %v1572
        %1574 = vset.pattern.permute.xlu0 2
        %1575 = vperm.xlu0 %1574, %v1149
        %v1576 = vpop.permute.xlu0 %1575
        %v1578 = vmul.f32 %v1576, %v1560
        %v1579 = vadd.f32 %v1573, %v1578
        %1580 = vset.pattern.permute.xlu0 3
        %1581 = vperm.xlu0 %1580, %v1149
        %v1582 = vpop.permute.xlu0 %1581
        %v1584 = vmul.f32 %v1582, %v1561
        %v1585 = vadd.f32 %v1579, %v1584
        %1586 = vset.pattern.permute.xlu0 4
        %1587 = vperm.xlu0 %1586, %v1149
        %v1588 = vpop.permute.xlu0 %1587
        %v1590 = vmul.f32 %v1588, %v1558
        %1591 = vset.pattern.permute.xlu0 5
        %1592 = vperm.xlu0 %1591, %v1149
        %v1593 = vpop.permute.xlu0 %1592
        %v1595 = vmul.f32 %v1593, %v1559
        %v1596 = vadd.f32 %v1590, %v1595
        %1597 = vset.pattern.permute.xlu0 6
        %1598 = vperm.xlu0 %1597, %v1149
        %v1599 = vpop.permute.xlu0 %1598
        %v1601 = vmul.f32 %v1599, %v1560
        %v1602 = vadd.f32 %v1596, %v1601
        %1603 = vset.pattern.permute.xlu0 7
        %1604 = vperm.xlu0 %1603, %v1149
        %v1605 = vpop.permute.xlu0 %1604
        %v1607 = vmul.f32 %v1605, %v1561
        %v1608 = vadd.f32 %v1602, %v1607
        %1609 = vset.pattern.permute.xlu0 8
        %1610 = vperm.xlu0 %1609, %v1149
        %v1611 = vpop.permute.xlu0 %1610
        %v1613 = vmul.f32 %v1611, %v1558
        %1614 = vset.pattern.permute.xlu0 9
        %1615 = vperm.xlu0 %1614, %v1149
        %v1616 = vpop.permute.xlu0 %1615
        %v1618 = vmul.f32 %v1616, %v1559
        %v1619 = vadd.f32 %v1613, %v1618
        %1620 = vset.pattern.permute.xlu0 10
        %1621 = vperm.xlu0 %1620, %v1149
        %v1622 = vpop.permute.xlu0 %1621
        %v1624 = vmul.f32 %v1622, %v1560
        %v1625 = vadd.f32 %v1619, %v1624
        %1626 = vset.pattern.permute.xlu0 11
        %1627 = vperm.xlu0 %1626, %v1149
        %v1628 = vpop.permute.xlu0 %1627
        %v1630 = vmul.f32 %v1628, %v1561
        %v1631 = vadd.f32 %v1625, %v1630
        %1633 = vrot.lane.b32.xlu0 %v1608, 2
        %v1634 = vpop.permute.xlu0 %1633
        %1637 = vrot.lane.b32.xlu0 %v1631, 4
        %v1638 = vpop.permute.xlu0 %1637
        %v1640 = vsel %vm451, %v1585, %v1634
        %v1641 = vsel %vm503, %v1640, %v1638
        %v1642 = vadd.f32 %v439, %v1557
        %v1643 = vadd.f32 %v458, %v1641
        %1644 = vadd.xlane.f32.xlu0 %v1642
        %v1645 = vpop.xlane.xlu0 %1644
        %v1646 = vmul.f32 %v1645, %v426
        %v1647 = vsub.f32 %v1642, %v1646
        %v1648 = vmul.f32 %v1647, %v1647
        %1649 = vadd.xlane.f32.xlu0 %v1648
        %v1650 = vpop.xlane.xlu0 %1649
        %v1651 = vmul.f32 %v1650, %v426
        %v1652 = vadd.f32 %v1651, 1e-05
        %v1653 = vrsqrt.pop %v1652
        %v1654 = vmul.f32 %v1647, %v1653
        %v1655 = vld [vmem:[%s8 + $0x3] ss:$0 sm:$0xff]
        %v1656 = vmul.f32 %v1654, %v1655
        %v1657 = vld [vmem:[%s8 + $0x4] ss:$0 sm:$0xff]
        %v1658 = vadd.f32 %v1656, %v1657
        %v1659 = vmul.f32 %v1643, %v1643
        %1661 = vrot.lane.b32.xlu0 %v1659, 126
        %v1662 = vpop.permute.xlu0 %1661
        %v1664 = vadd.f32 %v1659, %v1662
        %1665 = vrot.lane.b32.xlu0 %v1659, 124
        %v1666 = vpop.permute.xlu0 %1665
        %v1668 = vadd.f32 %v1664, %v1666
        %v1669 = vmax.f32 %v1668, 1e-08
        %v1670 = vsel %vm451, %v1669, 0.0
        %1671 = vadd.xlane.f32.xlu0 %v1670
        %v1672 = vpop.xlane.xlu0 %1671
        %v1673 = vmul.f32 %v1672, %v455
        %v1674 = vrsqrt.pop %v1673
        %v1675 = vmul.f32 %v1643, %v1674
        %v1676 = vadd.f32 %v1658, %v418
        %v1677 = vmul.f32 %v1676, 0.5
        %1678 = vst [vmem:[%s416] sm:$0xff] %v1677
        %v1679 = vadd.f32 %v1675, %v419
        %v1680 = vmul.f32 %v1679, 0.5
        %vm1681 = vcmask 48128
        %1682 = vst.msk [vmem:[%s396] sm:$0xff] %vm1681, %v1680
        %p1683 = scmp.lt.s32.totalorder %s25, 1
        %s1684 = scalar_select %p1683, %s25, 1
        %s1685 = smul.addr %s1684, 8
        %s1686 = scalar_lea.vmem %s9, %s1685
        %s1687 = sand.u32 %s268, 1
        %s1688 = scalar_lea.sflag [#allocation3], %s1687
        %s1689 = sand.u32 %s268, 1
        %s1690 = smul.addr %s1689, 8
        %s1691 = scalar_lea.vmem [#allocation2], %s1690
        // Predicated region
        $region57: #{scoring_forward.33} parent=55 // pred_check
          %p1692 = pneg %p252
        $region58: #{scoring_forward.33} parent=55 // pred_check_branch
          %1694 = sbr.rel (%p1692) target = $region60
        $region59: #{scoring_forward.33} parent=55 // pred_region
          _
        $region60: #{scoring_forward.33} parent=55 // pred_fallthru
          _
        // Predicated region
        $region61: #{scoring_forward.33} parent=55 // pred_check
          %p1695 = pneg %p278
        $region62: #{scoring_forward.33} parent=55 // pred_check_branch
          %1697 = sbr.rel (%p1695) target = $region64
        $region63: #{scoring_forward.33} parent=55 // pred_region
          %s1699 = ssub.s32 128, 128
          %1700 = vsyncadd %s1688, %s1699
          %s1701 = smul.addr %s25, 128
          %s1702 = scalar_lea.hbm %s10, %s1701
          %s1704 = sshll.u32 %s1691, 4
          %s1705 = int_to_ptr.vmem [resolvable:$true] %s1704
          %1707 = dma.vmem_to_hbm [thread:$0]  %s1705, 128, %s1702, %s1688
        $region64: #{scoring_forward.33} parent=55 // pred_fallthru
          _
      $region56: #{scoring_forward.33} parent=5 // pred_fallthru
        _
      %p1708 = scmp.le.s32.totalorder 2, %s20
      // Predicated region
      $region65: #{scoring_forward.33} parent=5 // pred_check
        %p1709 = pneg %p1708
      $region66: #{scoring_forward.33} parent=5 // pred_check_branch
        %1711 = sbr.rel (%p1709) target = $region68
      $region67: #{scoring_forward.33} parent=5 // pred_region
        %s1712 = ssub.s32 %s20, 2
        // Predicated region
        $region69: #{scoring_forward.33} parent=67 // pred_check
          %p1713 = pneg %p258
        $region70: #{scoring_forward.33} parent=67 // pred_check_branch
          %1715 = sbr.rel (%p1713) target = $region72
        $region71: #{scoring_forward.33} parent=67 // pred_region
          %p1716 = scmp.lt.s32.totalorder %s26, 1
          %s1717 = scalar_select %p1716, %s26, 1
          %s1718 = smul.addr %s1717, 8
          %s1719 = scalar_lea.vmem %s9, %s1718
        $region72: #{scoring_forward.33} parent=67 // pred_fallthru
          _
        // Predicated region
        $region73: #{scoring_forward.33} parent=67 // pred_check
          %p1720 = pneg %p284
        $region74: #{scoring_forward.33} parent=67 // pred_check_branch
          %1722 = sbr.rel (%p1720) target = $region76
        $region75: #{scoring_forward.33} parent=67 // pred_region
          %s1723 = sand.u32 %s269, 1
          %s1724 = scalar_lea.sflag [#allocation3], %s1723
          %s1725 = sand.u32 %s269, 1
          %s1726 = smul.addr %s1725, 8
          %s1727 = scalar_lea.vmem [#allocation2], %s1726
          %1728 = dma.done %s1724, 128
        $region76: #{scoring_forward.33} parent=67 // pred_fallthru
          _
      $region68: #{scoring_forward.33} parent=5 // pred_fallthru
        _
    $region6: #{scoring_forward.33} parent=1 // loop_footer
      %s24 = sadd.s32 1, %s20
    $region7: #{scoring_forward.33} parent=1 // loop_footer_branch
      %19 = sbr.rel target = $region3
    $region8: #{scoring_forward.33} parent=1 // loop_exit
      _
    %1729 = vsyncpa [#allocation3], 1
    %s1730 = scalar_lea.sflag [#allocation3], 1
    %1731 = vsyncpa %s1730, 1

</llo_original>
